<compile_context>
chip_gen: v7x
topology: tpu7x:2x2x1
jax: 0.10.0
libtpu: 0.0.40
codegen_flags: <defaults>
</compile_context>

<pallas_src>
import functools

import numpy as np

import jax
import jax.numpy as jnp
from jax import lax
from jax.experimental import pallas as pl
from jax.experimental.pallas import tpu as pltpu


# ---------------------------------------------------------------------------
# Host-side pre-composition (sub-pixel / transposed-conv identity)
# ---------------------------------------------------------------------------
def _active_qy(i, r):
    return sorted({(i + dy - 1) // r for dy in range(3)})


def _precompose(w_proj, b_proj, w_out, b_out, r, W, TH):
    """Compose proj(1x1)+shuffle+conv3x3 into per-phase low-res kernels (f64)."""
    wp = np.asarray(w_proj, np.float64)[:, :, 0, 0]            # (cin*r*r, cin)
    bp = np.asarray(b_proj, np.float64)                        # (cin*r*r,)
    wo = np.asarray(w_out, np.float64)                         # (cout, cin, 3, 3)
    bo = np.asarray(b_out, np.float64)                         # (cout,)
    cout, cin = wo.shape[0], wo.shape[1]
    Ws = W * r
    wpa = np.concatenate([wp, bp[:, None]], axis=1)            # bias as extra channel

    # K[i, j, co, ci_aug, qy+1, qx+1]: composed kernel per output phase (i, j)
    K = np.zeros((r, r, cout, cin + 1, 3, 3), np.float64)
    for i in range(r):
        for j in range(r):
            for dy in range(3):
                a = i + dy - 1
                qy, iy = a // r, a % r
                for dx in range(3):
                    b = j + dx - 1
                    qx, jx = b // r, b % r
                    for c in range(cin):
                        cp = (c * r + iy) * r + jx             # PixelShuffle order
                        K[i, j, :, :, qy + 1, qx + 1] += np.outer(
                            wo[:, c, dy, dx], wpa[cp])

    # Lane-periodic weight planes: column phase j = X % r lives in the lane dim.
    jlane = np.arange(Ws) % r
    wlane = np.arange(Ws) // r
    colmask = np.ones((3, Ws))                                 # fold column zero-pad
    colmask[0, wlane == 0] = 0.0                               # qx = -1 at left edge
    colmask[2, wlane == W - 1] = 0.0                           # qx = +1 at right edge

    Kx = np.moveaxis(K[:, :, :, :cin][:, jlane], 1, -1)        # (r,cout,cin,3,3,Ws)
    Kx = Kx * colmask[None, None, None, None, :, :]
    vw = Kx.reshape(r * cout * cin * 9, 1, Ws)

    Ko = np.moveaxis(K[:, :, :, cin][:, jlane], 1, -1)         # (r,cout,3,3,Ws) ones-chan
    Ko = Ko * colmask[None, None, None, :, :]
    bias_int = Ko.sum(axis=(2, 3)) + bo[None, :, None]         # interior bias
    btop = Ko[:, :, 0, :, :].sum(axis=2)                       # image-top correction
    bbot = Ko[:, :, 2, :, :].sum(axis=2)                       # image-bottom correction
    bias = np.stack([bias_int, btop, bbot], 0).reshape(3 * r * cout, 1, Ws)

    # Exact 0/1 column replication matrix: E[:, r + w*r + jj] = x[:, w]
    rep = np.zeros((W, Ws + 2 * r), np.float32)
    for jj in range(r):
        rep[np.arange(W), r + np.arange(W) * r + jj] = 1.0

    # Exact 0/1 row-phase interleave matrix: out row h*r+i <- phase i, row h
    lcat = np.zeros((TH * r, r * TH), np.float32)
    for i in range(r):
        for h in range(TH):
            lcat[h * r + i, i * TH + h] = 1.0

    return (jnp.asarray(vw, jnp.float32), jnp.asarray(bias, jnp.float32),
            jnp.asarray(rep, jnp.float32), jnp.asarray(lcat, jnp.float32))


# ---------------------------------------------------------------------------
# Fused kernel: one (batch, row-tile) step
# ---------------------------------------------------------------------------
def _fused_kernel(vw_ref, bias_ref, rep_ref, lcat_ref,       # precomposed constants
                  xc_ref, xp_ref, xn_ref,                    # x tile + 1-row halos
                  o_ref,
                  *, cin, cout, r, TH, W, halo_top_row, halo_bot_row):
    f32 = jnp.float32
    Ws = W * r
    t = pl.program_id(1)
    nt = pl.num_programs(1)

    top_keep = (t > 0).astype(f32)            # 0 at image top edge
    bot_keep = (t < nt - 1).astype(f32)       # 0 at image bottom edge
    top_edge = 1.0 - top_keep
    bot_edge = 1.0 - bot_keep

    rep = rep_ref[...]                        # (W, Ws + 2r) exact 0/1

    row_id = lax.broadcasted_iota(jnp.int32, (TH, Ws), 0)
    row_first = (row_id == 0).astype(f32)
    row_last = (row_id == TH - 1).astype(f32)

    def vw_idx(i, co, ci, qy, qx):
        return (((i * cout + co) * cin + ci) * 3 + (qy + 1)) * 3 + (qx + 1)

    def bias_idx(k, i, co):
        return (k * r + i) * cout + co

    # ---- accumulators initialised from the precomposed bias planes --------
    acc = [[None] * cout for _ in range(r)]
    for i in range(r):
        for co in range(cout):
            a = jnp.broadcast_to(bias_ref[bias_idx(0, i, co)], (TH, Ws)).astype(f32)
            if i == 0:          # image-top correction hits only the first tile row
                a = a - (top_edge * row_first) * bias_ref[bias_idx(1, i, co)]
            if i == r - 1:      # image-bottom correction hits only the last tile row
                a = a - (bot_edge * row_last) * bias_ref[bias_idx(2, i, co)]
            acc[i][co] = a

    # ---- x-channel contributions: shifted slabs reused across all cout ----
    for ci in range(cin):
        top = top_keep * xp_ref[0, ci, halo_top_row:halo_top_row + 1, :].astype(f32)
        bot = bot_keep * xn_ref[0, ci, halo_bot_row:halo_bot_row + 1, :].astype(f32)
        p = jnp.concatenate([top, xc_ref[0, ci].astype(f32), bot], axis=0)   # (TH+2, W)
        # Exact column replication (0/1 matmul on the MXU): (TH+2, Ws+2r)
        ex = jnp.dot(p, rep, preferred_element_type=f32)
        for qy in (-1, 0, 1):
            phases = [i for i in range(r) if qy in _active_qy(i, r)]
            if not phases:
                continue
            for qx in (-1, 0, 1):
                tap = ex[qy + 1:qy + 1 + TH, (qx + 1) * r:(qx + 1) * r + Ws]  # (TH, Ws)
                for i in phases:
                    for co in range(cout):
                        acc[i][co] = acc[i][co] + vw_ref[vw_idx(i, co, ci, qy, qx)] * tap

    # ---- row-phase interleave (exact 0/1 matmul) + lane-dense stores -------
    if r == 1:
        for co in range(cout):
            o_ref[0, co] = acc[0][co].astype(o_ref.dtype)
    else:
        lcat = lcat_ref[...]                   # (TH*r, r*TH) exact 0/1
        for co in range(cout):
            cat = jnp.concatenate([acc[i][co] for i in range(r)], axis=0)    # (r*TH, Ws)
            o_ref[0, co] = jnp.dot(lcat, cat, preferred_element_type=f32).astype(o_ref.dtype)


# ---------------------------------------------------------------------------
# Chip-aware tiling / VMEM budgeting
# ---------------------------------------------------------------------------
def _vmem_capacity_bytes():
    try:
        return int(pltpu.get_tpu_info().vmem_capacity_bytes)
    except Exception:
        return 64 * 1024 * 1024        # conservative (v7x per-core VMEM)


def _estimate_step_bytes(cin, cout, r, TH, W, H):
    Ws = W * r
    THr = TH * r
    fixed = (r * cout * cin * 9 * Ws           # lane-periodic weight planes
             + 3 * r * cout * Ws                # bias planes
             + W * (Ws + 2 * r)                 # column replication matrix
             + THr * r * TH)                    # row interleave matrix
    blocks = (2 * cin * TH * W                  # x tile (double buffered)
              + 4 * cin * min(8, H) * W         # two 8-row halo bands (double buffered)
              + 2 * cout * THr * Ws)            # output tile (double buffered)
    live = (r * cout * TH * Ws                  # accumulators
            + (TH + 2) * (Ws + 2 * r)           # expanded input plane
            + 3 * THr * Ws)                     # interleave temporaries
    return 4 * (2 * fixed + blocks + live)


def _pick_row_tile(H, W, cin, cout, r, vmem_bytes):
    cands = [d for d in range(8, H + 1, 8) if H % d == 0] or [H]
    budget = int(0.55 * vmem_bytes)
    chosen = cands[0]
    for d in cands:
        if _estimate_step_bytes(cin, cout, r, d, W, H) <= budget:
            chosen = d
    return chosen


# ---------------------------------------------------------------------------
# Wrapper
# ---------------------------------------------------------------------------
def unpatch_embedding_pixel_shuffle(x_nchw, params, *, scale, row_tile=None):
    """x_nchw: (N, in_ch, H, W) -> (N, out_ch, H*scale, W*scale), NCHW."""
    w_proj, b_proj = params["w_proj"], params["b_proj"]
    w_out, b_out = params["w_out"], params["b_out"]

    N, cin, H, W = x_nchw.shape
    r = int(scale)
    cout = w_out.shape[0]
    assert r >= 1
    assert w_proj.shape == (cin * r * r, cin, 1, 1)
    assert w_out.shape[1:] == (cin, 3, 3)

    vmem_bytes = _vmem_capacity_bytes()
    TH = int(row_tile) if row_tile is not None else _pick_row_tile(
        H, W, cin, cout, r, vmem_bytes)
    assert H % TH == 0 and (TH % 8 == 0 or TH == H), (H, TH)
    T = H // TH
    THr, Ws, Hs = TH * r, W * r, H * r

    vw, bias, rep, lcat = _precompose(w_proj, b_proj, w_out, b_out, r, W, TH)

    # Single-row halos: an 8-row band blocked along H; only one row is used.
    if T > 1:
        HALO = 8
        hb = TH // 8
        top_map = lambda n, t: (n, 0, jnp.maximum(t * hb - 1, 0), 0)
        bot_map = lambda n, t: (n, 0, jnp.minimum((t + 1) * hb, H // 8 - 1), 0)
        halo_top_row, halo_bot_row = HALO - 1, 0
    else:
        HALO = min(8, H)
        top_map = lambda n, t: (n, 0, 0, 0)
        bot_map = lambda n, t: (n, 0, 0, 0)
        halo_top_row, halo_bot_row = 0, 0

    kernel = functools.partial(
        _fused_kernel, cin=cin, cout=cout, r=r, TH=TH, W=W,
        halo_top_row=halo_top_row, halo_bot_row=halo_bot_row)

    const3 = lambda n, t: (0, 0, 0)
    const2 = lambda n, t: (0, 0)
    vmem_limit = int(min(0.9 * vmem_bytes,
                         max(2 * _estimate_step_bytes(cin, cout, r, TH, W, H),
                             32 * 1024 * 1024)))

    return pl.pallas_call(
        kernel,
        out_shape=jax.ShapeDtypeStruct((N, cout, Hs, Ws), x_nchw.dtype),
        grid_spec=pltpu.PrefetchScalarGridSpec(
            num_scalar_prefetch=0,
            grid=(N, T),
            in_specs=[
                pl.BlockSpec(vw.shape, const3),                      # fetched once
                pl.BlockSpec(bias.shape, const3),                    # fetched once
                pl.BlockSpec(rep.shape, const2),                     # fetched once
                pl.BlockSpec(lcat.shape, const2),                    # fetched once
                pl.BlockSpec((1, cin, TH, W), lambda n, t: (n, 0, t, 0)),
                pl.BlockSpec((1, cin, HALO, W), top_map),            # row above tile
                pl.BlockSpec((1, cin, HALO, W), bot_map),            # row below tile
            ],
            out_specs=pl.BlockSpec((1, cout, THr, Ws), lambda n, t: (n, 0, t, 0)),
        ),
        compiler_params=pltpu.CompilerParams(
            dimension_semantics=("parallel", "parallel"),
            vmem_limit_bytes=vmem_limit,
        ),
    )(vw, bias, rep, lcat, x_nchw, x_nchw, x_nchw)


if __name__ == "__main__":
    key = jax.random.PRNGKey(0)
    in_ch, out_ch, patch_size = 4, 8, 2
    scale = patch_size                     # stride=None -> s = patch_size
    N, H, W = 2, 16, 16

    k1, k2, k3, k4, k5 = jax.random.split(key, 5)
    x = jax.random.normal(k1, (N, in_ch, H, W), jnp.float32)
    w_proj = 0.1 * jax.random.normal(k2, (in_ch * scale * scale, in_ch, 1, 1), jnp.float32)
    b_proj = 0.1 * jax.random.normal(k3, (in_ch * scale * scale,), jnp.float32)
    w_out = 0.1 * jax.random.normal(k4, (out_ch, in_ch, 3, 3), jnp.float32)
    b_out = 0.1 * jax.random.normal(k5, (out_ch,), jnp.float32)
    params = dict(w_proj=w_proj, b_proj=b_proj, w_out=w_out, b_out=b_out)

    # row_tile=8 -> two row tiles per image: exercises the halo / edge paths.
    out = unpatch_embedding_pixel_shuffle(x, params, scale=scale, row_tile=8)
    out = jax.block_until_ready(out)
    assert out.shape == (N, out_ch, H * scale, W * scale)

    # Pure-JAX NCHW reference (mirrors the PyTorch forward).
    y_ref = lax.conv_general_dilated(
        x, w_proj, (1, 1), "VALID",
        dimension_numbers=("NCHW", "OIHW", "NCHW"),
    ) + b_proj[None, :, None, None]
    ps_ref = y_ref.reshape(N, in_ch, scale, scale, H, W)
    ps_ref = jnp.transpose(ps_ref, (0, 1, 4, 2, 5, 3)).reshape(
        N, in_ch, H * scale, W * scale)
    out_ref = lax.conv_general_dilated(
        ps_ref, w_out, (1, 1), ((1, 1), (1, 1)),
        dimension_numbers=("NCHW", "OIHW", "NCHW"),
    ) + b_out[None, :, None, None]

    err = float(jnp.max(jnp.abs(out - out_ref)))
    assert jnp.allclose(out, out_ref, atol=1e-4, rtol=1e-4), err
    print("KERNEL_OK")
</pallas_src>

<mosaic_0001>
module attributes {stable_mosaic.version = 11 : i64} {
  func.func @_fused_kernel(%arg0: i32, %arg1: i32, %arg2: memref<576x1x32xf32, #tpu.memory_space<vmem>>, %arg3: memref<48x1x32xf32, #tpu.memory_space<vmem>>, %arg4: memref<16x36xf32, #tpu.memory_space<vmem>>, %arg5: memref<16x16xf32, #tpu.memory_space<vmem>>, %arg6: memref<1x4x8x16xf32, #tpu.memory_space<vmem>>, %arg7: memref<1x4x8x16xf32, #tpu.memory_space<vmem>>, %arg8: memref<1x4x8x16xf32, #tpu.memory_space<vmem>>, %arg9: memref<1x8x16x32xf32, #tpu.memory_space<vmem>>) attributes {dimension_semantics = [#tpu.dimension_semantics<parallel>, #tpu.dimension_semantics<parallel>], iteration_bounds = array<i64: 2, 2>, scalar_prefetch = 0 : i64, scratch_operands = 0 : i64, tpu.core_type = #tpu.core_type<tc>, window_params = [{pipeline_mode = #tpu.pipeline_mode<synchronous>, transform_indices = @transform_0, window_bounds = array<i64: 576, 1, 32>}, {pipeline_mode = #tpu.pipeline_mode<synchronous>, transform_indices = @transform_1, window_bounds = array<i64: 48, 1, 32>}, {pipeline_mode = #tpu.pipeline_mode<synchronous>, transform_indices = @transform_2, window_bounds = array<i64: 16, 36>}, {pipeline_mode = #tpu.pipeline_mode<synchronous>, transform_indices = @transform_3, window_bounds = array<i64: 16, 16>}, {transform_indices = @transform_4, window_bounds = array<i64: 1, 4, 8, 16>}, {transform_indices = @transform_5, window_bounds = array<i64: 1, 4, 8, 16>}, {transform_indices = @transform_6, window_bounds = array<i64: 1, 4, 8, 16>}, {transform_indices = @transform_7, window_bounds = array<i64: 1, 8, 16, 32>}]} {
    %c0_i32 = arith.constant 0 : i32
    %0 = arith.cmpi sgt, %arg1, %c0_i32 : i32
    %1 = arith.extui %0 : i1 to i32
    %2 = arith.sitofp %1 : i32 to f32
    %c1_i32 = arith.constant 1 : i32
    %3 = arith.cmpi slt, %arg1, %c1_i32 : i32
    %4 = arith.extui %3 : i1 to i32
    %5 = arith.sitofp %4 : i32 to f32
    %cst = arith.constant 1.000000e+00 : f32
    %6 = arith.subf %cst, %2 : f32
    %cst_0 = arith.constant 1.000000e+00 : f32
    %7 = arith.subf %cst_0, %5 : f32
    %c0 = arith.constant 0 : index
    %c0_1 = arith.constant 0 : index
    %8 = vector.load %arg4[%c0, %c0_1] : memref<16x36xf32, #tpu.memory_space<vmem>>, vector<16x36xf32>
    %9 = tpu.iota {dimensions = array<i32: 0>} : vector<8x32xi32>
    %c0_i32_2 = arith.constant 0 : i32
    %10 = vector.broadcast %c0_i32_2 : i32 to vector<8x32xi32>
    %11 = arith.cmpi eq, %9, %10 : vector<8x32xi32>
    %12 = arith.extui %11 : vector<8x32xi1> to vector<8x32xi32>
    %13 = arith.sitofp %12 : vector<8x32xi32> to vector<8x32xf32>
    %c7_i32 = arith.constant 7 : i32
    %14 = vector.broadcast %c7_i32 : i32 to vector<8x32xi32>
    %15 = arith.cmpi eq, %9, %14 : vector<8x32xi32>
    %16 = arith.extui %15 : vector<8x32xi1> to vector<8x32xi32>
    %17 = arith.sitofp %16 : vector<8x32xi32> to vector<8x32xf32>
    %c0_3 = arith.constant 0 : index
    %c0_4 = arith.constant 0 : index
    %c0_5 = arith.constant 0 : index
    %18 = vector.load %arg3[%c0_3, %c0_4, %c0_5] : memref<48x1x32xf32, #tpu.memory_space<vmem>>, vector<1x1x32xf32>
    %19 = vector.shape_cast %18 : vector<1x1x32xf32> to vector<1x32xf32>
    %20 = vector.shape_cast %19 : vector<1x32xf32> to vector<1x32xf32>
    %21 = vector.broadcast %20 : vector<1x32xf32> to vector<8x32xf32>
    %22 = vector.broadcast %6 : f32 to vector<8x32xf32>
    %23 = arith.mulf %22, %13 : vector<8x32xf32>
    %c16 = arith.constant 16 : index
    %c0_6 = arith.constant 0 : index
    %c0_7 = arith.constant 0 : index
    %24 = vector.load %arg3[%c16, %c0_6, %c0_7] : memref<48x1x32xf32, #tpu.memory_space<vmem>>, vector<1x1x32xf32>
    %25 = vector.shape_cast %24 : vector<1x1x32xf32> to vector<1x32xf32>
    %26 = vector.broadcast %25 : vector<1x32xf32> to vector<8x32xf32>
    %27 = arith.mulf %23, %26 : vector<8x32xf32>
    %28 = arith.subf %21, %27 : vector<8x32xf32>
    %c1 = arith.constant 1 : index
    %c0_8 = arith.constant 0 : index
    %c0_9 = arith.constant 0 : index
    %29 = vector.load %arg3[%c1, %c0_8, %c0_9] : memref<48x1x32xf32, #tpu.memory_space<vmem>>, vector<1x1x32xf32>
    %30 = vector.shape_cast %29 : vector<1x1x32xf32> to vector<1x32xf32>
    %31 = vector.shape_cast %30 : vector<1x32xf32> to vector<1x32xf32>
    %32 = vector.broadcast %31 : vector<1x32xf32> to vector<8x32xf32>
    %33 = vector.broadcast %6 : f32 to vector<8x32xf32>
    %34 = arith.mulf %33, %13 : vector<8x32xf32>
    %c17 = arith.constant 17 : index
    %c0_10 = arith.constant 0 : index
    %c0_11 = arith.constant 0 : index
    %35 = vector.load %arg3[%c17, %c0_10, %c0_11] : memref<48x1x32xf32, #tpu.memory_space<vmem>>, vector<1x1x32xf32>
    %36 = vector.shape_cast %35 : vector<1x1x32xf32> to vector<1x32xf32>
    %37 = vector.broadcast %36 : vector<1x32xf32> to vector<8x32xf32>
    %38 = arith.mulf %34, %37 : vector<8x32xf32>
    %39 = arith.subf %32, %38 : vector<8x32xf32>
    %c2 = arith.constant 2 : index
    %c0_12 = arith.constant 0 : index
    %c0_13 = arith.constant 0 : index
    %40 = vector.load %arg3[%c2, %c0_12, %c0_13] : memref<48x1x32xf32, #tpu.memory_space<vmem>>, vector<1x1x32xf32>
    %41 = vector.shape_cast %40 : vector<1x1x32xf32> to vector<1x32xf32>
    %42 = vector.shape_cast %41 : vector<1x32xf32> to vector<1x32xf32>
    %43 = vector.broadcast %42 : vector<1x32xf32> to vector<8x32xf32>
    %44 = vector.broadcast %6 : f32 to vector<8x32xf32>
    %45 = arith.mulf %44, %13 : vector<8x32xf32>
    %c18 = arith.constant 18 : index
    %c0_14 = arith.constant 0 : index
    %c0_15 = arith.constant 0 : index
    %46 = vector.load %arg3[%c18, %c0_14, %c0_15] : memref<48x1x32xf32, #tpu.memory_space<vmem>>, vector<1x1x32xf32>
    %47 = vector.shape_cast %46 : vector<1x1x32xf32> to vector<1x32xf32>
    %48 = vector.broadcast %47 : vector<1x32xf32> to vector<8x32xf32>
    %49 = arith.mulf %45, %48 : vector<8x32xf32>
    %50 = arith.subf %43, %49 : vector<8x32xf32>
    %c3 = arith.constant 3 : index
    %c0_16 = arith.constant 0 : index
    %c0_17 = arith.constant 0 : index
    %51 = vector.load %arg3[%c3, %c0_16, %c0_17] : memref<48x1x32xf32, #tpu.memory_space<vmem>>, vector<1x1x32xf32>
    %52 = vector.shape_cast %51 : vector<1x1x32xf32> to vector<1x32xf32>
    %53 = vector.shape_cast %52 : vector<1x32xf32> to vector<1x32xf32>
    %54 = vector.broadcast %53 : vector<1x32xf32> to vector<8x32xf32>
    %55 = vector.broadcast %6 : f32 to vector<8x32xf32>
    %56 = arith.mulf %55, %13 : vector<8x32xf32>
    %c19 = arith.constant 19 : index
    %c0_18 = arith.constant 0 : index
    %c0_19 = arith.constant 0 : index
    %57 = vector.load %arg3[%c19, %c0_18, %c0_19] : memref<48x1x32xf32, #tpu.memory_space<vmem>>, vector<1x1x32xf32>
    %58 = vector.shape_cast %57 : vector<1x1x32xf32> to vector<1x32xf32>
    %59 = vector.broadcast %58 : vector<1x32xf32> to vector<8x32xf32>
    %60 = arith.mulf %56, %59 : vector<8x32xf32>
    %61 = arith.subf %54, %60 : vector<8x32xf32>
    %c4 = arith.constant 4 : index
    %c0_20 = arith.constant 0 : index
    %c0_21 = arith.constant 0 : index
    %62 = vector.load %arg3[%c4, %c0_20, %c0_21] : memref<48x1x32xf32, #tpu.memory_space<vmem>>, vector<1x1x32xf32>
    %63 = vector.shape_cast %62 : vector<1x1x32xf32> to vector<1x32xf32>
    %64 = vector.shape_cast %63 : vector<1x32xf32> to vector<1x32xf32>
    %65 = vector.broadcast %64 : vector<1x32xf32> to vector<8x32xf32>
    %66 = vector.broadcast %6 : f32 to vector<8x32xf32>
    %67 = arith.mulf %66, %13 : vector<8x32xf32>
    %c20 = arith.constant 20 : index
    %c0_22 = arith.constant 0 : index
    %c0_23 = arith.constant 0 : index
    %68 = vector.load %arg3[%c20, %c0_22, %c0_23] : memref<48x1x32xf32, #tpu.memory_space<vmem>>, vector<1x1x32xf32>
    %69 = vector.shape_cast %68 : vector<1x1x32xf32> to vector<1x32xf32>
    %70 = vector.broadcast %69 : vector<1x32xf32> to vector<8x32xf32>
    %71 = arith.mulf %67, %70 : vector<8x32xf32>
    %72 = arith.subf %65, %71 : vector<8x32xf32>
    %c5 = arith.constant 5 : index
    %c0_24 = arith.constant 0 : index
    %c0_25 = arith.constant 0 : index
    %73 = vector.load %arg3[%c5, %c0_24, %c0_25] : memref<48x1x32xf32, #tpu.memory_space<vmem>>, vector<1x1x32xf32>
    %74 = vector.shape_cast %73 : vector<1x1x32xf32> to vector<1x32xf32>
    %75 = vector.shape_cast %74 : vector<1x32xf32> to vector<1x32xf32>
    %76 = vector.broadcast %75 : vector<1x32xf32> to vector<8x32xf32>
    %77 = vector.broadcast %6 : f32 to vector<8x32xf32>
    %78 = arith.mulf %77, %13 : vector<8x32xf32>
    %c21 = arith.constant 21 : index
    %c0_26 = arith.constant 0 : index
    %c0_27 = arith.constant 0 : index
    %79 = vector.load %arg3[%c21, %c0_26, %c0_27] : memref<48x1x32xf32, #tpu.memory_space<vmem>>, vector<1x1x32xf32>
    %80 = vector.shape_cast %79 : vector<1x1x32xf32> to vector<1x32xf32>
    %81 = vector.broadcast %80 : vector<1x32xf32> to vector<8x32xf32>
    %82 = arith.mulf %78, %81 : vector<8x32xf32>
    %83 = arith.subf %76, %82 : vector<8x32xf32>
    %c6 = arith.constant 6 : index
    %c0_28 = arith.constant 0 : index
    %c0_29 = arith.constant 0 : index
    %84 = vector.load %arg3[%c6, %c0_28, %c0_29] : memref<48x1x32xf32, #tpu.memory_space<vmem>>, vector<1x1x32xf32>
    %85 = vector.shape_cast %84 : vector<1x1x32xf32> to vector<1x32xf32>
    %86 = vector.shape_cast %85 : vector<1x32xf32> to vector<1x32xf32>
    %87 = vector.broadcast %86 : vector<1x32xf32> to vector<8x32xf32>
    %88 = vector.broadcast %6 : f32 to vector<8x32xf32>
    %89 = arith.mulf %88, %13 : vector<8x32xf32>
    %c22 = arith.constant 22 : index
    %c0_30 = arith.constant 0 : index
    %c0_31 = arith.constant 0 : index
    %90 = vector.load %arg3[%c22, %c0_30, %c0_31] : memref<48x1x32xf32, #tpu.memory_space<vmem>>, vector<1x1x32xf32>
    %91 = vector.shape_cast %90 : vector<1x1x32xf32> to vector<1x32xf32>
    %92 = vector.broadcast %91 : vector<1x32xf32> to vector<8x32xf32>
    %93 = arith.mulf %89, %92 : vector<8x32xf32>
    %94 = arith.subf %87, %93 : vector<8x32xf32>
    %c7 = arith.constant 7 : index
    %c0_32 = arith.constant 0 : index
    %c0_33 = arith.constant 0 : index
    %95 = vector.load %arg3[%c7, %c0_32, %c0_33] : memref<48x1x32xf32, #tpu.memory_space<vmem>>, vector<1x1x32xf32>
    %96 = vector.shape_cast %95 : vector<1x1x32xf32> to vector<1x32xf32>
    %97 = vector.shape_cast %96 : vector<1x32xf32> to vector<1x32xf32>
    %98 = vector.broadcast %97 : vector<1x32xf32> to vector<8x32xf32>
    %99 = vector.broadcast %6 : f32 to vector<8x32xf32>
    %100 = arith.mulf %99, %13 : vector<8x32xf32>
    %c23 = arith.constant 23 : index
    %c0_34 = arith.constant 0 : index
    %c0_35 = arith.constant 0 : index
    %101 = vector.load %arg3[%c23, %c0_34, %c0_35] : memref<48x1x32xf32, #tpu.memory_space<vmem>>, vector<1x1x32xf32>
    %102 = vector.shape_cast %101 : vector<1x1x32xf32> to vector<1x32xf32>
    %103 = vector.broadcast %102 : vector<1x32xf32> to vector<8x32xf32>
    %104 = arith.mulf %100, %103 : vector<8x32xf32>
    %105 = arith.subf %98, %104 : vector<8x32xf32>
    %c8 = arith.constant 8 : index
    %c0_36 = arith.constant 0 : index
    %c0_37 = arith.constant 0 : index
    %106 = vector.load %arg3[%c8, %c0_36, %c0_37] : memref<48x1x32xf32, #tpu.memory_space<vmem>>, vector<1x1x32xf32>
    %107 = vector.shape_cast %106 : vector<1x1x32xf32> to vector<1x32xf32>
    %108 = vector.shape_cast %107 : vector<1x32xf32> to vector<1x32xf32>
    %109 = vector.broadcast %108 : vector<1x32xf32> to vector<8x32xf32>
    %110 = vector.broadcast %7 : f32 to vector<8x32xf32>
    %111 = arith.mulf %110, %17 : vector<8x32xf32>
    %c40 = arith.constant 40 : index
    %c0_38 = arith.constant 0 : index
    %c0_39 = arith.constant 0 : index
    %112 = vector.load %arg3[%c40, %c0_38, %c0_39] : memref<48x1x32xf32, #tpu.memory_space<vmem>>, vector<1x1x32xf32>
    %113 = vector.shape_cast %112 : vector<1x1x32xf32> to vector<1x32xf32>
    %114 = vector.broadcast %113 : vector<1x32xf32> to vector<8x32xf32>
    %115 = arith.mulf %111, %114 : vector<8x32xf32>
    %116 = arith.subf %109, %115 : vector<8x32xf32>
    %c9 = arith.constant 9 : index
    %c0_40 = arith.constant 0 : index
    %c0_41 = arith.constant 0 : index
    %117 = vector.load %arg3[%c9, %c0_40, %c0_41] : memref<48x1x32xf32, #tpu.memory_space<vmem>>, vector<1x1x32xf32>
    %118 = vector.shape_cast %117 : vector<1x1x32xf32> to vector<1x32xf32>
    %119 = vector.shape_cast %118 : vector<1x32xf32> to vector<1x32xf32>
    %120 = vector.broadcast %119 : vector<1x32xf32> to vector<8x32xf32>
    %121 = vector.broadcast %7 : f32 to vector<8x32xf32>
    %122 = arith.mulf %121, %17 : vector<8x32xf32>
    %c41 = arith.constant 41 : index
    %c0_42 = arith.constant 0 : index
    %c0_43 = arith.constant 0 : index
    %123 = vector.load %arg3[%c41, %c0_42, %c0_43] : memref<48x1x32xf32, #tpu.memory_space<vmem>>, vector<1x1x32xf32>
    %124 = vector.shape_cast %123 : vector<1x1x32xf32> to vector<1x32xf32>
    %125 = vector.broadcast %124 : vector<1x32xf32> to vector<8x32xf32>
    %126 = arith.mulf %122, %125 : vector<8x32xf32>
    %127 = arith.subf %120, %126 : vector<8x32xf32>
    %c10 = arith.constant 10 : index
    %c0_44 = arith.constant 0 : index
    %c0_45 = arith.constant 0 : index
    %128 = vector.load %arg3[%c10, %c0_44, %c0_45] : memref<48x1x32xf32, #tpu.memory_space<vmem>>, vector<1x1x32xf32>
    %129 = vector.shape_cast %128 : vector<1x1x32xf32> to vector<1x32xf32>
    %130 = vector.shape_cast %129 : vector<1x32xf32> to vector<1x32xf32>
    %131 = vector.broadcast %130 : vector<1x32xf32> to vector<8x32xf32>
    %132 = vector.broadcast %7 : f32 to vector<8x32xf32>
    %133 = arith.mulf %132, %17 : vector<8x32xf32>
    %c42 = arith.constant 42 : index
    %c0_46 = arith.constant 0 : index
    %c0_47 = arith.constant 0 : index
    %134 = vector.load %arg3[%c42, %c0_46, %c0_47] : memref<48x1x32xf32, #tpu.memory_space<vmem>>, vector<1x1x32xf32>
    %135 = vector.shape_cast %134 : vector<1x1x32xf32> to vector<1x32xf32>
    %136 = vector.broadcast %135 : vector<1x32xf32> to vector<8x32xf32>
    %137 = arith.mulf %133, %136 : vector<8x32xf32>
    %138 = arith.subf %131, %137 : vector<8x32xf32>
    %c11 = arith.constant 11 : index
    %c0_48 = arith.constant 0 : index
    %c0_49 = arith.constant 0 : index
    %139 = vector.load %arg3[%c11, %c0_48, %c0_49] : memref<48x1x32xf32, #tpu.memory_space<vmem>>, vector<1x1x32xf32>
    %140 = vector.shape_cast %139 : vector<1x1x32xf32> to vector<1x32xf32>
    %141 = vector.shape_cast %140 : vector<1x32xf32> to vector<1x32xf32>
    %142 = vector.broadcast %141 : vector<1x32xf32> to vector<8x32xf32>
    %143 = vector.broadcast %7 : f32 to vector<8x32xf32>
    %144 = arith.mulf %143, %17 : vector<8x32xf32>
    %c43 = arith.constant 43 : index
    %c0_50 = arith.constant 0 : index
    %c0_51 = arith.constant 0 : index
    %145 = vector.load %arg3[%c43, %c0_50, %c0_51] : memref<48x1x32xf32, #tpu.memory_space<vmem>>, vector<1x1x32xf32>
    %146 = vector.shape_cast %145 : vector<1x1x32xf32> to vector<1x32xf32>
    %147 = vector.broadcast %146 : vector<1x32xf32> to vector<8x32xf32>
    %148 = arith.mulf %144, %147 : vector<8x32xf32>
    %149 = arith.subf %142, %148 : vector<8x32xf32>
    %c12 = arith.constant 12 : index
    %c0_52 = arith.constant 0 : index
    %c0_53 = arith.constant 0 : index
    %150 = vector.load %arg3[%c12, %c0_52, %c0_53] : memref<48x1x32xf32, #tpu.memory_space<vmem>>, vector<1x1x32xf32>
    %151 = vector.shape_cast %150 : vector<1x1x32xf32> to vector<1x32xf32>
    %152 = vector.shape_cast %151 : vector<1x32xf32> to vector<1x32xf32>
    %153 = vector.broadcast %152 : vector<1x32xf32> to vector<8x32xf32>
    %154 = vector.broadcast %7 : f32 to vector<8x32xf32>
    %155 = arith.mulf %154, %17 : vector<8x32xf32>
    %c44 = arith.constant 44 : index
    %c0_54 = arith.constant 0 : index
    %c0_55 = arith.constant 0 : index
    %156 = vector.load %arg3[%c44, %c0_54, %c0_55] : memref<48x1x32xf32, #tpu.memory_space<vmem>>, vector<1x1x32xf32>
    %157 = vector.shape_cast %156 : vector<1x1x32xf32> to vector<1x32xf32>
    %158 = vector.broadcast %157 : vector<1x32xf32> to vector<8x32xf32>
    %159 = arith.mulf %155, %158 : vector<8x32xf32>
    %160 = arith.subf %153, %159 : vector<8x32xf32>
    %c13 = arith.constant 13 : index
    %c0_56 = arith.constant 0 : index
    %c0_57 = arith.constant 0 : index
    %161 = vector.load %arg3[%c13, %c0_56, %c0_57] : memref<48x1x32xf32, #tpu.memory_space<vmem>>, vector<1x1x32xf32>
    %162 = vector.shape_cast %161 : vector<1x1x32xf32> to vector<1x32xf32>
    %163 = vector.shape_cast %162 : vector<1x32xf32> to vector<1x32xf32>
    %164 = vector.broadcast %163 : vector<1x32xf32> to vector<8x32xf32>
    %165 = vector.broadcast %7 : f32 to vector<8x32xf32>
    %166 = arith.mulf %165, %17 : vector<8x32xf32>
    %c45 = arith.constant 45 : index
    %c0_58 = arith.constant 0 : index
    %c0_59 = arith.constant 0 : index
    %167 = vector.load %arg3[%c45, %c0_58, %c0_59] : memref<48x1x32xf32, #tpu.memory_space<vmem>>, vector<1x1x32xf32>
    %168 = vector.shape_cast %167 : vector<1x1x32xf32> to vector<1x32xf32>
    %169 = vector.broadcast %168 : vector<1x32xf32> to vector<8x32xf32>
    %170 = arith.mulf %166, %169 : vector<8x32xf32>
    %171 = arith.subf %164, %170 : vector<8x32xf32>
    %c14 = arith.constant 14 : index
    %c0_60 = arith.constant 0 : index
    %c0_61 = arith.constant 0 : index
    %172 = vector.load %arg3[%c14, %c0_60, %c0_61] : memref<48x1x32xf32, #tpu.memory_space<vmem>>, vector<1x1x32xf32>
    %173 = vector.shape_cast %172 : vector<1x1x32xf32> to vector<1x32xf32>
    %174 = vector.shape_cast %173 : vector<1x32xf32> to vector<1x32xf32>
    %175 = vector.broadcast %174 : vector<1x32xf32> to vector<8x32xf32>
    %176 = vector.broadcast %7 : f32 to vector<8x32xf32>
    %177 = arith.mulf %176, %17 : vector<8x32xf32>
    %c46 = arith.constant 46 : index
    %c0_62 = arith.constant 0 : index
    %c0_63 = arith.constant 0 : index
    %178 = vector.load %arg3[%c46, %c0_62, %c0_63] : memref<48x1x32xf32, #tpu.memory_space<vmem>>, vector<1x1x32xf32>
    %179 = vector.shape_cast %178 : vector<1x1x32xf32> to vector<1x32xf32>
    %180 = vector.broadcast %179 : vector<1x32xf32> to vector<8x32xf32>
    %181 = arith.mulf %177, %180 : vector<8x32xf32>
    %182 = arith.subf %175, %181 : vector<8x32xf32>
    %c15 = arith.constant 15 : index
    %c0_64 = arith.constant 0 : index
    %c0_65 = arith.constant 0 : index
    %183 = vector.load %arg3[%c15, %c0_64, %c0_65] : memref<48x1x32xf32, #tpu.memory_space<vmem>>, vector<1x1x32xf32>
    %184 = vector.shape_cast %183 : vector<1x1x32xf32> to vector<1x32xf32>
    %185 = vector.shape_cast %184 : vector<1x32xf32> to vector<1x32xf32>
    %186 = vector.broadcast %185 : vector<1x32xf32> to vector<8x32xf32>
    %187 = vector.broadcast %7 : f32 to vector<8x32xf32>
    %188 = arith.mulf %187, %17 : vector<8x32xf32>
    %c47 = arith.constant 47 : index
    %c0_66 = arith.constant 0 : index
    %c0_67 = arith.constant 0 : index
    %189 = vector.load %arg3[%c47, %c0_66, %c0_67] : memref<48x1x32xf32, #tpu.memory_space<vmem>>, vector<1x1x32xf32>
    %190 = vector.shape_cast %189 : vector<1x1x32xf32> to vector<1x32xf32>
    %191 = vector.broadcast %190 : vector<1x32xf32> to vector<8x32xf32>
    %192 = arith.mulf %188, %191 : vector<8x32xf32>
    %193 = arith.subf %186, %192 : vector<8x32xf32>
    %c0_68 = arith.constant 0 : index
    %c0_69 = arith.constant 0 : index
    %c7_70 = arith.constant 7 : index
    %c0_71 = arith.constant 0 : index
    %194 = vector.load %arg7[%c0_68, %c0_69, %c7_70, %c0_71] : memref<1x4x8x16xf32, #tpu.memory_space<vmem>>, vector<1x1x1x16xf32>
    %195 = vector.shape_cast %194 : vector<1x1x1x16xf32> to vector<1x16xf32>
    %196 = vector.broadcast %2 : f32 to vector<1x16xf32>
    %197 = arith.mulf %196, %195 : vector<1x16xf32>
    %c0_72 = arith.constant 0 : index
    %c0_73 = arith.constant 0 : index
    %c0_74 = arith.constant 0 : index
    %c0_75 = arith.constant 0 : index
    %198 = vector.load %arg8[%c0_72, %c0_73, %c0_74, %c0_75] : memref<1x4x8x16xf32, #tpu.memory_space<vmem>>, vector<1x1x1x16xf32>
    %199 = vector.shape_cast %198 : vector<1x1x1x16xf32> to vector<1x16xf32>
    %200 = vector.broadcast %5 : f32 to vector<1x16xf32>
    %201 = arith.mulf %200, %199 : vector<1x16xf32>
    %c0_76 = arith.constant 0 : index
    %c0_77 = arith.constant 0 : index
    %c0_78 = arith.constant 0 : index
    %c0_79 = arith.constant 0 : index
    %202 = vector.load %arg6[%c0_76, %c0_77, %c0_78, %c0_79] : memref<1x4x8x16xf32, #tpu.memory_space<vmem>>, vector<1x1x8x16xf32>
    %203 = vector.shape_cast %202 : vector<1x1x8x16xf32> to vector<8x16xf32>
    %204 = tpu.concatenate %197, %203, %201 in 0 : vector<1x16xf32>, vector<8x16xf32>, vector<1x16xf32> -> vector<10x16xf32>
    %cst_80 = arith.constant dense<0.000000e+00> : vector<10x36xf32>
    %205 = tpu.matmul %204, %8, %cst_80 {dimension_numbers = #tpu.dot_dimension_numbers<[1], [0], [0], [1], [0, 0, 1, 1], [], []>} : vector<10x16xf32>, vector<16x36xf32>, vector<10x36xf32> -> vector<10x36xf32>
    %206 = vector.extract_strided_slice %205 {offsets = [0, 0], sizes = [8, 32], strides = [1, 1]} : vector<10x36xf32> to vector<8x32xf32>
    %c0_81 = arith.constant 0 : index
    %c0_82 = arith.constant 0 : index
    %c0_83 = arith.constant 0 : index
    %207 = vector.load %arg2[%c0_81, %c0_82, %c0_83] : memref<576x1x32xf32, #tpu.memory_space<vmem>>, vector<1x1x32xf32>
    %208 = vector.shape_cast %207 : vector<1x1x32xf32> to vector<1x32xf32>
    %209 = vector.broadcast %208 : vector<1x32xf32> to vector<8x32xf32>
    %210 = arith.mulf %209, %206 : vector<8x32xf32>
    %211 = arith.addf %28, %210 : vector<8x32xf32>
    %c36 = arith.constant 36 : index
    %c0_84 = arith.constant 0 : index
    %c0_85 = arith.constant 0 : index
    %212 = vector.load %arg2[%c36, %c0_84, %c0_85] : memref<576x1x32xf32, #tpu.memory_space<vmem>>, vector<1x1x32xf32>
    %213 = vector.shape_cast %212 : vector<1x1x32xf32> to vector<1x32xf32>
    %214 = vector.broadcast %213 : vector<1x32xf32> to vector<8x32xf32>
    %215 = arith.mulf %214, %206 : vector<8x32xf32>
    %216 = arith.addf %39, %215 : vector<8x32xf32>
    %c72 = arith.constant 72 : index
    %c0_86 = arith.constant 0 : index
    %c0_87 = arith.constant 0 : index
    %217 = vector.load %arg2[%c72, %c0_86, %c0_87] : memref<576x1x32xf32, #tpu.memory_space<vmem>>, vector<1x1x32xf32>
    %218 = vector.shape_cast %217 : vector<1x1x32xf32> to vector<1x32xf32>
    %219 = vector.broadcast %218 : vector<1x32xf32> to vector<8x32xf32>
    %220 = arith.mulf %219, %206 : vector<8x32xf32>
    %221 = arith.addf %50, %220 : vector<8x32xf32>
    %c108 = arith.constant 108 : index
    %c0_88 = arith.constant 0 : index
    %c0_89 = arith.constant 0 : index
    %222 = vector.load %arg2[%c108, %c0_88, %c0_89] : memref<576x1x32xf32, #tpu.memory_space<vmem>>, vector<1x1x32xf32>
    %223 = vector.shape_cast %222 : vector<1x1x32xf32> to vector<1x32xf32>
    %224 = vector.broadcast %223 : vector<1x32xf32> to vector<8x32xf32>
    %225 = arith.mulf %224, %206 : vector<8x32xf32>
    %226 = arith.addf %61, %225 : vector<8x32xf32>
    %c144 = arith.constant 144 : index
    %c0_90 = arith.constant 0 : index
    %c0_91 = arith.constant 0 : index
    %227 = vector.load %arg2[%c144, %c0_90, %c0_91] : memref<576x1x32xf32, #tpu.memory_space<vmem>>, vector<1x1x32xf32>
    %228 = vector.shape_cast %227 : vector<1x1x32xf32> to vector<1x32xf32>
    %229 = vector.broadcast %228 : vector<1x32xf32> to vector<8x32xf32>
    %230 = arith.mulf %229, %206 : vector<8x32xf32>
    %231 = arith.addf %72, %230 : vector<8x32xf32>
    %c180 = arith.constant 180 : index
    %c0_92 = arith.constant 0 : index
    %c0_93 = arith.constant 0 : index
    %232 = vector.load %arg2[%c180, %c0_92, %c0_93] : memref<576x1x32xf32, #tpu.memory_space<vmem>>, vector<1x1x32xf32>
    %233 = vector.shape_cast %232 : vector<1x1x32xf32> to vector<1x32xf32>
    %234 = vector.broadcast %233 : vector<1x32xf32> to vector<8x32xf32>
    %235 = arith.mulf %234, %206 : vector<8x32xf32>
    %236 = arith.addf %83, %235 : vector<8x32xf32>
    %c216 = arith.constant 216 : index
    %c0_94 = arith.constant 0 : index
    %c0_95 = arith.constant 0 : index
    %237 = vector.load %arg2[%c216, %c0_94, %c0_95] : memref<576x1x32xf32, #tpu.memory_space<vmem>>, vector<1x1x32xf32>
    %238 = vector.shape_cast %237 : vector<1x1x32xf32> to vector<1x32xf32>
    %239 = vector.broadcast %238 : vector<1x32xf32> to vector<8x32xf32>
    %240 = arith.mulf %239, %206 : vector<8x32xf32>
    %241 = arith.addf %94, %240 : vector<8x32xf32>
    %c252 = arith.constant 252 : index
    %c0_96 = arith.constant 0 : index
    %c0_97 = arith.constant 0 : index
    %242 = vector.load %arg2[%c252, %c0_96, %c0_97] : memref<576x1x32xf32, #tpu.memory_space<vmem>>, vector<1x1x32xf32>
    %243 = vector.shape_cast %242 : vector<1x1x32xf32> to vector<1x32xf32>
    %244 = vector.broadcast %243 : vector<1x32xf32> to vector<8x32xf32>
    %245 = arith.mulf %244, %206 : vector<8x32xf32>
    %246 = arith.addf %105, %245 : vector<8x32xf32>
    %247 = vector.extract_strided_slice %205 {offsets = [0, 2], sizes = [8, 32], strides = [1, 1]} : vector<10x36xf32> to vector<8x32xf32>
    %c1_98 = arith.constant 1 : index
    %c0_99 = arith.constant 0 : index
    %c0_100 = arith.constant 0 : index
    %248 = vector.load %arg2[%c1_98, %c0_99, %c0_100] : memref<576x1x32xf32, #tpu.memory_space<vmem>>, vector<1x1x32xf32>
    %249 = vector.shape_cast %248 : vector<1x1x32xf32> to vector<1x32xf32>
    %250 = vector.broadcast %249 : vector<1x32xf32> to vector<8x32xf32>
    %251 = arith.mulf %250, %247 : vector<8x32xf32>
    %252 = arith.addf %211, %251 : vector<8x32xf32>
    %c37 = arith.constant 37 : index
    %c0_101 = arith.constant 0 : index
    %c0_102 = arith.constant 0 : index
    %253 = vector.load %arg2[%c37, %c0_101, %c0_102] : memref<576x1x32xf32, #tpu.memory_space<vmem>>, vector<1x1x32xf32>
    %254 = vector.shape_cast %253 : vector<1x1x32xf32> to vector<1x32xf32>
    %255 = vector.broadcast %254 : vector<1x32xf32> to vector<8x32xf32>
    %256 = arith.mulf %255, %247 : vector<8x32xf32>
    %257 = arith.addf %216, %256 : vector<8x32xf32>
    %c73 = arith.constant 73 : index
    %c0_103 = arith.constant 0 : index
    %c0_104 = arith.constant 0 : index
    %258 = vector.load %arg2[%c73, %c0_103, %c0_104] : memref<576x1x32xf32, #tpu.memory_space<vmem>>, vector<1x1x32xf32>
    %259 = vector.shape_cast %258 : vector<1x1x32xf32> to vector<1x32xf32>
    %260 = vector.broadcast %259 : vector<1x32xf32> to vector<8x32xf32>
    %261 = arith.mulf %260, %247 : vector<8x32xf32>
    %262 = arith.addf %221, %261 : vector<8x32xf32>
    %c109 = arith.constant 109 : index
    %c0_105 = arith.constant 0 : index
    %c0_106 = arith.constant 0 : index
    %263 = vector.load %arg2[%c109, %c0_105, %c0_106] : memref<576x1x32xf32, #tpu.memory_space<vmem>>, vector<1x1x32xf32>
    %264 = vector.shape_cast %263 : vector<1x1x32xf32> to vector<1x32xf32>
    %265 = vector.broadcast %264 : vector<1x32xf32> to vector<8x32xf32>
    %266 = arith.mulf %265, %247 : vector<8x32xf32>
    %267 = arith.addf %226, %266 : vector<8x32xf32>
    %c145 = arith.constant 145 : index
    %c0_107 = arith.constant 0 : index
    %c0_108 = arith.constant 0 : index
    %268 = vector.load %arg2[%c145, %c0_107, %c0_108] : memref<576x1x32xf32, #tpu.memory_space<vmem>>, vector<1x1x32xf32>
    %269 = vector.shape_cast %268 : vector<1x1x32xf32> to vector<1x32xf32>
    %270 = vector.broadcast %269 : vector<1x32xf32> to vector<8x32xf32>
    %271 = arith.mulf %270, %247 : vector<8x32xf32>
    %272 = arith.addf %231, %271 : vector<8x32xf32>
    %c181 = arith.constant 181 : index
    %c0_109 = arith.constant 0 : index
    %c0_110 = arith.constant 0 : index
    %273 = vector.load %arg2[%c181, %c0_109, %c0_110] : memref<576x1x32xf32, #tpu.memory_space<vmem>>, vector<1x1x32xf32>
    %274 = vector.shape_cast %273 : vector<1x1x32xf32> to vector<1x32xf32>
    %275 = vector.broadcast %274 : vector<1x32xf32> to vector<8x32xf32>
    %276 = arith.mulf %275, %247 : vector<8x32xf32>
    %277 = arith.addf %236, %276 : vector<8x32xf32>
    %c217 = arith.constant 217 : index
    %c0_111 = arith.constant 0 : index
    %c0_112 = arith.constant 0 : index
    %278 = vector.load %arg2[%c217, %c0_111, %c0_112] : memref<576x1x32xf32, #tpu.memory_space<vmem>>, vector<1x1x32xf32>
    %279 = vector.shape_cast %278 : vector<1x1x32xf32> to vector<1x32xf32>
    %280 = vector.broadcast %279 : vector<1x32xf32> to vector<8x32xf32>
    %281 = arith.mulf %280, %247 : vector<8x32xf32>
    %282 = arith.addf %241, %281 : vector<8x32xf32>
    %c253 = arith.constant 253 : index
    %c0_113 = arith.constant 0 : index
    %c0_114 = arith.constant 0 : index
    %283 = vector.load %arg2[%c253, %c0_113, %c0_114] : memref<576x1x32xf32, #tpu.memory_space<vmem>>, vector<1x1x32xf32>
    %284 = vector.shape_cast %283 : vector<1x1x32xf32> to vector<1x32xf32>
    %285 = vector.broadcast %284 : vector<1x32xf32> to vector<8x32xf32>
    %286 = arith.mulf %285, %247 : vector<8x32xf32>
    %287 = arith.addf %246, %286 : vector<8x32xf32>
    %288 = vector.extract_strided_slice %205 {offsets = [0, 4], sizes = [8, 32], strides = [1, 1]} : vector<10x36xf32> to vector<8x32xf32>
    %c2_115 = arith.constant 2 : index
    %c0_116 = arith.constant 0 : index
    %c0_117 = arith.constant 0 : index
    %289 = vector.load %arg2[%c2_115, %c0_116, %c0_117] : memref<576x1x32xf32, #tpu.memory_space<vmem>>, vector<1x1x32xf32>
    %290 = vector.shape_cast %289 : vector<1x1x32xf32> to vector<1x32xf32>
    %291 = vector.broadcast %290 : vector<1x32xf32> to vector<8x32xf32>
    %292 = arith.mulf %291, %288 : vector<8x32xf32>
    %293 = arith.addf %252, %292 : vector<8x32xf32>
    %c38 = arith.constant 38 : index
    %c0_118 = arith.constant 0 : index
    %c0_119 = arith.constant 0 : index
    %294 = vector.load %arg2[%c38, %c0_118, %c0_119] : memref<576x1x32xf32, #tpu.memory_space<vmem>>, vector<1x1x32xf32>
    %295 = vector.shape_cast %294 : vector<1x1x32xf32> to vector<1x32xf32>
    %296 = vector.broadcast %295 : vector<1x32xf32> to vector<8x32xf32>
    %297 = arith.mulf %296, %288 : vector<8x32xf32>
    %298 = arith.addf %257, %297 : vector<8x32xf32>
    %c74 = arith.constant 74 : index
    %c0_120 = arith.constant 0 : index
    %c0_121 = arith.constant 0 : index
    %299 = vector.load %arg2[%c74, %c0_120, %c0_121] : memref<576x1x32xf32, #tpu.memory_space<vmem>>, vector<1x1x32xf32>
    %300 = vector.shape_cast %299 : vector<1x1x32xf32> to vector<1x32xf32>
    %301 = vector.broadcast %300 : vector<1x32xf32> to vector<8x32xf32>
    %302 = arith.mulf %301, %288 : vector<8x32xf32>
    %303 = arith.addf %262, %302 : vector<8x32xf32>
    %c110 = arith.constant 110 : index
    %c0_122 = arith.constant 0 : index
    %c0_123 = arith.constant 0 : index
    %304 = vector.load %arg2[%c110, %c0_122, %c0_123] : memref<576x1x32xf32, #tpu.memory_space<vmem>>, vector<1x1x32xf32>
    %305 = vector.shape_cast %304 : vector<1x1x32xf32> to vector<1x32xf32>
    %306 = vector.broadcast %305 : vector<1x32xf32> to vector<8x32xf32>
    %307 = arith.mulf %306, %288 : vector<8x32xf32>
    %308 = arith.addf %267, %307 : vector<8x32xf32>
    %c146 = arith.constant 146 : index
    %c0_124 = arith.constant 0 : index
    %c0_125 = arith.constant 0 : index
    %309 = vector.load %arg2[%c146, %c0_124, %c0_125] : memref<576x1x32xf32, #tpu.memory_space<vmem>>, vector<1x1x32xf32>
    %310 = vector.shape_cast %309 : vector<1x1x32xf32> to vector<1x32xf32>
    %311 = vector.broadcast %310 : vector<1x32xf32> to vector<8x32xf32>
    %312 = arith.mulf %311, %288 : vector<8x32xf32>
    %313 = arith.addf %272, %312 : vector<8x32xf32>
    %c182 = arith.constant 182 : index
    %c0_126 = arith.constant 0 : index
    %c0_127 = arith.constant 0 : index
    %314 = vector.load %arg2[%c182, %c0_126, %c0_127] : memref<576x1x32xf32, #tpu.memory_space<vmem>>, vector<1x1x32xf32>
    %315 = vector.shape_cast %314 : vector<1x1x32xf32> to vector<1x32xf32>
    %316 = vector.broadcast %315 : vector<1x32xf32> to vector<8x32xf32>
    %317 = arith.mulf %316, %288 : vector<8x32xf32>
    %318 = arith.addf %277, %317 : vector<8x32xf32>
    %c218 = arith.constant 218 : index
    %c0_128 = arith.constant 0 : index
    %c0_129 = arith.constant 0 : index
    %319 = vector.load %arg2[%c218, %c0_128, %c0_129] : memref<576x1x32xf32, #tpu.memory_space<vmem>>, vector<1x1x32xf32>
    %320 = vector.shape_cast %319 : vector<1x1x32xf32> to vector<1x32xf32>
    %321 = vector.broadcast %320 : vector<1x32xf32> to vector<8x32xf32>
    %322 = arith.mulf %321, %288 : vector<8x32xf32>
    %323 = arith.addf %282, %322 : vector<8x32xf32>
    %c254 = arith.constant 254 : index
    %c0_130 = arith.constant 0 : index
    %c0_131 = arith.constant 0 : index
    %324 = vector.load %arg2[%c254, %c0_130, %c0_131] : memref<576x1x32xf32, #tpu.memory_space<vmem>>, vector<1x1x32xf32>
    %325 = vector.shape_cast %324 : vector<1x1x32xf32> to vector<1x32xf32>
    %326 = vector.broadcast %325 : vector<1x32xf32> to vector<8x32xf32>
    %327 = arith.mulf %326, %288 : vector<8x32xf32>
    %328 = arith.addf %287, %327 : vector<8x32xf32>
    %329 = vector.extract_strided_slice %205 {offsets = [1, 0], sizes = [8, 32], strides = [1, 1]} : vector<10x36xf32> to vector<8x32xf32>
    %c3_132 = arith.constant 3 : index
    %c0_133 = arith.constant 0 : index
    %c0_134 = arith.constant 0 : index
    %330 = vector.load %arg2[%c3_132, %c0_133, %c0_134] : memref<576x1x32xf32, #tpu.memory_space<vmem>>, vector<1x1x32xf32>
    %331 = vector.shape_cast %330 : vector<1x1x32xf32> to vector<1x32xf32>
    %332 = vector.broadcast %331 : vector<1x32xf32> to vector<8x32xf32>
    %333 = arith.mulf %332, %329 : vector<8x32xf32>
    %334 = arith.addf %293, %333 : vector<8x32xf32>
    %c39 = arith.constant 39 : index
    %c0_135 = arith.constant 0 : index
    %c0_136 = arith.constant 0 : index
    %335 = vector.load %arg2[%c39, %c0_135, %c0_136] : memref<576x1x32xf32, #tpu.memory_space<vmem>>, vector<1x1x32xf32>
    %336 = vector.shape_cast %335 : vector<1x1x32xf32> to vector<1x32xf32>
    %337 = vector.broadcast %336 : vector<1x32xf32> to vector<8x32xf32>
    %338 = arith.mulf %337, %329 : vector<8x32xf32>
    %339 = arith.addf %298, %338 : vector<8x32xf32>
    %c75 = arith.constant 75 : index
    %c0_137 = arith.constant 0 : index
    %c0_138 = arith.constant 0 : index
    %340 = vector.load %arg2[%c75, %c0_137, %c0_138] : memref<576x1x32xf32, #tpu.memory_space<vmem>>, vector<1x1x32xf32>
    %341 = vector.shape_cast %340 : vector<1x1x32xf32> to vector<1x32xf32>
    %342 = vector.broadcast %341 : vector<1x32xf32> to vector<8x32xf32>
    %343 = arith.mulf %342, %329 : vector<8x32xf32>
    %344 = arith.addf %303, %343 : vector<8x32xf32>
    %c111 = arith.constant 111 : index
    %c0_139 = arith.constant 0 : index
    %c0_140 = arith.constant 0 : index
    %345 = vector.load %arg2[%c111, %c0_139, %c0_140] : memref<576x1x32xf32, #tpu.memory_space<vmem>>, vector<1x1x32xf32>
    %346 = vector.shape_cast %345 : vector<1x1x32xf32> to vector<1x32xf32>
    %347 = vector.broadcast %346 : vector<1x32xf32> to vector<8x32xf32>
    %348 = arith.mulf %347, %329 : vector<8x32xf32>
    %349 = arith.addf %308, %348 : vector<8x32xf32>
    %c147 = arith.constant 147 : index
    %c0_141 = arith.constant 0 : index
    %c0_142 = arith.constant 0 : index
    %350 = vector.load %arg2[%c147, %c0_141, %c0_142] : memref<576x1x32xf32, #tpu.memory_space<vmem>>, vector<1x1x32xf32>
    %351 = vector.shape_cast %350 : vector<1x1x32xf32> to vector<1x32xf32>
    %352 = vector.broadcast %351 : vector<1x32xf32> to vector<8x32xf32>
    %353 = arith.mulf %352, %329 : vector<8x32xf32>
    %354 = arith.addf %313, %353 : vector<8x32xf32>
    %c183 = arith.constant 183 : index
    %c0_143 = arith.constant 0 : index
    %c0_144 = arith.constant 0 : index
    %355 = vector.load %arg2[%c183, %c0_143, %c0_144] : memref<576x1x32xf32, #tpu.memory_space<vmem>>, vector<1x1x32xf32>
    %356 = vector.shape_cast %355 : vector<1x1x32xf32> to vector<1x32xf32>
    %357 = vector.broadcast %356 : vector<1x32xf32> to vector<8x32xf32>
    %358 = arith.mulf %357, %329 : vector<8x32xf32>
    %359 = arith.addf %318, %358 : vector<8x32xf32>
    %c219 = arith.constant 219 : index
    %c0_145 = arith.constant 0 : index
    %c0_146 = arith.constant 0 : index
    %360 = vector.load %arg2[%c219, %c0_145, %c0_146] : memref<576x1x32xf32, #tpu.memory_space<vmem>>, vector<1x1x32xf32>
    %361 = vector.shape_cast %360 : vector<1x1x32xf32> to vector<1x32xf32>
    %362 = vector.broadcast %361 : vector<1x32xf32> to vector<8x32xf32>
    %363 = arith.mulf %362, %329 : vector<8x32xf32>
    %364 = arith.addf %323, %363 : vector<8x32xf32>
    %c255 = arith.constant 255 : index
    %c0_147 = arith.constant 0 : index
    %c0_148 = arith.constant 0 : index
    %365 = vector.load %arg2[%c255, %c0_147, %c0_148] : memref<576x1x32xf32, #tpu.memory_space<vmem>>, vector<1x1x32xf32>
    %366 = vector.shape_cast %365 : vector<1x1x32xf32> to vector<1x32xf32>
    %367 = vector.broadcast %366 : vector<1x32xf32> to vector<8x32xf32>
    %368 = arith.mulf %367, %329 : vector<8x32xf32>
    %369 = arith.addf %328, %368 : vector<8x32xf32>
    %c291 = arith.constant 291 : index
    %c0_149 = arith.constant 0 : index
    %c0_150 = arith.constant 0 : index
    %370 = vector.load %arg2[%c291, %c0_149, %c0_150] : memref<576x1x32xf32, #tpu.memory_space<vmem>>, vector<1x1x32xf32>
    %371 = vector.shape_cast %370 : vector<1x1x32xf32> to vector<1x32xf32>
    %372 = vector.broadcast %371 : vector<1x32xf32> to vector<8x32xf32>
    %373 = arith.mulf %372, %329 : vector<8x32xf32>
    %374 = arith.addf %116, %373 : vector<8x32xf32>
    %c327 = arith.constant 327 : index
    %c0_151 = arith.constant 0 : index
    %c0_152 = arith.constant 0 : index
    %375 = vector.load %arg2[%c327, %c0_151, %c0_152] : memref<576x1x32xf32, #tpu.memory_space<vmem>>, vector<1x1x32xf32>
    %376 = vector.shape_cast %375 : vector<1x1x32xf32> to vector<1x32xf32>
    %377 = vector.broadcast %376 : vector<1x32xf32> to vector<8x32xf32>
    %378 = arith.mulf %377, %329 : vector<8x32xf32>
    %379 = arith.addf %127, %378 : vector<8x32xf32>
    %c363 = arith.constant 363 : index
    %c0_153 = arith.constant 0 : index
    %c0_154 = arith.constant 0 : index
    %380 = vector.load %arg2[%c363, %c0_153, %c0_154] : memref<576x1x32xf32, #tpu.memory_space<vmem>>, vector<1x1x32xf32>
    %381 = vector.shape_cast %380 : vector<1x1x32xf32> to vector<1x32xf32>
    %382 = vector.broadcast %381 : vector<1x32xf32> to vector<8x32xf32>
    %383 = arith.mulf %382, %329 : vector<8x32xf32>
    %384 = arith.addf %138, %383 : vector<8x32xf32>
    %c399 = arith.constant 399 : index
    %c0_155 = arith.constant 0 : index
    %c0_156 = arith.constant 0 : index
    %385 = vector.load %arg2[%c399, %c0_155, %c0_156] : memref<576x1x32xf32, #tpu.memory_space<vmem>>, vector<1x1x32xf32>
    %386 = vector.shape_cast %385 : vector<1x1x32xf32> to vector<1x32xf32>
    %387 = vector.broadcast %386 : vector<1x32xf32> to vector<8x32xf32>
    %388 = arith.mulf %387, %329 : vector<8x32xf32>
    %389 = arith.addf %149, %388 : vector<8x32xf32>
    %c435 = arith.constant 435 : index
    %c0_157 = arith.constant 0 : index
    %c0_158 = arith.constant 0 : index
    %390 = vector.load %arg2[%c435, %c0_157, %c0_158] : memref<576x1x32xf32, #tpu.memory_space<vmem>>, vector<1x1x32xf32>
    %391 = vector.shape_cast %390 : vector<1x1x32xf32> to vector<1x32xf32>
    %392 = vector.broadcast %391 : vector<1x32xf32> to vector<8x32xf32>
    %393 = arith.mulf %392, %329 : vector<8x32xf32>
    %394 = arith.addf %160, %393 : vector<8x32xf32>
    %c471 = arith.constant 471 : index
    %c0_159 = arith.constant 0 : index
    %c0_160 = arith.constant 0 : index
    %395 = vector.load %arg2[%c471, %c0_159, %c0_160] : memref<576x1x32xf32, #tpu.memory_space<vmem>>, vector<1x1x32xf32>
    %396 = vector.shape_cast %395 : vector<1x1x32xf32> to vector<1x32xf32>
    %397 = vector.broadcast %396 : vector<1x32xf32> to vector<8x32xf32>
    %398 = arith.mulf %397, %329 : vector<8x32xf32>
    %399 = arith.addf %171, %398 : vector<8x32xf32>
    %c507 = arith.constant 507 : index
    %c0_161 = arith.constant 0 : index
    %c0_162 = arith.constant 0 : index
    %400 = vector.load %arg2[%c507, %c0_161, %c0_162] : memref<576x1x32xf32, #tpu.memory_space<vmem>>, vector<1x1x32xf32>
    %401 = vector.shape_cast %400 : vector<1x1x32xf32> to vector<1x32xf32>
    %402 = vector.broadcast %401 : vector<1x32xf32> to vector<8x32xf32>
    %403 = arith.mulf %402, %329 : vector<8x32xf32>
    %404 = arith.addf %182, %403 : vector<8x32xf32>
    %c543 = arith.constant 543 : index
    %c0_163 = arith.constant 0 : index
    %c0_164 = arith.constant 0 : index
    %405 = vector.load %arg2[%c543, %c0_163, %c0_164] : memref<576x1x32xf32, #tpu.memory_space<vmem>>, vector<1x1x32xf32>
    %406 = vector.shape_cast %405 : vector<1x1x32xf32> to vector<1x32xf32>
    %407 = vector.broadcast %406 : vector<1x32xf32> to vector<8x32xf32>
    %408 = arith.mulf %407, %329 : vector<8x32xf32>
    %409 = arith.addf %193, %408 : vector<8x32xf32>
    %410 = vector.extract_strided_slice %205 {offsets = [1, 2], sizes = [8, 32], strides = [1, 1]} : vector<10x36xf32> to vector<8x32xf32>
    %c4_165 = arith.constant 4 : index
    %c0_166 = arith.constant 0 : index
    %c0_167 = arith.constant 0 : index
    %411 = vector.load %arg2[%c4_165, %c0_166, %c0_167] : memref<576x1x32xf32, #tpu.memory_space<vmem>>, vector<1x1x32xf32>
    %412 = vector.shape_cast %411 : vector<1x1x32xf32> to vector<1x32xf32>
    %413 = vector.broadcast %412 : vector<1x32xf32> to vector<8x32xf32>
    %414 = arith.mulf %413, %410 : vector<8x32xf32>
    %415 = arith.addf %334, %414 : vector<8x32xf32>
    %c40_168 = arith.constant 40 : index
    %c0_169 = arith.constant 0 : index
    %c0_170 = arith.constant 0 : index
    %416 = vector.load %arg2[%c40_168, %c0_169, %c0_170] : memref<576x1x32xf32, #tpu.memory_space<vmem>>, vector<1x1x32xf32>
    %417 = vector.shape_cast %416 : vector<1x1x32xf32> to vector<1x32xf32>
    %418 = vector.broadcast %417 : vector<1x32xf32> to vector<8x32xf32>
    %419 = arith.mulf %418, %410 : vector<8x32xf32>
    %420 = arith.addf %339, %419 : vector<8x32xf32>
    %c76 = arith.constant 76 : index
    %c0_171 = arith.constant 0 : index
    %c0_172 = arith.constant 0 : index
    %421 = vector.load %arg2[%c76, %c0_171, %c0_172] : memref<576x1x32xf32, #tpu.memory_space<vmem>>, vector<1x1x32xf32>
    %422 = vector.shape_cast %421 : vector<1x1x32xf32> to vector<1x32xf32>
    %423 = vector.broadcast %422 : vector<1x32xf32> to vector<8x32xf32>
    %424 = arith.mulf %423, %410 : vector<8x32xf32>
    %425 = arith.addf %344, %424 : vector<8x32xf32>
    %c112 = arith.constant 112 : index
    %c0_173 = arith.constant 0 : index
    %c0_174 = arith.constant 0 : index
    %426 = vector.load %arg2[%c112, %c0_173, %c0_174] : memref<576x1x32xf32, #tpu.memory_space<vmem>>, vector<1x1x32xf32>
    %427 = vector.shape_cast %426 : vector<1x1x32xf32> to vector<1x32xf32>
    %428 = vector.broadcast %427 : vector<1x32xf32> to vector<8x32xf32>
    %429 = arith.mulf %428, %410 : vector<8x32xf32>
    %430 = arith.addf %349, %429 : vector<8x32xf32>
    %c148 = arith.constant 148 : index
    %c0_175 = arith.constant 0 : index
    %c0_176 = arith.constant 0 : index
    %431 = vector.load %arg2[%c148, %c0_175, %c0_176] : memref<576x1x32xf32, #tpu.memory_space<vmem>>, vector<1x1x32xf32>
    %432 = vector.shape_cast %431 : vector<1x1x32xf32> to vector<1x32xf32>
    %433 = vector.broadcast %432 : vector<1x32xf32> to vector<8x32xf32>
    %434 = arith.mulf %433, %410 : vector<8x32xf32>
    %435 = arith.addf %354, %434 : vector<8x32xf32>
    %c184 = arith.constant 184 : index
    %c0_177 = arith.constant 0 : index
    %c0_178 = arith.constant 0 : index
    %436 = vector.load %arg2[%c184, %c0_177, %c0_178] : memref<576x1x32xf32, #tpu.memory_space<vmem>>, vector<1x1x32xf32>
    %437 = vector.shape_cast %436 : vector<1x1x32xf32> to vector<1x32xf32>
    %438 = vector.broadcast %437 : vector<1x32xf32> to vector<8x32xf32>
    %439 = arith.mulf %438, %410 : vector<8x32xf32>
    %440 = arith.addf %359, %439 : vector<8x32xf32>
    %c220 = arith.constant 220 : index
    %c0_179 = arith.constant 0 : index
    %c0_180 = arith.constant 0 : index
    %441 = vector.load %arg2[%c220, %c0_179, %c0_180] : memref<576x1x32xf32, #tpu.memory_space<vmem>>, vector<1x1x32xf32>
    %442 = vector.shape_cast %441 : vector<1x1x32xf32> to vector<1x32xf32>
    %443 = vector.broadcast %442 : vector<1x32xf32> to vector<8x32xf32>
    %444 = arith.mulf %443, %410 : vector<8x32xf32>
    %445 = arith.addf %364, %444 : vector<8x32xf32>
    %c256 = arith.constant 256 : index
    %c0_181 = arith.constant 0 : index
    %c0_182 = arith.constant 0 : index
    %446 = vector.load %arg2[%c256, %c0_181, %c0_182] : memref<576x1x32xf32, #tpu.memory_space<vmem>>, vector<1x1x32xf32>
    %447 = vector.shape_cast %446 : vector<1x1x32xf32> to vector<1x32xf32>
    %448 = vector.broadcast %447 : vector<1x32xf32> to vector<8x32xf32>
    %449 = arith.mulf %448, %410 : vector<8x32xf32>
    %450 = arith.addf %369, %449 : vector<8x32xf32>
    %c292 = arith.constant 292 : index
    %c0_183 = arith.constant 0 : index
    %c0_184 = arith.constant 0 : index
    %451 = vector.load %arg2[%c292, %c0_183, %c0_184] : memref<576x1x32xf32, #tpu.memory_space<vmem>>, vector<1x1x32xf32>
    %452 = vector.shape_cast %451 : vector<1x1x32xf32> to vector<1x32xf32>
    %453 = vector.broadcast %452 : vector<1x32xf32> to vector<8x32xf32>
    %454 = arith.mulf %453, %410 : vector<8x32xf32>
    %455 = arith.addf %374, %454 : vector<8x32xf32>
    %c328 = arith.constant 328 : index
    %c0_185 = arith.constant 0 : index
    %c0_186 = arith.constant 0 : index
    %456 = vector.load %arg2[%c328, %c0_185, %c0_186] : memref<576x1x32xf32, #tpu.memory_space<vmem>>, vector<1x1x32xf32>
    %457 = vector.shape_cast %456 : vector<1x1x32xf32> to vector<1x32xf32>
    %458 = vector.broadcast %457 : vector<1x32xf32> to vector<8x32xf32>
    %459 = arith.mulf %458, %410 : vector<8x32xf32>
    %460 = arith.addf %379, %459 : vector<8x32xf32>
    %c364 = arith.constant 364 : index
    %c0_187 = arith.constant 0 : index
    %c0_188 = arith.constant 0 : index
    %461 = vector.load %arg2[%c364, %c0_187, %c0_188] : memref<576x1x32xf32, #tpu.memory_space<vmem>>, vector<1x1x32xf32>
    %462 = vector.shape_cast %461 : vector<1x1x32xf32> to vector<1x32xf32>
    %463 = vector.broadcast %462 : vector<1x32xf32> to vector<8x32xf32>
    %464 = arith.mulf %463, %410 : vector<8x32xf32>
    %465 = arith.addf %384, %464 : vector<8x32xf32>
    %c400 = arith.constant 400 : index
    %c0_189 = arith.constant 0 : index
    %c0_190 = arith.constant 0 : index
    %466 = vector.load %arg2[%c400, %c0_189, %c0_190] : memref<576x1x32xf32, #tpu.memory_space<vmem>>, vector<1x1x32xf32>
    %467 = vector.shape_cast %466 : vector<1x1x32xf32> to vector<1x32xf32>
    %468 = vector.broadcast %467 : vector<1x32xf32> to vector<8x32xf32>
    %469 = arith.mulf %468, %410 : vector<8x32xf32>
    %470 = arith.addf %389, %469 : vector<8x32xf32>
    %c436 = arith.constant 436 : index
    %c0_191 = arith.constant 0 : index
    %c0_192 = arith.constant 0 : index
    %471 = vector.load %arg2[%c436, %c0_191, %c0_192] : memref<576x1x32xf32, #tpu.memory_space<vmem>>, vector<1x1x32xf32>
    %472 = vector.shape_cast %471 : vector<1x1x32xf32> to vector<1x32xf32>
    %473 = vector.broadcast %472 : vector<1x32xf32> to vector<8x32xf32>
    %474 = arith.mulf %473, %410 : vector<8x32xf32>
    %475 = arith.addf %394, %474 : vector<8x32xf32>
    %c472 = arith.constant 472 : index
    %c0_193 = arith.constant 0 : index
    %c0_194 = arith.constant 0 : index
    %476 = vector.load %arg2[%c472, %c0_193, %c0_194] : memref<576x1x32xf32, #tpu.memory_space<vmem>>, vector<1x1x32xf32>
    %477 = vector.shape_cast %476 : vector<1x1x32xf32> to vector<1x32xf32>
    %478 = vector.broadcast %477 : vector<1x32xf32> to vector<8x32xf32>
    %479 = arith.mulf %478, %410 : vector<8x32xf32>
    %480 = arith.addf %399, %479 : vector<8x32xf32>
    %c508 = arith.constant 508 : index
    %c0_195 = arith.constant 0 : index
    %c0_196 = arith.constant 0 : index
    %481 = vector.load %arg2[%c508, %c0_195, %c0_196] : memref<576x1x32xf32, #tpu.memory_space<vmem>>, vector<1x1x32xf32>
    %482 = vector.shape_cast %481 : vector<1x1x32xf32> to vector<1x32xf32>
    %483 = vector.broadcast %482 : vector<1x32xf32> to vector<8x32xf32>
    %484 = arith.mulf %483, %410 : vector<8x32xf32>
    %485 = arith.addf %404, %484 : vector<8x32xf32>
    %c544 = arith.constant 544 : index
    %c0_197 = arith.constant 0 : index
    %c0_198 = arith.constant 0 : index
    %486 = vector.load %arg2[%c544, %c0_197, %c0_198] : memref<576x1x32xf32, #tpu.memory_space<vmem>>, vector<1x1x32xf32>
    %487 = vector.shape_cast %486 : vector<1x1x32xf32> to vector<1x32xf32>
    %488 = vector.broadcast %487 : vector<1x32xf32> to vector<8x32xf32>
    %489 = arith.mulf %488, %410 : vector<8x32xf32>
    %490 = arith.addf %409, %489 : vector<8x32xf32>
    %491 = vector.extract_strided_slice %205 {offsets = [1, 4], sizes = [8, 32], strides = [1, 1]} : vector<10x36xf32> to vector<8x32xf32>
    %c5_199 = arith.constant 5 : index
    %c0_200 = arith.constant 0 : index
    %c0_201 = arith.constant 0 : index
    %492 = vector.load %arg2[%c5_199, %c0_200, %c0_201] : memref<576x1x32xf32, #tpu.memory_space<vmem>>, vector<1x1x32xf32>
    %493 = vector.shape_cast %492 : vector<1x1x32xf32> to vector<1x32xf32>
    %494 = vector.broadcast %493 : vector<1x32xf32> to vector<8x32xf32>
    %495 = arith.mulf %494, %491 : vector<8x32xf32>
    %496 = arith.addf %415, %495 : vector<8x32xf32>
    %c41_202 = arith.constant 41 : index
    %c0_203 = arith.constant 0 : index
    %c0_204 = arith.constant 0 : index
    %497 = vector.load %arg2[%c41_202, %c0_203, %c0_204] : memref<576x1x32xf32, #tpu.memory_space<vmem>>, vector<1x1x32xf32>
    %498 = vector.shape_cast %497 : vector<1x1x32xf32> to vector<1x32xf32>
    %499 = vector.broadcast %498 : vector<1x32xf32> to vector<8x32xf32>
    %500 = arith.mulf %499, %491 : vector<8x32xf32>
    %501 = arith.addf %420, %500 : vector<8x32xf32>
    %c77 = arith.constant 77 : index
    %c0_205 = arith.constant 0 : index
    %c0_206 = arith.constant 0 : index
    %502 = vector.load %arg2[%c77, %c0_205, %c0_206] : memref<576x1x32xf32, #tpu.memory_space<vmem>>, vector<1x1x32xf32>
    %503 = vector.shape_cast %502 : vector<1x1x32xf32> to vector<1x32xf32>
    %504 = vector.broadcast %503 : vector<1x32xf32> to vector<8x32xf32>
    %505 = arith.mulf %504, %491 : vector<8x32xf32>
    %506 = arith.addf %425, %505 : vector<8x32xf32>
    %c113 = arith.constant 113 : index
    %c0_207 = arith.constant 0 : index
    %c0_208 = arith.constant 0 : index
    %507 = vector.load %arg2[%c113, %c0_207, %c0_208] : memref<576x1x32xf32, #tpu.memory_space<vmem>>, vector<1x1x32xf32>
    %508 = vector.shape_cast %507 : vector<1x1x32xf32> to vector<1x32xf32>
    %509 = vector.broadcast %508 : vector<1x32xf32> to vector<8x32xf32>
    %510 = arith.mulf %509, %491 : vector<8x32xf32>
    %511 = arith.addf %430, %510 : vector<8x32xf32>
    %c149 = arith.constant 149 : index
    %c0_209 = arith.constant 0 : index
    %c0_210 = arith.constant 0 : index
    %512 = vector.load %arg2[%c149, %c0_209, %c0_210] : memref<576x1x32xf32, #tpu.memory_space<vmem>>, vector<1x1x32xf32>
    %513 = vector.shape_cast %512 : vector<1x1x32xf32> to vector<1x32xf32>
    %514 = vector.broadcast %513 : vector<1x32xf32> to vector<8x32xf32>
    %515 = arith.mulf %514, %491 : vector<8x32xf32>
    %516 = arith.addf %435, %515 : vector<8x32xf32>
    %c185 = arith.constant 185 : index
    %c0_211 = arith.constant 0 : index
    %c0_212 = arith.constant 0 : index
    %517 = vector.load %arg2[%c185, %c0_211, %c0_212] : memref<576x1x32xf32, #tpu.memory_space<vmem>>, vector<1x1x32xf32>
    %518 = vector.shape_cast %517 : vector<1x1x32xf32> to vector<1x32xf32>
    %519 = vector.broadcast %518 : vector<1x32xf32> to vector<8x32xf32>
    %520 = arith.mulf %519, %491 : vector<8x32xf32>
    %521 = arith.addf %440, %520 : vector<8x32xf32>
    %c221 = arith.constant 221 : index
    %c0_213 = arith.constant 0 : index
    %c0_214 = arith.constant 0 : index
    %522 = vector.load %arg2[%c221, %c0_213, %c0_214] : memref<576x1x32xf32, #tpu.memory_space<vmem>>, vector<1x1x32xf32>
    %523 = vector.shape_cast %522 : vector<1x1x32xf32> to vector<1x32xf32>
    %524 = vector.broadcast %523 : vector<1x32xf32> to vector<8x32xf32>
    %525 = arith.mulf %524, %491 : vector<8x32xf32>
    %526 = arith.addf %445, %525 : vector<8x32xf32>
    %c257 = arith.constant 257 : index
    %c0_215 = arith.constant 0 : index
    %c0_216 = arith.constant 0 : index
    %527 = vector.load %arg2[%c257, %c0_215, %c0_216] : memref<576x1x32xf32, #tpu.memory_space<vmem>>, vector<1x1x32xf32>
    %528 = vector.shape_cast %527 : vector<1x1x32xf32> to vector<1x32xf32>
    %529 = vector.broadcast %528 : vector<1x32xf32> to vector<8x32xf32>
    %530 = arith.mulf %529, %491 : vector<8x32xf32>
    %531 = arith.addf %450, %530 : vector<8x32xf32>
    %c293 = arith.constant 293 : index
    %c0_217 = arith.constant 0 : index
    %c0_218 = arith.constant 0 : index
    %532 = vector.load %arg2[%c293, %c0_217, %c0_218] : memref<576x1x32xf32, #tpu.memory_space<vmem>>, vector<1x1x32xf32>
    %533 = vector.shape_cast %532 : vector<1x1x32xf32> to vector<1x32xf32>
    %534 = vector.broadcast %533 : vector<1x32xf32> to vector<8x32xf32>
    %535 = arith.mulf %534, %491 : vector<8x32xf32>
    %536 = arith.addf %455, %535 : vector<8x32xf32>
    %c329 = arith.constant 329 : index
    %c0_219 = arith.constant 0 : index
    %c0_220 = arith.constant 0 : index
    %537 = vector.load %arg2[%c329, %c0_219, %c0_220] : memref<576x1x32xf32, #tpu.memory_space<vmem>>, vector<1x1x32xf32>
    %538 = vector.shape_cast %537 : vector<1x1x32xf32> to vector<1x32xf32>
    %539 = vector.broadcast %538 : vector<1x32xf32> to vector<8x32xf32>
    %540 = arith.mulf %539, %491 : vector<8x32xf32>
    %541 = arith.addf %460, %540 : vector<8x32xf32>
    %c365 = arith.constant 365 : index
    %c0_221 = arith.constant 0 : index
    %c0_222 = arith.constant 0 : index
    %542 = vector.load %arg2[%c365, %c0_221, %c0_222] : memref<576x1x32xf32, #tpu.memory_space<vmem>>, vector<1x1x32xf32>
    %543 = vector.shape_cast %542 : vector<1x1x32xf32> to vector<1x32xf32>
    %544 = vector.broadcast %543 : vector<1x32xf32> to vector<8x32xf32>
    %545 = arith.mulf %544, %491 : vector<8x32xf32>
    %546 = arith.addf %465, %545 : vector<8x32xf32>
    %c401 = arith.constant 401 : index
    %c0_223 = arith.constant 0 : index
    %c0_224 = arith.constant 0 : index
    %547 = vector.load %arg2[%c401, %c0_223, %c0_224] : memref<576x1x32xf32, #tpu.memory_space<vmem>>, vector<1x1x32xf32>
    %548 = vector.shape_cast %547 : vector<1x1x32xf32> to vector<1x32xf32>
    %549 = vector.broadcast %548 : vector<1x32xf32> to vector<8x32xf32>
    %550 = arith.mulf %549, %491 : vector<8x32xf32>
    %551 = arith.addf %470, %550 : vector<8x32xf32>
    %c437 = arith.constant 437 : index
    %c0_225 = arith.constant 0 : index
    %c0_226 = arith.constant 0 : index
    %552 = vector.load %arg2[%c437, %c0_225, %c0_226] : memref<576x1x32xf32, #tpu.memory_space<vmem>>, vector<1x1x32xf32>
    %553 = vector.shape_cast %552 : vector<1x1x32xf32> to vector<1x32xf32>
    %554 = vector.broadcast %553 : vector<1x32xf32> to vector<8x32xf32>
    %555 = arith.mulf %554, %491 : vector<8x32xf32>
    %556 = arith.addf %475, %555 : vector<8x32xf32>
    %c473 = arith.constant 473 : index
    %c0_227 = arith.constant 0 : index
    %c0_228 = arith.constant 0 : index
    %557 = vector.load %arg2[%c473, %c0_227, %c0_228] : memref<576x1x32xf32, #tpu.memory_space<vmem>>, vector<1x1x32xf32>
    %558 = vector.shape_cast %557 : vector<1x1x32xf32> to vector<1x32xf32>
    %559 = vector.broadcast %558 : vector<1x32xf32> to vector<8x32xf32>
    %560 = arith.mulf %559, %491 : vector<8x32xf32>
    %561 = arith.addf %480, %560 : vector<8x32xf32>
    %c509 = arith.constant 509 : index
    %c0_229 = arith.constant 0 : index
    %c0_230 = arith.constant 0 : index
    %562 = vector.load %arg2[%c509, %c0_229, %c0_230] : memref<576x1x32xf32, #tpu.memory_space<vmem>>, vector<1x1x32xf32>
    %563 = vector.shape_cast %562 : vector<1x1x32xf32> to vector<1x32xf32>
    %564 = vector.broadcast %563 : vector<1x32xf32> to vector<8x32xf32>
    %565 = arith.mulf %564, %491 : vector<8x32xf32>
    %566 = arith.addf %485, %565 : vector<8x32xf32>
    %c545 = arith.constant 545 : index
    %c0_231 = arith.constant 0 : index
    %c0_232 = arith.constant 0 : index
    %567 = vector.load %arg2[%c545, %c0_231, %c0_232] : memref<576x1x32xf32, #tpu.memory_space<vmem>>, vector<1x1x32xf32>
    %568 = vector.shape_cast %567 : vector<1x1x32xf32> to vector<1x32xf32>
    %569 = vector.broadcast %568 : vector<1x32xf32> to vector<8x32xf32>
    %570 = arith.mulf %569, %491 : vector<8x32xf32>
    %571 = arith.addf %490, %570 : vector<8x32xf32>
    %572 = vector.extract_strided_slice %205 {offsets = [2, 0], sizes = [8, 32], strides = [1, 1]} : vector<10x36xf32> to vector<8x32xf32>
    %c294 = arith.constant 294 : index
    %c0_233 = arith.constant 0 : index
    %c0_234 = arith.constant 0 : index
    %573 = vector.load %arg2[%c294, %c0_233, %c0_234] : memref<576x1x32xf32, #tpu.memory_space<vmem>>, vector<1x1x32xf32>
    %574 = vector.shape_cast %573 : vector<1x1x32xf32> to vector<1x32xf32>
    %575 = vector.broadcast %574 : vector<1x32xf32> to vector<8x32xf32>
    %576 = arith.mulf %575, %572 : vector<8x32xf32>
    %577 = arith.addf %536, %576 : vector<8x32xf32>
    %c330 = arith.constant 330 : index
    %c0_235 = arith.constant 0 : index
    %c0_236 = arith.constant 0 : index
    %578 = vector.load %arg2[%c330, %c0_235, %c0_236] : memref<576x1x32xf32, #tpu.memory_space<vmem>>, vector<1x1x32xf32>
    %579 = vector.shape_cast %578 : vector<1x1x32xf32> to vector<1x32xf32>
    %580 = vector.broadcast %579 : vector<1x32xf32> to vector<8x32xf32>
    %581 = arith.mulf %580, %572 : vector<8x32xf32>
    %582 = arith.addf %541, %581 : vector<8x32xf32>
    %c366 = arith.constant 366 : index
    %c0_237 = arith.constant 0 : index
    %c0_238 = arith.constant 0 : index
    %583 = vector.load %arg2[%c366, %c0_237, %c0_238] : memref<576x1x32xf32, #tpu.memory_space<vmem>>, vector<1x1x32xf32>
    %584 = vector.shape_cast %583 : vector<1x1x32xf32> to vector<1x32xf32>
    %585 = vector.broadcast %584 : vector<1x32xf32> to vector<8x32xf32>
    %586 = arith.mulf %585, %572 : vector<8x32xf32>
    %587 = arith.addf %546, %586 : vector<8x32xf32>
    %c402 = arith.constant 402 : index
    %c0_239 = arith.constant 0 : index
    %c0_240 = arith.constant 0 : index
    %588 = vector.load %arg2[%c402, %c0_239, %c0_240] : memref<576x1x32xf32, #tpu.memory_space<vmem>>, vector<1x1x32xf32>
    %589 = vector.shape_cast %588 : vector<1x1x32xf32> to vector<1x32xf32>
    %590 = vector.broadcast %589 : vector<1x32xf32> to vector<8x32xf32>
    %591 = arith.mulf %590, %572 : vector<8x32xf32>
    %592 = arith.addf %551, %591 : vector<8x32xf32>
    %c438 = arith.constant 438 : index
    %c0_241 = arith.constant 0 : index
    %c0_242 = arith.constant 0 : index
    %593 = vector.load %arg2[%c438, %c0_241, %c0_242] : memref<576x1x32xf32, #tpu.memory_space<vmem>>, vector<1x1x32xf32>
    %594 = vector.shape_cast %593 : vector<1x1x32xf32> to vector<1x32xf32>
    %595 = vector.broadcast %594 : vector<1x32xf32> to vector<8x32xf32>
    %596 = arith.mulf %595, %572 : vector<8x32xf32>
    %597 = arith.addf %556, %596 : vector<8x32xf32>
    %c474 = arith.constant 474 : index
    %c0_243 = arith.constant 0 : index
    %c0_244 = arith.constant 0 : index
    %598 = vector.load %arg2[%c474, %c0_243, %c0_244] : memref<576x1x32xf32, #tpu.memory_space<vmem>>, vector<1x1x32xf32>
    %599 = vector.shape_cast %598 : vector<1x1x32xf32> to vector<1x32xf32>
    %600 = vector.broadcast %599 : vector<1x32xf32> to vector<8x32xf32>
    %601 = arith.mulf %600, %572 : vector<8x32xf32>
    %602 = arith.addf %561, %601 : vector<8x32xf32>
    %c510 = arith.constant 510 : index
    %c0_245 = arith.constant 0 : index
    %c0_246 = arith.constant 0 : index
    %603 = vector.load %arg2[%c510, %c0_245, %c0_246] : memref<576x1x32xf32, #tpu.memory_space<vmem>>, vector<1x1x32xf32>
    %604 = vector.shape_cast %603 : vector<1x1x32xf32> to vector<1x32xf32>
    %605 = vector.broadcast %604 : vector<1x32xf32> to vector<8x32xf32>
    %606 = arith.mulf %605, %572 : vector<8x32xf32>
    %607 = arith.addf %566, %606 : vector<8x32xf32>
    %c546 = arith.constant 546 : index
    %c0_247 = arith.constant 0 : index
    %c0_248 = arith.constant 0 : index
    %608 = vector.load %arg2[%c546, %c0_247, %c0_248] : memref<576x1x32xf32, #tpu.memory_space<vmem>>, vector<1x1x32xf32>
    %609 = vector.shape_cast %608 : vector<1x1x32xf32> to vector<1x32xf32>
    %610 = vector.broadcast %609 : vector<1x32xf32> to vector<8x32xf32>
    %611 = arith.mulf %610, %572 : vector<8x32xf32>
    %612 = arith.addf %571, %611 : vector<8x32xf32>
    %613 = vector.extract_strided_slice %205 {offsets = [2, 2], sizes = [8, 32], strides = [1, 1]} : vector<10x36xf32> to vector<8x32xf32>
    %c295 = arith.constant 295 : index
    %c0_249 = arith.constant 0 : index
    %c0_250 = arith.constant 0 : index
    %614 = vector.load %arg2[%c295, %c0_249, %c0_250] : memref<576x1x32xf32, #tpu.memory_space<vmem>>, vector<1x1x32xf32>
    %615 = vector.shape_cast %614 : vector<1x1x32xf32> to vector<1x32xf32>
    %616 = vector.broadcast %615 : vector<1x32xf32> to vector<8x32xf32>
    %617 = arith.mulf %616, %613 : vector<8x32xf32>
    %618 = arith.addf %577, %617 : vector<8x32xf32>
    %c331 = arith.constant 331 : index
    %c0_251 = arith.constant 0 : index
    %c0_252 = arith.constant 0 : index
    %619 = vector.load %arg2[%c331, %c0_251, %c0_252] : memref<576x1x32xf32, #tpu.memory_space<vmem>>, vector<1x1x32xf32>
    %620 = vector.shape_cast %619 : vector<1x1x32xf32> to vector<1x32xf32>
    %621 = vector.broadcast %620 : vector<1x32xf32> to vector<8x32xf32>
    %622 = arith.mulf %621, %613 : vector<8x32xf32>
    %623 = arith.addf %582, %622 : vector<8x32xf32>
    %c367 = arith.constant 367 : index
    %c0_253 = arith.constant 0 : index
    %c0_254 = arith.constant 0 : index
    %624 = vector.load %arg2[%c367, %c0_253, %c0_254] : memref<576x1x32xf32, #tpu.memory_space<vmem>>, vector<1x1x32xf32>
    %625 = vector.shape_cast %624 : vector<1x1x32xf32> to vector<1x32xf32>
    %626 = vector.broadcast %625 : vector<1x32xf32> to vector<8x32xf32>
    %627 = arith.mulf %626, %613 : vector<8x32xf32>
    %628 = arith.addf %587, %627 : vector<8x32xf32>
    %c403 = arith.constant 403 : index
    %c0_255 = arith.constant 0 : index
    %c0_256 = arith.constant 0 : index
    %629 = vector.load %arg2[%c403, %c0_255, %c0_256] : memref<576x1x32xf32, #tpu.memory_space<vmem>>, vector<1x1x32xf32>
    %630 = vector.shape_cast %629 : vector<1x1x32xf32> to vector<1x32xf32>
    %631 = vector.broadcast %630 : vector<1x32xf32> to vector<8x32xf32>
    %632 = arith.mulf %631, %613 : vector<8x32xf32>
    %633 = arith.addf %592, %632 : vector<8x32xf32>
    %c439 = arith.constant 439 : index
    %c0_257 = arith.constant 0 : index
    %c0_258 = arith.constant 0 : index
    %634 = vector.load %arg2[%c439, %c0_257, %c0_258] : memref<576x1x32xf32, #tpu.memory_space<vmem>>, vector<1x1x32xf32>
    %635 = vector.shape_cast %634 : vector<1x1x32xf32> to vector<1x32xf32>
    %636 = vector.broadcast %635 : vector<1x32xf32> to vector<8x32xf32>
    %637 = arith.mulf %636, %613 : vector<8x32xf32>
    %638 = arith.addf %597, %637 : vector<8x32xf32>
    %c475 = arith.constant 475 : index
    %c0_259 = arith.constant 0 : index
    %c0_260 = arith.constant 0 : index
    %639 = vector.load %arg2[%c475, %c0_259, %c0_260] : memref<576x1x32xf32, #tpu.memory_space<vmem>>, vector<1x1x32xf32>
    %640 = vector.shape_cast %639 : vector<1x1x32xf32> to vector<1x32xf32>
    %641 = vector.broadcast %640 : vector<1x32xf32> to vector<8x32xf32>
    %642 = arith.mulf %641, %613 : vector<8x32xf32>
    %643 = arith.addf %602, %642 : vector<8x32xf32>
    %c511 = arith.constant 511 : index
    %c0_261 = arith.constant 0 : index
    %c0_262 = arith.constant 0 : index
    %644 = vector.load %arg2[%c511, %c0_261, %c0_262] : memref<576x1x32xf32, #tpu.memory_space<vmem>>, vector<1x1x32xf32>
    %645 = vector.shape_cast %644 : vector<1x1x32xf32> to vector<1x32xf32>
    %646 = vector.broadcast %645 : vector<1x32xf32> to vector<8x32xf32>
    %647 = arith.mulf %646, %613 : vector<8x32xf32>
    %648 = arith.addf %607, %647 : vector<8x32xf32>
    %c547 = arith.constant 547 : index
    %c0_263 = arith.constant 0 : index
    %c0_264 = arith.constant 0 : index
    %649 = vector.load %arg2[%c547, %c0_263, %c0_264] : memref<576x1x32xf32, #tpu.memory_space<vmem>>, vector<1x1x32xf32>
    %650 = vector.shape_cast %649 : vector<1x1x32xf32> to vector<1x32xf32>
    %651 = vector.broadcast %650 : vector<1x32xf32> to vector<8x32xf32>
    %652 = arith.mulf %651, %613 : vector<8x32xf32>
    %653 = arith.addf %612, %652 : vector<8x32xf32>
    %654 = vector.extract_strided_slice %205 {offsets = [2, 4], sizes = [8, 32], strides = [1, 1]} : vector<10x36xf32> to vector<8x32xf32>
    %c296 = arith.constant 296 : index
    %c0_265 = arith.constant 0 : index
    %c0_266 = arith.constant 0 : index
    %655 = vector.load %arg2[%c296, %c0_265, %c0_266] : memref<576x1x32xf32, #tpu.memory_space<vmem>>, vector<1x1x32xf32>
    %656 = vector.shape_cast %655 : vector<1x1x32xf32> to vector<1x32xf32>
    %657 = vector.broadcast %656 : vector<1x32xf32> to vector<8x32xf32>
    %658 = arith.mulf %657, %654 : vector<8x32xf32>
    %659 = arith.addf %618, %658 : vector<8x32xf32>
    %c332 = arith.constant 332 : index
    %c0_267 = arith.constant 0 : index
    %c0_268 = arith.constant 0 : index
    %660 = vector.load %arg2[%c332, %c0_267, %c0_268] : memref<576x1x32xf32, #tpu.memory_space<vmem>>, vector<1x1x32xf32>
    %661 = vector.shape_cast %660 : vector<1x1x32xf32> to vector<1x32xf32>
    %662 = vector.broadcast %661 : vector<1x32xf32> to vector<8x32xf32>
    %663 = arith.mulf %662, %654 : vector<8x32xf32>
    %664 = arith.addf %623, %663 : vector<8x32xf32>
    %c368 = arith.constant 368 : index
    %c0_269 = arith.constant 0 : index
    %c0_270 = arith.constant 0 : index
    %665 = vector.load %arg2[%c368, %c0_269, %c0_270] : memref<576x1x32xf32, #tpu.memory_space<vmem>>, vector<1x1x32xf32>
    %666 = vector.shape_cast %665 : vector<1x1x32xf32> to vector<1x32xf32>
    %667 = vector.broadcast %666 : vector<1x32xf32> to vector<8x32xf32>
    %668 = arith.mulf %667, %654 : vector<8x32xf32>
    %669 = arith.addf %628, %668 : vector<8x32xf32>
    %c404 = arith.constant 404 : index
    %c0_271 = arith.constant 0 : index
    %c0_272 = arith.constant 0 : index
    %670 = vector.load %arg2[%c404, %c0_271, %c0_272] : memref<576x1x32xf32, #tpu.memory_space<vmem>>, vector<1x1x32xf32>
    %671 = vector.shape_cast %670 : vector<1x1x32xf32> to vector<1x32xf32>
    %672 = vector.broadcast %671 : vector<1x32xf32> to vector<8x32xf32>
    %673 = arith.mulf %672, %654 : vector<8x32xf32>
    %674 = arith.addf %633, %673 : vector<8x32xf32>
    %c440 = arith.constant 440 : index
    %c0_273 = arith.constant 0 : index
    %c0_274 = arith.constant 0 : index
    %675 = vector.load %arg2[%c440, %c0_273, %c0_274] : memref<576x1x32xf32, #tpu.memory_space<vmem>>, vector<1x1x32xf32>
    %676 = vector.shape_cast %675 : vector<1x1x32xf32> to vector<1x32xf32>
    %677 = vector.broadcast %676 : vector<1x32xf32> to vector<8x32xf32>
    %678 = arith.mulf %677, %654 : vector<8x32xf32>
    %679 = arith.addf %638, %678 : vector<8x32xf32>
    %c476 = arith.constant 476 : index
    %c0_275 = arith.constant 0 : index
    %c0_276 = arith.constant 0 : index
    %680 = vector.load %arg2[%c476, %c0_275, %c0_276] : memref<576x1x32xf32, #tpu.memory_space<vmem>>, vector<1x1x32xf32>
    %681 = vector.shape_cast %680 : vector<1x1x32xf32> to vector<1x32xf32>
    %682 = vector.broadcast %681 : vector<1x32xf32> to vector<8x32xf32>
    %683 = arith.mulf %682, %654 : vector<8x32xf32>
    %684 = arith.addf %643, %683 : vector<8x32xf32>
    %c512 = arith.constant 512 : index
    %c0_277 = arith.constant 0 : index
    %c0_278 = arith.constant 0 : index
    %685 = vector.load %arg2[%c512, %c0_277, %c0_278] : memref<576x1x32xf32, #tpu.memory_space<vmem>>, vector<1x1x32xf32>
    %686 = vector.shape_cast %685 : vector<1x1x32xf32> to vector<1x32xf32>
    %687 = vector.broadcast %686 : vector<1x32xf32> to vector<8x32xf32>
    %688 = arith.mulf %687, %654 : vector<8x32xf32>
    %689 = arith.addf %648, %688 : vector<8x32xf32>
    %c548 = arith.constant 548 : index
    %c0_279 = arith.constant 0 : index
    %c0_280 = arith.constant 0 : index
    %690 = vector.load %arg2[%c548, %c0_279, %c0_280] : memref<576x1x32xf32, #tpu.memory_space<vmem>>, vector<1x1x32xf32>
    %691 = vector.shape_cast %690 : vector<1x1x32xf32> to vector<1x32xf32>
    %692 = vector.broadcast %691 : vector<1x32xf32> to vector<8x32xf32>
    %693 = arith.mulf %692, %654 : vector<8x32xf32>
    %694 = arith.addf %653, %693 : vector<8x32xf32>
    %c0_281 = arith.constant 0 : index
    %c1_282 = arith.constant 1 : index
    %c7_283 = arith.constant 7 : index
    %c0_284 = arith.constant 0 : index
    %695 = vector.load %arg7[%c0_281, %c1_282, %c7_283, %c0_284] : memref<1x4x8x16xf32, #tpu.memory_space<vmem>>, vector<1x1x1x16xf32>
    %696 = vector.shape_cast %695 : vector<1x1x1x16xf32> to vector<1x16xf32>
    %697 = vector.broadcast %2 : f32 to vector<1x16xf32>
    %698 = arith.mulf %697, %696 : vector<1x16xf32>
    %c0_285 = arith.constant 0 : index
    %c1_286 = arith.constant 1 : index
    %c0_287 = arith.constant 0 : index
    %c0_288 = arith.constant 0 : index
    %699 = vector.load %arg8[%c0_285, %c1_286, %c0_287, %c0_288] : memref<1x4x8x16xf32, #tpu.memory_space<vmem>>, vector<1x1x1x16xf32>
    %700 = vector.shape_cast %699 : vector<1x1x1x16xf32> to vector<1x16xf32>
    %701 = vector.broadcast %5 : f32 to vector<1x16xf32>
    %702 = arith.mulf %701, %700 : vector<1x16xf32>
    %c0_289 = arith.constant 0 : index
    %c1_290 = arith.constant 1 : index
    %c0_291 = arith.constant 0 : index
    %c0_292 = arith.constant 0 : index
    %703 = vector.load %arg6[%c0_289, %c1_290, %c0_291, %c0_292] : memref<1x4x8x16xf32, #tpu.memory_space<vmem>>, vector<1x1x8x16xf32>
    %704 = vector.shape_cast %703 : vector<1x1x8x16xf32> to vector<8x16xf32>
    %705 = tpu.concatenate %698, %704, %702 in 0 : vector<1x16xf32>, vector<8x16xf32>, vector<1x16xf32> -> vector<10x16xf32>
    %cst_293 = arith.constant dense<0.000000e+00> : vector<10x36xf32>
    %706 = tpu.matmul %705, %8, %cst_293 {dimension_numbers = #tpu.dot_dimension_numbers<[1], [0], [0], [1], [0, 0, 1, 1], [], []>} : vector<10x16xf32>, vector<16x36xf32>, vector<10x36xf32> -> vector<10x36xf32>
    %707 = vector.extract_strided_slice %706 {offsets = [0, 0], sizes = [8, 32], strides = [1, 1]} : vector<10x36xf32> to vector<8x32xf32>
    %c9_294 = arith.constant 9 : index
    %c0_295 = arith.constant 0 : index
    %c0_296 = arith.constant 0 : index
    %708 = vector.load %arg2[%c9_294, %c0_295, %c0_296] : memref<576x1x32xf32, #tpu.memory_space<vmem>>, vector<1x1x32xf32>
    %709 = vector.shape_cast %708 : vector<1x1x32xf32> to vector<1x32xf32>
    %710 = vector.broadcast %709 : vector<1x32xf32> to vector<8x32xf32>
    %711 = arith.mulf %710, %707 : vector<8x32xf32>
    %712 = arith.addf %496, %711 : vector<8x32xf32>
    %c45_297 = arith.constant 45 : index
    %c0_298 = arith.constant 0 : index
    %c0_299 = arith.constant 0 : index
    %713 = vector.load %arg2[%c45_297, %c0_298, %c0_299] : memref<576x1x32xf32, #tpu.memory_space<vmem>>, vector<1x1x32xf32>
    %714 = vector.shape_cast %713 : vector<1x1x32xf32> to vector<1x32xf32>
    %715 = vector.broadcast %714 : vector<1x32xf32> to vector<8x32xf32>
    %716 = arith.mulf %715, %707 : vector<8x32xf32>
    %717 = arith.addf %501, %716 : vector<8x32xf32>
    %c81 = arith.constant 81 : index
    %c0_300 = arith.constant 0 : index
    %c0_301 = arith.constant 0 : index
    %718 = vector.load %arg2[%c81, %c0_300, %c0_301] : memref<576x1x32xf32, #tpu.memory_space<vmem>>, vector<1x1x32xf32>
    %719 = vector.shape_cast %718 : vector<1x1x32xf32> to vector<1x32xf32>
    %720 = vector.broadcast %719 : vector<1x32xf32> to vector<8x32xf32>
    %721 = arith.mulf %720, %707 : vector<8x32xf32>
    %722 = arith.addf %506, %721 : vector<8x32xf32>
    %c117 = arith.constant 117 : index
    %c0_302 = arith.constant 0 : index
    %c0_303 = arith.constant 0 : index
    %723 = vector.load %arg2[%c117, %c0_302, %c0_303] : memref<576x1x32xf32, #tpu.memory_space<vmem>>, vector<1x1x32xf32>
    %724 = vector.shape_cast %723 : vector<1x1x32xf32> to vector<1x32xf32>
    %725 = vector.broadcast %724 : vector<1x32xf32> to vector<8x32xf32>
    %726 = arith.mulf %725, %707 : vector<8x32xf32>
    %727 = arith.addf %511, %726 : vector<8x32xf32>
    %c153 = arith.constant 153 : index
    %c0_304 = arith.constant 0 : index
    %c0_305 = arith.constant 0 : index
    %728 = vector.load %arg2[%c153, %c0_304, %c0_305] : memref<576x1x32xf32, #tpu.memory_space<vmem>>, vector<1x1x32xf32>
    %729 = vector.shape_cast %728 : vector<1x1x32xf32> to vector<1x32xf32>
    %730 = vector.broadcast %729 : vector<1x32xf32> to vector<8x32xf32>
    %731 = arith.mulf %730, %707 : vector<8x32xf32>
    %732 = arith.addf %516, %731 : vector<8x32xf32>
    %c189 = arith.constant 189 : index
    %c0_306 = arith.constant 0 : index
    %c0_307 = arith.constant 0 : index
    %733 = vector.load %arg2[%c189, %c0_306, %c0_307] : memref<576x1x32xf32, #tpu.memory_space<vmem>>, vector<1x1x32xf32>
    %734 = vector.shape_cast %733 : vector<1x1x32xf32> to vector<1x32xf32>
    %735 = vector.broadcast %734 : vector<1x32xf32> to vector<8x32xf32>
    %736 = arith.mulf %735, %707 : vector<8x32xf32>
    %737 = arith.addf %521, %736 : vector<8x32xf32>
    %c225 = arith.constant 225 : index
    %c0_308 = arith.constant 0 : index
    %c0_309 = arith.constant 0 : index
    %738 = vector.load %arg2[%c225, %c0_308, %c0_309] : memref<576x1x32xf32, #tpu.memory_space<vmem>>, vector<1x1x32xf32>
    %739 = vector.shape_cast %738 : vector<1x1x32xf32> to vector<1x32xf32>
    %740 = vector.broadcast %739 : vector<1x32xf32> to vector<8x32xf32>
    %741 = arith.mulf %740, %707 : vector<8x32xf32>
    %742 = arith.addf %526, %741 : vector<8x32xf32>
    %c261 = arith.constant 261 : index
    %c0_310 = arith.constant 0 : index
    %c0_311 = arith.constant 0 : index
    %743 = vector.load %arg2[%c261, %c0_310, %c0_311] : memref<576x1x32xf32, #tpu.memory_space<vmem>>, vector<1x1x32xf32>
    %744 = vector.shape_cast %743 : vector<1x1x32xf32> to vector<1x32xf32>
    %745 = vector.broadcast %744 : vector<1x32xf32> to vector<8x32xf32>
    %746 = arith.mulf %745, %707 : vector<8x32xf32>
    %747 = arith.addf %531, %746 : vector<8x32xf32>
    %748 = vector.extract_strided_slice %706 {offsets = [0, 2], sizes = [8, 32], strides = [1, 1]} : vector<10x36xf32> to vector<8x32xf32>
    %c10_312 = arith.constant 10 : index
    %c0_313 = arith.constant 0 : index
    %c0_314 = arith.constant 0 : index
    %749 = vector.load %arg2[%c10_312, %c0_313, %c0_314] : memref<576x1x32xf32, #tpu.memory_space<vmem>>, vector<1x1x32xf32>
    %750 = vector.shape_cast %749 : vector<1x1x32xf32> to vector<1x32xf32>
    %751 = vector.broadcast %750 : vector<1x32xf32> to vector<8x32xf32>
    %752 = arith.mulf %751, %748 : vector<8x32xf32>
    %753 = arith.addf %712, %752 : vector<8x32xf32>
    %c46_315 = arith.constant 46 : index
    %c0_316 = arith.constant 0 : index
    %c0_317 = arith.constant 0 : index
    %754 = vector.load %arg2[%c46_315, %c0_316, %c0_317] : memref<576x1x32xf32, #tpu.memory_space<vmem>>, vector<1x1x32xf32>
    %755 = vector.shape_cast %754 : vector<1x1x32xf32> to vector<1x32xf32>
    %756 = vector.broadcast %755 : vector<1x32xf32> to vector<8x32xf32>
    %757 = arith.mulf %756, %748 : vector<8x32xf32>
    %758 = arith.addf %717, %757 : vector<8x32xf32>
    %c82 = arith.constant 82 : index
    %c0_318 = arith.constant 0 : index
    %c0_319 = arith.constant 0 : index
    %759 = vector.load %arg2[%c82, %c0_318, %c0_319] : memref<576x1x32xf32, #tpu.memory_space<vmem>>, vector<1x1x32xf32>
    %760 = vector.shape_cast %759 : vector<1x1x32xf32> to vector<1x32xf32>
    %761 = vector.broadcast %760 : vector<1x32xf32> to vector<8x32xf32>
    %762 = arith.mulf %761, %748 : vector<8x32xf32>
    %763 = arith.addf %722, %762 : vector<8x32xf32>
    %c118 = arith.constant 118 : index
    %c0_320 = arith.constant 0 : index
    %c0_321 = arith.constant 0 : index
    %764 = vector.load %arg2[%c118, %c0_320, %c0_321] : memref<576x1x32xf32, #tpu.memory_space<vmem>>, vector<1x1x32xf32>
    %765 = vector.shape_cast %764 : vector<1x1x32xf32> to vector<1x32xf32>
    %766 = vector.broadcast %765 : vector<1x32xf32> to vector<8x32xf32>
    %767 = arith.mulf %766, %748 : vector<8x32xf32>
    %768 = arith.addf %727, %767 : vector<8x32xf32>
    %c154 = arith.constant 154 : index
    %c0_322 = arith.constant 0 : index
    %c0_323 = arith.constant 0 : index
    %769 = vector.load %arg2[%c154, %c0_322, %c0_323] : memref<576x1x32xf32, #tpu.memory_space<vmem>>, vector<1x1x32xf32>
    %770 = vector.shape_cast %769 : vector<1x1x32xf32> to vector<1x32xf32>
    %771 = vector.broadcast %770 : vector<1x32xf32> to vector<8x32xf32>
    %772 = arith.mulf %771, %748 : vector<8x32xf32>
    %773 = arith.addf %732, %772 : vector<8x32xf32>
    %c190 = arith.constant 190 : index
    %c0_324 = arith.constant 0 : index
    %c0_325 = arith.constant 0 : index
    %774 = vector.load %arg2[%c190, %c0_324, %c0_325] : memref<576x1x32xf32, #tpu.memory_space<vmem>>, vector<1x1x32xf32>
    %775 = vector.shape_cast %774 : vector<1x1x32xf32> to vector<1x32xf32>
    %776 = vector.broadcast %775 : vector<1x32xf32> to vector<8x32xf32>
    %777 = arith.mulf %776, %748 : vector<8x32xf32>
    %778 = arith.addf %737, %777 : vector<8x32xf32>
    %c226 = arith.constant 226 : index
    %c0_326 = arith.constant 0 : index
    %c0_327 = arith.constant 0 : index
    %779 = vector.load %arg2[%c226, %c0_326, %c0_327] : memref<576x1x32xf32, #tpu.memory_space<vmem>>, vector<1x1x32xf32>
    %780 = vector.shape_cast %779 : vector<1x1x32xf32> to vector<1x32xf32>
    %781 = vector.broadcast %780 : vector<1x32xf32> to vector<8x32xf32>
    %782 = arith.mulf %781, %748 : vector<8x32xf32>
    %783 = arith.addf %742, %782 : vector<8x32xf32>
    %c262 = arith.constant 262 : index
    %c0_328 = arith.constant 0 : index
    %c0_329 = arith.constant 0 : index
    %784 = vector.load %arg2[%c262, %c0_328, %c0_329] : memref<576x1x32xf32, #tpu.memory_space<vmem>>, vector<1x1x32xf32>
    %785 = vector.shape_cast %784 : vector<1x1x32xf32> to vector<1x32xf32>
    %786 = vector.broadcast %785 : vector<1x32xf32> to vector<8x32xf32>
    %787 = arith.mulf %786, %748 : vector<8x32xf32>
    %788 = arith.addf %747, %787 : vector<8x32xf32>
    %789 = vector.extract_strided_slice %706 {offsets = [0, 4], sizes = [8, 32], strides = [1, 1]} : vector<10x36xf32> to vector<8x32xf32>
    %c11_330 = arith.constant 11 : index
    %c0_331 = arith.constant 0 : index
    %c0_332 = arith.constant 0 : index
    %790 = vector.load %arg2[%c11_330, %c0_331, %c0_332] : memref<576x1x32xf32, #tpu.memory_space<vmem>>, vector<1x1x32xf32>
    %791 = vector.shape_cast %790 : vector<1x1x32xf32> to vector<1x32xf32>
    %792 = vector.broadcast %791 : vector<1x32xf32> to vector<8x32xf32>
    %793 = arith.mulf %792, %789 : vector<8x32xf32>
    %794 = arith.addf %753, %793 : vector<8x32xf32>
    %c47_333 = arith.constant 47 : index
    %c0_334 = arith.constant 0 : index
    %c0_335 = arith.constant 0 : index
    %795 = vector.load %arg2[%c47_333, %c0_334, %c0_335] : memref<576x1x32xf32, #tpu.memory_space<vmem>>, vector<1x1x32xf32>
    %796 = vector.shape_cast %795 : vector<1x1x32xf32> to vector<1x32xf32>
    %797 = vector.broadcast %796 : vector<1x32xf32> to vector<8x32xf32>
    %798 = arith.mulf %797, %789 : vector<8x32xf32>
    %799 = arith.addf %758, %798 : vector<8x32xf32>
    %c83 = arith.constant 83 : index
    %c0_336 = arith.constant 0 : index
    %c0_337 = arith.constant 0 : index
    %800 = vector.load %arg2[%c83, %c0_336, %c0_337] : memref<576x1x32xf32, #tpu.memory_space<vmem>>, vector<1x1x32xf32>
    %801 = vector.shape_cast %800 : vector<1x1x32xf32> to vector<1x32xf32>
    %802 = vector.broadcast %801 : vector<1x32xf32> to vector<8x32xf32>
    %803 = arith.mulf %802, %789 : vector<8x32xf32>
    %804 = arith.addf %763, %803 : vector<8x32xf32>
    %c119 = arith.constant 119 : index
    %c0_338 = arith.constant 0 : index
    %c0_339 = arith.constant 0 : index
    %805 = vector.load %arg2[%c119, %c0_338, %c0_339] : memref<576x1x32xf32, #tpu.memory_space<vmem>>, vector<1x1x32xf32>
    %806 = vector.shape_cast %805 : vector<1x1x32xf32> to vector<1x32xf32>
    %807 = vector.broadcast %806 : vector<1x32xf32> to vector<8x32xf32>
    %808 = arith.mulf %807, %789 : vector<8x32xf32>
    %809 = arith.addf %768, %808 : vector<8x32xf32>
    %c155 = arith.constant 155 : index
    %c0_340 = arith.constant 0 : index
    %c0_341 = arith.constant 0 : index
    %810 = vector.load %arg2[%c155, %c0_340, %c0_341] : memref<576x1x32xf32, #tpu.memory_space<vmem>>, vector<1x1x32xf32>
    %811 = vector.shape_cast %810 : vector<1x1x32xf32> to vector<1x32xf32>
    %812 = vector.broadcast %811 : vector<1x32xf32> to vector<8x32xf32>
    %813 = arith.mulf %812, %789 : vector<8x32xf32>
    %814 = arith.addf %773, %813 : vector<8x32xf32>
    %c191 = arith.constant 191 : index
    %c0_342 = arith.constant 0 : index
    %c0_343 = arith.constant 0 : index
    %815 = vector.load %arg2[%c191, %c0_342, %c0_343] : memref<576x1x32xf32, #tpu.memory_space<vmem>>, vector<1x1x32xf32>
    %816 = vector.shape_cast %815 : vector<1x1x32xf32> to vector<1x32xf32>
    %817 = vector.broadcast %816 : vector<1x32xf32> to vector<8x32xf32>
    %818 = arith.mulf %817, %789 : vector<8x32xf32>
    %819 = arith.addf %778, %818 : vector<8x32xf32>
    %c227 = arith.constant 227 : index
    %c0_344 = arith.constant 0 : index
    %c0_345 = arith.constant 0 : index
    %820 = vector.load %arg2[%c227, %c0_344, %c0_345] : memref<576x1x32xf32, #tpu.memory_space<vmem>>, vector<1x1x32xf32>
    %821 = vector.shape_cast %820 : vector<1x1x32xf32> to vector<1x32xf32>
    %822 = vector.broadcast %821 : vector<1x32xf32> to vector<8x32xf32>
    %823 = arith.mulf %822, %789 : vector<8x32xf32>
    %824 = arith.addf %783, %823 : vector<8x32xf32>
    %c263 = arith.constant 263 : index
    %c0_346 = arith.constant 0 : index
    %c0_347 = arith.constant 0 : index
    %825 = vector.load %arg2[%c263, %c0_346, %c0_347] : memref<576x1x32xf32, #tpu.memory_space<vmem>>, vector<1x1x32xf32>
    %826 = vector.shape_cast %825 : vector<1x1x32xf32> to vector<1x32xf32>
    %827 = vector.broadcast %826 : vector<1x32xf32> to vector<8x32xf32>
    %828 = arith.mulf %827, %789 : vector<8x32xf32>
    %829 = arith.addf %788, %828 : vector<8x32xf32>
    %830 = vector.extract_strided_slice %706 {offsets = [1, 0], sizes = [8, 32], strides = [1, 1]} : vector<10x36xf32> to vector<8x32xf32>
    %c12_348 = arith.constant 12 : index
    %c0_349 = arith.constant 0 : index
    %c0_350 = arith.constant 0 : index
    %831 = vector.load %arg2[%c12_348, %c0_349, %c0_350] : memref<576x1x32xf32, #tpu.memory_space<vmem>>, vector<1x1x32xf32>
    %832 = vector.shape_cast %831 : vector<1x1x32xf32> to vector<1x32xf32>
    %833 = vector.broadcast %832 : vector<1x32xf32> to vector<8x32xf32>
    %834 = arith.mulf %833, %830 : vector<8x32xf32>
    %835 = arith.addf %794, %834 : vector<8x32xf32>
    %c48 = arith.constant 48 : index
    %c0_351 = arith.constant 0 : index
    %c0_352 = arith.constant 0 : index
    %836 = vector.load %arg2[%c48, %c0_351, %c0_352] : memref<576x1x32xf32, #tpu.memory_space<vmem>>, vector<1x1x32xf32>
    %837 = vector.shape_cast %836 : vector<1x1x32xf32> to vector<1x32xf32>
    %838 = vector.broadcast %837 : vector<1x32xf32> to vector<8x32xf32>
    %839 = arith.mulf %838, %830 : vector<8x32xf32>
    %840 = arith.addf %799, %839 : vector<8x32xf32>
    %c84 = arith.constant 84 : index
    %c0_353 = arith.constant 0 : index
    %c0_354 = arith.constant 0 : index
    %841 = vector.load %arg2[%c84, %c0_353, %c0_354] : memref<576x1x32xf32, #tpu.memory_space<vmem>>, vector<1x1x32xf32>
    %842 = vector.shape_cast %841 : vector<1x1x32xf32> to vector<1x32xf32>
    %843 = vector.broadcast %842 : vector<1x32xf32> to vector<8x32xf32>
    %844 = arith.mulf %843, %830 : vector<8x32xf32>
    %845 = arith.addf %804, %844 : vector<8x32xf32>
    %c120 = arith.constant 120 : index
    %c0_355 = arith.constant 0 : index
    %c0_356 = arith.constant 0 : index
    %846 = vector.load %arg2[%c120, %c0_355, %c0_356] : memref<576x1x32xf32, #tpu.memory_space<vmem>>, vector<1x1x32xf32>
    %847 = vector.shape_cast %846 : vector<1x1x32xf32> to vector<1x32xf32>
    %848 = vector.broadcast %847 : vector<1x32xf32> to vector<8x32xf32>
    %849 = arith.mulf %848, %830 : vector<8x32xf32>
    %850 = arith.addf %809, %849 : vector<8x32xf32>
    %c156 = arith.constant 156 : index
    %c0_357 = arith.constant 0 : index
    %c0_358 = arith.constant 0 : index
    %851 = vector.load %arg2[%c156, %c0_357, %c0_358] : memref<576x1x32xf32, #tpu.memory_space<vmem>>, vector<1x1x32xf32>
    %852 = vector.shape_cast %851 : vector<1x1x32xf32> to vector<1x32xf32>
    %853 = vector.broadcast %852 : vector<1x32xf32> to vector<8x32xf32>
    %854 = arith.mulf %853, %830 : vector<8x32xf32>
    %855 = arith.addf %814, %854 : vector<8x32xf32>
    %c192 = arith.constant 192 : index
    %c0_359 = arith.constant 0 : index
    %c0_360 = arith.constant 0 : index
    %856 = vector.load %arg2[%c192, %c0_359, %c0_360] : memref<576x1x32xf32, #tpu.memory_space<vmem>>, vector<1x1x32xf32>
    %857 = vector.shape_cast %856 : vector<1x1x32xf32> to vector<1x32xf32>
    %858 = vector.broadcast %857 : vector<1x32xf32> to vector<8x32xf32>
    %859 = arith.mulf %858, %830 : vector<8x32xf32>
    %860 = arith.addf %819, %859 : vector<8x32xf32>
    %c228 = arith.constant 228 : index
    %c0_361 = arith.constant 0 : index
    %c0_362 = arith.constant 0 : index
    %861 = vector.load %arg2[%c228, %c0_361, %c0_362] : memref<576x1x32xf32, #tpu.memory_space<vmem>>, vector<1x1x32xf32>
    %862 = vector.shape_cast %861 : vector<1x1x32xf32> to vector<1x32xf32>
    %863 = vector.broadcast %862 : vector<1x32xf32> to vector<8x32xf32>
    %864 = arith.mulf %863, %830 : vector<8x32xf32>
    %865 = arith.addf %824, %864 : vector<8x32xf32>
    %c264 = arith.constant 264 : index
    %c0_363 = arith.constant 0 : index
    %c0_364 = arith.constant 0 : index
    %866 = vector.load %arg2[%c264, %c0_363, %c0_364] : memref<576x1x32xf32, #tpu.memory_space<vmem>>, vector<1x1x32xf32>
    %867 = vector.shape_cast %866 : vector<1x1x32xf32> to vector<1x32xf32>
    %868 = vector.broadcast %867 : vector<1x32xf32> to vector<8x32xf32>
    %869 = arith.mulf %868, %830 : vector<8x32xf32>
    %870 = arith.addf %829, %869 : vector<8x32xf32>
    %c300 = arith.constant 300 : index
    %c0_365 = arith.constant 0 : index
    %c0_366 = arith.constant 0 : index
    %871 = vector.load %arg2[%c300, %c0_365, %c0_366] : memref<576x1x32xf32, #tpu.memory_space<vmem>>, vector<1x1x32xf32>
    %872 = vector.shape_cast %871 : vector<1x1x32xf32> to vector<1x32xf32>
    %873 = vector.broadcast %872 : vector<1x32xf32> to vector<8x32xf32>
    %874 = arith.mulf %873, %830 : vector<8x32xf32>
    %875 = arith.addf %659, %874 : vector<8x32xf32>
    %c336 = arith.constant 336 : index
    %c0_367 = arith.constant 0 : index
    %c0_368 = arith.constant 0 : index
    %876 = vector.load %arg2[%c336, %c0_367, %c0_368] : memref<576x1x32xf32, #tpu.memory_space<vmem>>, vector<1x1x32xf32>
    %877 = vector.shape_cast %876 : vector<1x1x32xf32> to vector<1x32xf32>
    %878 = vector.broadcast %877 : vector<1x32xf32> to vector<8x32xf32>
    %879 = arith.mulf %878, %830 : vector<8x32xf32>
    %880 = arith.addf %664, %879 : vector<8x32xf32>
    %c372 = arith.constant 372 : index
    %c0_369 = arith.constant 0 : index
    %c0_370 = arith.constant 0 : index
    %881 = vector.load %arg2[%c372, %c0_369, %c0_370] : memref<576x1x32xf32, #tpu.memory_space<vmem>>, vector<1x1x32xf32>
    %882 = vector.shape_cast %881 : vector<1x1x32xf32> to vector<1x32xf32>
    %883 = vector.broadcast %882 : vector<1x32xf32> to vector<8x32xf32>
    %884 = arith.mulf %883, %830 : vector<8x32xf32>
    %885 = arith.addf %669, %884 : vector<8x32xf32>
    %c408 = arith.constant 408 : index
    %c0_371 = arith.constant 0 : index
    %c0_372 = arith.constant 0 : index
    %886 = vector.load %arg2[%c408, %c0_371, %c0_372] : memref<576x1x32xf32, #tpu.memory_space<vmem>>, vector<1x1x32xf32>
    %887 = vector.shape_cast %886 : vector<1x1x32xf32> to vector<1x32xf32>
    %888 = vector.broadcast %887 : vector<1x32xf32> to vector<8x32xf32>
    %889 = arith.mulf %888, %830 : vector<8x32xf32>
    %890 = arith.addf %674, %889 : vector<8x32xf32>
    %c444 = arith.constant 444 : index
    %c0_373 = arith.constant 0 : index
    %c0_374 = arith.constant 0 : index
    %891 = vector.load %arg2[%c444, %c0_373, %c0_374] : memref<576x1x32xf32, #tpu.memory_space<vmem>>, vector<1x1x32xf32>
    %892 = vector.shape_cast %891 : vector<1x1x32xf32> to vector<1x32xf32>
    %893 = vector.broadcast %892 : vector<1x32xf32> to vector<8x32xf32>
    %894 = arith.mulf %893, %830 : vector<8x32xf32>
    %895 = arith.addf %679, %894 : vector<8x32xf32>
    %c480 = arith.constant 480 : index
    %c0_375 = arith.constant 0 : index
    %c0_376 = arith.constant 0 : index
    %896 = vector.load %arg2[%c480, %c0_375, %c0_376] : memref<576x1x32xf32, #tpu.memory_space<vmem>>, vector<1x1x32xf32>
    %897 = vector.shape_cast %896 : vector<1x1x32xf32> to vector<1x32xf32>
    %898 = vector.broadcast %897 : vector<1x32xf32> to vector<8x32xf32>
    %899 = arith.mulf %898, %830 : vector<8x32xf32>
    %900 = arith.addf %684, %899 : vector<8x32xf32>
    %c516 = arith.constant 516 : index
    %c0_377 = arith.constant 0 : index
    %c0_378 = arith.constant 0 : index
    %901 = vector.load %arg2[%c516, %c0_377, %c0_378] : memref<576x1x32xf32, #tpu.memory_space<vmem>>, vector<1x1x32xf32>
    %902 = vector.shape_cast %901 : vector<1x1x32xf32> to vector<1x32xf32>
    %903 = vector.broadcast %902 : vector<1x32xf32> to vector<8x32xf32>
    %904 = arith.mulf %903, %830 : vector<8x32xf32>
    %905 = arith.addf %689, %904 : vector<8x32xf32>
    %c552 = arith.constant 552 : index
    %c0_379 = arith.constant 0 : index
    %c0_380 = arith.constant 0 : index
    %906 = vector.load %arg2[%c552, %c0_379, %c0_380] : memref<576x1x32xf32, #tpu.memory_space<vmem>>, vector<1x1x32xf32>
    %907 = vector.shape_cast %906 : vector<1x1x32xf32> to vector<1x32xf32>
    %908 = vector.broadcast %907 : vector<1x32xf32> to vector<8x32xf32>
    %909 = arith.mulf %908, %830 : vector<8x32xf32>
    %910 = arith.addf %694, %909 : vector<8x32xf32>
    %911 = vector.extract_strided_slice %706 {offsets = [1, 2], sizes = [8, 32], strides = [1, 1]} : vector<10x36xf32> to vector<8x32xf32>
    %c13_381 = arith.constant 13 : index
    %c0_382 = arith.constant 0 : index
    %c0_383 = arith.constant 0 : index
    %912 = vector.load %arg2[%c13_381, %c0_382, %c0_383] : memref<576x1x32xf32, #tpu.memory_space<vmem>>, vector<1x1x32xf32>
    %913 = vector.shape_cast %912 : vector<1x1x32xf32> to vector<1x32xf32>
    %914 = vector.broadcast %913 : vector<1x32xf32> to vector<8x32xf32>
    %915 = arith.mulf %914, %911 : vector<8x32xf32>
    %916 = arith.addf %835, %915 : vector<8x32xf32>
    %c49 = arith.constant 49 : index
    %c0_384 = arith.constant 0 : index
    %c0_385 = arith.constant 0 : index
    %917 = vector.load %arg2[%c49, %c0_384, %c0_385] : memref<576x1x32xf32, #tpu.memory_space<vmem>>, vector<1x1x32xf32>
    %918 = vector.shape_cast %917 : vector<1x1x32xf32> to vector<1x32xf32>
    %919 = vector.broadcast %918 : vector<1x32xf32> to vector<8x32xf32>
    %920 = arith.mulf %919, %911 : vector<8x32xf32>
    %921 = arith.addf %840, %920 : vector<8x32xf32>
    %c85 = arith.constant 85 : index
    %c0_386 = arith.constant 0 : index
    %c0_387 = arith.constant 0 : index
    %922 = vector.load %arg2[%c85, %c0_386, %c0_387] : memref<576x1x32xf32, #tpu.memory_space<vmem>>, vector<1x1x32xf32>
    %923 = vector.shape_cast %922 : vector<1x1x32xf32> to vector<1x32xf32>
    %924 = vector.broadcast %923 : vector<1x32xf32> to vector<8x32xf32>
    %925 = arith.mulf %924, %911 : vector<8x32xf32>
    %926 = arith.addf %845, %925 : vector<8x32xf32>
    %c121 = arith.constant 121 : index
    %c0_388 = arith.constant 0 : index
    %c0_389 = arith.constant 0 : index
    %927 = vector.load %arg2[%c121, %c0_388, %c0_389] : memref<576x1x32xf32, #tpu.memory_space<vmem>>, vector<1x1x32xf32>
    %928 = vector.shape_cast %927 : vector<1x1x32xf32> to vector<1x32xf32>
    %929 = vector.broadcast %928 : vector<1x32xf32> to vector<8x32xf32>
    %930 = arith.mulf %929, %911 : vector<8x32xf32>
    %931 = arith.addf %850, %930 : vector<8x32xf32>
    %c157 = arith.constant 157 : index
    %c0_390 = arith.constant 0 : index
    %c0_391 = arith.constant 0 : index
    %932 = vector.load %arg2[%c157, %c0_390, %c0_391] : memref<576x1x32xf32, #tpu.memory_space<vmem>>, vector<1x1x32xf32>
    %933 = vector.shape_cast %932 : vector<1x1x32xf32> to vector<1x32xf32>
    %934 = vector.broadcast %933 : vector<1x32xf32> to vector<8x32xf32>
    %935 = arith.mulf %934, %911 : vector<8x32xf32>
    %936 = arith.addf %855, %935 : vector<8x32xf32>
    %c193 = arith.constant 193 : index
    %c0_392 = arith.constant 0 : index
    %c0_393 = arith.constant 0 : index
    %937 = vector.load %arg2[%c193, %c0_392, %c0_393] : memref<576x1x32xf32, #tpu.memory_space<vmem>>, vector<1x1x32xf32>
    %938 = vector.shape_cast %937 : vector<1x1x32xf32> to vector<1x32xf32>
    %939 = vector.broadcast %938 : vector<1x32xf32> to vector<8x32xf32>
    %940 = arith.mulf %939, %911 : vector<8x32xf32>
    %941 = arith.addf %860, %940 : vector<8x32xf32>
    %c229 = arith.constant 229 : index
    %c0_394 = arith.constant 0 : index
    %c0_395 = arith.constant 0 : index
    %942 = vector.load %arg2[%c229, %c0_394, %c0_395] : memref<576x1x32xf32, #tpu.memory_space<vmem>>, vector<1x1x32xf32>
    %943 = vector.shape_cast %942 : vector<1x1x32xf32> to vector<1x32xf32>
    %944 = vector.broadcast %943 : vector<1x32xf32> to vector<8x32xf32>
    %945 = arith.mulf %944, %911 : vector<8x32xf32>
    %946 = arith.addf %865, %945 : vector<8x32xf32>
    %c265 = arith.constant 265 : index
    %c0_396 = arith.constant 0 : index
    %c0_397 = arith.constant 0 : index
    %947 = vector.load %arg2[%c265, %c0_396, %c0_397] : memref<576x1x32xf32, #tpu.memory_space<vmem>>, vector<1x1x32xf32>
    %948 = vector.shape_cast %947 : vector<1x1x32xf32> to vector<1x32xf32>
    %949 = vector.broadcast %948 : vector<1x32xf32> to vector<8x32xf32>
    %950 = arith.mulf %949, %911 : vector<8x32xf32>
    %951 = arith.addf %870, %950 : vector<8x32xf32>
    %c301 = arith.constant 301 : index
    %c0_398 = arith.constant 0 : index
    %c0_399 = arith.constant 0 : index
    %952 = vector.load %arg2[%c301, %c0_398, %c0_399] : memref<576x1x32xf32, #tpu.memory_space<vmem>>, vector<1x1x32xf32>
    %953 = vector.shape_cast %952 : vector<1x1x32xf32> to vector<1x32xf32>
    %954 = vector.broadcast %953 : vector<1x32xf32> to vector<8x32xf32>
    %955 = arith.mulf %954, %911 : vector<8x32xf32>
    %956 = arith.addf %875, %955 : vector<8x32xf32>
    %c337 = arith.constant 337 : index
    %c0_400 = arith.constant 0 : index
    %c0_401 = arith.constant 0 : index
    %957 = vector.load %arg2[%c337, %c0_400, %c0_401] : memref<576x1x32xf32, #tpu.memory_space<vmem>>, vector<1x1x32xf32>
    %958 = vector.shape_cast %957 : vector<1x1x32xf32> to vector<1x32xf32>
    %959 = vector.broadcast %958 : vector<1x32xf32> to vector<8x32xf32>
    %960 = arith.mulf %959, %911 : vector<8x32xf32>
    %961 = arith.addf %880, %960 : vector<8x32xf32>
    %c373 = arith.constant 373 : index
    %c0_402 = arith.constant 0 : index
    %c0_403 = arith.constant 0 : index
    %962 = vector.load %arg2[%c373, %c0_402, %c0_403] : memref<576x1x32xf32, #tpu.memory_space<vmem>>, vector<1x1x32xf32>
    %963 = vector.shape_cast %962 : vector<1x1x32xf32> to vector<1x32xf32>
    %964 = vector.broadcast %963 : vector<1x32xf32> to vector<8x32xf32>
    %965 = arith.mulf %964, %911 : vector<8x32xf32>
    %966 = arith.addf %885, %965 : vector<8x32xf32>
    %c409 = arith.constant 409 : index
    %c0_404 = arith.constant 0 : index
    %c0_405 = arith.constant 0 : index
    %967 = vector.load %arg2[%c409, %c0_404, %c0_405] : memref<576x1x32xf32, #tpu.memory_space<vmem>>, vector<1x1x32xf32>
    %968 = vector.shape_cast %967 : vector<1x1x32xf32> to vector<1x32xf32>
    %969 = vector.broadcast %968 : vector<1x32xf32> to vector<8x32xf32>
    %970 = arith.mulf %969, %911 : vector<8x32xf32>
    %971 = arith.addf %890, %970 : vector<8x32xf32>
    %c445 = arith.constant 445 : index
    %c0_406 = arith.constant 0 : index
    %c0_407 = arith.constant 0 : index
    %972 = vector.load %arg2[%c445, %c0_406, %c0_407] : memref<576x1x32xf32, #tpu.memory_space<vmem>>, vector<1x1x32xf32>
    %973 = vector.shape_cast %972 : vector<1x1x32xf32> to vector<1x32xf32>
    %974 = vector.broadcast %973 : vector<1x32xf32> to vector<8x32xf32>
    %975 = arith.mulf %974, %911 : vector<8x32xf32>
    %976 = arith.addf %895, %975 : vector<8x32xf32>
    %c481 = arith.constant 481 : index
    %c0_408 = arith.constant 0 : index
    %c0_409 = arith.constant 0 : index
    %977 = vector.load %arg2[%c481, %c0_408, %c0_409] : memref<576x1x32xf32, #tpu.memory_space<vmem>>, vector<1x1x32xf32>
    %978 = vector.shape_cast %977 : vector<1x1x32xf32> to vector<1x32xf32>
    %979 = vector.broadcast %978 : vector<1x32xf32> to vector<8x32xf32>
    %980 = arith.mulf %979, %911 : vector<8x32xf32>
    %981 = arith.addf %900, %980 : vector<8x32xf32>
    %c517 = arith.constant 517 : index
    %c0_410 = arith.constant 0 : index
    %c0_411 = arith.constant 0 : index
    %982 = vector.load %arg2[%c517, %c0_410, %c0_411] : memref<576x1x32xf32, #tpu.memory_space<vmem>>, vector<1x1x32xf32>
    %983 = vector.shape_cast %982 : vector<1x1x32xf32> to vector<1x32xf32>
    %984 = vector.broadcast %983 : vector<1x32xf32> to vector<8x32xf32>
    %985 = arith.mulf %984, %911 : vector<8x32xf32>
    %986 = arith.addf %905, %985 : vector<8x32xf32>
    %c553 = arith.constant 553 : index
    %c0_412 = arith.constant 0 : index
    %c0_413 = arith.constant 0 : index
    %987 = vector.load %arg2[%c553, %c0_412, %c0_413] : memref<576x1x32xf32, #tpu.memory_space<vmem>>, vector<1x1x32xf32>
    %988 = vector.shape_cast %987 : vector<1x1x32xf32> to vector<1x32xf32>
    %989 = vector.broadcast %988 : vector<1x32xf32> to vector<8x32xf32>
    %990 = arith.mulf %989, %911 : vector<8x32xf32>
    %991 = arith.addf %910, %990 : vector<8x32xf32>
    %992 = vector.extract_strided_slice %706 {offsets = [1, 4], sizes = [8, 32], strides = [1, 1]} : vector<10x36xf32> to vector<8x32xf32>
    %c14_414 = arith.constant 14 : index
    %c0_415 = arith.constant 0 : index
    %c0_416 = arith.constant 0 : index
    %993 = vector.load %arg2[%c14_414, %c0_415, %c0_416] : memref<576x1x32xf32, #tpu.memory_space<vmem>>, vector<1x1x32xf32>
    %994 = vector.shape_cast %993 : vector<1x1x32xf32> to vector<1x32xf32>
    %995 = vector.broadcast %994 : vector<1x32xf32> to vector<8x32xf32>
    %996 = arith.mulf %995, %992 : vector<8x32xf32>
    %997 = arith.addf %916, %996 : vector<8x32xf32>
    %c50 = arith.constant 50 : index
    %c0_417 = arith.constant 0 : index
    %c0_418 = arith.constant 0 : index
    %998 = vector.load %arg2[%c50, %c0_417, %c0_418] : memref<576x1x32xf32, #tpu.memory_space<vmem>>, vector<1x1x32xf32>
    %999 = vector.shape_cast %998 : vector<1x1x32xf32> to vector<1x32xf32>
    %1000 = vector.broadcast %999 : vector<1x32xf32> to vector<8x32xf32>
    %1001 = arith.mulf %1000, %992 : vector<8x32xf32>
    %1002 = arith.addf %921, %1001 : vector<8x32xf32>
    %c86 = arith.constant 86 : index
    %c0_419 = arith.constant 0 : index
    %c0_420 = arith.constant 0 : index
    %1003 = vector.load %arg2[%c86, %c0_419, %c0_420] : memref<576x1x32xf32, #tpu.memory_space<vmem>>, vector<1x1x32xf32>
    %1004 = vector.shape_cast %1003 : vector<1x1x32xf32> to vector<1x32xf32>
    %1005 = vector.broadcast %1004 : vector<1x32xf32> to vector<8x32xf32>
    %1006 = arith.mulf %1005, %992 : vector<8x32xf32>
    %1007 = arith.addf %926, %1006 : vector<8x32xf32>
    %c122 = arith.constant 122 : index
    %c0_421 = arith.constant 0 : index
    %c0_422 = arith.constant 0 : index
    %1008 = vector.load %arg2[%c122, %c0_421, %c0_422] : memref<576x1x32xf32, #tpu.memory_space<vmem>>, vector<1x1x32xf32>
    %1009 = vector.shape_cast %1008 : vector<1x1x32xf32> to vector<1x32xf32>
    %1010 = vector.broadcast %1009 : vector<1x32xf32> to vector<8x32xf32>
    %1011 = arith.mulf %1010, %992 : vector<8x32xf32>
    %1012 = arith.addf %931, %1011 : vector<8x32xf32>
    %c158 = arith.constant 158 : index
    %c0_423 = arith.constant 0 : index
    %c0_424 = arith.constant 0 : index
    %1013 = vector.load %arg2[%c158, %c0_423, %c0_424] : memref<576x1x32xf32, #tpu.memory_space<vmem>>, vector<1x1x32xf32>
    %1014 = vector.shape_cast %1013 : vector<1x1x32xf32> to vector<1x32xf32>
    %1015 = vector.broadcast %1014 : vector<1x32xf32> to vector<8x32xf32>
    %1016 = arith.mulf %1015, %992 : vector<8x32xf32>
    %1017 = arith.addf %936, %1016 : vector<8x32xf32>
    %c194 = arith.constant 194 : index
    %c0_425 = arith.constant 0 : index
    %c0_426 = arith.constant 0 : index
    %1018 = vector.load %arg2[%c194, %c0_425, %c0_426] : memref<576x1x32xf32, #tpu.memory_space<vmem>>, vector<1x1x32xf32>
    %1019 = vector.shape_cast %1018 : vector<1x1x32xf32> to vector<1x32xf32>
    %1020 = vector.broadcast %1019 : vector<1x32xf32> to vector<8x32xf32>
    %1021 = arith.mulf %1020, %992 : vector<8x32xf32>
    %1022 = arith.addf %941, %1021 : vector<8x32xf32>
    %c230 = arith.constant 230 : index
    %c0_427 = arith.constant 0 : index
    %c0_428 = arith.constant 0 : index
    %1023 = vector.load %arg2[%c230, %c0_427, %c0_428] : memref<576x1x32xf32, #tpu.memory_space<vmem>>, vector<1x1x32xf32>
    %1024 = vector.shape_cast %1023 : vector<1x1x32xf32> to vector<1x32xf32>
    %1025 = vector.broadcast %1024 : vector<1x32xf32> to vector<8x32xf32>
    %1026 = arith.mulf %1025, %992 : vector<8x32xf32>
    %1027 = arith.addf %946, %1026 : vector<8x32xf32>
    %c266 = arith.constant 266 : index
    %c0_429 = arith.constant 0 : index
    %c0_430 = arith.constant 0 : index
    %1028 = vector.load %arg2[%c266, %c0_429, %c0_430] : memref<576x1x32xf32, #tpu.memory_space<vmem>>, vector<1x1x32xf32>
    %1029 = vector.shape_cast %1028 : vector<1x1x32xf32> to vector<1x32xf32>
    %1030 = vector.broadcast %1029 : vector<1x32xf32> to vector<8x32xf32>
    %1031 = arith.mulf %1030, %992 : vector<8x32xf32>
    %1032 = arith.addf %951, %1031 : vector<8x32xf32>
    %c302 = arith.constant 302 : index
    %c0_431 = arith.constant 0 : index
    %c0_432 = arith.constant 0 : index
    %1033 = vector.load %arg2[%c302, %c0_431, %c0_432] : memref<576x1x32xf32, #tpu.memory_space<vmem>>, vector<1x1x32xf32>
    %1034 = vector.shape_cast %1033 : vector<1x1x32xf32> to vector<1x32xf32>
    %1035 = vector.broadcast %1034 : vector<1x32xf32> to vector<8x32xf32>
    %1036 = arith.mulf %1035, %992 : vector<8x32xf32>
    %1037 = arith.addf %956, %1036 : vector<8x32xf32>
    %c338 = arith.constant 338 : index
    %c0_433 = arith.constant 0 : index
    %c0_434 = arith.constant 0 : index
    %1038 = vector.load %arg2[%c338, %c0_433, %c0_434] : memref<576x1x32xf32, #tpu.memory_space<vmem>>, vector<1x1x32xf32>
    %1039 = vector.shape_cast %1038 : vector<1x1x32xf32> to vector<1x32xf32>
    %1040 = vector.broadcast %1039 : vector<1x32xf32> to vector<8x32xf32>
    %1041 = arith.mulf %1040, %992 : vector<8x32xf32>
    %1042 = arith.addf %961, %1041 : vector<8x32xf32>
    %c374 = arith.constant 374 : index
    %c0_435 = arith.constant 0 : index
    %c0_436 = arith.constant 0 : index
    %1043 = vector.load %arg2[%c374, %c0_435, %c0_436] : memref<576x1x32xf32, #tpu.memory_space<vmem>>, vector<1x1x32xf32>
    %1044 = vector.shape_cast %1043 : vector<1x1x32xf32> to vector<1x32xf32>
    %1045 = vector.broadcast %1044 : vector<1x32xf32> to vector<8x32xf32>
    %1046 = arith.mulf %1045, %992 : vector<8x32xf32>
    %1047 = arith.addf %966, %1046 : vector<8x32xf32>
    %c410 = arith.constant 410 : index
    %c0_437 = arith.constant 0 : index
    %c0_438 = arith.constant 0 : index
    %1048 = vector.load %arg2[%c410, %c0_437, %c0_438] : memref<576x1x32xf32, #tpu.memory_space<vmem>>, vector<1x1x32xf32>
    %1049 = vector.shape_cast %1048 : vector<1x1x32xf32> to vector<1x32xf32>
    %1050 = vector.broadcast %1049 : vector<1x32xf32> to vector<8x32xf32>
    %1051 = arith.mulf %1050, %992 : vector<8x32xf32>
    %1052 = arith.addf %971, %1051 : vector<8x32xf32>
    %c446 = arith.constant 446 : index
    %c0_439 = arith.constant 0 : index
    %c0_440 = arith.constant 0 : index
    %1053 = vector.load %arg2[%c446, %c0_439, %c0_440] : memref<576x1x32xf32, #tpu.memory_space<vmem>>, vector<1x1x32xf32>
    %1054 = vector.shape_cast %1053 : vector<1x1x32xf32> to vector<1x32xf32>
    %1055 = vector.broadcast %1054 : vector<1x32xf32> to vector<8x32xf32>
    %1056 = arith.mulf %1055, %992 : vector<8x32xf32>
    %1057 = arith.addf %976, %1056 : vector<8x32xf32>
    %c482 = arith.constant 482 : index
    %c0_441 = arith.constant 0 : index
    %c0_442 = arith.constant 0 : index
    %1058 = vector.load %arg2[%c482, %c0_441, %c0_442] : memref<576x1x32xf32, #tpu.memory_space<vmem>>, vector<1x1x32xf32>
    %1059 = vector.shape_cast %1058 : vector<1x1x32xf32> to vector<1x32xf32>
    %1060 = vector.broadcast %1059 : vector<1x32xf32> to vector<8x32xf32>
    %1061 = arith.mulf %1060, %992 : vector<8x32xf32>
    %1062 = arith.addf %981, %1061 : vector<8x32xf32>
    %c518 = arith.constant 518 : index
    %c0_443 = arith.constant 0 : index
    %c0_444 = arith.constant 0 : index
    %1063 = vector.load %arg2[%c518, %c0_443, %c0_444] : memref<576x1x32xf32, #tpu.memory_space<vmem>>, vector<1x1x32xf32>
    %1064 = vector.shape_cast %1063 : vector<1x1x32xf32> to vector<1x32xf32>
    %1065 = vector.broadcast %1064 : vector<1x32xf32> to vector<8x32xf32>
    %1066 = arith.mulf %1065, %992 : vector<8x32xf32>
    %1067 = arith.addf %986, %1066 : vector<8x32xf32>
    %c554 = arith.constant 554 : index
    %c0_445 = arith.constant 0 : index
    %c0_446 = arith.constant 0 : index
    %1068 = vector.load %arg2[%c554, %c0_445, %c0_446] : memref<576x1x32xf32, #tpu.memory_space<vmem>>, vector<1x1x32xf32>
    %1069 = vector.shape_cast %1068 : vector<1x1x32xf32> to vector<1x32xf32>
    %1070 = vector.broadcast %1069 : vector<1x32xf32> to vector<8x32xf32>
    %1071 = arith.mulf %1070, %992 : vector<8x32xf32>
    %1072 = arith.addf %991, %1071 : vector<8x32xf32>
    %1073 = vector.extract_strided_slice %706 {offsets = [2, 0], sizes = [8, 32], strides = [1, 1]} : vector<10x36xf32> to vector<8x32xf32>
    %c303 = arith.constant 303 : index
    %c0_447 = arith.constant 0 : index
    %c0_448 = arith.constant 0 : index
    %1074 = vector.load %arg2[%c303, %c0_447, %c0_448] : memref<576x1x32xf32, #tpu.memory_space<vmem>>, vector<1x1x32xf32>
    %1075 = vector.shape_cast %1074 : vector<1x1x32xf32> to vector<1x32xf32>
    %1076 = vector.broadcast %1075 : vector<1x32xf32> to vector<8x32xf32>
    %1077 = arith.mulf %1076, %1073 : vector<8x32xf32>
    %1078 = arith.addf %1037, %1077 : vector<8x32xf32>
    %c339 = arith.constant 339 : index
    %c0_449 = arith.constant 0 : index
    %c0_450 = arith.constant 0 : index
    %1079 = vector.load %arg2[%c339, %c0_449, %c0_450] : memref<576x1x32xf32, #tpu.memory_space<vmem>>, vector<1x1x32xf32>
    %1080 = vector.shape_cast %1079 : vector<1x1x32xf32> to vector<1x32xf32>
    %1081 = vector.broadcast %1080 : vector<1x32xf32> to vector<8x32xf32>
    %1082 = arith.mulf %1081, %1073 : vector<8x32xf32>
    %1083 = arith.addf %1042, %1082 : vector<8x32xf32>
    %c375 = arith.constant 375 : index
    %c0_451 = arith.constant 0 : index
    %c0_452 = arith.constant 0 : index
    %1084 = vector.load %arg2[%c375, %c0_451, %c0_452] : memref<576x1x32xf32, #tpu.memory_space<vmem>>, vector<1x1x32xf32>
    %1085 = vector.shape_cast %1084 : vector<1x1x32xf32> to vector<1x32xf32>
    %1086 = vector.broadcast %1085 : vector<1x32xf32> to vector<8x32xf32>
    %1087 = arith.mulf %1086, %1073 : vector<8x32xf32>
    %1088 = arith.addf %1047, %1087 : vector<8x32xf32>
    %c411 = arith.constant 411 : index
    %c0_453 = arith.constant 0 : index
    %c0_454 = arith.constant 0 : index
    %1089 = vector.load %arg2[%c411, %c0_453, %c0_454] : memref<576x1x32xf32, #tpu.memory_space<vmem>>, vector<1x1x32xf32>
    %1090 = vector.shape_cast %1089 : vector<1x1x32xf32> to vector<1x32xf32>
    %1091 = vector.broadcast %1090 : vector<1x32xf32> to vector<8x32xf32>
    %1092 = arith.mulf %1091, %1073 : vector<8x32xf32>
    %1093 = arith.addf %1052, %1092 : vector<8x32xf32>
    %c447 = arith.constant 447 : index
    %c0_455 = arith.constant 0 : index
    %c0_456 = arith.constant 0 : index
    %1094 = vector.load %arg2[%c447, %c0_455, %c0_456] : memref<576x1x32xf32, #tpu.memory_space<vmem>>, vector<1x1x32xf32>
    %1095 = vector.shape_cast %1094 : vector<1x1x32xf32> to vector<1x32xf32>
    %1096 = vector.broadcast %1095 : vector<1x32xf32> to vector<8x32xf32>
    %1097 = arith.mulf %1096, %1073 : vector<8x32xf32>
    %1098 = arith.addf %1057, %1097 : vector<8x32xf32>
    %c483 = arith.constant 483 : index
    %c0_457 = arith.constant 0 : index
    %c0_458 = arith.constant 0 : index
    %1099 = vector.load %arg2[%c483, %c0_457, %c0_458] : memref<576x1x32xf32, #tpu.memory_space<vmem>>, vector<1x1x32xf32>
    %1100 = vector.shape_cast %1099 : vector<1x1x32xf32> to vector<1x32xf32>
    %1101 = vector.broadcast %1100 : vector<1x32xf32> to vector<8x32xf32>
    %1102 = arith.mulf %1101, %1073 : vector<8x32xf32>
    %1103 = arith.addf %1062, %1102 : vector<8x32xf32>
    %c519 = arith.constant 519 : index
    %c0_459 = arith.constant 0 : index
    %c0_460 = arith.constant 0 : index
    %1104 = vector.load %arg2[%c519, %c0_459, %c0_460] : memref<576x1x32xf32, #tpu.memory_space<vmem>>, vector<1x1x32xf32>
    %1105 = vector.shape_cast %1104 : vector<1x1x32xf32> to vector<1x32xf32>
    %1106 = vector.broadcast %1105 : vector<1x32xf32> to vector<8x32xf32>
    %1107 = arith.mulf %1106, %1073 : vector<8x32xf32>
    %1108 = arith.addf %1067, %1107 : vector<8x32xf32>
    %c555 = arith.constant 555 : index
    %c0_461 = arith.constant 0 : index
    %c0_462 = arith.constant 0 : index
    %1109 = vector.load %arg2[%c555, %c0_461, %c0_462] : memref<576x1x32xf32, #tpu.memory_space<vmem>>, vector<1x1x32xf32>
    %1110 = vector.shape_cast %1109 : vector<1x1x32xf32> to vector<1x32xf32>
    %1111 = vector.broadcast %1110 : vector<1x32xf32> to vector<8x32xf32>
    %1112 = arith.mulf %1111, %1073 : vector<8x32xf32>
    %1113 = arith.addf %1072, %1112 : vector<8x32xf32>
    %1114 = vector.extract_strided_slice %706 {offsets = [2, 2], sizes = [8, 32], strides = [1, 1]} : vector<10x36xf32> to vector<8x32xf32>
    %c304 = arith.constant 304 : index
    %c0_463 = arith.constant 0 : index
    %c0_464 = arith.constant 0 : index
    %1115 = vector.load %arg2[%c304, %c0_463, %c0_464] : memref<576x1x32xf32, #tpu.memory_space<vmem>>, vector<1x1x32xf32>
    %1116 = vector.shape_cast %1115 : vector<1x1x32xf32> to vector<1x32xf32>
    %1117 = vector.broadcast %1116 : vector<1x32xf32> to vector<8x32xf32>
    %1118 = arith.mulf %1117, %1114 : vector<8x32xf32>
    %1119 = arith.addf %1078, %1118 : vector<8x32xf32>
    %c340 = arith.constant 340 : index
    %c0_465 = arith.constant 0 : index
    %c0_466 = arith.constant 0 : index
    %1120 = vector.load %arg2[%c340, %c0_465, %c0_466] : memref<576x1x32xf32, #tpu.memory_space<vmem>>, vector<1x1x32xf32>
    %1121 = vector.shape_cast %1120 : vector<1x1x32xf32> to vector<1x32xf32>
    %1122 = vector.broadcast %1121 : vector<1x32xf32> to vector<8x32xf32>
    %1123 = arith.mulf %1122, %1114 : vector<8x32xf32>
    %1124 = arith.addf %1083, %1123 : vector<8x32xf32>
    %c376 = arith.constant 376 : index
    %c0_467 = arith.constant 0 : index
    %c0_468 = arith.constant 0 : index
    %1125 = vector.load %arg2[%c376, %c0_467, %c0_468] : memref<576x1x32xf32, #tpu.memory_space<vmem>>, vector<1x1x32xf32>
    %1126 = vector.shape_cast %1125 : vector<1x1x32xf32> to vector<1x32xf32>
    %1127 = vector.broadcast %1126 : vector<1x32xf32> to vector<8x32xf32>
    %1128 = arith.mulf %1127, %1114 : vector<8x32xf32>
    %1129 = arith.addf %1088, %1128 : vector<8x32xf32>
    %c412 = arith.constant 412 : index
    %c0_469 = arith.constant 0 : index
    %c0_470 = arith.constant 0 : index
    %1130 = vector.load %arg2[%c412, %c0_469, %c0_470] : memref<576x1x32xf32, #tpu.memory_space<vmem>>, vector<1x1x32xf32>
    %1131 = vector.shape_cast %1130 : vector<1x1x32xf32> to vector<1x32xf32>
    %1132 = vector.broadcast %1131 : vector<1x32xf32> to vector<8x32xf32>
    %1133 = arith.mulf %1132, %1114 : vector<8x32xf32>
    %1134 = arith.addf %1093, %1133 : vector<8x32xf32>
    %c448 = arith.constant 448 : index
    %c0_471 = arith.constant 0 : index
    %c0_472 = arith.constant 0 : index
    %1135 = vector.load %arg2[%c448, %c0_471, %c0_472] : memref<576x1x32xf32, #tpu.memory_space<vmem>>, vector<1x1x32xf32>
    %1136 = vector.shape_cast %1135 : vector<1x1x32xf32> to vector<1x32xf32>
    %1137 = vector.broadcast %1136 : vector<1x32xf32> to vector<8x32xf32>
    %1138 = arith.mulf %1137, %1114 : vector<8x32xf32>
    %1139 = arith.addf %1098, %1138 : vector<8x32xf32>
    %c484 = arith.constant 484 : index
    %c0_473 = arith.constant 0 : index
    %c0_474 = arith.constant 0 : index
    %1140 = vector.load %arg2[%c484, %c0_473, %c0_474] : memref<576x1x32xf32, #tpu.memory_space<vmem>>, vector<1x1x32xf32>
    %1141 = vector.shape_cast %1140 : vector<1x1x32xf32> to vector<1x32xf32>
    %1142 = vector.broadcast %1141 : vector<1x32xf32> to vector<8x32xf32>
    %1143 = arith.mulf %1142, %1114 : vector<8x32xf32>
    %1144 = arith.addf %1103, %1143 : vector<8x32xf32>
    %c520 = arith.constant 520 : index
    %c0_475 = arith.constant 0 : index
    %c0_476 = arith.constant 0 : index
    %1145 = vector.load %arg2[%c520, %c0_475, %c0_476] : memref<576x1x32xf32, #tpu.memory_space<vmem>>, vector<1x1x32xf32>
    %1146 = vector.shape_cast %1145 : vector<1x1x32xf32> to vector<1x32xf32>
    %1147 = vector.broadcast %1146 : vector<1x32xf32> to vector<8x32xf32>
    %1148 = arith.mulf %1147, %1114 : vector<8x32xf32>
    %1149 = arith.addf %1108, %1148 : vector<8x32xf32>
    %c556 = arith.constant 556 : index
    %c0_477 = arith.constant 0 : index
    %c0_478 = arith.constant 0 : index
    %1150 = vector.load %arg2[%c556, %c0_477, %c0_478] : memref<576x1x32xf32, #tpu.memory_space<vmem>>, vector<1x1x32xf32>
    %1151 = vector.shape_cast %1150 : vector<1x1x32xf32> to vector<1x32xf32>
    %1152 = vector.broadcast %1151 : vector<1x32xf32> to vector<8x32xf32>
    %1153 = arith.mulf %1152, %1114 : vector<8x32xf32>
    %1154 = arith.addf %1113, %1153 : vector<8x32xf32>
    %1155 = vector.extract_strided_slice %706 {offsets = [2, 4], sizes = [8, 32], strides = [1, 1]} : vector<10x36xf32> to vector<8x32xf32>
    %c305 = arith.constant 305 : index
    %c0_479 = arith.constant 0 : index
    %c0_480 = arith.constant 0 : index
    %1156 = vector.load %arg2[%c305, %c0_479, %c0_480] : memref<576x1x32xf32, #tpu.memory_space<vmem>>, vector<1x1x32xf32>
    %1157 = vector.shape_cast %1156 : vector<1x1x32xf32> to vector<1x32xf32>
    %1158 = vector.broadcast %1157 : vector<1x32xf32> to vector<8x32xf32>
    %1159 = arith.mulf %1158, %1155 : vector<8x32xf32>
    %1160 = arith.addf %1119, %1159 : vector<8x32xf32>
    %c341 = arith.constant 341 : index
    %c0_481 = arith.constant 0 : index
    %c0_482 = arith.constant 0 : index
    %1161 = vector.load %arg2[%c341, %c0_481, %c0_482] : memref<576x1x32xf32, #tpu.memory_space<vmem>>, vector<1x1x32xf32>
    %1162 = vector.shape_cast %1161 : vector<1x1x32xf32> to vector<1x32xf32>
    %1163 = vector.broadcast %1162 : vector<1x32xf32> to vector<8x32xf32>
    %1164 = arith.mulf %1163, %1155 : vector<8x32xf32>
    %1165 = arith.addf %1124, %1164 : vector<8x32xf32>
    %c377 = arith.constant 377 : index
    %c0_483 = arith.constant 0 : index
    %c0_484 = arith.constant 0 : index
    %1166 = vector.load %arg2[%c377, %c0_483, %c0_484] : memref<576x1x32xf32, #tpu.memory_space<vmem>>, vector<1x1x32xf32>
    %1167 = vector.shape_cast %1166 : vector<1x1x32xf32> to vector<1x32xf32>
    %1168 = vector.broadcast %1167 : vector<1x32xf32> to vector<8x32xf32>
    %1169 = arith.mulf %1168, %1155 : vector<8x32xf32>
    %1170 = arith.addf %1129, %1169 : vector<8x32xf32>
    %c413 = arith.constant 413 : index
    %c0_485 = arith.constant 0 : index
    %c0_486 = arith.constant 0 : index
    %1171 = vector.load %arg2[%c413, %c0_485, %c0_486] : memref<576x1x32xf32, #tpu.memory_space<vmem>>, vector<1x1x32xf32>
    %1172 = vector.shape_cast %1171 : vector<1x1x32xf32> to vector<1x32xf32>
    %1173 = vector.broadcast %1172 : vector<1x32xf32> to vector<8x32xf32>
    %1174 = arith.mulf %1173, %1155 : vector<8x32xf32>
    %1175 = arith.addf %1134, %1174 : vector<8x32xf32>
    %c449 = arith.constant 449 : index
    %c0_487 = arith.constant 0 : index
    %c0_488 = arith.constant 0 : index
    %1176 = vector.load %arg2[%c449, %c0_487, %c0_488] : memref<576x1x32xf32, #tpu.memory_space<vmem>>, vector<1x1x32xf32>
    %1177 = vector.shape_cast %1176 : vector<1x1x32xf32> to vector<1x32xf32>
    %1178 = vector.broadcast %1177 : vector<1x32xf32> to vector<8x32xf32>
    %1179 = arith.mulf %1178, %1155 : vector<8x32xf32>
    %1180 = arith.addf %1139, %1179 : vector<8x32xf32>
    %c485 = arith.constant 485 : index
    %c0_489 = arith.constant 0 : index
    %c0_490 = arith.constant 0 : index
    %1181 = vector.load %arg2[%c485, %c0_489, %c0_490] : memref<576x1x32xf32, #tpu.memory_space<vmem>>, vector<1x1x32xf32>
    %1182 = vector.shape_cast %1181 : vector<1x1x32xf32> to vector<1x32xf32>
    %1183 = vector.broadcast %1182 : vector<1x32xf32> to vector<8x32xf32>
    %1184 = arith.mulf %1183, %1155 : vector<8x32xf32>
    %1185 = arith.addf %1144, %1184 : vector<8x32xf32>
    %c521 = arith.constant 521 : index
    %c0_491 = arith.constant 0 : index
    %c0_492 = arith.constant 0 : index
    %1186 = vector.load %arg2[%c521, %c0_491, %c0_492] : memref<576x1x32xf32, #tpu.memory_space<vmem>>, vector<1x1x32xf32>
    %1187 = vector.shape_cast %1186 : vector<1x1x32xf32> to vector<1x32xf32>
    %1188 = vector.broadcast %1187 : vector<1x32xf32> to vector<8x32xf32>
    %1189 = arith.mulf %1188, %1155 : vector<8x32xf32>
    %1190 = arith.addf %1149, %1189 : vector<8x32xf32>
    %c557 = arith.constant 557 : index
    %c0_493 = arith.constant 0 : index
    %c0_494 = arith.constant 0 : index
    %1191 = vector.load %arg2[%c557, %c0_493, %c0_494] : memref<576x1x32xf32, #tpu.memory_space<vmem>>, vector<1x1x32xf32>
    %1192 = vector.shape_cast %1191 : vector<1x1x32xf32> to vector<1x32xf32>
    %1193 = vector.broadcast %1192 : vector<1x32xf32> to vector<8x32xf32>
    %1194 = arith.mulf %1193, %1155 : vector<8x32xf32>
    %1195 = arith.addf %1154, %1194 : vector<8x32xf32>
    %c0_495 = arith.constant 0 : index
    %c2_496 = arith.constant 2 : index
    %c7_497 = arith.constant 7 : index
    %c0_498 = arith.constant 0 : index
    %1196 = vector.load %arg7[%c0_495, %c2_496, %c7_497, %c0_498] : memref<1x4x8x16xf32, #tpu.memory_space<vmem>>, vector<1x1x1x16xf32>
    %1197 = vector.shape_cast %1196 : vector<1x1x1x16xf32> to vector<1x16xf32>
    %1198 = vector.broadcast %2 : f32 to vector<1x16xf32>
    %1199 = arith.mulf %1198, %1197 : vector<1x16xf32>
    %c0_499 = arith.constant 0 : index
    %c2_500 = arith.constant 2 : index
    %c0_501 = arith.constant 0 : index
    %c0_502 = arith.constant 0 : index
    %1200 = vector.load %arg8[%c0_499, %c2_500, %c0_501, %c0_502] : memref<1x4x8x16xf32, #tpu.memory_space<vmem>>, vector<1x1x1x16xf32>
    %1201 = vector.shape_cast %1200 : vector<1x1x1x16xf32> to vector<1x16xf32>
    %1202 = vector.broadcast %5 : f32 to vector<1x16xf32>
    %1203 = arith.mulf %1202, %1201 : vector<1x16xf32>
    %c0_503 = arith.constant 0 : index
    %c2_504 = arith.constant 2 : index
    %c0_505 = arith.constant 0 : index
    %c0_506 = arith.constant 0 : index
    %1204 = vector.load %arg6[%c0_503, %c2_504, %c0_505, %c0_506] : memref<1x4x8x16xf32, #tpu.memory_space<vmem>>, vector<1x1x8x16xf32>
    %1205 = vector.shape_cast %1204 : vector<1x1x8x16xf32> to vector<8x16xf32>
    %1206 = tpu.concatenate %1199, %1205, %1203 in 0 : vector<1x16xf32>, vector<8x16xf32>, vector<1x16xf32> -> vector<10x16xf32>
    %cst_507 = arith.constant dense<0.000000e+00> : vector<10x36xf32>
    %1207 = tpu.matmul %1206, %8, %cst_507 {dimension_numbers = #tpu.dot_dimension_numbers<[1], [0], [0], [1], [0, 0, 1, 1], [], []>} : vector<10x16xf32>, vector<16x36xf32>, vector<10x36xf32> -> vector<10x36xf32>
    %1208 = vector.extract_strided_slice %1207 {offsets = [0, 0], sizes = [8, 32], strides = [1, 1]} : vector<10x36xf32> to vector<8x32xf32>
    %c18_508 = arith.constant 18 : index
    %c0_509 = arith.constant 0 : index
    %c0_510 = arith.constant 0 : index
    %1209 = vector.load %arg2[%c18_508, %c0_509, %c0_510] : memref<576x1x32xf32, #tpu.memory_space<vmem>>, vector<1x1x32xf32>
    %1210 = vector.shape_cast %1209 : vector<1x1x32xf32> to vector<1x32xf32>
    %1211 = vector.broadcast %1210 : vector<1x32xf32> to vector<8x32xf32>
    %1212 = arith.mulf %1211, %1208 : vector<8x32xf32>
    %1213 = arith.addf %997, %1212 : vector<8x32xf32>
    %c54 = arith.constant 54 : index
    %c0_511 = arith.constant 0 : index
    %c0_512 = arith.constant 0 : index
    %1214 = vector.load %arg2[%c54, %c0_511, %c0_512] : memref<576x1x32xf32, #tpu.memory_space<vmem>>, vector<1x1x32xf32>
    %1215 = vector.shape_cast %1214 : vector<1x1x32xf32> to vector<1x32xf32>
    %1216 = vector.broadcast %1215 : vector<1x32xf32> to vector<8x32xf32>
    %1217 = arith.mulf %1216, %1208 : vector<8x32xf32>
    %1218 = arith.addf %1002, %1217 : vector<8x32xf32>
    %c90 = arith.constant 90 : index
    %c0_513 = arith.constant 0 : index
    %c0_514 = arith.constant 0 : index
    %1219 = vector.load %arg2[%c90, %c0_513, %c0_514] : memref<576x1x32xf32, #tpu.memory_space<vmem>>, vector<1x1x32xf32>
    %1220 = vector.shape_cast %1219 : vector<1x1x32xf32> to vector<1x32xf32>
    %1221 = vector.broadcast %1220 : vector<1x32xf32> to vector<8x32xf32>
    %1222 = arith.mulf %1221, %1208 : vector<8x32xf32>
    %1223 = arith.addf %1007, %1222 : vector<8x32xf32>
    %c126 = arith.constant 126 : index
    %c0_515 = arith.constant 0 : index
    %c0_516 = arith.constant 0 : index
    %1224 = vector.load %arg2[%c126, %c0_515, %c0_516] : memref<576x1x32xf32, #tpu.memory_space<vmem>>, vector<1x1x32xf32>
    %1225 = vector.shape_cast %1224 : vector<1x1x32xf32> to vector<1x32xf32>
    %1226 = vector.broadcast %1225 : vector<1x32xf32> to vector<8x32xf32>
    %1227 = arith.mulf %1226, %1208 : vector<8x32xf32>
    %1228 = arith.addf %1012, %1227 : vector<8x32xf32>
    %c162 = arith.constant 162 : index
    %c0_517 = arith.constant 0 : index
    %c0_518 = arith.constant 0 : index
    %1229 = vector.load %arg2[%c162, %c0_517, %c0_518] : memref<576x1x32xf32, #tpu.memory_space<vmem>>, vector<1x1x32xf32>
    %1230 = vector.shape_cast %1229 : vector<1x1x32xf32> to vector<1x32xf32>
    %1231 = vector.broadcast %1230 : vector<1x32xf32> to vector<8x32xf32>
    %1232 = arith.mulf %1231, %1208 : vector<8x32xf32>
    %1233 = arith.addf %1017, %1232 : vector<8x32xf32>
    %c198 = arith.constant 198 : index
    %c0_519 = arith.constant 0 : index
    %c0_520 = arith.constant 0 : index
    %1234 = vector.load %arg2[%c198, %c0_519, %c0_520] : memref<576x1x32xf32, #tpu.memory_space<vmem>>, vector<1x1x32xf32>
    %1235 = vector.shape_cast %1234 : vector<1x1x32xf32> to vector<1x32xf32>
    %1236 = vector.broadcast %1235 : vector<1x32xf32> to vector<8x32xf32>
    %1237 = arith.mulf %1236, %1208 : vector<8x32xf32>
    %1238 = arith.addf %1022, %1237 : vector<8x32xf32>
    %c234 = arith.constant 234 : index
    %c0_521 = arith.constant 0 : index
    %c0_522 = arith.constant 0 : index
    %1239 = vector.load %arg2[%c234, %c0_521, %c0_522] : memref<576x1x32xf32, #tpu.memory_space<vmem>>, vector<1x1x32xf32>
    %1240 = vector.shape_cast %1239 : vector<1x1x32xf32> to vector<1x32xf32>
    %1241 = vector.broadcast %1240 : vector<1x32xf32> to vector<8x32xf32>
    %1242 = arith.mulf %1241, %1208 : vector<8x32xf32>
    %1243 = arith.addf %1027, %1242 : vector<8x32xf32>
    %c270 = arith.constant 270 : index
    %c0_523 = arith.constant 0 : index
    %c0_524 = arith.constant 0 : index
    %1244 = vector.load %arg2[%c270, %c0_523, %c0_524] : memref<576x1x32xf32, #tpu.memory_space<vmem>>, vector<1x1x32xf32>
    %1245 = vector.shape_cast %1244 : vector<1x1x32xf32> to vector<1x32xf32>
    %1246 = vector.broadcast %1245 : vector<1x32xf32> to vector<8x32xf32>
    %1247 = arith.mulf %1246, %1208 : vector<8x32xf32>
    %1248 = arith.addf %1032, %1247 : vector<8x32xf32>
    %1249 = vector.extract_strided_slice %1207 {offsets = [0, 2], sizes = [8, 32], strides = [1, 1]} : vector<10x36xf32> to vector<8x32xf32>
    %c19_525 = arith.constant 19 : index
    %c0_526 = arith.constant 0 : index
    %c0_527 = arith.constant 0 : index
    %1250 = vector.load %arg2[%c19_525, %c0_526, %c0_527] : memref<576x1x32xf32, #tpu.memory_space<vmem>>, vector<1x1x32xf32>
    %1251 = vector.shape_cast %1250 : vector<1x1x32xf32> to vector<1x32xf32>
    %1252 = vector.broadcast %1251 : vector<1x32xf32> to vector<8x32xf32>
    %1253 = arith.mulf %1252, %1249 : vector<8x32xf32>
    %1254 = arith.addf %1213, %1253 : vector<8x32xf32>
    %c55 = arith.constant 55 : index
    %c0_528 = arith.constant 0 : index
    %c0_529 = arith.constant 0 : index
    %1255 = vector.load %arg2[%c55, %c0_528, %c0_529] : memref<576x1x32xf32, #tpu.memory_space<vmem>>, vector<1x1x32xf32>
    %1256 = vector.shape_cast %1255 : vector<1x1x32xf32> to vector<1x32xf32>
    %1257 = vector.broadcast %1256 : vector<1x32xf32> to vector<8x32xf32>
    %1258 = arith.mulf %1257, %1249 : vector<8x32xf32>
    %1259 = arith.addf %1218, %1258 : vector<8x32xf32>
    %c91 = arith.constant 91 : index
    %c0_530 = arith.constant 0 : index
    %c0_531 = arith.constant 0 : index
    %1260 = vector.load %arg2[%c91, %c0_530, %c0_531] : memref<576x1x32xf32, #tpu.memory_space<vmem>>, vector<1x1x32xf32>
    %1261 = vector.shape_cast %1260 : vector<1x1x32xf32> to vector<1x32xf32>
    %1262 = vector.broadcast %1261 : vector<1x32xf32> to vector<8x32xf32>
    %1263 = arith.mulf %1262, %1249 : vector<8x32xf32>
    %1264 = arith.addf %1223, %1263 : vector<8x32xf32>
    %c127 = arith.constant 127 : index
    %c0_532 = arith.constant 0 : index
    %c0_533 = arith.constant 0 : index
    %1265 = vector.load %arg2[%c127, %c0_532, %c0_533] : memref<576x1x32xf32, #tpu.memory_space<vmem>>, vector<1x1x32xf32>
    %1266 = vector.shape_cast %1265 : vector<1x1x32xf32> to vector<1x32xf32>
    %1267 = vector.broadcast %1266 : vector<1x32xf32> to vector<8x32xf32>
    %1268 = arith.mulf %1267, %1249 : vector<8x32xf32>
    %1269 = arith.addf %1228, %1268 : vector<8x32xf32>
    %c163 = arith.constant 163 : index
    %c0_534 = arith.constant 0 : index
    %c0_535 = arith.constant 0 : index
    %1270 = vector.load %arg2[%c163, %c0_534, %c0_535] : memref<576x1x32xf32, #tpu.memory_space<vmem>>, vector<1x1x32xf32>
    %1271 = vector.shape_cast %1270 : vector<1x1x32xf32> to vector<1x32xf32>
    %1272 = vector.broadcast %1271 : vector<1x32xf32> to vector<8x32xf32>
    %1273 = arith.mulf %1272, %1249 : vector<8x32xf32>
    %1274 = arith.addf %1233, %1273 : vector<8x32xf32>
    %c199 = arith.constant 199 : index
    %c0_536 = arith.constant 0 : index
    %c0_537 = arith.constant 0 : index
    %1275 = vector.load %arg2[%c199, %c0_536, %c0_537] : memref<576x1x32xf32, #tpu.memory_space<vmem>>, vector<1x1x32xf32>
    %1276 = vector.shape_cast %1275 : vector<1x1x32xf32> to vector<1x32xf32>
    %1277 = vector.broadcast %1276 : vector<1x32xf32> to vector<8x32xf32>
    %1278 = arith.mulf %1277, %1249 : vector<8x32xf32>
    %1279 = arith.addf %1238, %1278 : vector<8x32xf32>
    %c235 = arith.constant 235 : index
    %c0_538 = arith.constant 0 : index
    %c0_539 = arith.constant 0 : index
    %1280 = vector.load %arg2[%c235, %c0_538, %c0_539] : memref<576x1x32xf32, #tpu.memory_space<vmem>>, vector<1x1x32xf32>
    %1281 = vector.shape_cast %1280 : vector<1x1x32xf32> to vector<1x32xf32>
    %1282 = vector.broadcast %1281 : vector<1x32xf32> to vector<8x32xf32>
    %1283 = arith.mulf %1282, %1249 : vector<8x32xf32>
    %1284 = arith.addf %1243, %1283 : vector<8x32xf32>
    %c271 = arith.constant 271 : index
    %c0_540 = arith.constant 0 : index
    %c0_541 = arith.constant 0 : index
    %1285 = vector.load %arg2[%c271, %c0_540, %c0_541] : memref<576x1x32xf32, #tpu.memory_space<vmem>>, vector<1x1x32xf32>
    %1286 = vector.shape_cast %1285 : vector<1x1x32xf32> to vector<1x32xf32>
    %1287 = vector.broadcast %1286 : vector<1x32xf32> to vector<8x32xf32>
    %1288 = arith.mulf %1287, %1249 : vector<8x32xf32>
    %1289 = arith.addf %1248, %1288 : vector<8x32xf32>
    %1290 = vector.extract_strided_slice %1207 {offsets = [0, 4], sizes = [8, 32], strides = [1, 1]} : vector<10x36xf32> to vector<8x32xf32>
    %c20_542 = arith.constant 20 : index
    %c0_543 = arith.constant 0 : index
    %c0_544 = arith.constant 0 : index
    %1291 = vector.load %arg2[%c20_542, %c0_543, %c0_544] : memref<576x1x32xf32, #tpu.memory_space<vmem>>, vector<1x1x32xf32>
    %1292 = vector.shape_cast %1291 : vector<1x1x32xf32> to vector<1x32xf32>
    %1293 = vector.broadcast %1292 : vector<1x32xf32> to vector<8x32xf32>
    %1294 = arith.mulf %1293, %1290 : vector<8x32xf32>
    %1295 = arith.addf %1254, %1294 : vector<8x32xf32>
    %c56 = arith.constant 56 : index
    %c0_545 = arith.constant 0 : index
    %c0_546 = arith.constant 0 : index
    %1296 = vector.load %arg2[%c56, %c0_545, %c0_546] : memref<576x1x32xf32, #tpu.memory_space<vmem>>, vector<1x1x32xf32>
    %1297 = vector.shape_cast %1296 : vector<1x1x32xf32> to vector<1x32xf32>
    %1298 = vector.broadcast %1297 : vector<1x32xf32> to vector<8x32xf32>
    %1299 = arith.mulf %1298, %1290 : vector<8x32xf32>
    %1300 = arith.addf %1259, %1299 : vector<8x32xf32>
    %c92 = arith.constant 92 : index
    %c0_547 = arith.constant 0 : index
    %c0_548 = arith.constant 0 : index
    %1301 = vector.load %arg2[%c92, %c0_547, %c0_548] : memref<576x1x32xf32, #tpu.memory_space<vmem>>, vector<1x1x32xf32>
    %1302 = vector.shape_cast %1301 : vector<1x1x32xf32> to vector<1x32xf32>
    %1303 = vector.broadcast %1302 : vector<1x32xf32> to vector<8x32xf32>
    %1304 = arith.mulf %1303, %1290 : vector<8x32xf32>
    %1305 = arith.addf %1264, %1304 : vector<8x32xf32>
    %c128 = arith.constant 128 : index
    %c0_549 = arith.constant 0 : index
    %c0_550 = arith.constant 0 : index
    %1306 = vector.load %arg2[%c128, %c0_549, %c0_550] : memref<576x1x32xf32, #tpu.memory_space<vmem>>, vector<1x1x32xf32>
    %1307 = vector.shape_cast %1306 : vector<1x1x32xf32> to vector<1x32xf32>
    %1308 = vector.broadcast %1307 : vector<1x32xf32> to vector<8x32xf32>
    %1309 = arith.mulf %1308, %1290 : vector<8x32xf32>
    %1310 = arith.addf %1269, %1309 : vector<8x32xf32>
    %c164 = arith.constant 164 : index
    %c0_551 = arith.constant 0 : index
    %c0_552 = arith.constant 0 : index
    %1311 = vector.load %arg2[%c164, %c0_551, %c0_552] : memref<576x1x32xf32, #tpu.memory_space<vmem>>, vector<1x1x32xf32>
    %1312 = vector.shape_cast %1311 : vector<1x1x32xf32> to vector<1x32xf32>
    %1313 = vector.broadcast %1312 : vector<1x32xf32> to vector<8x32xf32>
    %1314 = arith.mulf %1313, %1290 : vector<8x32xf32>
    %1315 = arith.addf %1274, %1314 : vector<8x32xf32>
    %c200 = arith.constant 200 : index
    %c0_553 = arith.constant 0 : index
    %c0_554 = arith.constant 0 : index
    %1316 = vector.load %arg2[%c200, %c0_553, %c0_554] : memref<576x1x32xf32, #tpu.memory_space<vmem>>, vector<1x1x32xf32>
    %1317 = vector.shape_cast %1316 : vector<1x1x32xf32> to vector<1x32xf32>
    %1318 = vector.broadcast %1317 : vector<1x32xf32> to vector<8x32xf32>
    %1319 = arith.mulf %1318, %1290 : vector<8x32xf32>
    %1320 = arith.addf %1279, %1319 : vector<8x32xf32>
    %c236 = arith.constant 236 : index
    %c0_555 = arith.constant 0 : index
    %c0_556 = arith.constant 0 : index
    %1321 = vector.load %arg2[%c236, %c0_555, %c0_556] : memref<576x1x32xf32, #tpu.memory_space<vmem>>, vector<1x1x32xf32>
    %1322 = vector.shape_cast %1321 : vector<1x1x32xf32> to vector<1x32xf32>
    %1323 = vector.broadcast %1322 : vector<1x32xf32> to vector<8x32xf32>
    %1324 = arith.mulf %1323, %1290 : vector<8x32xf32>
    %1325 = arith.addf %1284, %1324 : vector<8x32xf32>
    %c272 = arith.constant 272 : index
    %c0_557 = arith.constant 0 : index
    %c0_558 = arith.constant 0 : index
    %1326 = vector.load %arg2[%c272, %c0_557, %c0_558] : memref<576x1x32xf32, #tpu.memory_space<vmem>>, vector<1x1x32xf32>
    %1327 = vector.shape_cast %1326 : vector<1x1x32xf32> to vector<1x32xf32>
    %1328 = vector.broadcast %1327 : vector<1x32xf32> to vector<8x32xf32>
    %1329 = arith.mulf %1328, %1290 : vector<8x32xf32>
    %1330 = arith.addf %1289, %1329 : vector<8x32xf32>
    %1331 = vector.extract_strided_slice %1207 {offsets = [1, 0], sizes = [8, 32], strides = [1, 1]} : vector<10x36xf32> to vector<8x32xf32>
    %c21_559 = arith.constant 21 : index
    %c0_560 = arith.constant 0 : index
    %c0_561 = arith.constant 0 : index
    %1332 = vector.load %arg2[%c21_559, %c0_560, %c0_561] : memref<576x1x32xf32, #tpu.memory_space<vmem>>, vector<1x1x32xf32>
    %1333 = vector.shape_cast %1332 : vector<1x1x32xf32> to vector<1x32xf32>
    %1334 = vector.broadcast %1333 : vector<1x32xf32> to vector<8x32xf32>
    %1335 = arith.mulf %1334, %1331 : vector<8x32xf32>
    %1336 = arith.addf %1295, %1335 : vector<8x32xf32>
    %c57 = arith.constant 57 : index
    %c0_562 = arith.constant 0 : index
    %c0_563 = arith.constant 0 : index
    %1337 = vector.load %arg2[%c57, %c0_562, %c0_563] : memref<576x1x32xf32, #tpu.memory_space<vmem>>, vector<1x1x32xf32>
    %1338 = vector.shape_cast %1337 : vector<1x1x32xf32> to vector<1x32xf32>
    %1339 = vector.broadcast %1338 : vector<1x32xf32> to vector<8x32xf32>
    %1340 = arith.mulf %1339, %1331 : vector<8x32xf32>
    %1341 = arith.addf %1300, %1340 : vector<8x32xf32>
    %c93 = arith.constant 93 : index
    %c0_564 = arith.constant 0 : index
    %c0_565 = arith.constant 0 : index
    %1342 = vector.load %arg2[%c93, %c0_564, %c0_565] : memref<576x1x32xf32, #tpu.memory_space<vmem>>, vector<1x1x32xf32>
    %1343 = vector.shape_cast %1342 : vector<1x1x32xf32> to vector<1x32xf32>
    %1344 = vector.broadcast %1343 : vector<1x32xf32> to vector<8x32xf32>
    %1345 = arith.mulf %1344, %1331 : vector<8x32xf32>
    %1346 = arith.addf %1305, %1345 : vector<8x32xf32>
    %c129 = arith.constant 129 : index
    %c0_566 = arith.constant 0 : index
    %c0_567 = arith.constant 0 : index
    %1347 = vector.load %arg2[%c129, %c0_566, %c0_567] : memref<576x1x32xf32, #tpu.memory_space<vmem>>, vector<1x1x32xf32>
    %1348 = vector.shape_cast %1347 : vector<1x1x32xf32> to vector<1x32xf32>
    %1349 = vector.broadcast %1348 : vector<1x32xf32> to vector<8x32xf32>
    %1350 = arith.mulf %1349, %1331 : vector<8x32xf32>
    %1351 = arith.addf %1310, %1350 : vector<8x32xf32>
    %c165 = arith.constant 165 : index
    %c0_568 = arith.constant 0 : index
    %c0_569 = arith.constant 0 : index
    %1352 = vector.load %arg2[%c165, %c0_568, %c0_569] : memref<576x1x32xf32, #tpu.memory_space<vmem>>, vector<1x1x32xf32>
    %1353 = vector.shape_cast %1352 : vector<1x1x32xf32> to vector<1x32xf32>
    %1354 = vector.broadcast %1353 : vector<1x32xf32> to vector<8x32xf32>
    %1355 = arith.mulf %1354, %1331 : vector<8x32xf32>
    %1356 = arith.addf %1315, %1355 : vector<8x32xf32>
    %c201 = arith.constant 201 : index
    %c0_570 = arith.constant 0 : index
    %c0_571 = arith.constant 0 : index
    %1357 = vector.load %arg2[%c201, %c0_570, %c0_571] : memref<576x1x32xf32, #tpu.memory_space<vmem>>, vector<1x1x32xf32>
    %1358 = vector.shape_cast %1357 : vector<1x1x32xf32> to vector<1x32xf32>
    %1359 = vector.broadcast %1358 : vector<1x32xf32> to vector<8x32xf32>
    %1360 = arith.mulf %1359, %1331 : vector<8x32xf32>
    %1361 = arith.addf %1320, %1360 : vector<8x32xf32>
    %c237 = arith.constant 237 : index
    %c0_572 = arith.constant 0 : index
    %c0_573 = arith.constant 0 : index
    %1362 = vector.load %arg2[%c237, %c0_572, %c0_573] : memref<576x1x32xf32, #tpu.memory_space<vmem>>, vector<1x1x32xf32>
    %1363 = vector.shape_cast %1362 : vector<1x1x32xf32> to vector<1x32xf32>
    %1364 = vector.broadcast %1363 : vector<1x32xf32> to vector<8x32xf32>
    %1365 = arith.mulf %1364, %1331 : vector<8x32xf32>
    %1366 = arith.addf %1325, %1365 : vector<8x32xf32>
    %c273 = arith.constant 273 : index
    %c0_574 = arith.constant 0 : index
    %c0_575 = arith.constant 0 : index
    %1367 = vector.load %arg2[%c273, %c0_574, %c0_575] : memref<576x1x32xf32, #tpu.memory_space<vmem>>, vector<1x1x32xf32>
    %1368 = vector.shape_cast %1367 : vector<1x1x32xf32> to vector<1x32xf32>
    %1369 = vector.broadcast %1368 : vector<1x32xf32> to vector<8x32xf32>
    %1370 = arith.mulf %1369, %1331 : vector<8x32xf32>
    %1371 = arith.addf %1330, %1370 : vector<8x32xf32>
    %c309 = arith.constant 309 : index
    %c0_576 = arith.constant 0 : index
    %c0_577 = arith.constant 0 : index
    %1372 = vector.load %arg2[%c309, %c0_576, %c0_577] : memref<576x1x32xf32, #tpu.memory_space<vmem>>, vector<1x1x32xf32>
    %1373 = vector.shape_cast %1372 : vector<1x1x32xf32> to vector<1x32xf32>
    %1374 = vector.broadcast %1373 : vector<1x32xf32> to vector<8x32xf32>
    %1375 = arith.mulf %1374, %1331 : vector<8x32xf32>
    %1376 = arith.addf %1160, %1375 : vector<8x32xf32>
    %c345 = arith.constant 345 : index
    %c0_578 = arith.constant 0 : index
    %c0_579 = arith.constant 0 : index
    %1377 = vector.load %arg2[%c345, %c0_578, %c0_579] : memref<576x1x32xf32, #tpu.memory_space<vmem>>, vector<1x1x32xf32>
    %1378 = vector.shape_cast %1377 : vector<1x1x32xf32> to vector<1x32xf32>
    %1379 = vector.broadcast %1378 : vector<1x32xf32> to vector<8x32xf32>
    %1380 = arith.mulf %1379, %1331 : vector<8x32xf32>
    %1381 = arith.addf %1165, %1380 : vector<8x32xf32>
    %c381 = arith.constant 381 : index
    %c0_580 = arith.constant 0 : index
    %c0_581 = arith.constant 0 : index
    %1382 = vector.load %arg2[%c381, %c0_580, %c0_581] : memref<576x1x32xf32, #tpu.memory_space<vmem>>, vector<1x1x32xf32>
    %1383 = vector.shape_cast %1382 : vector<1x1x32xf32> to vector<1x32xf32>
    %1384 = vector.broadcast %1383 : vector<1x32xf32> to vector<8x32xf32>
    %1385 = arith.mulf %1384, %1331 : vector<8x32xf32>
    %1386 = arith.addf %1170, %1385 : vector<8x32xf32>
    %c417 = arith.constant 417 : index
    %c0_582 = arith.constant 0 : index
    %c0_583 = arith.constant 0 : index
    %1387 = vector.load %arg2[%c417, %c0_582, %c0_583] : memref<576x1x32xf32, #tpu.memory_space<vmem>>, vector<1x1x32xf32>
    %1388 = vector.shape_cast %1387 : vector<1x1x32xf32> to vector<1x32xf32>
    %1389 = vector.broadcast %1388 : vector<1x32xf32> to vector<8x32xf32>
    %1390 = arith.mulf %1389, %1331 : vector<8x32xf32>
    %1391 = arith.addf %1175, %1390 : vector<8x32xf32>
    %c453 = arith.constant 453 : index
    %c0_584 = arith.constant 0 : index
    %c0_585 = arith.constant 0 : index
    %1392 = vector.load %arg2[%c453, %c0_584, %c0_585] : memref<576x1x32xf32, #tpu.memory_space<vmem>>, vector<1x1x32xf32>
    %1393 = vector.shape_cast %1392 : vector<1x1x32xf32> to vector<1x32xf32>
    %1394 = vector.broadcast %1393 : vector<1x32xf32> to vector<8x32xf32>
    %1395 = arith.mulf %1394, %1331 : vector<8x32xf32>
    %1396 = arith.addf %1180, %1395 : vector<8x32xf32>
    %c489 = arith.constant 489 : index
    %c0_586 = arith.constant 0 : index
    %c0_587 = arith.constant 0 : index
    %1397 = vector.load %arg2[%c489, %c0_586, %c0_587] : memref<576x1x32xf32, #tpu.memory_space<vmem>>, vector<1x1x32xf32>
    %1398 = vector.shape_cast %1397 : vector<1x1x32xf32> to vector<1x32xf32>
    %1399 = vector.broadcast %1398 : vector<1x32xf32> to vector<8x32xf32>
    %1400 = arith.mulf %1399, %1331 : vector<8x32xf32>
    %1401 = arith.addf %1185, %1400 : vector<8x32xf32>
    %c525 = arith.constant 525 : index
    %c0_588 = arith.constant 0 : index
    %c0_589 = arith.constant 0 : index
    %1402 = vector.load %arg2[%c525, %c0_588, %c0_589] : memref<576x1x32xf32, #tpu.memory_space<vmem>>, vector<1x1x32xf32>
    %1403 = vector.shape_cast %1402 : vector<1x1x32xf32> to vector<1x32xf32>
    %1404 = vector.broadcast %1403 : vector<1x32xf32> to vector<8x32xf32>
    %1405 = arith.mulf %1404, %1331 : vector<8x32xf32>
    %1406 = arith.addf %1190, %1405 : vector<8x32xf32>
    %c561 = arith.constant 561 : index
    %c0_590 = arith.constant 0 : index
    %c0_591 = arith.constant 0 : index
    %1407 = vector.load %arg2[%c561, %c0_590, %c0_591] : memref<576x1x32xf32, #tpu.memory_space<vmem>>, vector<1x1x32xf32>
    %1408 = vector.shape_cast %1407 : vector<1x1x32xf32> to vector<1x32xf32>
    %1409 = vector.broadcast %1408 : vector<1x32xf32> to vector<8x32xf32>
    %1410 = arith.mulf %1409, %1331 : vector<8x32xf32>
    %1411 = arith.addf %1195, %1410 : vector<8x32xf32>
    %1412 = vector.extract_strided_slice %1207 {offsets = [1, 2], sizes = [8, 32], strides = [1, 1]} : vector<10x36xf32> to vector<8x32xf32>
    %c22_592 = arith.constant 22 : index
    %c0_593 = arith.constant 0 : index
    %c0_594 = arith.constant 0 : index
    %1413 = vector.load %arg2[%c22_592, %c0_593, %c0_594] : memref<576x1x32xf32, #tpu.memory_space<vmem>>, vector<1x1x32xf32>
    %1414 = vector.shape_cast %1413 : vector<1x1x32xf32> to vector<1x32xf32>
    %1415 = vector.broadcast %1414 : vector<1x32xf32> to vector<8x32xf32>
    %1416 = arith.mulf %1415, %1412 : vector<8x32xf32>
    %1417 = arith.addf %1336, %1416 : vector<8x32xf32>
    %c58 = arith.constant 58 : index
    %c0_595 = arith.constant 0 : index
    %c0_596 = arith.constant 0 : index
    %1418 = vector.load %arg2[%c58, %c0_595, %c0_596] : memref<576x1x32xf32, #tpu.memory_space<vmem>>, vector<1x1x32xf32>
    %1419 = vector.shape_cast %1418 : vector<1x1x32xf32> to vector<1x32xf32>
    %1420 = vector.broadcast %1419 : vector<1x32xf32> to vector<8x32xf32>
    %1421 = arith.mulf %1420, %1412 : vector<8x32xf32>
    %1422 = arith.addf %1341, %1421 : vector<8x32xf32>
    %c94 = arith.constant 94 : index
    %c0_597 = arith.constant 0 : index
    %c0_598 = arith.constant 0 : index
    %1423 = vector.load %arg2[%c94, %c0_597, %c0_598] : memref<576x1x32xf32, #tpu.memory_space<vmem>>, vector<1x1x32xf32>
    %1424 = vector.shape_cast %1423 : vector<1x1x32xf32> to vector<1x32xf32>
    %1425 = vector.broadcast %1424 : vector<1x32xf32> to vector<8x32xf32>
    %1426 = arith.mulf %1425, %1412 : vector<8x32xf32>
    %1427 = arith.addf %1346, %1426 : vector<8x32xf32>
    %c130 = arith.constant 130 : index
    %c0_599 = arith.constant 0 : index
    %c0_600 = arith.constant 0 : index
    %1428 = vector.load %arg2[%c130, %c0_599, %c0_600] : memref<576x1x32xf32, #tpu.memory_space<vmem>>, vector<1x1x32xf32>
    %1429 = vector.shape_cast %1428 : vector<1x1x32xf32> to vector<1x32xf32>
    %1430 = vector.broadcast %1429 : vector<1x32xf32> to vector<8x32xf32>
    %1431 = arith.mulf %1430, %1412 : vector<8x32xf32>
    %1432 = arith.addf %1351, %1431 : vector<8x32xf32>
    %c166 = arith.constant 166 : index
    %c0_601 = arith.constant 0 : index
    %c0_602 = arith.constant 0 : index
    %1433 = vector.load %arg2[%c166, %c0_601, %c0_602] : memref<576x1x32xf32, #tpu.memory_space<vmem>>, vector<1x1x32xf32>
    %1434 = vector.shape_cast %1433 : vector<1x1x32xf32> to vector<1x32xf32>
    %1435 = vector.broadcast %1434 : vector<1x32xf32> to vector<8x32xf32>
    %1436 = arith.mulf %1435, %1412 : vector<8x32xf32>
    %1437 = arith.addf %1356, %1436 : vector<8x32xf32>
    %c202 = arith.constant 202 : index
    %c0_603 = arith.constant 0 : index
    %c0_604 = arith.constant 0 : index
    %1438 = vector.load %arg2[%c202, %c0_603, %c0_604] : memref<576x1x32xf32, #tpu.memory_space<vmem>>, vector<1x1x32xf32>
    %1439 = vector.shape_cast %1438 : vector<1x1x32xf32> to vector<1x32xf32>
    %1440 = vector.broadcast %1439 : vector<1x32xf32> to vector<8x32xf32>
    %1441 = arith.mulf %1440, %1412 : vector<8x32xf32>
    %1442 = arith.addf %1361, %1441 : vector<8x32xf32>
    %c238 = arith.constant 238 : index
    %c0_605 = arith.constant 0 : index
    %c0_606 = arith.constant 0 : index
    %1443 = vector.load %arg2[%c238, %c0_605, %c0_606] : memref<576x1x32xf32, #tpu.memory_space<vmem>>, vector<1x1x32xf32>
    %1444 = vector.shape_cast %1443 : vector<1x1x32xf32> to vector<1x32xf32>
    %1445 = vector.broadcast %1444 : vector<1x32xf32> to vector<8x32xf32>
    %1446 = arith.mulf %1445, %1412 : vector<8x32xf32>
    %1447 = arith.addf %1366, %1446 : vector<8x32xf32>
    %c274 = arith.constant 274 : index
    %c0_607 = arith.constant 0 : index
    %c0_608 = arith.constant 0 : index
    %1448 = vector.load %arg2[%c274, %c0_607, %c0_608] : memref<576x1x32xf32, #tpu.memory_space<vmem>>, vector<1x1x32xf32>
    %1449 = vector.shape_cast %1448 : vector<1x1x32xf32> to vector<1x32xf32>
    %1450 = vector.broadcast %1449 : vector<1x32xf32> to vector<8x32xf32>
    %1451 = arith.mulf %1450, %1412 : vector<8x32xf32>
    %1452 = arith.addf %1371, %1451 : vector<8x32xf32>
    %c310 = arith.constant 310 : index
    %c0_609 = arith.constant 0 : index
    %c0_610 = arith.constant 0 : index
    %1453 = vector.load %arg2[%c310, %c0_609, %c0_610] : memref<576x1x32xf32, #tpu.memory_space<vmem>>, vector<1x1x32xf32>
    %1454 = vector.shape_cast %1453 : vector<1x1x32xf32> to vector<1x32xf32>
    %1455 = vector.broadcast %1454 : vector<1x32xf32> to vector<8x32xf32>
    %1456 = arith.mulf %1455, %1412 : vector<8x32xf32>
    %1457 = arith.addf %1376, %1456 : vector<8x32xf32>
    %c346 = arith.constant 346 : index
    %c0_611 = arith.constant 0 : index
    %c0_612 = arith.constant 0 : index
    %1458 = vector.load %arg2[%c346, %c0_611, %c0_612] : memref<576x1x32xf32, #tpu.memory_space<vmem>>, vector<1x1x32xf32>
    %1459 = vector.shape_cast %1458 : vector<1x1x32xf32> to vector<1x32xf32>
    %1460 = vector.broadcast %1459 : vector<1x32xf32> to vector<8x32xf32>
    %1461 = arith.mulf %1460, %1412 : vector<8x32xf32>
    %1462 = arith.addf %1381, %1461 : vector<8x32xf32>
    %c382 = arith.constant 382 : index
    %c0_613 = arith.constant 0 : index
    %c0_614 = arith.constant 0 : index
    %1463 = vector.load %arg2[%c382, %c0_613, %c0_614] : memref<576x1x32xf32, #tpu.memory_space<vmem>>, vector<1x1x32xf32>
    %1464 = vector.shape_cast %1463 : vector<1x1x32xf32> to vector<1x32xf32>
    %1465 = vector.broadcast %1464 : vector<1x32xf32> to vector<8x32xf32>
    %1466 = arith.mulf %1465, %1412 : vector<8x32xf32>
    %1467 = arith.addf %1386, %1466 : vector<8x32xf32>
    %c418 = arith.constant 418 : index
    %c0_615 = arith.constant 0 : index
    %c0_616 = arith.constant 0 : index
    %1468 = vector.load %arg2[%c418, %c0_615, %c0_616] : memref<576x1x32xf32, #tpu.memory_space<vmem>>, vector<1x1x32xf32>
    %1469 = vector.shape_cast %1468 : vector<1x1x32xf32> to vector<1x32xf32>
    %1470 = vector.broadcast %1469 : vector<1x32xf32> to vector<8x32xf32>
    %1471 = arith.mulf %1470, %1412 : vector<8x32xf32>
    %1472 = arith.addf %1391, %1471 : vector<8x32xf32>
    %c454 = arith.constant 454 : index
    %c0_617 = arith.constant 0 : index
    %c0_618 = arith.constant 0 : index
    %1473 = vector.load %arg2[%c454, %c0_617, %c0_618] : memref<576x1x32xf32, #tpu.memory_space<vmem>>, vector<1x1x32xf32>
    %1474 = vector.shape_cast %1473 : vector<1x1x32xf32> to vector<1x32xf32>
    %1475 = vector.broadcast %1474 : vector<1x32xf32> to vector<8x32xf32>
    %1476 = arith.mulf %1475, %1412 : vector<8x32xf32>
    %1477 = arith.addf %1396, %1476 : vector<8x32xf32>
    %c490 = arith.constant 490 : index
    %c0_619 = arith.constant 0 : index
    %c0_620 = arith.constant 0 : index
    %1478 = vector.load %arg2[%c490, %c0_619, %c0_620] : memref<576x1x32xf32, #tpu.memory_space<vmem>>, vector<1x1x32xf32>
    %1479 = vector.shape_cast %1478 : vector<1x1x32xf32> to vector<1x32xf32>
    %1480 = vector.broadcast %1479 : vector<1x32xf32> to vector<8x32xf32>
    %1481 = arith.mulf %1480, %1412 : vector<8x32xf32>
    %1482 = arith.addf %1401, %1481 : vector<8x32xf32>
    %c526 = arith.constant 526 : index
    %c0_621 = arith.constant 0 : index
    %c0_622 = arith.constant 0 : index
    %1483 = vector.load %arg2[%c526, %c0_621, %c0_622] : memref<576x1x32xf32, #tpu.memory_space<vmem>>, vector<1x1x32xf32>
    %1484 = vector.shape_cast %1483 : vector<1x1x32xf32> to vector<1x32xf32>
    %1485 = vector.broadcast %1484 : vector<1x32xf32> to vector<8x32xf32>
    %1486 = arith.mulf %1485, %1412 : vector<8x32xf32>
    %1487 = arith.addf %1406, %1486 : vector<8x32xf32>
    %c562 = arith.constant 562 : index
    %c0_623 = arith.constant 0 : index
    %c0_624 = arith.constant 0 : index
    %1488 = vector.load %arg2[%c562, %c0_623, %c0_624] : memref<576x1x32xf32, #tpu.memory_space<vmem>>, vector<1x1x32xf32>
    %1489 = vector.shape_cast %1488 : vector<1x1x32xf32> to vector<1x32xf32>
    %1490 = vector.broadcast %1489 : vector<1x32xf32> to vector<8x32xf32>
    %1491 = arith.mulf %1490, %1412 : vector<8x32xf32>
    %1492 = arith.addf %1411, %1491 : vector<8x32xf32>
    %1493 = vector.extract_strided_slice %1207 {offsets = [1, 4], sizes = [8, 32], strides = [1, 1]} : vector<10x36xf32> to vector<8x32xf32>
    %c23_625 = arith.constant 23 : index
    %c0_626 = arith.constant 0 : index
    %c0_627 = arith.constant 0 : index
    %1494 = vector.load %arg2[%c23_625, %c0_626, %c0_627] : memref<576x1x32xf32, #tpu.memory_space<vmem>>, vector<1x1x32xf32>
    %1495 = vector.shape_cast %1494 : vector<1x1x32xf32> to vector<1x32xf32>
    %1496 = vector.broadcast %1495 : vector<1x32xf32> to vector<8x32xf32>
    %1497 = arith.mulf %1496, %1493 : vector<8x32xf32>
    %1498 = arith.addf %1417, %1497 : vector<8x32xf32>
    %c59 = arith.constant 59 : index
    %c0_628 = arith.constant 0 : index
    %c0_629 = arith.constant 0 : index
    %1499 = vector.load %arg2[%c59, %c0_628, %c0_629] : memref<576x1x32xf32, #tpu.memory_space<vmem>>, vector<1x1x32xf32>
    %1500 = vector.shape_cast %1499 : vector<1x1x32xf32> to vector<1x32xf32>
    %1501 = vector.broadcast %1500 : vector<1x32xf32> to vector<8x32xf32>
    %1502 = arith.mulf %1501, %1493 : vector<8x32xf32>
    %1503 = arith.addf %1422, %1502 : vector<8x32xf32>
    %c95 = arith.constant 95 : index
    %c0_630 = arith.constant 0 : index
    %c0_631 = arith.constant 0 : index
    %1504 = vector.load %arg2[%c95, %c0_630, %c0_631] : memref<576x1x32xf32, #tpu.memory_space<vmem>>, vector<1x1x32xf32>
    %1505 = vector.shape_cast %1504 : vector<1x1x32xf32> to vector<1x32xf32>
    %1506 = vector.broadcast %1505 : vector<1x32xf32> to vector<8x32xf32>
    %1507 = arith.mulf %1506, %1493 : vector<8x32xf32>
    %1508 = arith.addf %1427, %1507 : vector<8x32xf32>
    %c131 = arith.constant 131 : index
    %c0_632 = arith.constant 0 : index
    %c0_633 = arith.constant 0 : index
    %1509 = vector.load %arg2[%c131, %c0_632, %c0_633] : memref<576x1x32xf32, #tpu.memory_space<vmem>>, vector<1x1x32xf32>
    %1510 = vector.shape_cast %1509 : vector<1x1x32xf32> to vector<1x32xf32>
    %1511 = vector.broadcast %1510 : vector<1x32xf32> to vector<8x32xf32>
    %1512 = arith.mulf %1511, %1493 : vector<8x32xf32>
    %1513 = arith.addf %1432, %1512 : vector<8x32xf32>
    %c167 = arith.constant 167 : index
    %c0_634 = arith.constant 0 : index
    %c0_635 = arith.constant 0 : index
    %1514 = vector.load %arg2[%c167, %c0_634, %c0_635] : memref<576x1x32xf32, #tpu.memory_space<vmem>>, vector<1x1x32xf32>
    %1515 = vector.shape_cast %1514 : vector<1x1x32xf32> to vector<1x32xf32>
    %1516 = vector.broadcast %1515 : vector<1x32xf32> to vector<8x32xf32>
    %1517 = arith.mulf %1516, %1493 : vector<8x32xf32>
    %1518 = arith.addf %1437, %1517 : vector<8x32xf32>
    %c203 = arith.constant 203 : index
    %c0_636 = arith.constant 0 : index
    %c0_637 = arith.constant 0 : index
    %1519 = vector.load %arg2[%c203, %c0_636, %c0_637] : memref<576x1x32xf32, #tpu.memory_space<vmem>>, vector<1x1x32xf32>
    %1520 = vector.shape_cast %1519 : vector<1x1x32xf32> to vector<1x32xf32>
    %1521 = vector.broadcast %1520 : vector<1x32xf32> to vector<8x32xf32>
    %1522 = arith.mulf %1521, %1493 : vector<8x32xf32>
    %1523 = arith.addf %1442, %1522 : vector<8x32xf32>
    %c239 = arith.constant 239 : index
    %c0_638 = arith.constant 0 : index
    %c0_639 = arith.constant 0 : index
    %1524 = vector.load %arg2[%c239, %c0_638, %c0_639] : memref<576x1x32xf32, #tpu.memory_space<vmem>>, vector<1x1x32xf32>
    %1525 = vector.shape_cast %1524 : vector<1x1x32xf32> to vector<1x32xf32>
    %1526 = vector.broadcast %1525 : vector<1x32xf32> to vector<8x32xf32>
    %1527 = arith.mulf %1526, %1493 : vector<8x32xf32>
    %1528 = arith.addf %1447, %1527 : vector<8x32xf32>
    %c275 = arith.constant 275 : index
    %c0_640 = arith.constant 0 : index
    %c0_641 = arith.constant 0 : index
    %1529 = vector.load %arg2[%c275, %c0_640, %c0_641] : memref<576x1x32xf32, #tpu.memory_space<vmem>>, vector<1x1x32xf32>
    %1530 = vector.shape_cast %1529 : vector<1x1x32xf32> to vector<1x32xf32>
    %1531 = vector.broadcast %1530 : vector<1x32xf32> to vector<8x32xf32>
    %1532 = arith.mulf %1531, %1493 : vector<8x32xf32>
    %1533 = arith.addf %1452, %1532 : vector<8x32xf32>
    %c311 = arith.constant 311 : index
    %c0_642 = arith.constant 0 : index
    %c0_643 = arith.constant 0 : index
    %1534 = vector.load %arg2[%c311, %c0_642, %c0_643] : memref<576x1x32xf32, #tpu.memory_space<vmem>>, vector<1x1x32xf32>
    %1535 = vector.shape_cast %1534 : vector<1x1x32xf32> to vector<1x32xf32>
    %1536 = vector.broadcast %1535 : vector<1x32xf32> to vector<8x32xf32>
    %1537 = arith.mulf %1536, %1493 : vector<8x32xf32>
    %1538 = arith.addf %1457, %1537 : vector<8x32xf32>
    %c347 = arith.constant 347 : index
    %c0_644 = arith.constant 0 : index
    %c0_645 = arith.constant 0 : index
    %1539 = vector.load %arg2[%c347, %c0_644, %c0_645] : memref<576x1x32xf32, #tpu.memory_space<vmem>>, vector<1x1x32xf32>
    %1540 = vector.shape_cast %1539 : vector<1x1x32xf32> to vector<1x32xf32>
    %1541 = vector.broadcast %1540 : vector<1x32xf32> to vector<8x32xf32>
    %1542 = arith.mulf %1541, %1493 : vector<8x32xf32>
    %1543 = arith.addf %1462, %1542 : vector<8x32xf32>
    %c383 = arith.constant 383 : index
    %c0_646 = arith.constant 0 : index
    %c0_647 = arith.constant 0 : index
    %1544 = vector.load %arg2[%c383, %c0_646, %c0_647] : memref<576x1x32xf32, #tpu.memory_space<vmem>>, vector<1x1x32xf32>
    %1545 = vector.shape_cast %1544 : vector<1x1x32xf32> to vector<1x32xf32>
    %1546 = vector.broadcast %1545 : vector<1x32xf32> to vector<8x32xf32>
    %1547 = arith.mulf %1546, %1493 : vector<8x32xf32>
    %1548 = arith.addf %1467, %1547 : vector<8x32xf32>
    %c419 = arith.constant 419 : index
    %c0_648 = arith.constant 0 : index
    %c0_649 = arith.constant 0 : index
    %1549 = vector.load %arg2[%c419, %c0_648, %c0_649] : memref<576x1x32xf32, #tpu.memory_space<vmem>>, vector<1x1x32xf32>
    %1550 = vector.shape_cast %1549 : vector<1x1x32xf32> to vector<1x32xf32>
    %1551 = vector.broadcast %1550 : vector<1x32xf32> to vector<8x32xf32>
    %1552 = arith.mulf %1551, %1493 : vector<8x32xf32>
    %1553 = arith.addf %1472, %1552 : vector<8x32xf32>
    %c455 = arith.constant 455 : index
    %c0_650 = arith.constant 0 : index
    %c0_651 = arith.constant 0 : index
    %1554 = vector.load %arg2[%c455, %c0_650, %c0_651] : memref<576x1x32xf32, #tpu.memory_space<vmem>>, vector<1x1x32xf32>
    %1555 = vector.shape_cast %1554 : vector<1x1x32xf32> to vector<1x32xf32>
    %1556 = vector.broadcast %1555 : vector<1x32xf32> to vector<8x32xf32>
    %1557 = arith.mulf %1556, %1493 : vector<8x32xf32>
    %1558 = arith.addf %1477, %1557 : vector<8x32xf32>
    %c491 = arith.constant 491 : index
    %c0_652 = arith.constant 0 : index
    %c0_653 = arith.constant 0 : index
    %1559 = vector.load %arg2[%c491, %c0_652, %c0_653] : memref<576x1x32xf32, #tpu.memory_space<vmem>>, vector<1x1x32xf32>
    %1560 = vector.shape_cast %1559 : vector<1x1x32xf32> to vector<1x32xf32>
    %1561 = vector.broadcast %1560 : vector<1x32xf32> to vector<8x32xf32>
    %1562 = arith.mulf %1561, %1493 : vector<8x32xf32>
    %1563 = arith.addf %1482, %1562 : vector<8x32xf32>
    %c527 = arith.constant 527 : index
    %c0_654 = arith.constant 0 : index
    %c0_655 = arith.constant 0 : index
    %1564 = vector.load %arg2[%c527, %c0_654, %c0_655] : memref<576x1x32xf32, #tpu.memory_space<vmem>>, vector<1x1x32xf32>
    %1565 = vector.shape_cast %1564 : vector<1x1x32xf32> to vector<1x32xf32>
    %1566 = vector.broadcast %1565 : vector<1x32xf32> to vector<8x32xf32>
    %1567 = arith.mulf %1566, %1493 : vector<8x32xf32>
    %1568 = arith.addf %1487, %1567 : vector<8x32xf32>
    %c563 = arith.constant 563 : index
    %c0_656 = arith.constant 0 : index
    %c0_657 = arith.constant 0 : index
    %1569 = vector.load %arg2[%c563, %c0_656, %c0_657] : memref<576x1x32xf32, #tpu.memory_space<vmem>>, vector<1x1x32xf32>
    %1570 = vector.shape_cast %1569 : vector<1x1x32xf32> to vector<1x32xf32>
    %1571 = vector.broadcast %1570 : vector<1x32xf32> to vector<8x32xf32>
    %1572 = arith.mulf %1571, %1493 : vector<8x32xf32>
    %1573 = arith.addf %1492, %1572 : vector<8x32xf32>
    %1574 = vector.extract_strided_slice %1207 {offsets = [2, 0], sizes = [8, 32], strides = [1, 1]} : vector<10x36xf32> to vector<8x32xf32>
    %c312 = arith.constant 312 : index
    %c0_658 = arith.constant 0 : index
    %c0_659 = arith.constant 0 : index
    %1575 = vector.load %arg2[%c312, %c0_658, %c0_659] : memref<576x1x32xf32, #tpu.memory_space<vmem>>, vector<1x1x32xf32>
    %1576 = vector.shape_cast %1575 : vector<1x1x32xf32> to vector<1x32xf32>
    %1577 = vector.broadcast %1576 : vector<1x32xf32> to vector<8x32xf32>
    %1578 = arith.mulf %1577, %1574 : vector<8x32xf32>
    %1579 = arith.addf %1538, %1578 : vector<8x32xf32>
    %c348 = arith.constant 348 : index
    %c0_660 = arith.constant 0 : index
    %c0_661 = arith.constant 0 : index
    %1580 = vector.load %arg2[%c348, %c0_660, %c0_661] : memref<576x1x32xf32, #tpu.memory_space<vmem>>, vector<1x1x32xf32>
    %1581 = vector.shape_cast %1580 : vector<1x1x32xf32> to vector<1x32xf32>
    %1582 = vector.broadcast %1581 : vector<1x32xf32> to vector<8x32xf32>
    %1583 = arith.mulf %1582, %1574 : vector<8x32xf32>
    %1584 = arith.addf %1543, %1583 : vector<8x32xf32>
    %c384 = arith.constant 384 : index
    %c0_662 = arith.constant 0 : index
    %c0_663 = arith.constant 0 : index
    %1585 = vector.load %arg2[%c384, %c0_662, %c0_663] : memref<576x1x32xf32, #tpu.memory_space<vmem>>, vector<1x1x32xf32>
    %1586 = vector.shape_cast %1585 : vector<1x1x32xf32> to vector<1x32xf32>
    %1587 = vector.broadcast %1586 : vector<1x32xf32> to vector<8x32xf32>
    %1588 = arith.mulf %1587, %1574 : vector<8x32xf32>
    %1589 = arith.addf %1548, %1588 : vector<8x32xf32>
    %c420 = arith.constant 420 : index
    %c0_664 = arith.constant 0 : index
    %c0_665 = arith.constant 0 : index
    %1590 = vector.load %arg2[%c420, %c0_664, %c0_665] : memref<576x1x32xf32, #tpu.memory_space<vmem>>, vector<1x1x32xf32>
    %1591 = vector.shape_cast %1590 : vector<1x1x32xf32> to vector<1x32xf32>
    %1592 = vector.broadcast %1591 : vector<1x32xf32> to vector<8x32xf32>
    %1593 = arith.mulf %1592, %1574 : vector<8x32xf32>
    %1594 = arith.addf %1553, %1593 : vector<8x32xf32>
    %c456 = arith.constant 456 : index
    %c0_666 = arith.constant 0 : index
    %c0_667 = arith.constant 0 : index
    %1595 = vector.load %arg2[%c456, %c0_666, %c0_667] : memref<576x1x32xf32, #tpu.memory_space<vmem>>, vector<1x1x32xf32>
    %1596 = vector.shape_cast %1595 : vector<1x1x32xf32> to vector<1x32xf32>
    %1597 = vector.broadcast %1596 : vector<1x32xf32> to vector<8x32xf32>
    %1598 = arith.mulf %1597, %1574 : vector<8x32xf32>
    %1599 = arith.addf %1558, %1598 : vector<8x32xf32>
    %c492 = arith.constant 492 : index
    %c0_668 = arith.constant 0 : index
    %c0_669 = arith.constant 0 : index
    %1600 = vector.load %arg2[%c492, %c0_668, %c0_669] : memref<576x1x32xf32, #tpu.memory_space<vmem>>, vector<1x1x32xf32>
    %1601 = vector.shape_cast %1600 : vector<1x1x32xf32> to vector<1x32xf32>
    %1602 = vector.broadcast %1601 : vector<1x32xf32> to vector<8x32xf32>
    %1603 = arith.mulf %1602, %1574 : vector<8x32xf32>
    %1604 = arith.addf %1563, %1603 : vector<8x32xf32>
    %c528 = arith.constant 528 : index
    %c0_670 = arith.constant 0 : index
    %c0_671 = arith.constant 0 : index
    %1605 = vector.load %arg2[%c528, %c0_670, %c0_671] : memref<576x1x32xf32, #tpu.memory_space<vmem>>, vector<1x1x32xf32>
    %1606 = vector.shape_cast %1605 : vector<1x1x32xf32> to vector<1x32xf32>
    %1607 = vector.broadcast %1606 : vector<1x32xf32> to vector<8x32xf32>
    %1608 = arith.mulf %1607, %1574 : vector<8x32xf32>
    %1609 = arith.addf %1568, %1608 : vector<8x32xf32>
    %c564 = arith.constant 564 : index
    %c0_672 = arith.constant 0 : index
    %c0_673 = arith.constant 0 : index
    %1610 = vector.load %arg2[%c564, %c0_672, %c0_673] : memref<576x1x32xf32, #tpu.memory_space<vmem>>, vector<1x1x32xf32>
    %1611 = vector.shape_cast %1610 : vector<1x1x32xf32> to vector<1x32xf32>
    %1612 = vector.broadcast %1611 : vector<1x32xf32> to vector<8x32xf32>
    %1613 = arith.mulf %1612, %1574 : vector<8x32xf32>
    %1614 = arith.addf %1573, %1613 : vector<8x32xf32>
    %1615 = vector.extract_strided_slice %1207 {offsets = [2, 2], sizes = [8, 32], strides = [1, 1]} : vector<10x36xf32> to vector<8x32xf32>
    %c313 = arith.constant 313 : index
    %c0_674 = arith.constant 0 : index
    %c0_675 = arith.constant 0 : index
    %1616 = vector.load %arg2[%c313, %c0_674, %c0_675] : memref<576x1x32xf32, #tpu.memory_space<vmem>>, vector<1x1x32xf32>
    %1617 = vector.shape_cast %1616 : vector<1x1x32xf32> to vector<1x32xf32>
    %1618 = vector.broadcast %1617 : vector<1x32xf32> to vector<8x32xf32>
    %1619 = arith.mulf %1618, %1615 : vector<8x32xf32>
    %1620 = arith.addf %1579, %1619 : vector<8x32xf32>
    %c349 = arith.constant 349 : index
    %c0_676 = arith.constant 0 : index
    %c0_677 = arith.constant 0 : index
    %1621 = vector.load %arg2[%c349, %c0_676, %c0_677] : memref<576x1x32xf32, #tpu.memory_space<vmem>>, vector<1x1x32xf32>
    %1622 = vector.shape_cast %1621 : vector<1x1x32xf32> to vector<1x32xf32>
    %1623 = vector.broadcast %1622 : vector<1x32xf32> to vector<8x32xf32>
    %1624 = arith.mulf %1623, %1615 : vector<8x32xf32>
    %1625 = arith.addf %1584, %1624 : vector<8x32xf32>
    %c385 = arith.constant 385 : index
    %c0_678 = arith.constant 0 : index
    %c0_679 = arith.constant 0 : index
    %1626 = vector.load %arg2[%c385, %c0_678, %c0_679] : memref<576x1x32xf32, #tpu.memory_space<vmem>>, vector<1x1x32xf32>
    %1627 = vector.shape_cast %1626 : vector<1x1x32xf32> to vector<1x32xf32>
    %1628 = vector.broadcast %1627 : vector<1x32xf32> to vector<8x32xf32>
    %1629 = arith.mulf %1628, %1615 : vector<8x32xf32>
    %1630 = arith.addf %1589, %1629 : vector<8x32xf32>
    %c421 = arith.constant 421 : index
    %c0_680 = arith.constant 0 : index
    %c0_681 = arith.constant 0 : index
    %1631 = vector.load %arg2[%c421, %c0_680, %c0_681] : memref<576x1x32xf32, #tpu.memory_space<vmem>>, vector<1x1x32xf32>
    %1632 = vector.shape_cast %1631 : vector<1x1x32xf32> to vector<1x32xf32>
    %1633 = vector.broadcast %1632 : vector<1x32xf32> to vector<8x32xf32>
    %1634 = arith.mulf %1633, %1615 : vector<8x32xf32>
    %1635 = arith.addf %1594, %1634 : vector<8x32xf32>
    %c457 = arith.constant 457 : index
    %c0_682 = arith.constant 0 : index
    %c0_683 = arith.constant 0 : index
    %1636 = vector.load %arg2[%c457, %c0_682, %c0_683] : memref<576x1x32xf32, #tpu.memory_space<vmem>>, vector<1x1x32xf32>
    %1637 = vector.shape_cast %1636 : vector<1x1x32xf32> to vector<1x32xf32>
    %1638 = vector.broadcast %1637 : vector<1x32xf32> to vector<8x32xf32>
    %1639 = arith.mulf %1638, %1615 : vector<8x32xf32>
    %1640 = arith.addf %1599, %1639 : vector<8x32xf32>
    %c493 = arith.constant 493 : index
    %c0_684 = arith.constant 0 : index
    %c0_685 = arith.constant 0 : index
    %1641 = vector.load %arg2[%c493, %c0_684, %c0_685] : memref<576x1x32xf32, #tpu.memory_space<vmem>>, vector<1x1x32xf32>
    %1642 = vector.shape_cast %1641 : vector<1x1x32xf32> to vector<1x32xf32>
    %1643 = vector.broadcast %1642 : vector<1x32xf32> to vector<8x32xf32>
    %1644 = arith.mulf %1643, %1615 : vector<8x32xf32>
    %1645 = arith.addf %1604, %1644 : vector<8x32xf32>
    %c529 = arith.constant 529 : index
    %c0_686 = arith.constant 0 : index
    %c0_687 = arith.constant 0 : index
    %1646 = vector.load %arg2[%c529, %c0_686, %c0_687] : memref<576x1x32xf32, #tpu.memory_space<vmem>>, vector<1x1x32xf32>
    %1647 = vector.shape_cast %1646 : vector<1x1x32xf32> to vector<1x32xf32>
    %1648 = vector.broadcast %1647 : vector<1x32xf32> to vector<8x32xf32>
    %1649 = arith.mulf %1648, %1615 : vector<8x32xf32>
    %1650 = arith.addf %1609, %1649 : vector<8x32xf32>
    %c565 = arith.constant 565 : index
    %c0_688 = arith.constant 0 : index
    %c0_689 = arith.constant 0 : index
    %1651 = vector.load %arg2[%c565, %c0_688, %c0_689] : memref<576x1x32xf32, #tpu.memory_space<vmem>>, vector<1x1x32xf32>
    %1652 = vector.shape_cast %1651 : vector<1x1x32xf32> to vector<1x32xf32>
    %1653 = vector.broadcast %1652 : vector<1x32xf32> to vector<8x32xf32>
    %1654 = arith.mulf %1653, %1615 : vector<8x32xf32>
    %1655 = arith.addf %1614, %1654 : vector<8x32xf32>
    %1656 = vector.extract_strided_slice %1207 {offsets = [2, 4], sizes = [8, 32], strides = [1, 1]} : vector<10x36xf32> to vector<8x32xf32>
    %c314 = arith.constant 314 : index
    %c0_690 = arith.constant 0 : index
    %c0_691 = arith.constant 0 : index
    %1657 = vector.load %arg2[%c314, %c0_690, %c0_691] : memref<576x1x32xf32, #tpu.memory_space<vmem>>, vector<1x1x32xf32>
    %1658 = vector.shape_cast %1657 : vector<1x1x32xf32> to vector<1x32xf32>
    %1659 = vector.broadcast %1658 : vector<1x32xf32> to vector<8x32xf32>
    %1660 = arith.mulf %1659, %1656 : vector<8x32xf32>
    %1661 = arith.addf %1620, %1660 : vector<8x32xf32>
    %c350 = arith.constant 350 : index
    %c0_692 = arith.constant 0 : index
    %c0_693 = arith.constant 0 : index
    %1662 = vector.load %arg2[%c350, %c0_692, %c0_693] : memref<576x1x32xf32, #tpu.memory_space<vmem>>, vector<1x1x32xf32>
    %1663 = vector.shape_cast %1662 : vector<1x1x32xf32> to vector<1x32xf32>
    %1664 = vector.broadcast %1663 : vector<1x32xf32> to vector<8x32xf32>
    %1665 = arith.mulf %1664, %1656 : vector<8x32xf32>
    %1666 = arith.addf %1625, %1665 : vector<8x32xf32>
    %c386 = arith.constant 386 : index
    %c0_694 = arith.constant 0 : index
    %c0_695 = arith.constant 0 : index
    %1667 = vector.load %arg2[%c386, %c0_694, %c0_695] : memref<576x1x32xf32, #tpu.memory_space<vmem>>, vector<1x1x32xf32>
    %1668 = vector.shape_cast %1667 : vector<1x1x32xf32> to vector<1x32xf32>
    %1669 = vector.broadcast %1668 : vector<1x32xf32> to vector<8x32xf32>
    %1670 = arith.mulf %1669, %1656 : vector<8x32xf32>
    %1671 = arith.addf %1630, %1670 : vector<8x32xf32>
    %c422 = arith.constant 422 : index
    %c0_696 = arith.constant 0 : index
    %c0_697 = arith.constant 0 : index
    %1672 = vector.load %arg2[%c422, %c0_696, %c0_697] : memref<576x1x32xf32, #tpu.memory_space<vmem>>, vector<1x1x32xf32>
    %1673 = vector.shape_cast %1672 : vector<1x1x32xf32> to vector<1x32xf32>
    %1674 = vector.broadcast %1673 : vector<1x32xf32> to vector<8x32xf32>
    %1675 = arith.mulf %1674, %1656 : vector<8x32xf32>
    %1676 = arith.addf %1635, %1675 : vector<8x32xf32>
    %c458 = arith.constant 458 : index
    %c0_698 = arith.constant 0 : index
    %c0_699 = arith.constant 0 : index
    %1677 = vector.load %arg2[%c458, %c0_698, %c0_699] : memref<576x1x32xf32, #tpu.memory_space<vmem>>, vector<1x1x32xf32>
    %1678 = vector.shape_cast %1677 : vector<1x1x32xf32> to vector<1x32xf32>
    %1679 = vector.broadcast %1678 : vector<1x32xf32> to vector<8x32xf32>
    %1680 = arith.mulf %1679, %1656 : vector<8x32xf32>
    %1681 = arith.addf %1640, %1680 : vector<8x32xf32>
    %c494 = arith.constant 494 : index
    %c0_700 = arith.constant 0 : index
    %c0_701 = arith.constant 0 : index
    %1682 = vector.load %arg2[%c494, %c0_700, %c0_701] : memref<576x1x32xf32, #tpu.memory_space<vmem>>, vector<1x1x32xf32>
    %1683 = vector.shape_cast %1682 : vector<1x1x32xf32> to vector<1x32xf32>
    %1684 = vector.broadcast %1683 : vector<1x32xf32> to vector<8x32xf32>
    %1685 = arith.mulf %1684, %1656 : vector<8x32xf32>
    %1686 = arith.addf %1645, %1685 : vector<8x32xf32>
    %c530 = arith.constant 530 : index
    %c0_702 = arith.constant 0 : index
    %c0_703 = arith.constant 0 : index
    %1687 = vector.load %arg2[%c530, %c0_702, %c0_703] : memref<576x1x32xf32, #tpu.memory_space<vmem>>, vector<1x1x32xf32>
    %1688 = vector.shape_cast %1687 : vector<1x1x32xf32> to vector<1x32xf32>
    %1689 = vector.broadcast %1688 : vector<1x32xf32> to vector<8x32xf32>
    %1690 = arith.mulf %1689, %1656 : vector<8x32xf32>
    %1691 = arith.addf %1650, %1690 : vector<8x32xf32>
    %c566 = arith.constant 566 : index
    %c0_704 = arith.constant 0 : index
    %c0_705 = arith.constant 0 : index
    %1692 = vector.load %arg2[%c566, %c0_704, %c0_705] : memref<576x1x32xf32, #tpu.memory_space<vmem>>, vector<1x1x32xf32>
    %1693 = vector.shape_cast %1692 : vector<1x1x32xf32> to vector<1x32xf32>
    %1694 = vector.broadcast %1693 : vector<1x32xf32> to vector<8x32xf32>
    %1695 = arith.mulf %1694, %1656 : vector<8x32xf32>
    %1696 = arith.addf %1655, %1695 : vector<8x32xf32>
    %c0_706 = arith.constant 0 : index
    %c3_707 = arith.constant 3 : index
    %c7_708 = arith.constant 7 : index
    %c0_709 = arith.constant 0 : index
    %1697 = vector.load %arg7[%c0_706, %c3_707, %c7_708, %c0_709] : memref<1x4x8x16xf32, #tpu.memory_space<vmem>>, vector<1x1x1x16xf32>
    %1698 = vector.shape_cast %1697 : vector<1x1x1x16xf32> to vector<1x16xf32>
    %1699 = vector.broadcast %2 : f32 to vector<1x16xf32>
    %1700 = arith.mulf %1699, %1698 : vector<1x16xf32>
    %c0_710 = arith.constant 0 : index
    %c3_711 = arith.constant 3 : index
    %c0_712 = arith.constant 0 : index
    %c0_713 = arith.constant 0 : index
    %1701 = vector.load %arg8[%c0_710, %c3_711, %c0_712, %c0_713] : memref<1x4x8x16xf32, #tpu.memory_space<vmem>>, vector<1x1x1x16xf32>
    %1702 = vector.shape_cast %1701 : vector<1x1x1x16xf32> to vector<1x16xf32>
    %1703 = vector.broadcast %5 : f32 to vector<1x16xf32>
    %1704 = arith.mulf %1703, %1702 : vector<1x16xf32>
    %c0_714 = arith.constant 0 : index
    %c3_715 = arith.constant 3 : index
    %c0_716 = arith.constant 0 : index
    %c0_717 = arith.constant 0 : index
    %1705 = vector.load %arg6[%c0_714, %c3_715, %c0_716, %c0_717] : memref<1x4x8x16xf32, #tpu.memory_space<vmem>>, vector<1x1x8x16xf32>
    %1706 = vector.shape_cast %1705 : vector<1x1x8x16xf32> to vector<8x16xf32>
    %1707 = tpu.concatenate %1700, %1706, %1704 in 0 : vector<1x16xf32>, vector<8x16xf32>, vector<1x16xf32> -> vector<10x16xf32>
    %cst_718 = arith.constant dense<0.000000e+00> : vector<10x36xf32>
    %1708 = tpu.matmul %1707, %8, %cst_718 {dimension_numbers = #tpu.dot_dimension_numbers<[1], [0], [0], [1], [0, 0, 1, 1], [], []>} : vector<10x16xf32>, vector<16x36xf32>, vector<10x36xf32> -> vector<10x36xf32>
    %1709 = vector.extract_strided_slice %1708 {offsets = [0, 0], sizes = [8, 32], strides = [1, 1]} : vector<10x36xf32> to vector<8x32xf32>
    %c27 = arith.constant 27 : index
    %c0_719 = arith.constant 0 : index
    %c0_720 = arith.constant 0 : index
    %1710 = vector.load %arg2[%c27, %c0_719, %c0_720] : memref<576x1x32xf32, #tpu.memory_space<vmem>>, vector<1x1x32xf32>
    %1711 = vector.shape_cast %1710 : vector<1x1x32xf32> to vector<1x32xf32>
    %1712 = vector.broadcast %1711 : vector<1x32xf32> to vector<8x32xf32>
    %1713 = arith.mulf %1712, %1709 : vector<8x32xf32>
    %1714 = arith.addf %1498, %1713 : vector<8x32xf32>
    %c63 = arith.constant 63 : index
    %c0_721 = arith.constant 0 : index
    %c0_722 = arith.constant 0 : index
    %1715 = vector.load %arg2[%c63, %c0_721, %c0_722] : memref<576x1x32xf32, #tpu.memory_space<vmem>>, vector<1x1x32xf32>
    %1716 = vector.shape_cast %1715 : vector<1x1x32xf32> to vector<1x32xf32>
    %1717 = vector.broadcast %1716 : vector<1x32xf32> to vector<8x32xf32>
    %1718 = arith.mulf %1717, %1709 : vector<8x32xf32>
    %1719 = arith.addf %1503, %1718 : vector<8x32xf32>
    %c99 = arith.constant 99 : index
    %c0_723 = arith.constant 0 : index
    %c0_724 = arith.constant 0 : index
    %1720 = vector.load %arg2[%c99, %c0_723, %c0_724] : memref<576x1x32xf32, #tpu.memory_space<vmem>>, vector<1x1x32xf32>
    %1721 = vector.shape_cast %1720 : vector<1x1x32xf32> to vector<1x32xf32>
    %1722 = vector.broadcast %1721 : vector<1x32xf32> to vector<8x32xf32>
    %1723 = arith.mulf %1722, %1709 : vector<8x32xf32>
    %1724 = arith.addf %1508, %1723 : vector<8x32xf32>
    %c135 = arith.constant 135 : index
    %c0_725 = arith.constant 0 : index
    %c0_726 = arith.constant 0 : index
    %1725 = vector.load %arg2[%c135, %c0_725, %c0_726] : memref<576x1x32xf32, #tpu.memory_space<vmem>>, vector<1x1x32xf32>
    %1726 = vector.shape_cast %1725 : vector<1x1x32xf32> to vector<1x32xf32>
    %1727 = vector.broadcast %1726 : vector<1x32xf32> to vector<8x32xf32>
    %1728 = arith.mulf %1727, %1709 : vector<8x32xf32>
    %1729 = arith.addf %1513, %1728 : vector<8x32xf32>
    %c171 = arith.constant 171 : index
    %c0_727 = arith.constant 0 : index
    %c0_728 = arith.constant 0 : index
    %1730 = vector.load %arg2[%c171, %c0_727, %c0_728] : memref<576x1x32xf32, #tpu.memory_space<vmem>>, vector<1x1x32xf32>
    %1731 = vector.shape_cast %1730 : vector<1x1x32xf32> to vector<1x32xf32>
    %1732 = vector.broadcast %1731 : vector<1x32xf32> to vector<8x32xf32>
    %1733 = arith.mulf %1732, %1709 : vector<8x32xf32>
    %1734 = arith.addf %1518, %1733 : vector<8x32xf32>
    %c207 = arith.constant 207 : index
    %c0_729 = arith.constant 0 : index
    %c0_730 = arith.constant 0 : index
    %1735 = vector.load %arg2[%c207, %c0_729, %c0_730] : memref<576x1x32xf32, #tpu.memory_space<vmem>>, vector<1x1x32xf32>
    %1736 = vector.shape_cast %1735 : vector<1x1x32xf32> to vector<1x32xf32>
    %1737 = vector.broadcast %1736 : vector<1x32xf32> to vector<8x32xf32>
    %1738 = arith.mulf %1737, %1709 : vector<8x32xf32>
    %1739 = arith.addf %1523, %1738 : vector<8x32xf32>
    %c243 = arith.constant 243 : index
    %c0_731 = arith.constant 0 : index
    %c0_732 = arith.constant 0 : index
    %1740 = vector.load %arg2[%c243, %c0_731, %c0_732] : memref<576x1x32xf32, #tpu.memory_space<vmem>>, vector<1x1x32xf32>
    %1741 = vector.shape_cast %1740 : vector<1x1x32xf32> to vector<1x32xf32>
    %1742 = vector.broadcast %1741 : vector<1x32xf32> to vector<8x32xf32>
    %1743 = arith.mulf %1742, %1709 : vector<8x32xf32>
    %1744 = arith.addf %1528, %1743 : vector<8x32xf32>
    %c279 = arith.constant 279 : index
    %c0_733 = arith.constant 0 : index
    %c0_734 = arith.constant 0 : index
    %1745 = vector.load %arg2[%c279, %c0_733, %c0_734] : memref<576x1x32xf32, #tpu.memory_space<vmem>>, vector<1x1x32xf32>
    %1746 = vector.shape_cast %1745 : vector<1x1x32xf32> to vector<1x32xf32>
    %1747 = vector.broadcast %1746 : vector<1x32xf32> to vector<8x32xf32>
    %1748 = arith.mulf %1747, %1709 : vector<8x32xf32>
    %1749 = arith.addf %1533, %1748 : vector<8x32xf32>
    %1750 = vector.extract_strided_slice %1708 {offsets = [0, 2], sizes = [8, 32], strides = [1, 1]} : vector<10x36xf32> to vector<8x32xf32>
    %c28 = arith.constant 28 : index
    %c0_735 = arith.constant 0 : index
    %c0_736 = arith.constant 0 : index
    %1751 = vector.load %arg2[%c28, %c0_735, %c0_736] : memref<576x1x32xf32, #tpu.memory_space<vmem>>, vector<1x1x32xf32>
    %1752 = vector.shape_cast %1751 : vector<1x1x32xf32> to vector<1x32xf32>
    %1753 = vector.broadcast %1752 : vector<1x32xf32> to vector<8x32xf32>
    %1754 = arith.mulf %1753, %1750 : vector<8x32xf32>
    %1755 = arith.addf %1714, %1754 : vector<8x32xf32>
    %c64 = arith.constant 64 : index
    %c0_737 = arith.constant 0 : index
    %c0_738 = arith.constant 0 : index
    %1756 = vector.load %arg2[%c64, %c0_737, %c0_738] : memref<576x1x32xf32, #tpu.memory_space<vmem>>, vector<1x1x32xf32>
    %1757 = vector.shape_cast %1756 : vector<1x1x32xf32> to vector<1x32xf32>
    %1758 = vector.broadcast %1757 : vector<1x32xf32> to vector<8x32xf32>
    %1759 = arith.mulf %1758, %1750 : vector<8x32xf32>
    %1760 = arith.addf %1719, %1759 : vector<8x32xf32>
    %c100 = arith.constant 100 : index
    %c0_739 = arith.constant 0 : index
    %c0_740 = arith.constant 0 : index
    %1761 = vector.load %arg2[%c100, %c0_739, %c0_740] : memref<576x1x32xf32, #tpu.memory_space<vmem>>, vector<1x1x32xf32>
    %1762 = vector.shape_cast %1761 : vector<1x1x32xf32> to vector<1x32xf32>
    %1763 = vector.broadcast %1762 : vector<1x32xf32> to vector<8x32xf32>
    %1764 = arith.mulf %1763, %1750 : vector<8x32xf32>
    %1765 = arith.addf %1724, %1764 : vector<8x32xf32>
    %c136 = arith.constant 136 : index
    %c0_741 = arith.constant 0 : index
    %c0_742 = arith.constant 0 : index
    %1766 = vector.load %arg2[%c136, %c0_741, %c0_742] : memref<576x1x32xf32, #tpu.memory_space<vmem>>, vector<1x1x32xf32>
    %1767 = vector.shape_cast %1766 : vector<1x1x32xf32> to vector<1x32xf32>
    %1768 = vector.broadcast %1767 : vector<1x32xf32> to vector<8x32xf32>
    %1769 = arith.mulf %1768, %1750 : vector<8x32xf32>
    %1770 = arith.addf %1729, %1769 : vector<8x32xf32>
    %c172 = arith.constant 172 : index
    %c0_743 = arith.constant 0 : index
    %c0_744 = arith.constant 0 : index
    %1771 = vector.load %arg2[%c172, %c0_743, %c0_744] : memref<576x1x32xf32, #tpu.memory_space<vmem>>, vector<1x1x32xf32>
    %1772 = vector.shape_cast %1771 : vector<1x1x32xf32> to vector<1x32xf32>
    %1773 = vector.broadcast %1772 : vector<1x32xf32> to vector<8x32xf32>
    %1774 = arith.mulf %1773, %1750 : vector<8x32xf32>
    %1775 = arith.addf %1734, %1774 : vector<8x32xf32>
    %c208 = arith.constant 208 : index
    %c0_745 = arith.constant 0 : index
    %c0_746 = arith.constant 0 : index
    %1776 = vector.load %arg2[%c208, %c0_745, %c0_746] : memref<576x1x32xf32, #tpu.memory_space<vmem>>, vector<1x1x32xf32>
    %1777 = vector.shape_cast %1776 : vector<1x1x32xf32> to vector<1x32xf32>
    %1778 = vector.broadcast %1777 : vector<1x32xf32> to vector<8x32xf32>
    %1779 = arith.mulf %1778, %1750 : vector<8x32xf32>
    %1780 = arith.addf %1739, %1779 : vector<8x32xf32>
    %c244 = arith.constant 244 : index
    %c0_747 = arith.constant 0 : index
    %c0_748 = arith.constant 0 : index
    %1781 = vector.load %arg2[%c244, %c0_747, %c0_748] : memref<576x1x32xf32, #tpu.memory_space<vmem>>, vector<1x1x32xf32>
    %1782 = vector.shape_cast %1781 : vector<1x1x32xf32> to vector<1x32xf32>
    %1783 = vector.broadcast %1782 : vector<1x32xf32> to vector<8x32xf32>
    %1784 = arith.mulf %1783, %1750 : vector<8x32xf32>
    %1785 = arith.addf %1744, %1784 : vector<8x32xf32>
    %c280 = arith.constant 280 : index
    %c0_749 = arith.constant 0 : index
    %c0_750 = arith.constant 0 : index
    %1786 = vector.load %arg2[%c280, %c0_749, %c0_750] : memref<576x1x32xf32, #tpu.memory_space<vmem>>, vector<1x1x32xf32>
    %1787 = vector.shape_cast %1786 : vector<1x1x32xf32> to vector<1x32xf32>
    %1788 = vector.broadcast %1787 : vector<1x32xf32> to vector<8x32xf32>
    %1789 = arith.mulf %1788, %1750 : vector<8x32xf32>
    %1790 = arith.addf %1749, %1789 : vector<8x32xf32>
    %1791 = vector.extract_strided_slice %1708 {offsets = [0, 4], sizes = [8, 32], strides = [1, 1]} : vector<10x36xf32> to vector<8x32xf32>
    %c29 = arith.constant 29 : index
    %c0_751 = arith.constant 0 : index
    %c0_752 = arith.constant 0 : index
    %1792 = vector.load %arg2[%c29, %c0_751, %c0_752] : memref<576x1x32xf32, #tpu.memory_space<vmem>>, vector<1x1x32xf32>
    %1793 = vector.shape_cast %1792 : vector<1x1x32xf32> to vector<1x32xf32>
    %1794 = vector.broadcast %1793 : vector<1x32xf32> to vector<8x32xf32>
    %1795 = arith.mulf %1794, %1791 : vector<8x32xf32>
    %1796 = arith.addf %1755, %1795 : vector<8x32xf32>
    %c65 = arith.constant 65 : index
    %c0_753 = arith.constant 0 : index
    %c0_754 = arith.constant 0 : index
    %1797 = vector.load %arg2[%c65, %c0_753, %c0_754] : memref<576x1x32xf32, #tpu.memory_space<vmem>>, vector<1x1x32xf32>
    %1798 = vector.shape_cast %1797 : vector<1x1x32xf32> to vector<1x32xf32>
    %1799 = vector.broadcast %1798 : vector<1x32xf32> to vector<8x32xf32>
    %1800 = arith.mulf %1799, %1791 : vector<8x32xf32>
    %1801 = arith.addf %1760, %1800 : vector<8x32xf32>
    %c101 = arith.constant 101 : index
    %c0_755 = arith.constant 0 : index
    %c0_756 = arith.constant 0 : index
    %1802 = vector.load %arg2[%c101, %c0_755, %c0_756] : memref<576x1x32xf32, #tpu.memory_space<vmem>>, vector<1x1x32xf32>
    %1803 = vector.shape_cast %1802 : vector<1x1x32xf32> to vector<1x32xf32>
    %1804 = vector.broadcast %1803 : vector<1x32xf32> to vector<8x32xf32>
    %1805 = arith.mulf %1804, %1791 : vector<8x32xf32>
    %1806 = arith.addf %1765, %1805 : vector<8x32xf32>
    %c137 = arith.constant 137 : index
    %c0_757 = arith.constant 0 : index
    %c0_758 = arith.constant 0 : index
    %1807 = vector.load %arg2[%c137, %c0_757, %c0_758] : memref<576x1x32xf32, #tpu.memory_space<vmem>>, vector<1x1x32xf32>
    %1808 = vector.shape_cast %1807 : vector<1x1x32xf32> to vector<1x32xf32>
    %1809 = vector.broadcast %1808 : vector<1x32xf32> to vector<8x32xf32>
    %1810 = arith.mulf %1809, %1791 : vector<8x32xf32>
    %1811 = arith.addf %1770, %1810 : vector<8x32xf32>
    %c173 = arith.constant 173 : index
    %c0_759 = arith.constant 0 : index
    %c0_760 = arith.constant 0 : index
    %1812 = vector.load %arg2[%c173, %c0_759, %c0_760] : memref<576x1x32xf32, #tpu.memory_space<vmem>>, vector<1x1x32xf32>
    %1813 = vector.shape_cast %1812 : vector<1x1x32xf32> to vector<1x32xf32>
    %1814 = vector.broadcast %1813 : vector<1x32xf32> to vector<8x32xf32>
    %1815 = arith.mulf %1814, %1791 : vector<8x32xf32>
    %1816 = arith.addf %1775, %1815 : vector<8x32xf32>
    %c209 = arith.constant 209 : index
    %c0_761 = arith.constant 0 : index
    %c0_762 = arith.constant 0 : index
    %1817 = vector.load %arg2[%c209, %c0_761, %c0_762] : memref<576x1x32xf32, #tpu.memory_space<vmem>>, vector<1x1x32xf32>
    %1818 = vector.shape_cast %1817 : vector<1x1x32xf32> to vector<1x32xf32>
    %1819 = vector.broadcast %1818 : vector<1x32xf32> to vector<8x32xf32>
    %1820 = arith.mulf %1819, %1791 : vector<8x32xf32>
    %1821 = arith.addf %1780, %1820 : vector<8x32xf32>
    %c245 = arith.constant 245 : index
    %c0_763 = arith.constant 0 : index
    %c0_764 = arith.constant 0 : index
    %1822 = vector.load %arg2[%c245, %c0_763, %c0_764] : memref<576x1x32xf32, #tpu.memory_space<vmem>>, vector<1x1x32xf32>
    %1823 = vector.shape_cast %1822 : vector<1x1x32xf32> to vector<1x32xf32>
    %1824 = vector.broadcast %1823 : vector<1x32xf32> to vector<8x32xf32>
    %1825 = arith.mulf %1824, %1791 : vector<8x32xf32>
    %1826 = arith.addf %1785, %1825 : vector<8x32xf32>
    %c281 = arith.constant 281 : index
    %c0_765 = arith.constant 0 : index
    %c0_766 = arith.constant 0 : index
    %1827 = vector.load %arg2[%c281, %c0_765, %c0_766] : memref<576x1x32xf32, #tpu.memory_space<vmem>>, vector<1x1x32xf32>
    %1828 = vector.shape_cast %1827 : vector<1x1x32xf32> to vector<1x32xf32>
    %1829 = vector.broadcast %1828 : vector<1x32xf32> to vector<8x32xf32>
    %1830 = arith.mulf %1829, %1791 : vector<8x32xf32>
    %1831 = arith.addf %1790, %1830 : vector<8x32xf32>
    %1832 = vector.extract_strided_slice %1708 {offsets = [1, 0], sizes = [8, 32], strides = [1, 1]} : vector<10x36xf32> to vector<8x32xf32>
    %c30 = arith.constant 30 : index
    %c0_767 = arith.constant 0 : index
    %c0_768 = arith.constant 0 : index
    %1833 = vector.load %arg2[%c30, %c0_767, %c0_768] : memref<576x1x32xf32, #tpu.memory_space<vmem>>, vector<1x1x32xf32>
    %1834 = vector.shape_cast %1833 : vector<1x1x32xf32> to vector<1x32xf32>
    %1835 = vector.broadcast %1834 : vector<1x32xf32> to vector<8x32xf32>
    %1836 = arith.mulf %1835, %1832 : vector<8x32xf32>
    %1837 = arith.addf %1796, %1836 : vector<8x32xf32>
    %c66 = arith.constant 66 : index
    %c0_769 = arith.constant 0 : index
    %c0_770 = arith.constant 0 : index
    %1838 = vector.load %arg2[%c66, %c0_769, %c0_770] : memref<576x1x32xf32, #tpu.memory_space<vmem>>, vector<1x1x32xf32>
    %1839 = vector.shape_cast %1838 : vector<1x1x32xf32> to vector<1x32xf32>
    %1840 = vector.broadcast %1839 : vector<1x32xf32> to vector<8x32xf32>
    %1841 = arith.mulf %1840, %1832 : vector<8x32xf32>
    %1842 = arith.addf %1801, %1841 : vector<8x32xf32>
    %c102 = arith.constant 102 : index
    %c0_771 = arith.constant 0 : index
    %c0_772 = arith.constant 0 : index
    %1843 = vector.load %arg2[%c102, %c0_771, %c0_772] : memref<576x1x32xf32, #tpu.memory_space<vmem>>, vector<1x1x32xf32>
    %1844 = vector.shape_cast %1843 : vector<1x1x32xf32> to vector<1x32xf32>
    %1845 = vector.broadcast %1844 : vector<1x32xf32> to vector<8x32xf32>
    %1846 = arith.mulf %1845, %1832 : vector<8x32xf32>
    %1847 = arith.addf %1806, %1846 : vector<8x32xf32>
    %c138 = arith.constant 138 : index
    %c0_773 = arith.constant 0 : index
    %c0_774 = arith.constant 0 : index
    %1848 = vector.load %arg2[%c138, %c0_773, %c0_774] : memref<576x1x32xf32, #tpu.memory_space<vmem>>, vector<1x1x32xf32>
    %1849 = vector.shape_cast %1848 : vector<1x1x32xf32> to vector<1x32xf32>
    %1850 = vector.broadcast %1849 : vector<1x32xf32> to vector<8x32xf32>
    %1851 = arith.mulf %1850, %1832 : vector<8x32xf32>
    %1852 = arith.addf %1811, %1851 : vector<8x32xf32>
    %c174 = arith.constant 174 : index
    %c0_775 = arith.constant 0 : index
    %c0_776 = arith.constant 0 : index
    %1853 = vector.load %arg2[%c174, %c0_775, %c0_776] : memref<576x1x32xf32, #tpu.memory_space<vmem>>, vector<1x1x32xf32>
    %1854 = vector.shape_cast %1853 : vector<1x1x32xf32> to vector<1x32xf32>
    %1855 = vector.broadcast %1854 : vector<1x32xf32> to vector<8x32xf32>
    %1856 = arith.mulf %1855, %1832 : vector<8x32xf32>
    %1857 = arith.addf %1816, %1856 : vector<8x32xf32>
    %c210 = arith.constant 210 : index
    %c0_777 = arith.constant 0 : index
    %c0_778 = arith.constant 0 : index
    %1858 = vector.load %arg2[%c210, %c0_777, %c0_778] : memref<576x1x32xf32, #tpu.memory_space<vmem>>, vector<1x1x32xf32>
    %1859 = vector.shape_cast %1858 : vector<1x1x32xf32> to vector<1x32xf32>
    %1860 = vector.broadcast %1859 : vector<1x32xf32> to vector<8x32xf32>
    %1861 = arith.mulf %1860, %1832 : vector<8x32xf32>
    %1862 = arith.addf %1821, %1861 : vector<8x32xf32>
    %c246 = arith.constant 246 : index
    %c0_779 = arith.constant 0 : index
    %c0_780 = arith.constant 0 : index
    %1863 = vector.load %arg2[%c246, %c0_779, %c0_780] : memref<576x1x32xf32, #tpu.memory_space<vmem>>, vector<1x1x32xf32>
    %1864 = vector.shape_cast %1863 : vector<1x1x32xf32> to vector<1x32xf32>
    %1865 = vector.broadcast %1864 : vector<1x32xf32> to vector<8x32xf32>
    %1866 = arith.mulf %1865, %1832 : vector<8x32xf32>
    %1867 = arith.addf %1826, %1866 : vector<8x32xf32>
    %c282 = arith.constant 282 : index
    %c0_781 = arith.constant 0 : index
    %c0_782 = arith.constant 0 : index
    %1868 = vector.load %arg2[%c282, %c0_781, %c0_782] : memref<576x1x32xf32, #tpu.memory_space<vmem>>, vector<1x1x32xf32>
    %1869 = vector.shape_cast %1868 : vector<1x1x32xf32> to vector<1x32xf32>
    %1870 = vector.broadcast %1869 : vector<1x32xf32> to vector<8x32xf32>
    %1871 = arith.mulf %1870, %1832 : vector<8x32xf32>
    %1872 = arith.addf %1831, %1871 : vector<8x32xf32>
    %c318 = arith.constant 318 : index
    %c0_783 = arith.constant 0 : index
    %c0_784 = arith.constant 0 : index
    %1873 = vector.load %arg2[%c318, %c0_783, %c0_784] : memref<576x1x32xf32, #tpu.memory_space<vmem>>, vector<1x1x32xf32>
    %1874 = vector.shape_cast %1873 : vector<1x1x32xf32> to vector<1x32xf32>
    %1875 = vector.broadcast %1874 : vector<1x32xf32> to vector<8x32xf32>
    %1876 = arith.mulf %1875, %1832 : vector<8x32xf32>
    %1877 = arith.addf %1661, %1876 : vector<8x32xf32>
    %c354 = arith.constant 354 : index
    %c0_785 = arith.constant 0 : index
    %c0_786 = arith.constant 0 : index
    %1878 = vector.load %arg2[%c354, %c0_785, %c0_786] : memref<576x1x32xf32, #tpu.memory_space<vmem>>, vector<1x1x32xf32>
    %1879 = vector.shape_cast %1878 : vector<1x1x32xf32> to vector<1x32xf32>
    %1880 = vector.broadcast %1879 : vector<1x32xf32> to vector<8x32xf32>
    %1881 = arith.mulf %1880, %1832 : vector<8x32xf32>
    %1882 = arith.addf %1666, %1881 : vector<8x32xf32>
    %c390 = arith.constant 390 : index
    %c0_787 = arith.constant 0 : index
    %c0_788 = arith.constant 0 : index
    %1883 = vector.load %arg2[%c390, %c0_787, %c0_788] : memref<576x1x32xf32, #tpu.memory_space<vmem>>, vector<1x1x32xf32>
    %1884 = vector.shape_cast %1883 : vector<1x1x32xf32> to vector<1x32xf32>
    %1885 = vector.broadcast %1884 : vector<1x32xf32> to vector<8x32xf32>
    %1886 = arith.mulf %1885, %1832 : vector<8x32xf32>
    %1887 = arith.addf %1671, %1886 : vector<8x32xf32>
    %c426 = arith.constant 426 : index
    %c0_789 = arith.constant 0 : index
    %c0_790 = arith.constant 0 : index
    %1888 = vector.load %arg2[%c426, %c0_789, %c0_790] : memref<576x1x32xf32, #tpu.memory_space<vmem>>, vector<1x1x32xf32>
    %1889 = vector.shape_cast %1888 : vector<1x1x32xf32> to vector<1x32xf32>
    %1890 = vector.broadcast %1889 : vector<1x32xf32> to vector<8x32xf32>
    %1891 = arith.mulf %1890, %1832 : vector<8x32xf32>
    %1892 = arith.addf %1676, %1891 : vector<8x32xf32>
    %c462 = arith.constant 462 : index
    %c0_791 = arith.constant 0 : index
    %c0_792 = arith.constant 0 : index
    %1893 = vector.load %arg2[%c462, %c0_791, %c0_792] : memref<576x1x32xf32, #tpu.memory_space<vmem>>, vector<1x1x32xf32>
    %1894 = vector.shape_cast %1893 : vector<1x1x32xf32> to vector<1x32xf32>
    %1895 = vector.broadcast %1894 : vector<1x32xf32> to vector<8x32xf32>
    %1896 = arith.mulf %1895, %1832 : vector<8x32xf32>
    %1897 = arith.addf %1681, %1896 : vector<8x32xf32>
    %c498 = arith.constant 498 : index
    %c0_793 = arith.constant 0 : index
    %c0_794 = arith.constant 0 : index
    %1898 = vector.load %arg2[%c498, %c0_793, %c0_794] : memref<576x1x32xf32, #tpu.memory_space<vmem>>, vector<1x1x32xf32>
    %1899 = vector.shape_cast %1898 : vector<1x1x32xf32> to vector<1x32xf32>
    %1900 = vector.broadcast %1899 : vector<1x32xf32> to vector<8x32xf32>
    %1901 = arith.mulf %1900, %1832 : vector<8x32xf32>
    %1902 = arith.addf %1686, %1901 : vector<8x32xf32>
    %c534 = arith.constant 534 : index
    %c0_795 = arith.constant 0 : index
    %c0_796 = arith.constant 0 : index
    %1903 = vector.load %arg2[%c534, %c0_795, %c0_796] : memref<576x1x32xf32, #tpu.memory_space<vmem>>, vector<1x1x32xf32>
    %1904 = vector.shape_cast %1903 : vector<1x1x32xf32> to vector<1x32xf32>
    %1905 = vector.broadcast %1904 : vector<1x32xf32> to vector<8x32xf32>
    %1906 = arith.mulf %1905, %1832 : vector<8x32xf32>
    %1907 = arith.addf %1691, %1906 : vector<8x32xf32>
    %c570 = arith.constant 570 : index
    %c0_797 = arith.constant 0 : index
    %c0_798 = arith.constant 0 : index
    %1908 = vector.load %arg2[%c570, %c0_797, %c0_798] : memref<576x1x32xf32, #tpu.memory_space<vmem>>, vector<1x1x32xf32>
    %1909 = vector.shape_cast %1908 : vector<1x1x32xf32> to vector<1x32xf32>
    %1910 = vector.broadcast %1909 : vector<1x32xf32> to vector<8x32xf32>
    %1911 = arith.mulf %1910, %1832 : vector<8x32xf32>
    %1912 = arith.addf %1696, %1911 : vector<8x32xf32>
    %1913 = vector.extract_strided_slice %1708 {offsets = [1, 2], sizes = [8, 32], strides = [1, 1]} : vector<10x36xf32> to vector<8x32xf32>
    %c31 = arith.constant 31 : index
    %c0_799 = arith.constant 0 : index
    %c0_800 = arith.constant 0 : index
    %1914 = vector.load %arg2[%c31, %c0_799, %c0_800] : memref<576x1x32xf32, #tpu.memory_space<vmem>>, vector<1x1x32xf32>
    %1915 = vector.shape_cast %1914 : vector<1x1x32xf32> to vector<1x32xf32>
    %1916 = vector.broadcast %1915 : vector<1x32xf32> to vector<8x32xf32>
    %1917 = arith.mulf %1916, %1913 : vector<8x32xf32>
    %1918 = arith.addf %1837, %1917 : vector<8x32xf32>
    %c67 = arith.constant 67 : index
    %c0_801 = arith.constant 0 : index
    %c0_802 = arith.constant 0 : index
    %1919 = vector.load %arg2[%c67, %c0_801, %c0_802] : memref<576x1x32xf32, #tpu.memory_space<vmem>>, vector<1x1x32xf32>
    %1920 = vector.shape_cast %1919 : vector<1x1x32xf32> to vector<1x32xf32>
    %1921 = vector.broadcast %1920 : vector<1x32xf32> to vector<8x32xf32>
    %1922 = arith.mulf %1921, %1913 : vector<8x32xf32>
    %1923 = arith.addf %1842, %1922 : vector<8x32xf32>
    %c103 = arith.constant 103 : index
    %c0_803 = arith.constant 0 : index
    %c0_804 = arith.constant 0 : index
    %1924 = vector.load %arg2[%c103, %c0_803, %c0_804] : memref<576x1x32xf32, #tpu.memory_space<vmem>>, vector<1x1x32xf32>
    %1925 = vector.shape_cast %1924 : vector<1x1x32xf32> to vector<1x32xf32>
    %1926 = vector.broadcast %1925 : vector<1x32xf32> to vector<8x32xf32>
    %1927 = arith.mulf %1926, %1913 : vector<8x32xf32>
    %1928 = arith.addf %1847, %1927 : vector<8x32xf32>
    %c139 = arith.constant 139 : index
    %c0_805 = arith.constant 0 : index
    %c0_806 = arith.constant 0 : index
    %1929 = vector.load %arg2[%c139, %c0_805, %c0_806] : memref<576x1x32xf32, #tpu.memory_space<vmem>>, vector<1x1x32xf32>
    %1930 = vector.shape_cast %1929 : vector<1x1x32xf32> to vector<1x32xf32>
    %1931 = vector.broadcast %1930 : vector<1x32xf32> to vector<8x32xf32>
    %1932 = arith.mulf %1931, %1913 : vector<8x32xf32>
    %1933 = arith.addf %1852, %1932 : vector<8x32xf32>
    %c175 = arith.constant 175 : index
    %c0_807 = arith.constant 0 : index
    %c0_808 = arith.constant 0 : index
    %1934 = vector.load %arg2[%c175, %c0_807, %c0_808] : memref<576x1x32xf32, #tpu.memory_space<vmem>>, vector<1x1x32xf32>
    %1935 = vector.shape_cast %1934 : vector<1x1x32xf32> to vector<1x32xf32>
    %1936 = vector.broadcast %1935 : vector<1x32xf32> to vector<8x32xf32>
    %1937 = arith.mulf %1936, %1913 : vector<8x32xf32>
    %1938 = arith.addf %1857, %1937 : vector<8x32xf32>
    %c211 = arith.constant 211 : index
    %c0_809 = arith.constant 0 : index
    %c0_810 = arith.constant 0 : index
    %1939 = vector.load %arg2[%c211, %c0_809, %c0_810] : memref<576x1x32xf32, #tpu.memory_space<vmem>>, vector<1x1x32xf32>
    %1940 = vector.shape_cast %1939 : vector<1x1x32xf32> to vector<1x32xf32>
    %1941 = vector.broadcast %1940 : vector<1x32xf32> to vector<8x32xf32>
    %1942 = arith.mulf %1941, %1913 : vector<8x32xf32>
    %1943 = arith.addf %1862, %1942 : vector<8x32xf32>
    %c247 = arith.constant 247 : index
    %c0_811 = arith.constant 0 : index
    %c0_812 = arith.constant 0 : index
    %1944 = vector.load %arg2[%c247, %c0_811, %c0_812] : memref<576x1x32xf32, #tpu.memory_space<vmem>>, vector<1x1x32xf32>
    %1945 = vector.shape_cast %1944 : vector<1x1x32xf32> to vector<1x32xf32>
    %1946 = vector.broadcast %1945 : vector<1x32xf32> to vector<8x32xf32>
    %1947 = arith.mulf %1946, %1913 : vector<8x32xf32>
    %1948 = arith.addf %1867, %1947 : vector<8x32xf32>
    %c283 = arith.constant 283 : index
    %c0_813 = arith.constant 0 : index
    %c0_814 = arith.constant 0 : index
    %1949 = vector.load %arg2[%c283, %c0_813, %c0_814] : memref<576x1x32xf32, #tpu.memory_space<vmem>>, vector<1x1x32xf32>
    %1950 = vector.shape_cast %1949 : vector<1x1x32xf32> to vector<1x32xf32>
    %1951 = vector.broadcast %1950 : vector<1x32xf32> to vector<8x32xf32>
    %1952 = arith.mulf %1951, %1913 : vector<8x32xf32>
    %1953 = arith.addf %1872, %1952 : vector<8x32xf32>
    %c319 = arith.constant 319 : index
    %c0_815 = arith.constant 0 : index
    %c0_816 = arith.constant 0 : index
    %1954 = vector.load %arg2[%c319, %c0_815, %c0_816] : memref<576x1x32xf32, #tpu.memory_space<vmem>>, vector<1x1x32xf32>
    %1955 = vector.shape_cast %1954 : vector<1x1x32xf32> to vector<1x32xf32>
    %1956 = vector.broadcast %1955 : vector<1x32xf32> to vector<8x32xf32>
    %1957 = arith.mulf %1956, %1913 : vector<8x32xf32>
    %1958 = arith.addf %1877, %1957 : vector<8x32xf32>
    %c355 = arith.constant 355 : index
    %c0_817 = arith.constant 0 : index
    %c0_818 = arith.constant 0 : index
    %1959 = vector.load %arg2[%c355, %c0_817, %c0_818] : memref<576x1x32xf32, #tpu.memory_space<vmem>>, vector<1x1x32xf32>
    %1960 = vector.shape_cast %1959 : vector<1x1x32xf32> to vector<1x32xf32>
    %1961 = vector.broadcast %1960 : vector<1x32xf32> to vector<8x32xf32>
    %1962 = arith.mulf %1961, %1913 : vector<8x32xf32>
    %1963 = arith.addf %1882, %1962 : vector<8x32xf32>
    %c391 = arith.constant 391 : index
    %c0_819 = arith.constant 0 : index
    %c0_820 = arith.constant 0 : index
    %1964 = vector.load %arg2[%c391, %c0_819, %c0_820] : memref<576x1x32xf32, #tpu.memory_space<vmem>>, vector<1x1x32xf32>
    %1965 = vector.shape_cast %1964 : vector<1x1x32xf32> to vector<1x32xf32>
    %1966 = vector.broadcast %1965 : vector<1x32xf32> to vector<8x32xf32>
    %1967 = arith.mulf %1966, %1913 : vector<8x32xf32>
    %1968 = arith.addf %1887, %1967 : vector<8x32xf32>
    %c427 = arith.constant 427 : index
    %c0_821 = arith.constant 0 : index
    %c0_822 = arith.constant 0 : index
    %1969 = vector.load %arg2[%c427, %c0_821, %c0_822] : memref<576x1x32xf32, #tpu.memory_space<vmem>>, vector<1x1x32xf32>
    %1970 = vector.shape_cast %1969 : vector<1x1x32xf32> to vector<1x32xf32>
    %1971 = vector.broadcast %1970 : vector<1x32xf32> to vector<8x32xf32>
    %1972 = arith.mulf %1971, %1913 : vector<8x32xf32>
    %1973 = arith.addf %1892, %1972 : vector<8x32xf32>
    %c463 = arith.constant 463 : index
    %c0_823 = arith.constant 0 : index
    %c0_824 = arith.constant 0 : index
    %1974 = vector.load %arg2[%c463, %c0_823, %c0_824] : memref<576x1x32xf32, #tpu.memory_space<vmem>>, vector<1x1x32xf32>
    %1975 = vector.shape_cast %1974 : vector<1x1x32xf32> to vector<1x32xf32>
    %1976 = vector.broadcast %1975 : vector<1x32xf32> to vector<8x32xf32>
    %1977 = arith.mulf %1976, %1913 : vector<8x32xf32>
    %1978 = arith.addf %1897, %1977 : vector<8x32xf32>
    %c499 = arith.constant 499 : index
    %c0_825 = arith.constant 0 : index
    %c0_826 = arith.constant 0 : index
    %1979 = vector.load %arg2[%c499, %c0_825, %c0_826] : memref<576x1x32xf32, #tpu.memory_space<vmem>>, vector<1x1x32xf32>
    %1980 = vector.shape_cast %1979 : vector<1x1x32xf32> to vector<1x32xf32>
    %1981 = vector.broadcast %1980 : vector<1x32xf32> to vector<8x32xf32>
    %1982 = arith.mulf %1981, %1913 : vector<8x32xf32>
    %1983 = arith.addf %1902, %1982 : vector<8x32xf32>
    %c535 = arith.constant 535 : index
    %c0_827 = arith.constant 0 : index
    %c0_828 = arith.constant 0 : index
    %1984 = vector.load %arg2[%c535, %c0_827, %c0_828] : memref<576x1x32xf32, #tpu.memory_space<vmem>>, vector<1x1x32xf32>
    %1985 = vector.shape_cast %1984 : vector<1x1x32xf32> to vector<1x32xf32>
    %1986 = vector.broadcast %1985 : vector<1x32xf32> to vector<8x32xf32>
    %1987 = arith.mulf %1986, %1913 : vector<8x32xf32>
    %1988 = arith.addf %1907, %1987 : vector<8x32xf32>
    %c571 = arith.constant 571 : index
    %c0_829 = arith.constant 0 : index
    %c0_830 = arith.constant 0 : index
    %1989 = vector.load %arg2[%c571, %c0_829, %c0_830] : memref<576x1x32xf32, #tpu.memory_space<vmem>>, vector<1x1x32xf32>
    %1990 = vector.shape_cast %1989 : vector<1x1x32xf32> to vector<1x32xf32>
    %1991 = vector.broadcast %1990 : vector<1x32xf32> to vector<8x32xf32>
    %1992 = arith.mulf %1991, %1913 : vector<8x32xf32>
    %1993 = arith.addf %1912, %1992 : vector<8x32xf32>
    %1994 = vector.extract_strided_slice %1708 {offsets = [1, 4], sizes = [8, 32], strides = [1, 1]} : vector<10x36xf32> to vector<8x32xf32>
    %c32 = arith.constant 32 : index
    %c0_831 = arith.constant 0 : index
    %c0_832 = arith.constant 0 : index
    %1995 = vector.load %arg2[%c32, %c0_831, %c0_832] : memref<576x1x32xf32, #tpu.memory_space<vmem>>, vector<1x1x32xf32>
    %1996 = vector.shape_cast %1995 : vector<1x1x32xf32> to vector<1x32xf32>
    %1997 = vector.broadcast %1996 : vector<1x32xf32> to vector<8x32xf32>
    %1998 = arith.mulf %1997, %1994 : vector<8x32xf32>
    %1999 = arith.addf %1918, %1998 : vector<8x32xf32>
    %c68 = arith.constant 68 : index
    %c0_833 = arith.constant 0 : index
    %c0_834 = arith.constant 0 : index
    %2000 = vector.load %arg2[%c68, %c0_833, %c0_834] : memref<576x1x32xf32, #tpu.memory_space<vmem>>, vector<1x1x32xf32>
    %2001 = vector.shape_cast %2000 : vector<1x1x32xf32> to vector<1x32xf32>
    %2002 = vector.broadcast %2001 : vector<1x32xf32> to vector<8x32xf32>
    %2003 = arith.mulf %2002, %1994 : vector<8x32xf32>
    %2004 = arith.addf %1923, %2003 : vector<8x32xf32>
    %c104 = arith.constant 104 : index
    %c0_835 = arith.constant 0 : index
    %c0_836 = arith.constant 0 : index
    %2005 = vector.load %arg2[%c104, %c0_835, %c0_836] : memref<576x1x32xf32, #tpu.memory_space<vmem>>, vector<1x1x32xf32>
    %2006 = vector.shape_cast %2005 : vector<1x1x32xf32> to vector<1x32xf32>
    %2007 = vector.broadcast %2006 : vector<1x32xf32> to vector<8x32xf32>
    %2008 = arith.mulf %2007, %1994 : vector<8x32xf32>
    %2009 = arith.addf %1928, %2008 : vector<8x32xf32>
    %c140 = arith.constant 140 : index
    %c0_837 = arith.constant 0 : index
    %c0_838 = arith.constant 0 : index
    %2010 = vector.load %arg2[%c140, %c0_837, %c0_838] : memref<576x1x32xf32, #tpu.memory_space<vmem>>, vector<1x1x32xf32>
    %2011 = vector.shape_cast %2010 : vector<1x1x32xf32> to vector<1x32xf32>
    %2012 = vector.broadcast %2011 : vector<1x32xf32> to vector<8x32xf32>
    %2013 = arith.mulf %2012, %1994 : vector<8x32xf32>
    %2014 = arith.addf %1933, %2013 : vector<8x32xf32>
    %c176 = arith.constant 176 : index
    %c0_839 = arith.constant 0 : index
    %c0_840 = arith.constant 0 : index
    %2015 = vector.load %arg2[%c176, %c0_839, %c0_840] : memref<576x1x32xf32, #tpu.memory_space<vmem>>, vector<1x1x32xf32>
    %2016 = vector.shape_cast %2015 : vector<1x1x32xf32> to vector<1x32xf32>
    %2017 = vector.broadcast %2016 : vector<1x32xf32> to vector<8x32xf32>
    %2018 = arith.mulf %2017, %1994 : vector<8x32xf32>
    %2019 = arith.addf %1938, %2018 : vector<8x32xf32>
    %c212 = arith.constant 212 : index
    %c0_841 = arith.constant 0 : index
    %c0_842 = arith.constant 0 : index
    %2020 = vector.load %arg2[%c212, %c0_841, %c0_842] : memref<576x1x32xf32, #tpu.memory_space<vmem>>, vector<1x1x32xf32>
    %2021 = vector.shape_cast %2020 : vector<1x1x32xf32> to vector<1x32xf32>
    %2022 = vector.broadcast %2021 : vector<1x32xf32> to vector<8x32xf32>
    %2023 = arith.mulf %2022, %1994 : vector<8x32xf32>
    %2024 = arith.addf %1943, %2023 : vector<8x32xf32>
    %c248 = arith.constant 248 : index
    %c0_843 = arith.constant 0 : index
    %c0_844 = arith.constant 0 : index
    %2025 = vector.load %arg2[%c248, %c0_843, %c0_844] : memref<576x1x32xf32, #tpu.memory_space<vmem>>, vector<1x1x32xf32>
    %2026 = vector.shape_cast %2025 : vector<1x1x32xf32> to vector<1x32xf32>
    %2027 = vector.broadcast %2026 : vector<1x32xf32> to vector<8x32xf32>
    %2028 = arith.mulf %2027, %1994 : vector<8x32xf32>
    %2029 = arith.addf %1948, %2028 : vector<8x32xf32>
    %c284 = arith.constant 284 : index
    %c0_845 = arith.constant 0 : index
    %c0_846 = arith.constant 0 : index
    %2030 = vector.load %arg2[%c284, %c0_845, %c0_846] : memref<576x1x32xf32, #tpu.memory_space<vmem>>, vector<1x1x32xf32>
    %2031 = vector.shape_cast %2030 : vector<1x1x32xf32> to vector<1x32xf32>
    %2032 = vector.broadcast %2031 : vector<1x32xf32> to vector<8x32xf32>
    %2033 = arith.mulf %2032, %1994 : vector<8x32xf32>
    %2034 = arith.addf %1953, %2033 : vector<8x32xf32>
    %c320 = arith.constant 320 : index
    %c0_847 = arith.constant 0 : index
    %c0_848 = arith.constant 0 : index
    %2035 = vector.load %arg2[%c320, %c0_847, %c0_848] : memref<576x1x32xf32, #tpu.memory_space<vmem>>, vector<1x1x32xf32>
    %2036 = vector.shape_cast %2035 : vector<1x1x32xf32> to vector<1x32xf32>
    %2037 = vector.broadcast %2036 : vector<1x32xf32> to vector<8x32xf32>
    %2038 = arith.mulf %2037, %1994 : vector<8x32xf32>
    %2039 = arith.addf %1958, %2038 : vector<8x32xf32>
    %c356 = arith.constant 356 : index
    %c0_849 = arith.constant 0 : index
    %c0_850 = arith.constant 0 : index
    %2040 = vector.load %arg2[%c356, %c0_849, %c0_850] : memref<576x1x32xf32, #tpu.memory_space<vmem>>, vector<1x1x32xf32>
    %2041 = vector.shape_cast %2040 : vector<1x1x32xf32> to vector<1x32xf32>
    %2042 = vector.broadcast %2041 : vector<1x32xf32> to vector<8x32xf32>
    %2043 = arith.mulf %2042, %1994 : vector<8x32xf32>
    %2044 = arith.addf %1963, %2043 : vector<8x32xf32>
    %c392 = arith.constant 392 : index
    %c0_851 = arith.constant 0 : index
    %c0_852 = arith.constant 0 : index
    %2045 = vector.load %arg2[%c392, %c0_851, %c0_852] : memref<576x1x32xf32, #tpu.memory_space<vmem>>, vector<1x1x32xf32>
    %2046 = vector.shape_cast %2045 : vector<1x1x32xf32> to vector<1x32xf32>
    %2047 = vector.broadcast %2046 : vector<1x32xf32> to vector<8x32xf32>
    %2048 = arith.mulf %2047, %1994 : vector<8x32xf32>
    %2049 = arith.addf %1968, %2048 : vector<8x32xf32>
    %c428 = arith.constant 428 : index
    %c0_853 = arith.constant 0 : index
    %c0_854 = arith.constant 0 : index
    %2050 = vector.load %arg2[%c428, %c0_853, %c0_854] : memref<576x1x32xf32, #tpu.memory_space<vmem>>, vector<1x1x32xf32>
    %2051 = vector.shape_cast %2050 : vector<1x1x32xf32> to vector<1x32xf32>
    %2052 = vector.broadcast %2051 : vector<1x32xf32> to vector<8x32xf32>
    %2053 = arith.mulf %2052, %1994 : vector<8x32xf32>
    %2054 = arith.addf %1973, %2053 : vector<8x32xf32>
    %c464 = arith.constant 464 : index
    %c0_855 = arith.constant 0 : index
    %c0_856 = arith.constant 0 : index
    %2055 = vector.load %arg2[%c464, %c0_855, %c0_856] : memref<576x1x32xf32, #tpu.memory_space<vmem>>, vector<1x1x32xf32>
    %2056 = vector.shape_cast %2055 : vector<1x1x32xf32> to vector<1x32xf32>
    %2057 = vector.broadcast %2056 : vector<1x32xf32> to vector<8x32xf32>
    %2058 = arith.mulf %2057, %1994 : vector<8x32xf32>
    %2059 = arith.addf %1978, %2058 : vector<8x32xf32>
    %c500 = arith.constant 500 : index
    %c0_857 = arith.constant 0 : index
    %c0_858 = arith.constant 0 : index
    %2060 = vector.load %arg2[%c500, %c0_857, %c0_858] : memref<576x1x32xf32, #tpu.memory_space<vmem>>, vector<1x1x32xf32>
    %2061 = vector.shape_cast %2060 : vector<1x1x32xf32> to vector<1x32xf32>
    %2062 = vector.broadcast %2061 : vector<1x32xf32> to vector<8x32xf32>
    %2063 = arith.mulf %2062, %1994 : vector<8x32xf32>
    %2064 = arith.addf %1983, %2063 : vector<8x32xf32>
    %c536 = arith.constant 536 : index
    %c0_859 = arith.constant 0 : index
    %c0_860 = arith.constant 0 : index
    %2065 = vector.load %arg2[%c536, %c0_859, %c0_860] : memref<576x1x32xf32, #tpu.memory_space<vmem>>, vector<1x1x32xf32>
    %2066 = vector.shape_cast %2065 : vector<1x1x32xf32> to vector<1x32xf32>
    %2067 = vector.broadcast %2066 : vector<1x32xf32> to vector<8x32xf32>
    %2068 = arith.mulf %2067, %1994 : vector<8x32xf32>
    %2069 = arith.addf %1988, %2068 : vector<8x32xf32>
    %c572 = arith.constant 572 : index
    %c0_861 = arith.constant 0 : index
    %c0_862 = arith.constant 0 : index
    %2070 = vector.load %arg2[%c572, %c0_861, %c0_862] : memref<576x1x32xf32, #tpu.memory_space<vmem>>, vector<1x1x32xf32>
    %2071 = vector.shape_cast %2070 : vector<1x1x32xf32> to vector<1x32xf32>
    %2072 = vector.broadcast %2071 : vector<1x32xf32> to vector<8x32xf32>
    %2073 = arith.mulf %2072, %1994 : vector<8x32xf32>
    %2074 = arith.addf %1993, %2073 : vector<8x32xf32>
    %2075 = vector.extract_strided_slice %1708 {offsets = [2, 0], sizes = [8, 32], strides = [1, 1]} : vector<10x36xf32> to vector<8x32xf32>
    %c321 = arith.constant 321 : index
    %c0_863 = arith.constant 0 : index
    %c0_864 = arith.constant 0 : index
    %2076 = vector.load %arg2[%c321, %c0_863, %c0_864] : memref<576x1x32xf32, #tpu.memory_space<vmem>>, vector<1x1x32xf32>
    %2077 = vector.shape_cast %2076 : vector<1x1x32xf32> to vector<1x32xf32>
    %2078 = vector.broadcast %2077 : vector<1x32xf32> to vector<8x32xf32>
    %2079 = arith.mulf %2078, %2075 : vector<8x32xf32>
    %2080 = arith.addf %2039, %2079 : vector<8x32xf32>
    %c357 = arith.constant 357 : index
    %c0_865 = arith.constant 0 : index
    %c0_866 = arith.constant 0 : index
    %2081 = vector.load %arg2[%c357, %c0_865, %c0_866] : memref<576x1x32xf32, #tpu.memory_space<vmem>>, vector<1x1x32xf32>
    %2082 = vector.shape_cast %2081 : vector<1x1x32xf32> to vector<1x32xf32>
    %2083 = vector.broadcast %2082 : vector<1x32xf32> to vector<8x32xf32>
    %2084 = arith.mulf %2083, %2075 : vector<8x32xf32>
    %2085 = arith.addf %2044, %2084 : vector<8x32xf32>
    %c393 = arith.constant 393 : index
    %c0_867 = arith.constant 0 : index
    %c0_868 = arith.constant 0 : index
    %2086 = vector.load %arg2[%c393, %c0_867, %c0_868] : memref<576x1x32xf32, #tpu.memory_space<vmem>>, vector<1x1x32xf32>
    %2087 = vector.shape_cast %2086 : vector<1x1x32xf32> to vector<1x32xf32>
    %2088 = vector.broadcast %2087 : vector<1x32xf32> to vector<8x32xf32>
    %2089 = arith.mulf %2088, %2075 : vector<8x32xf32>
    %2090 = arith.addf %2049, %2089 : vector<8x32xf32>
    %c429 = arith.constant 429 : index
    %c0_869 = arith.constant 0 : index
    %c0_870 = arith.constant 0 : index
    %2091 = vector.load %arg2[%c429, %c0_869, %c0_870] : memref<576x1x32xf32, #tpu.memory_space<vmem>>, vector<1x1x32xf32>
    %2092 = vector.shape_cast %2091 : vector<1x1x32xf32> to vector<1x32xf32>
    %2093 = vector.broadcast %2092 : vector<1x32xf32> to vector<8x32xf32>
    %2094 = arith.mulf %2093, %2075 : vector<8x32xf32>
    %2095 = arith.addf %2054, %2094 : vector<8x32xf32>
    %c465 = arith.constant 465 : index
    %c0_871 = arith.constant 0 : index
    %c0_872 = arith.constant 0 : index
    %2096 = vector.load %arg2[%c465, %c0_871, %c0_872] : memref<576x1x32xf32, #tpu.memory_space<vmem>>, vector<1x1x32xf32>
    %2097 = vector.shape_cast %2096 : vector<1x1x32xf32> to vector<1x32xf32>
    %2098 = vector.broadcast %2097 : vector<1x32xf32> to vector<8x32xf32>
    %2099 = arith.mulf %2098, %2075 : vector<8x32xf32>
    %2100 = arith.addf %2059, %2099 : vector<8x32xf32>
    %c501 = arith.constant 501 : index
    %c0_873 = arith.constant 0 : index
    %c0_874 = arith.constant 0 : index
    %2101 = vector.load %arg2[%c501, %c0_873, %c0_874] : memref<576x1x32xf32, #tpu.memory_space<vmem>>, vector<1x1x32xf32>
    %2102 = vector.shape_cast %2101 : vector<1x1x32xf32> to vector<1x32xf32>
    %2103 = vector.broadcast %2102 : vector<1x32xf32> to vector<8x32xf32>
    %2104 = arith.mulf %2103, %2075 : vector<8x32xf32>
    %2105 = arith.addf %2064, %2104 : vector<8x32xf32>
    %c537 = arith.constant 537 : index
    %c0_875 = arith.constant 0 : index
    %c0_876 = arith.constant 0 : index
    %2106 = vector.load %arg2[%c537, %c0_875, %c0_876] : memref<576x1x32xf32, #tpu.memory_space<vmem>>, vector<1x1x32xf32>
    %2107 = vector.shape_cast %2106 : vector<1x1x32xf32> to vector<1x32xf32>
    %2108 = vector.broadcast %2107 : vector<1x32xf32> to vector<8x32xf32>
    %2109 = arith.mulf %2108, %2075 : vector<8x32xf32>
    %2110 = arith.addf %2069, %2109 : vector<8x32xf32>
    %c573 = arith.constant 573 : index
    %c0_877 = arith.constant 0 : index
    %c0_878 = arith.constant 0 : index
    %2111 = vector.load %arg2[%c573, %c0_877, %c0_878] : memref<576x1x32xf32, #tpu.memory_space<vmem>>, vector<1x1x32xf32>
    %2112 = vector.shape_cast %2111 : vector<1x1x32xf32> to vector<1x32xf32>
    %2113 = vector.broadcast %2112 : vector<1x32xf32> to vector<8x32xf32>
    %2114 = arith.mulf %2113, %2075 : vector<8x32xf32>
    %2115 = arith.addf %2074, %2114 : vector<8x32xf32>
    %2116 = vector.extract_strided_slice %1708 {offsets = [2, 2], sizes = [8, 32], strides = [1, 1]} : vector<10x36xf32> to vector<8x32xf32>
    %c322 = arith.constant 322 : index
    %c0_879 = arith.constant 0 : index
    %c0_880 = arith.constant 0 : index
    %2117 = vector.load %arg2[%c322, %c0_879, %c0_880] : memref<576x1x32xf32, #tpu.memory_space<vmem>>, vector<1x1x32xf32>
    %2118 = vector.shape_cast %2117 : vector<1x1x32xf32> to vector<1x32xf32>
    %2119 = vector.broadcast %2118 : vector<1x32xf32> to vector<8x32xf32>
    %2120 = arith.mulf %2119, %2116 : vector<8x32xf32>
    %2121 = arith.addf %2080, %2120 : vector<8x32xf32>
    %c358 = arith.constant 358 : index
    %c0_881 = arith.constant 0 : index
    %c0_882 = arith.constant 0 : index
    %2122 = vector.load %arg2[%c358, %c0_881, %c0_882] : memref<576x1x32xf32, #tpu.memory_space<vmem>>, vector<1x1x32xf32>
    %2123 = vector.shape_cast %2122 : vector<1x1x32xf32> to vector<1x32xf32>
    %2124 = vector.broadcast %2123 : vector<1x32xf32> to vector<8x32xf32>
    %2125 = arith.mulf %2124, %2116 : vector<8x32xf32>
    %2126 = arith.addf %2085, %2125 : vector<8x32xf32>
    %c394 = arith.constant 394 : index
    %c0_883 = arith.constant 0 : index
    %c0_884 = arith.constant 0 : index
    %2127 = vector.load %arg2[%c394, %c0_883, %c0_884] : memref<576x1x32xf32, #tpu.memory_space<vmem>>, vector<1x1x32xf32>
    %2128 = vector.shape_cast %2127 : vector<1x1x32xf32> to vector<1x32xf32>
    %2129 = vector.broadcast %2128 : vector<1x32xf32> to vector<8x32xf32>
    %2130 = arith.mulf %2129, %2116 : vector<8x32xf32>
    %2131 = arith.addf %2090, %2130 : vector<8x32xf32>
    %c430 = arith.constant 430 : index
    %c0_885 = arith.constant 0 : index
    %c0_886 = arith.constant 0 : index
    %2132 = vector.load %arg2[%c430, %c0_885, %c0_886] : memref<576x1x32xf32, #tpu.memory_space<vmem>>, vector<1x1x32xf32>
    %2133 = vector.shape_cast %2132 : vector<1x1x32xf32> to vector<1x32xf32>
    %2134 = vector.broadcast %2133 : vector<1x32xf32> to vector<8x32xf32>
    %2135 = arith.mulf %2134, %2116 : vector<8x32xf32>
    %2136 = arith.addf %2095, %2135 : vector<8x32xf32>
    %c466 = arith.constant 466 : index
    %c0_887 = arith.constant 0 : index
    %c0_888 = arith.constant 0 : index
    %2137 = vector.load %arg2[%c466, %c0_887, %c0_888] : memref<576x1x32xf32, #tpu.memory_space<vmem>>, vector<1x1x32xf32>
    %2138 = vector.shape_cast %2137 : vector<1x1x32xf32> to vector<1x32xf32>
    %2139 = vector.broadcast %2138 : vector<1x32xf32> to vector<8x32xf32>
    %2140 = arith.mulf %2139, %2116 : vector<8x32xf32>
    %2141 = arith.addf %2100, %2140 : vector<8x32xf32>
    %c502 = arith.constant 502 : index
    %c0_889 = arith.constant 0 : index
    %c0_890 = arith.constant 0 : index
    %2142 = vector.load %arg2[%c502, %c0_889, %c0_890] : memref<576x1x32xf32, #tpu.memory_space<vmem>>, vector<1x1x32xf32>
    %2143 = vector.shape_cast %2142 : vector<1x1x32xf32> to vector<1x32xf32>
    %2144 = vector.broadcast %2143 : vector<1x32xf32> to vector<8x32xf32>
    %2145 = arith.mulf %2144, %2116 : vector<8x32xf32>
    %2146 = arith.addf %2105, %2145 : vector<8x32xf32>
    %c538 = arith.constant 538 : index
    %c0_891 = arith.constant 0 : index
    %c0_892 = arith.constant 0 : index
    %2147 = vector.load %arg2[%c538, %c0_891, %c0_892] : memref<576x1x32xf32, #tpu.memory_space<vmem>>, vector<1x1x32xf32>
    %2148 = vector.shape_cast %2147 : vector<1x1x32xf32> to vector<1x32xf32>
    %2149 = vector.broadcast %2148 : vector<1x32xf32> to vector<8x32xf32>
    %2150 = arith.mulf %2149, %2116 : vector<8x32xf32>
    %2151 = arith.addf %2110, %2150 : vector<8x32xf32>
    %c574 = arith.constant 574 : index
    %c0_893 = arith.constant 0 : index
    %c0_894 = arith.constant 0 : index
    %2152 = vector.load %arg2[%c574, %c0_893, %c0_894] : memref<576x1x32xf32, #tpu.memory_space<vmem>>, vector<1x1x32xf32>
    %2153 = vector.shape_cast %2152 : vector<1x1x32xf32> to vector<1x32xf32>
    %2154 = vector.broadcast %2153 : vector<1x32xf32> to vector<8x32xf32>
    %2155 = arith.mulf %2154, %2116 : vector<8x32xf32>
    %2156 = arith.addf %2115, %2155 : vector<8x32xf32>
    %2157 = vector.extract_strided_slice %1708 {offsets = [2, 4], sizes = [8, 32], strides = [1, 1]} : vector<10x36xf32> to vector<8x32xf32>
    %c323 = arith.constant 323 : index
    %c0_895 = arith.constant 0 : index
    %c0_896 = arith.constant 0 : index
    %2158 = vector.load %arg2[%c323, %c0_895, %c0_896] : memref<576x1x32xf32, #tpu.memory_space<vmem>>, vector<1x1x32xf32>
    %2159 = vector.shape_cast %2158 : vector<1x1x32xf32> to vector<1x32xf32>
    %2160 = vector.broadcast %2159 : vector<1x32xf32> to vector<8x32xf32>
    %2161 = arith.mulf %2160, %2157 : vector<8x32xf32>
    %2162 = arith.addf %2121, %2161 : vector<8x32xf32>
    %c359 = arith.constant 359 : index
    %c0_897 = arith.constant 0 : index
    %c0_898 = arith.constant 0 : index
    %2163 = vector.load %arg2[%c359, %c0_897, %c0_898] : memref<576x1x32xf32, #tpu.memory_space<vmem>>, vector<1x1x32xf32>
    %2164 = vector.shape_cast %2163 : vector<1x1x32xf32> to vector<1x32xf32>
    %2165 = vector.broadcast %2164 : vector<1x32xf32> to vector<8x32xf32>
    %2166 = arith.mulf %2165, %2157 : vector<8x32xf32>
    %2167 = arith.addf %2126, %2166 : vector<8x32xf32>
    %c395 = arith.constant 395 : index
    %c0_899 = arith.constant 0 : index
    %c0_900 = arith.constant 0 : index
    %2168 = vector.load %arg2[%c395, %c0_899, %c0_900] : memref<576x1x32xf32, #tpu.memory_space<vmem>>, vector<1x1x32xf32>
    %2169 = vector.shape_cast %2168 : vector<1x1x32xf32> to vector<1x32xf32>
    %2170 = vector.broadcast %2169 : vector<1x32xf32> to vector<8x32xf32>
    %2171 = arith.mulf %2170, %2157 : vector<8x32xf32>
    %2172 = arith.addf %2131, %2171 : vector<8x32xf32>
    %c431 = arith.constant 431 : index
    %c0_901 = arith.constant 0 : index
    %c0_902 = arith.constant 0 : index
    %2173 = vector.load %arg2[%c431, %c0_901, %c0_902] : memref<576x1x32xf32, #tpu.memory_space<vmem>>, vector<1x1x32xf32>
    %2174 = vector.shape_cast %2173 : vector<1x1x32xf32> to vector<1x32xf32>
    %2175 = vector.broadcast %2174 : vector<1x32xf32> to vector<8x32xf32>
    %2176 = arith.mulf %2175, %2157 : vector<8x32xf32>
    %2177 = arith.addf %2136, %2176 : vector<8x32xf32>
    %c467 = arith.constant 467 : index
    %c0_903 = arith.constant 0 : index
    %c0_904 = arith.constant 0 : index
    %2178 = vector.load %arg2[%c467, %c0_903, %c0_904] : memref<576x1x32xf32, #tpu.memory_space<vmem>>, vector<1x1x32xf32>
    %2179 = vector.shape_cast %2178 : vector<1x1x32xf32> to vector<1x32xf32>
    %2180 = vector.broadcast %2179 : vector<1x32xf32> to vector<8x32xf32>
    %2181 = arith.mulf %2180, %2157 : vector<8x32xf32>
    %2182 = arith.addf %2141, %2181 : vector<8x32xf32>
    %c503 = arith.constant 503 : index
    %c0_905 = arith.constant 0 : index
    %c0_906 = arith.constant 0 : index
    %2183 = vector.load %arg2[%c503, %c0_905, %c0_906] : memref<576x1x32xf32, #tpu.memory_space<vmem>>, vector<1x1x32xf32>
    %2184 = vector.shape_cast %2183 : vector<1x1x32xf32> to vector<1x32xf32>
    %2185 = vector.broadcast %2184 : vector<1x32xf32> to vector<8x32xf32>
    %2186 = arith.mulf %2185, %2157 : vector<8x32xf32>
    %2187 = arith.addf %2146, %2186 : vector<8x32xf32>
    %c539 = arith.constant 539 : index
    %c0_907 = arith.constant 0 : index
    %c0_908 = arith.constant 0 : index
    %2188 = vector.load %arg2[%c539, %c0_907, %c0_908] : memref<576x1x32xf32, #tpu.memory_space<vmem>>, vector<1x1x32xf32>
    %2189 = vector.shape_cast %2188 : vector<1x1x32xf32> to vector<1x32xf32>
    %2190 = vector.broadcast %2189 : vector<1x32xf32> to vector<8x32xf32>
    %2191 = arith.mulf %2190, %2157 : vector<8x32xf32>
    %2192 = arith.addf %2151, %2191 : vector<8x32xf32>
    %c575 = arith.constant 575 : index
    %c0_909 = arith.constant 0 : index
    %c0_910 = arith.constant 0 : index
    %2193 = vector.load %arg2[%c575, %c0_909, %c0_910] : memref<576x1x32xf32, #tpu.memory_space<vmem>>, vector<1x1x32xf32>
    %2194 = vector.shape_cast %2193 : vector<1x1x32xf32> to vector<1x32xf32>
    %2195 = vector.broadcast %2194 : vector<1x32xf32> to vector<8x32xf32>
    %2196 = arith.mulf %2195, %2157 : vector<8x32xf32>
    %2197 = arith.addf %2156, %2196 : vector<8x32xf32>
    %c0_911 = arith.constant 0 : index
    %c0_912 = arith.constant 0 : index
    %2198 = vector.load %arg5[%c0_911, %c0_912] : memref<16x16xf32, #tpu.memory_space<vmem>>, vector<16x16xf32>
    %2199 = tpu.concatenate %1999, %2162 in 0 : vector<8x32xf32>, vector<8x32xf32> -> vector<16x32xf32>
    %cst_913 = arith.constant dense<0.000000e+00> : vector<16x32xf32>
    %2200 = tpu.matmul %2198, %2199, %cst_913 {dimension_numbers = #tpu.dot_dimension_numbers<[1], [0], [0], [1], [0, 0, 1, 1], [], []>} : vector<16x16xf32>, vector<16x32xf32>, vector<16x32xf32> -> vector<16x32xf32>
    %c0_914 = arith.constant 0 : index
    %c0_915 = arith.constant 0 : index
    %c0_916 = arith.constant 0 : index
    %c0_917 = arith.constant 0 : index
    %2201 = vector.load %arg9[%c0_914, %c0_915, %c0_916, %c0_917] : memref<1x8x16x32xf32, #tpu.memory_space<vmem>>, vector<1x1x16x32xf32>
    %2202 = vector.shape_cast %2201 : vector<1x1x16x32xf32> to vector<16x32xf32>
    %2203 = vector.shape_cast %2200 : vector<16x32xf32> to vector<1x1x16x32xf32>
    tpu.vector_store %arg9[%c0_914, %c0_915, %c0_916, %c0_917], %2203 {strides = array<i32>} : memref<1x8x16x32xf32, #tpu.memory_space<vmem>>, vector<1x1x16x32xf32>,
    %2204 = tpu.concatenate %2004, %2167 in 0 : vector<8x32xf32>, vector<8x32xf32> -> vector<16x32xf32>
    %cst_918 = arith.constant dense<0.000000e+00> : vector<16x32xf32>
    %2205 = tpu.matmul %2198, %2204, %cst_918 {dimension_numbers = #tpu.dot_dimension_numbers<[1], [0], [0], [1], [0, 0, 1, 1], [], []>} : vector<16x16xf32>, vector<16x32xf32>, vector<16x32xf32> -> vector<16x32xf32>
    %c0_919 = arith.constant 0 : index
    %c1_920 = arith.constant 1 : index
    %c0_921 = arith.constant 0 : index
    %c0_922 = arith.constant 0 : index
    %2206 = vector.load %arg9[%c0_919, %c1_920, %c0_921, %c0_922] : memref<1x8x16x32xf32, #tpu.memory_space<vmem>>, vector<1x1x16x32xf32>
    %2207 = vector.shape_cast %2206 : vector<1x1x16x32xf32> to vector<16x32xf32>
    %2208 = vector.shape_cast %2205 : vector<16x32xf32> to vector<1x1x16x32xf32>
    tpu.vector_store %arg9[%c0_919, %c1_920, %c0_921, %c0_922], %2208 {strides = array<i32>} : memref<1x8x16x32xf32, #tpu.memory_space<vmem>>, vector<1x1x16x32xf32>,
    %2209 = tpu.concatenate %2009, %2172 in 0 : vector<8x32xf32>, vector<8x32xf32> -> vector<16x32xf32>
    %cst_923 = arith.constant dense<0.000000e+00> : vector<16x32xf32>
    %2210 = tpu.matmul %2198, %2209, %cst_923 {dimension_numbers = #tpu.dot_dimension_numbers<[1], [0], [0], [1], [0, 0, 1, 1], [], []>} : vector<16x16xf32>, vector<16x32xf32>, vector<16x32xf32> -> vector<16x32xf32>
    %c0_924 = arith.constant 0 : index
    %c2_925 = arith.constant 2 : index
    %c0_926 = arith.constant 0 : index
    %c0_927 = arith.constant 0 : index
    %2211 = vector.load %arg9[%c0_924, %c2_925, %c0_926, %c0_927] : memref<1x8x16x32xf32, #tpu.memory_space<vmem>>, vector<1x1x16x32xf32>
    %2212 = vector.shape_cast %2211 : vector<1x1x16x32xf32> to vector<16x32xf32>
    %2213 = vector.shape_cast %2210 : vector<16x32xf32> to vector<1x1x16x32xf32>
    tpu.vector_store %arg9[%c0_924, %c2_925, %c0_926, %c0_927], %2213 {strides = array<i32>} : memref<1x8x16x32xf32, #tpu.memory_space<vmem>>, vector<1x1x16x32xf32>,
    %2214 = tpu.concatenate %2014, %2177 in 0 : vector<8x32xf32>, vector<8x32xf32> -> vector<16x32xf32>
    %cst_928 = arith.constant dense<0.000000e+00> : vector<16x32xf32>
    %2215 = tpu.matmul %2198, %2214, %cst_928 {dimension_numbers = #tpu.dot_dimension_numbers<[1], [0], [0], [1], [0, 0, 1, 1], [], []>} : vector<16x16xf32>, vector<16x32xf32>, vector<16x32xf32> -> vector<16x32xf32>
    %c0_929 = arith.constant 0 : index
    %c3_930 = arith.constant 3 : index
    %c0_931 = arith.constant 0 : index
    %c0_932 = arith.constant 0 : index
    %2216 = vector.load %arg9[%c0_929, %c3_930, %c0_931, %c0_932] : memref<1x8x16x32xf32, #tpu.memory_space<vmem>>, vector<1x1x16x32xf32>
    %2217 = vector.shape_cast %2216 : vector<1x1x16x32xf32> to vector<16x32xf32>
    %2218 = vector.shape_cast %2215 : vector<16x32xf32> to vector<1x1x16x32xf32>
    tpu.vector_store %arg9[%c0_929, %c3_930, %c0_931, %c0_932], %2218 {strides = array<i32>} : memref<1x8x16x32xf32, #tpu.memory_space<vmem>>, vector<1x1x16x32xf32>,
    %2219 = tpu.concatenate %2019, %2182 in 0 : vector<8x32xf32>, vector<8x32xf32> -> vector<16x32xf32>
    %cst_933 = arith.constant dense<0.000000e+00> : vector<16x32xf32>
    %2220 = tpu.matmul %2198, %2219, %cst_933 {dimension_numbers = #tpu.dot_dimension_numbers<[1], [0], [0], [1], [0, 0, 1, 1], [], []>} : vector<16x16xf32>, vector<16x32xf32>, vector<16x32xf32> -> vector<16x32xf32>
    %c0_934 = arith.constant 0 : index
    %c4_935 = arith.constant 4 : index
    %c0_936 = arith.constant 0 : index
    %c0_937 = arith.constant 0 : index
    %2221 = vector.load %arg9[%c0_934, %c4_935, %c0_936, %c0_937] : memref<1x8x16x32xf32, #tpu.memory_space<vmem>>, vector<1x1x16x32xf32>
    %2222 = vector.shape_cast %2221 : vector<1x1x16x32xf32> to vector<16x32xf32>
    %2223 = vector.shape_cast %2220 : vector<16x32xf32> to vector<1x1x16x32xf32>
    tpu.vector_store %arg9[%c0_934, %c4_935, %c0_936, %c0_937], %2223 {strides = array<i32>} : memref<1x8x16x32xf32, #tpu.memory_space<vmem>>, vector<1x1x16x32xf32>,
    %2224 = tpu.concatenate %2024, %2187 in 0 : vector<8x32xf32>, vector<8x32xf32> -> vector<16x32xf32>
    %cst_938 = arith.constant dense<0.000000e+00> : vector<16x32xf32>
    %2225 = tpu.matmul %2198, %2224, %cst_938 {dimension_numbers = #tpu.dot_dimension_numbers<[1], [0], [0], [1], [0, 0, 1, 1], [], []>} : vector<16x16xf32>, vector<16x32xf32>, vector<16x32xf32> -> vector<16x32xf32>
    %c0_939 = arith.constant 0 : index
    %c5_940 = arith.constant 5 : index
    %c0_941 = arith.constant 0 : index
    %c0_942 = arith.constant 0 : index
    %2226 = vector.load %arg9[%c0_939, %c5_940, %c0_941, %c0_942] : memref<1x8x16x32xf32, #tpu.memory_space<vmem>>, vector<1x1x16x32xf32>
    %2227 = vector.shape_cast %2226 : vector<1x1x16x32xf32> to vector<16x32xf32>
    %2228 = vector.shape_cast %2225 : vector<16x32xf32> to vector<1x1x16x32xf32>
    tpu.vector_store %arg9[%c0_939, %c5_940, %c0_941, %c0_942], %2228 {strides = array<i32>} : memref<1x8x16x32xf32, #tpu.memory_space<vmem>>, vector<1x1x16x32xf32>,
    %2229 = tpu.concatenate %2029, %2192 in 0 : vector<8x32xf32>, vector<8x32xf32> -> vector<16x32xf32>
    %cst_943 = arith.constant dense<0.000000e+00> : vector<16x32xf32>
    %2230 = tpu.matmul %2198, %2229, %cst_943 {dimension_numbers = #tpu.dot_dimension_numbers<[1], [0], [0], [1], [0, 0, 1, 1], [], []>} : vector<16x16xf32>, vector<16x32xf32>, vector<16x32xf32> -> vector<16x32xf32>
    %c0_944 = arith.constant 0 : index
    %c6_945 = arith.constant 6 : index
    %c0_946 = arith.constant 0 : index
    %c0_947 = arith.constant 0 : index
    %2231 = vector.load %arg9[%c0_944, %c6_945, %c0_946, %c0_947] : memref<1x8x16x32xf32, #tpu.memory_space<vmem>>, vector<1x1x16x32xf32>
    %2232 = vector.shape_cast %2231 : vector<1x1x16x32xf32> to vector<16x32xf32>
    %2233 = vector.shape_cast %2230 : vector<16x32xf32> to vector<1x1x16x32xf32>
    tpu.vector_store %arg9[%c0_944, %c6_945, %c0_946, %c0_947], %2233 {strides = array<i32>} : memref<1x8x16x32xf32, #tpu.memory_space<vmem>>, vector<1x1x16x32xf32>,
    %2234 = tpu.concatenate %2034, %2197 in 0 : vector<8x32xf32>, vector<8x32xf32> -> vector<16x32xf32>
    %cst_948 = arith.constant dense<0.000000e+00> : vector<16x32xf32>
    %2235 = tpu.matmul %2198, %2234, %cst_948 {dimension_numbers = #tpu.dot_dimension_numbers<[1], [0], [0], [1], [0, 0, 1, 1], [], []>} : vector<16x16xf32>, vector<16x32xf32>, vector<16x32xf32> -> vector<16x32xf32>
    %c0_949 = arith.constant 0 : index
    %c7_950 = arith.constant 7 : index
    %c0_951 = arith.constant 0 : index
    %c0_952 = arith.constant 0 : index
    %2236 = vector.load %arg9[%c0_949, %c7_950, %c0_951, %c0_952] : memref<1x8x16x32xf32, #tpu.memory_space<vmem>>, vector<1x1x16x32xf32>
    %2237 = vector.shape_cast %2236 : vector<1x1x16x32xf32> to vector<16x32xf32>
    %2238 = vector.shape_cast %2235 : vector<16x32xf32> to vector<1x1x16x32xf32>
    tpu.vector_store %arg9[%c0_949, %c7_950, %c0_951, %c0_952], %2238 {strides = array<i32>} : memref<1x8x16x32xf32, #tpu.memory_space<vmem>>, vector<1x1x16x32xf32>,
    return
  }
  func.func @transform_0(%arg0: i32, %arg1: i32) -> (i32, i32, i32) {
    %c0_i32 = arith.constant 0 : i32
    %c0_i32_0 = arith.constant 0 : i32
    %c0_i32_1 = arith.constant 0 : i32
    %c0_i32_2 = arith.constant 0 : i32
    return %c0_i32, %c0_i32_0, %c0_i32_1 : i32, i32, i32
  }
  func.func @transform_1(%arg0: i32, %arg1: i32) -> (i32, i32, i32) {
    %c0_i32 = arith.constant 0 : i32
    %c0_i32_0 = arith.constant 0 : i32
    %c0_i32_1 = arith.constant 0 : i32
    %c0_i32_2 = arith.constant 0 : i32
    return %c0_i32, %c0_i32_0, %c0_i32_1 : i32, i32, i32
  }
  func.func @transform_2(%arg0: i32, %arg1: i32) -> (i32, i32) {
    %c0_i32 = arith.constant 0 : i32
    %c0_i32_0 = arith.constant 0 : i32
    %c0_i32_1 = arith.constant 0 : i32
    return %c0_i32, %c0_i32_0 : i32, i32
  }
  func.func @transform_3(%arg0: i32, %arg1: i32) -> (i32, i32) {
    %c0_i32 = arith.constant 0 : i32
    %c0_i32_0 = arith.constant 0 : i32
    %c0_i32_1 = arith.constant 0 : i32
    return %c0_i32, %c0_i32_0 : i32, i32
  }
  func.func @transform_4(%arg0: i32, %arg1: i32) -> (i32, i32, i32, i32) {
    %c0_i32 = arith.constant 0 : i32
    %c0_i32_0 = arith.constant 0 : i32
    %c0_i32_1 = arith.constant 0 : i32
    return %arg0, %c0_i32, %arg1, %c0_i32_0 : i32, i32, i32, i32
  }
  func.func @transform_5(%arg0: i32, %arg1: i32) -> (i32, i32, i32, i32) {
    %c1_i32 = arith.constant 1 : i32
    %0 = arith.muli %arg1, %c1_i32 : i32
    %c1_i32_0 = arith.constant 1 : i32
    %1 = arith.subi %0, %c1_i32_0 : i32
    %c0_i32 = arith.constant 0 : i32
    %2 = arith.maxsi %1, %c0_i32 : i32
    %c0_i32_1 = arith.constant 0 : i32
    %c0_i32_2 = arith.constant 0 : i32
    %c0_i32_3 = arith.constant 0 : i32
    return %arg0, %c0_i32_1, %2, %c0_i32_2 : i32, i32, i32, i32
  }
  func.func @transform_6(%arg0: i32, %arg1: i32) -> (i32, i32, i32, i32) {
    %c1_i32 = arith.constant 1 : i32
    %0 = arith.addi %arg1, %c1_i32 : i32
    %c1_i32_0 = arith.constant 1 : i32
    %1 = arith.muli %0, %c1_i32_0 : i32
    %c1_i32_1 = arith.constant 1 : i32
    %2 = arith.minsi %1, %c1_i32_1 : i32
    %c0_i32 = arith.constant 0 : i32
    %c0_i32_2 = arith.constant 0 : i32
    %c0_i32_3 = arith.constant 0 : i32
    return %arg0, %c0_i32, %2, %c0_i32_2 : i32, i32, i32, i32
  }
  func.func @transform_7(%arg0: i32, %arg1: i32) -> (i32, i32, i32, i32) {
    %c0_i32 = arith.constant 0 : i32
    %c0_i32_0 = arith.constant 0 : i32
    %c0_i32_1 = arith.constant 0 : i32
    return %arg0, %c0_i32, %arg1, %c0_i32_0 : i32, i32, i32, i32
  }
}

</mosaic_0001>

<llo_original>
// kernel: tpu_custom_call.1
$region0: #{tpu_custom_call.1}
  #allocation0 [shape = 'u32[]', space=smem, size = 0x4, offset = 0x4, fixed_abs, tag = 'smem constant byte address 0x4 - core index']
  #allocation1 [shape = 'u32[144,128]{1,0:T(1,128)}', space=vmem, size = 0x12000, scoped, tag = 'internal scratch']
  #allocation7 [shape = 's32[]', space=sflag, size = 0x4, offset = 0, fixed_abs, tag = 'sflag constant byte address 0x0 - dummy sync flag']
  %s0 = inlined_call_operand.vmem [shape: f32[576,1,32], index: 0, kind: input, shape index: {}]
  %s1 = inlined_call_operand.vmem [shape: f32[48,1,32], index: 1, kind: input, shape index: {}]
  %s2 = inlined_call_operand.vmem [shape: f32[16,36], index: 2, kind: input, shape index: {}]
  %s3 = inlined_call_operand.vmem [shape: f32[16,16], index: 3, kind: input, shape index: {}]
  %s4 = inlined_call_operand.vmem [shape: f32[2,4,16,16], index: 4, kind: input, shape index: {}]
  %s5 = inlined_call_operand.vmem [shape: f32[2,4,16,16], index: 5, kind: input, shape index: {}]
  %s6 = inlined_call_operand.vmem [shape: f32[2,4,16,16], index: 6, kind: input, shape index: {}]
  %s7 = inlined_call_operand.hbm [shape: f32[2,8,32,32], index: 7, kind: output, shape index: {}]
  %s8 = sld [smem:[#allocation0]]
  $region175: #{tpu_custom_call.1} parent=0
    _
  %s10 = ssub.s32 1, %s8
  %s11 = scalar_select 0, %s10, %s8
  $region1: #{tpu_custom_call.1} parent=0
    #allocation2 [shape = 'u8[32768]{0}', space=vmem, size = 0x8000, scoped, tag = 'input window, operand 4']
    #allocation3 [shape = 'u8[32768]{0}', space=vmem, size = 0x8000, scoped, tag = 'input window, operand 5']
    #allocation4 [shape = 'u8[32768]{0}', space=vmem, size = 0x8000, scoped, tag = 'input window, operand 6']
    #allocation5 [shape = 'u8[131072]{0}', space=vmem, size = 0x20000, scoped, tag = 'output window, operand 0']
    #allocation6 [shape = 's32[2]{0}', space=sflag, size = 0x8, scoped, tag = 'scoped memory for tpu_custom_call.1']
    %12 = vsyncpa [#allocation6], 0
    %s13 = scalar_lea.sflag [#allocation6], 1
    %14 = vsyncpa %s13, 0
    loop: start=0, step=1, limit=6
    $region2: #{tpu_custom_call.1} parent=1 // loop_pre_header
      _
    $region3: #{tpu_custom_call.1} parent=1 // loop_header
      %s16 = sphi 0, %s20
      %p17 = scmp.ge.s32.totalorder %s16, 6
      %s23 = sphi 0, %s35
      %s24 = sphi 0, %s31
      %s25 = sphi 0, %s23
      %s26 = sphi 0, %s24
      %s27 = sphi 0, %s25
      %s28 = sphi 0, %s26
      %s36 = sphi 0, %s36
      %s38 = sphi 0, %s36
      %s39 = sphi 0, %s38
      %s53 = sphi 0, %s39
      %s57 = sphi 0, %s57
      %s59 = sphi 0, %s57
      %s60 = sphi 0, %s59
      %s74 = sphi 0, %s60
      %s78 = sphi 0, %s78
      %s80 = sphi 0, %s78
      %s81 = sphi 0, %s80
      %s95 = sphi 0, %s81
      %s99 = sphi 0, %s99
      %s101 = sphi 0, %s99
      %s102 = sphi 0, %s101
      %s116 = sphi 0, %s102
      %s124 = sphi 0, %s126
      %s127 = sphi 0, %s124
      %s128 = sphi 0, %s127
      %s144 = sphi 0, %s128
      %s158 = sphi 0, %s160
      %s161 = sphi 0, %s158
      %s162 = sphi 0, %s161
      %s178 = sphi 0, %s162
      %s192 = sphi 0, %s194
      %s195 = sphi 0, %s192
      %s196 = sphi 0, %s195
      %s212 = sphi 0, %s196
      %s220 = sphi 0, %s222
      %s223 = sphi 0, %s220
      %s224 = sphi 0, %s223
      %s240 = sphi 0, %s224
    $region4: #{tpu_custom_call.1} parent=1 // loop_header_branch
      %19 = sbr.rel (%p17) target = $region8
    $region5: #{tpu_custom_call.1} parent=1 // loop_body
      %s21 = ssub.s32 %s16, 1
      %s22 = ssub.s32 %s16, 2
      %s29 = sadd.s32 1, %s24
      %p30 = scmp.ge.s32.totalorder %s29, 2
      %s31 = scalar_select %p30, 0, %s29
      %s32 = sadd.s32 1, %s23
      %s33 = scalar_select %p30, %s32, %s23
      %p34 = scmp.ge.s32.totalorder %s33, 2
      %s35 = scalar_select %p34, 0, %s33
      %s37 = sadd.s32 %s36, 1
      %p40 = scmp.eq.s32.totalorder %s16, 3
      %p41 = scmp.ne.s32.totalorder %s36, %s38
      %p42 = scmp.eq.s32.totalorder %s16, 0
      %p43 = por %p41, %p42
      %p44 = scmp.ne.s32.totalorder %s36, %s38
      %p45 = scmp.eq.s32.totalorder %s21, 3
      %p46 = por %p44, %p45
      %p47 = scmp.ne.s32.totalorder %s38, %s39
      %p48 = scmp.eq.s32.totalorder %s21, 0
      %p49 = por %p47, %p48
      %p50 = scmp.ne.s32.totalorder %s38, %s39
      %p51 = scmp.eq.s32.totalorder %s22, 3
      %p52 = por %p50, %p51
      %p54 = scmp.ne.s32.totalorder %s39, %s53
      %p55 = scmp.eq.s32.totalorder %s22, 0
      %p56 = por %p54, %p55
      %s58 = sadd.s32 %s57, 1
      %p61 = scmp.eq.s32.totalorder %s16, 3
      %p62 = scmp.ne.s32.totalorder %s57, %s59
      %p63 = scmp.eq.s32.totalorder %s16, 0
      %p64 = por %p62, %p63
      %p65 = scmp.ne.s32.totalorder %s57, %s59
      %p66 = scmp.eq.s32.totalorder %s21, 3
      %p67 = por %p65, %p66
      %p68 = scmp.ne.s32.totalorder %s59, %s60
      %p69 = scmp.eq.s32.totalorder %s21, 0
      %p70 = por %p68, %p69
      %p71 = scmp.ne.s32.totalorder %s59, %s60
      %p72 = scmp.eq.s32.totalorder %s22, 3
      %p73 = por %p71, %p72
      %p75 = scmp.ne.s32.totalorder %s60, %s74
      %p76 = scmp.eq.s32.totalorder %s22, 0
      %p77 = por %p75, %p76
      %s79 = sadd.s32 %s78, 1
      %p82 = scmp.eq.s32.totalorder %s16, 3
      %p83 = scmp.ne.s32.totalorder %s78, %s80
      %p84 = scmp.eq.s32.totalorder %s16, 0
      %p85 = por %p83, %p84
      %p86 = scmp.ne.s32.totalorder %s78, %s80
      %p87 = scmp.eq.s32.totalorder %s21, 3
      %p88 = por %p86, %p87
      %p89 = scmp.ne.s32.totalorder %s80, %s81
      %p90 = scmp.eq.s32.totalorder %s21, 0
      %p91 = por %p89, %p90
      %p92 = scmp.ne.s32.totalorder %s80, %s81
      %p93 = scmp.eq.s32.totalorder %s22, 3
      %p94 = por %p92, %p93
      %p96 = scmp.ne.s32.totalorder %s81, %s95
      %p97 = scmp.eq.s32.totalorder %s22, 0
      %p98 = por %p96, %p97
      %s100 = sadd.s32 %s99, 1
      %p103 = scmp.eq.s32.totalorder %s16, 3
      %p104 = scmp.ne.s32.totalorder %s99, %s101
      %p105 = scmp.eq.s32.totalorder %s16, 0
      %p106 = por %p104, %p105
      %p107 = scmp.ne.s32.totalorder %s99, %s101
      %p108 = scmp.eq.s32.totalorder %s21, 3
      %p109 = por %p107, %p108
      %p110 = scmp.ne.s32.totalorder %s101, %s102
      %p111 = scmp.eq.s32.totalorder %s21, 0
      %p112 = por %p110, %p111
      %p113 = scmp.ne.s32.totalorder %s101, %s102
      %p114 = scmp.eq.s32.totalorder %s22, 3
      %p115 = por %p113, %p114
      %p117 = scmp.ne.s32.totalorder %s102, %s116
      %p118 = scmp.eq.s32.totalorder %s22, 0
      %p119 = por %p117, %p118
      %s120 = ssub.s32 %s23, %s35
      %s121 = ssub.s32 %s24, %s31
      %s122 = sor.u32 %s120, %s121
      %p123 = scmp.eq.s32.totalorder %s122, 0
      %s125 = sadd.s32 %s124, 1
      %s126 = scalar_select %p123, %s124, %s125
      %p129 = pneg %p123
      %p130 = scmp.eq.s32.totalorder %s16, 3
      %p131 = por %p129, %p130
      %p132 = scmp.ne.s32.totalorder %s124, %s127
      %p133 = scmp.eq.s32.totalorder %s16, 0
      %p134 = por %p132, %p133
      %p135 = scmp.ne.s32.totalorder %s124, %s127
      %p136 = scmp.eq.s32.totalorder %s21, 3
      %p137 = por %p135, %p136
      %p138 = scmp.ne.s32.totalorder %s127, %s128
      %p139 = scmp.eq.s32.totalorder %s21, 0
      %p140 = por %p138, %p139
      %p141 = scmp.ne.s32.totalorder %s127, %s128
      %p142 = scmp.eq.s32.totalorder %s22, 3
      %p143 = por %p141, %p142
      %p145 = scmp.ne.s32.totalorder %s128, %s144
      %p146 = scmp.eq.s32.totalorder %s22, 0
      %p147 = por %p145, %p146
      %s148 = ssub.s32 %s24, 1
      %p149 = scmp.gt.s32.totalorder %s148, 0
      %s150 = scalar_select %p149, %s148, 0
      %s151 = ssub.s32 %s31, 1
      %p152 = scmp.gt.s32.totalorder %s151, 0
      %s153 = scalar_select %p152, %s151, 0
      %s154 = ssub.s32 %s23, %s35
      %s155 = ssub.s32 %s150, %s153
      %s156 = sor.u32 %s154, %s155
      %p157 = scmp.eq.s32.totalorder %s156, 0
      %s159 = sadd.s32 %s158, 1
      %s160 = scalar_select %p157, %s158, %s159
      %p163 = pneg %p157
      %p164 = scmp.eq.s32.totalorder %s16, 3
      %p165 = por %p163, %p164
      %p166 = scmp.ne.s32.totalorder %s158, %s161
      %p167 = scmp.eq.s32.totalorder %s16, 0
      %p168 = por %p166, %p167
      %p169 = scmp.ne.s32.totalorder %s158, %s161
      %p170 = scmp.eq.s32.totalorder %s21, 3
      %p171 = por %p169, %p170
      %p172 = scmp.ne.s32.totalorder %s161, %s162
      %p173 = scmp.eq.s32.totalorder %s21, 0
      %p174 = por %p172, %p173
      %p175 = scmp.ne.s32.totalorder %s161, %s162
      %p176 = scmp.eq.s32.totalorder %s22, 3
      %p177 = por %p175, %p176
      %p179 = scmp.ne.s32.totalorder %s162, %s178
      %p180 = scmp.eq.s32.totalorder %s22, 0
      %p181 = por %p179, %p180
      %s182 = sadd.s32 %s24, 1
      %p183 = scmp.lt.s32.totalorder %s182, 1
      %s184 = scalar_select %p183, %s182, 1
      %s185 = sadd.s32 %s31, 1
      %p186 = scmp.lt.s32.totalorder %s185, 1
      %s187 = scalar_select %p186, %s185, 1
      %s188 = ssub.s32 %s23, %s35
      %s189 = ssub.s32 %s184, %s187
      %s190 = sor.u32 %s188, %s189
      %p191 = scmp.eq.s32.totalorder %s190, 0
      %s193 = sadd.s32 %s192, 1
      %s194 = scalar_select %p191, %s192, %s193
      %p197 = pneg %p191
      %p198 = scmp.eq.s32.totalorder %s16, 3
      %p199 = por %p197, %p198
      %p200 = scmp.ne.s32.totalorder %s192, %s195
      %p201 = scmp.eq.s32.totalorder %s16, 0
      %p202 = por %p200, %p201
      %p203 = scmp.ne.s32.totalorder %s192, %s195
      %p204 = scmp.eq.s32.totalorder %s21, 3
      %p205 = por %p203, %p204
      %p206 = scmp.ne.s32.totalorder %s195, %s196
      %p207 = scmp.eq.s32.totalorder %s21, 0
      %p208 = por %p206, %p207
      %p209 = scmp.ne.s32.totalorder %s195, %s196
      %p210 = scmp.eq.s32.totalorder %s22, 3
      %p211 = por %p209, %p210
      %p213 = scmp.ne.s32.totalorder %s196, %s212
      %p214 = scmp.eq.s32.totalorder %s22, 0
      %p215 = por %p213, %p214
      %s216 = ssub.s32 %s23, %s35
      %s217 = ssub.s32 %s24, %s31
      %s218 = sor.u32 %s216, %s217
      %p219 = scmp.eq.s32.totalorder %s218, 0
      %s221 = sadd.s32 %s220, 1
      %s222 = scalar_select %p219, %s220, %s221
      %p225 = pneg %p219
      %p226 = scmp.eq.s32.totalorder %s16, 3
      %p227 = por %p225, %p226
      %p228 = scmp.ne.s32.totalorder %s220, %s223
      %p229 = scmp.eq.s32.totalorder %s16, 0
      %p230 = por %p228, %p229
      %p231 = scmp.ne.s32.totalorder %s220, %s223
      %p232 = scmp.eq.s32.totalorder %s21, 3
      %p233 = por %p231, %p232
      %p234 = scmp.ne.s32.totalorder %s223, %s224
      %p235 = scmp.eq.s32.totalorder %s21, 0
      %p236 = por %p234, %p235
      %p237 = scmp.ne.s32.totalorder %s223, %s224
      %p238 = scmp.eq.s32.totalorder %s22, 3
      %p239 = por %p237, %p238
      %p241 = scmp.ne.s32.totalorder %s224, %s240
      %p242 = scmp.eq.s32.totalorder %s22, 0
      %p243 = por %p241, %p242
      %p244 = scmp.le.s32.totalorder 1, %s16
      %p245 = scmp.lt.s32.totalorder %s16, 5
      %p246 = pnand %p244, %p245
      %p247 = pneg %p246
      // Predicated region
      $region9: #{tpu_custom_call.1} parent=5 // pred_check
        _
      $region10: #{tpu_custom_call.1} parent=5 // pred_check_branch
        %249 = sbr.rel (%p246) target = $region12
      $region11: #{tpu_custom_call.1} parent=5 // pred_region
        %s250 = ssub.s32 %s16, 1
        // Predicated region
        $region13: #{tpu_custom_call.1} parent=11 // pred_check
          %p251 = pneg %p49
        $region14: #{tpu_custom_call.1} parent=11 // pred_check_branch
          %253 = sbr.rel (%p251) target = $region16
        $region15: #{tpu_custom_call.1} parent=11 // pred_region
          _
        $region16: #{tpu_custom_call.1} parent=11 // pred_fallthru
          _
        // Predicated region
        $region17: #{tpu_custom_call.1} parent=11 // pred_check
          %p254 = pneg %p70
        $region18: #{tpu_custom_call.1} parent=11 // pred_check_branch
          %256 = sbr.rel (%p254) target = $region20
        $region19: #{tpu_custom_call.1} parent=11 // pred_region
          _
        $region20: #{tpu_custom_call.1} parent=11 // pred_fallthru
          _
        // Predicated region
        $region21: #{tpu_custom_call.1} parent=11 // pred_check
          %p257 = pneg %p91
        $region22: #{tpu_custom_call.1} parent=11 // pred_check_branch
          %259 = sbr.rel (%p257) target = $region24
        $region23: #{tpu_custom_call.1} parent=11 // pred_region
          _
        $region24: #{tpu_custom_call.1} parent=11 // pred_fallthru
          _
        // Predicated region
        $region25: #{tpu_custom_call.1} parent=11 // pred_check
          %p260 = pneg %p112
        $region26: #{tpu_custom_call.1} parent=11 // pred_check_branch
          %262 = sbr.rel (%p260) target = $region28
        $region27: #{tpu_custom_call.1} parent=11 // pred_region
          _
        $region28: #{tpu_custom_call.1} parent=11 // pred_fallthru
          _
      $region12: #{tpu_custom_call.1} parent=5 // pred_fallthru
        _
      %p263 = scmp.lt.s32.totalorder %s16, 4
      // Predicated region
      $region29: #{tpu_custom_call.1} parent=5 // pred_check
        %p264 = pneg %p263
      $region30: #{tpu_custom_call.1} parent=5 // pred_check_branch
        %266 = sbr.rel (%p264) target = $region32
      $region31: #{tpu_custom_call.1} parent=5 // pred_region
        // Predicated region
        $region33: #{tpu_custom_call.1} parent=31 // pred_check
          %p267 = pneg %p134
        $region34: #{tpu_custom_call.1} parent=31 // pred_check_branch
          %269 = sbr.rel (%p267) target = $region36
        $region35: #{tpu_custom_call.1} parent=31 // pred_region
          %s270 = sand.u32 %s124, 1
          %s271 = sand.u32 %s124, 1
          %s272 = smul.addr %s271, 32
          %s273 = scalar_lea.vmem [#allocation2], %s272
          %s274 = smul.addr %s23, 8
          %s275 = sadd.s32 %s24, %s274
          %s276 = smul.addr %s275, 8
          %s277 = scalar_lea.vmem %s4, %s276
          // Predicated region
          $region37: #{tpu_custom_call.1} parent=35 // pred_check
            _
          $region38: #{tpu_custom_call.1} parent=35 // pred_check_branch
            %279 = sbr.rel (0) target = $region40
          $region39: #{tpu_custom_call.1} parent=35 // pred_region
            // Predicated region
            $region41: #{tpu_custom_call.1} parent=39 // pred_check
              _
            $region42: #{tpu_custom_call.1} parent=39 // pred_check_branch
              %281 = sbr.rel (0) target = $region44
            $region43: #{tpu_custom_call.1} parent=39 // pred_region
              // Predicated region
              $region56: #{tpu_custom_call.1} parent=43 // pred_check
                _
              $region57: #{tpu_custom_call.1} parent=43 // pred_check_branch
                %302 = sbr.rel (0) target = $region59
              $region58: #{tpu_custom_call.1} parent=43 // pred_region
                loop: start=0, step=1, limit=1
                $region60: #{tpu_custom_call.1} parent=58 // loop_pre_header
                  _
                $region61: #{tpu_custom_call.1} parent=58 // loop_header
                  %s304 = sphi 0, %s308
                  %p305 = scmp.ge.s32.totalorder %s304, 1
                  %s309 = sphi %s277, %s277
                  %s310 = sphi %s273, %s273
                $region62: #{tpu_custom_call.1} parent=58 // loop_header_branch
                  %307 = sbr.rel (%p305) target = $region66
                $region63: #{tpu_custom_call.1} parent=58 // loop_body
                  %v311 = vld [vmem:[%s309] sm:$0xff]
                  %312 = vst [vmem:[%s310] sm:$0xff] %v311
                  %v313 = vld [vmem:[%s309 + $0x10] sm:$0xff]
                  %314 = vst [vmem:[%s310 + $0x8] sm:$0xff] %v313
                  %v315 = vld [vmem:[%s309 + $0x20] sm:$0xff]
                  %316 = vst [vmem:[%s310 + $0x10] sm:$0xff] %v315
                  %v317 = vld [vmem:[%s309 + $0x30] sm:$0xff]
                  %318 = vst [vmem:[%s310 + $0x18] sm:$0xff] %v317
                $region64: #{tpu_custom_call.1} parent=58 // loop_footer
                  %s308 = sadd.s32 1, %s304
                $region65: #{tpu_custom_call.1} parent=58 // loop_footer_branch
                  %303 = sbr.rel target = $region61
                $region66: #{tpu_custom_call.1} parent=58 // loop_exit
                  _
              $region59: #{tpu_custom_call.1} parent=43 // pred_fallthru
                _
              // Predicated region
              $region67: #{tpu_custom_call.1} parent=43 // pred_check
                _
              $region68: #{tpu_custom_call.1} parent=43 // pred_check_branch
                %320 = sbr.rel target = $region70
              $region69: #{tpu_custom_call.1} parent=43 // pred_region
                _
              $region70: #{tpu_custom_call.1} parent=43 // pred_fallthru
                _
            $region44: #{tpu_custom_call.1} parent=39 // pred_fallthru
              _
            // Predicated region
            $region45: #{tpu_custom_call.1} parent=39 // pred_check
              _
            $region46: #{tpu_custom_call.1} parent=39 // pred_check_branch
              %283 = sbr.rel target = $region48
            $region47: #{tpu_custom_call.1} parent=39 // pred_region
              loop: start=0, step=1, limit=1
              $region49: #{tpu_custom_call.1} parent=47 // loop_pre_header
                _
              $region50: #{tpu_custom_call.1} parent=47 // loop_header
                %s286 = sphi 0, %s290
                %p287 = scmp.ge.s32.totalorder %s286, 1
                %s291 = sphi %s277, %s277
                %s292 = sphi %s273, %s273
              $region51: #{tpu_custom_call.1} parent=47 // loop_header_branch
                %289 = sbr.rel (%p287) target = $region55
              $region52: #{tpu_custom_call.1} parent=47 // loop_body
                %v293 = vld [vmem:[%s291] sm:$0xff]
                %294 = vst [vmem:[%s292] sm:$0xff] %v293
                %v295 = vld [vmem:[%s291 + $0x10] sm:$0xff]
                %296 = vst [vmem:[%s292 + $0x8] sm:$0xff] %v295
                %v297 = vld [vmem:[%s291 + $0x20] sm:$0xff]
                %298 = vst [vmem:[%s292 + $0x10] sm:$0xff] %v297
                %v299 = vld [vmem:[%s291 + $0x30] sm:$0xff]
                %300 = vst [vmem:[%s292 + $0x18] sm:$0xff] %v299
              $region53: #{tpu_custom_call.1} parent=47 // loop_footer
                %s290 = sadd.s32 1, %s286
              $region54: #{tpu_custom_call.1} parent=47 // loop_footer_branch
                %285 = sbr.rel target = $region50
              $region55: #{tpu_custom_call.1} parent=47 // loop_exit
                _
            $region48: #{tpu_custom_call.1} parent=39 // pred_fallthru
              _
          $region40: #{tpu_custom_call.1} parent=35 // pred_fallthru
            _
          %321 = vnop
        $region36: #{tpu_custom_call.1} parent=31 // pred_fallthru
          _
        // Predicated region
        $region71: #{tpu_custom_call.1} parent=31 // pred_check
          %p322 = pneg %p168
        $region72: #{tpu_custom_call.1} parent=31 // pred_check_branch
          %324 = sbr.rel (%p322) target = $region74
        $region73: #{tpu_custom_call.1} parent=31 // pred_region
          %s325 = sand.u32 %s158, 1
          %s326 = sand.u32 %s158, 1
          %s327 = smul.addr %s326, 32
          %s328 = scalar_lea.vmem [#allocation3], %s327
          %s329 = ssub.s32 %s24, 1
          %p330 = scmp.gt.s32.totalorder %s329, 0
          %s331 = scalar_select %p330, %s329, 0
          %s332 = smul.addr %s23, 8
          %s333 = sadd.s32 %s331, %s332
          %s334 = smul.addr %s333, 8
          %s335 = scalar_lea.vmem %s5, %s334
          // Predicated region
          $region75: #{tpu_custom_call.1} parent=73 // pred_check
            _
          $region76: #{tpu_custom_call.1} parent=73 // pred_check_branch
            %337 = sbr.rel (0) target = $region78
          $region77: #{tpu_custom_call.1} parent=73 // pred_region
            // Predicated region
            $region79: #{tpu_custom_call.1} parent=77 // pred_check
              _
            $region80: #{tpu_custom_call.1} parent=77 // pred_check_branch
              %339 = sbr.rel (0) target = $region82
            $region81: #{tpu_custom_call.1} parent=77 // pred_region
              // Predicated region
              $region94: #{tpu_custom_call.1} parent=81 // pred_check
                _
              $region95: #{tpu_custom_call.1} parent=81 // pred_check_branch
                %360 = sbr.rel (0) target = $region97
              $region96: #{tpu_custom_call.1} parent=81 // pred_region
                loop: start=0, step=1, limit=1
                $region98: #{tpu_custom_call.1} parent=96 // loop_pre_header
                  _
                $region99: #{tpu_custom_call.1} parent=96 // loop_header
                  %s362 = sphi 0, %s366
                  %p363 = scmp.ge.s32.totalorder %s362, 1
                  %s367 = sphi %s335, %s335
                  %s368 = sphi %s328, %s328
                $region100: #{tpu_custom_call.1} parent=96 // loop_header_branch
                  %365 = sbr.rel (%p363) target = $region104
                $region101: #{tpu_custom_call.1} parent=96 // loop_body
                  %v369 = vld [vmem:[%s367] sm:$0xff]
                  %370 = vst [vmem:[%s368] sm:$0xff] %v369
                  %v371 = vld [vmem:[%s367 + $0x10] sm:$0xff]
                  %372 = vst [vmem:[%s368 + $0x8] sm:$0xff] %v371
                  %v373 = vld [vmem:[%s367 + $0x20] sm:$0xff]
                  %374 = vst [vmem:[%s368 + $0x10] sm:$0xff] %v373
                  %v375 = vld [vmem:[%s367 + $0x30] sm:$0xff]
                  %376 = vst [vmem:[%s368 + $0x18] sm:$0xff] %v375
                $region102: #{tpu_custom_call.1} parent=96 // loop_footer
                  %s366 = sadd.s32 1, %s362
                $region103: #{tpu_custom_call.1} parent=96 // loop_footer_branch
                  %361 = sbr.rel target = $region99
                $region104: #{tpu_custom_call.1} parent=96 // loop_exit
                  _
              $region97: #{tpu_custom_call.1} parent=81 // pred_fallthru
                _
              // Predicated region
              $region105: #{tpu_custom_call.1} parent=81 // pred_check
                _
              $region106: #{tpu_custom_call.1} parent=81 // pred_check_branch
                %378 = sbr.rel target = $region108
              $region107: #{tpu_custom_call.1} parent=81 // pred_region
                _
              $region108: #{tpu_custom_call.1} parent=81 // pred_fallthru
                _
            $region82: #{tpu_custom_call.1} parent=77 // pred_fallthru
              _
            // Predicated region
            $region83: #{tpu_custom_call.1} parent=77 // pred_check
              _
            $region84: #{tpu_custom_call.1} parent=77 // pred_check_branch
              %341 = sbr.rel target = $region86
            $region85: #{tpu_custom_call.1} parent=77 // pred_region
              loop: start=0, step=1, limit=1
              $region87: #{tpu_custom_call.1} parent=85 // loop_pre_header
                _
              $region88: #{tpu_custom_call.1} parent=85 // loop_header
                %s344 = sphi 0, %s348
                %p345 = scmp.ge.s32.totalorder %s344, 1
                %s349 = sphi %s335, %s335
                %s350 = sphi %s328, %s328
              $region89: #{tpu_custom_call.1} parent=85 // loop_header_branch
                %347 = sbr.rel (%p345) target = $region93
              $region90: #{tpu_custom_call.1} parent=85 // loop_body
                %v351 = vld [vmem:[%s349] sm:$0xff]
                %352 = vst [vmem:[%s350] sm:$0xff] %v351
                %v353 = vld [vmem:[%s349 + $0x10] sm:$0xff]
                %354 = vst [vmem:[%s350 + $0x8] sm:$0xff] %v353
                %v355 = vld [vmem:[%s349 + $0x20] sm:$0xff]
                %356 = vst [vmem:[%s350 + $0x10] sm:$0xff] %v355
                %v357 = vld [vmem:[%s349 + $0x30] sm:$0xff]
                %358 = vst [vmem:[%s350 + $0x18] sm:$0xff] %v357
              $region91: #{tpu_custom_call.1} parent=85 // loop_footer
                %s348 = sadd.s32 1, %s344
              $region92: #{tpu_custom_call.1} parent=85 // loop_footer_branch
                %343 = sbr.rel target = $region88
              $region93: #{tpu_custom_call.1} parent=85 // loop_exit
                _
            $region86: #{tpu_custom_call.1} parent=77 // pred_fallthru
              _
          $region78: #{tpu_custom_call.1} parent=73 // pred_fallthru
            _
          %379 = vnop
        $region74: #{tpu_custom_call.1} parent=31 // pred_fallthru
          _
        // Predicated region
        $region109: #{tpu_custom_call.1} parent=31 // pred_check
          %p380 = pneg %p202
        $region110: #{tpu_custom_call.1} parent=31 // pred_check_branch
          %382 = sbr.rel (%p380) target = $region112
        $region111: #{tpu_custom_call.1} parent=31 // pred_region
          %s383 = sand.u32 %s192, 1
          %s384 = sand.u32 %s192, 1
          %s385 = smul.addr %s384, 32
          %s386 = scalar_lea.vmem [#allocation4], %s385
          %s387 = sadd.s32 %s24, 1
          %p388 = scmp.lt.s32.totalorder %s387, 1
          %s389 = scalar_select %p388, %s387, 1
          %s390 = smul.addr %s23, 8
          %s391 = sadd.s32 %s389, %s390
          %s392 = smul.addr %s391, 8
          %s393 = scalar_lea.vmem %s6, %s392
          // Predicated region
          $region113: #{tpu_custom_call.1} parent=111 // pred_check
            _
          $region114: #{tpu_custom_call.1} parent=111 // pred_check_branch
            %395 = sbr.rel (0) target = $region116
          $region115: #{tpu_custom_call.1} parent=111 // pred_region
            // Predicated region
            $region117: #{tpu_custom_call.1} parent=115 // pred_check
              _
            $region118: #{tpu_custom_call.1} parent=115 // pred_check_branch
              %397 = sbr.rel (0) target = $region120
            $region119: #{tpu_custom_call.1} parent=115 // pred_region
              // Predicated region
              $region132: #{tpu_custom_call.1} parent=119 // pred_check
                _
              $region133: #{tpu_custom_call.1} parent=119 // pred_check_branch
                %418 = sbr.rel (0) target = $region135
              $region134: #{tpu_custom_call.1} parent=119 // pred_region
                loop: start=0, step=1, limit=1
                $region136: #{tpu_custom_call.1} parent=134 // loop_pre_header
                  _
                $region137: #{tpu_custom_call.1} parent=134 // loop_header
                  %s420 = sphi 0, %s424
                  %p421 = scmp.ge.s32.totalorder %s420, 1
                  %s425 = sphi %s393, %s393
                  %s426 = sphi %s386, %s386
                $region138: #{tpu_custom_call.1} parent=134 // loop_header_branch
                  %423 = sbr.rel (%p421) target = $region142
                $region139: #{tpu_custom_call.1} parent=134 // loop_body
                  %v427 = vld [vmem:[%s425] sm:$0xff]
                  %428 = vst [vmem:[%s426] sm:$0xff] %v427
                  %v429 = vld [vmem:[%s425 + $0x10] sm:$0xff]
                  %430 = vst [vmem:[%s426 + $0x8] sm:$0xff] %v429
                  %v431 = vld [vmem:[%s425 + $0x20] sm:$0xff]
                  %432 = vst [vmem:[%s426 + $0x10] sm:$0xff] %v431
                  %v433 = vld [vmem:[%s425 + $0x30] sm:$0xff]
                  %434 = vst [vmem:[%s426 + $0x18] sm:$0xff] %v433
                $region140: #{tpu_custom_call.1} parent=134 // loop_footer
                  %s424 = sadd.s32 1, %s420
                $region141: #{tpu_custom_call.1} parent=134 // loop_footer_branch
                  %419 = sbr.rel target = $region137
                $region142: #{tpu_custom_call.1} parent=134 // loop_exit
                  _
              $region135: #{tpu_custom_call.1} parent=119 // pred_fallthru
                _
              // Predicated region
              $region143: #{tpu_custom_call.1} parent=119 // pred_check
                _
              $region144: #{tpu_custom_call.1} parent=119 // pred_check_branch
                %436 = sbr.rel target = $region146
              $region145: #{tpu_custom_call.1} parent=119 // pred_region
                _
              $region146: #{tpu_custom_call.1} parent=119 // pred_fallthru
                _
            $region120: #{tpu_custom_call.1} parent=115 // pred_fallthru
              _
            // Predicated region
            $region121: #{tpu_custom_call.1} parent=115 // pred_check
              _
            $region122: #{tpu_custom_call.1} parent=115 // pred_check_branch
              %399 = sbr.rel target = $region124
            $region123: #{tpu_custom_call.1} parent=115 // pred_region
              loop: start=0, step=1, limit=1
              $region125: #{tpu_custom_call.1} parent=123 // loop_pre_header
                _
              $region126: #{tpu_custom_call.1} parent=123 // loop_header
                %s402 = sphi 0, %s406
                %p403 = scmp.ge.s32.totalorder %s402, 1
                %s407 = sphi %s393, %s393
                %s408 = sphi %s386, %s386
              $region127: #{tpu_custom_call.1} parent=123 // loop_header_branch
                %405 = sbr.rel (%p403) target = $region131
              $region128: #{tpu_custom_call.1} parent=123 // loop_body
                %v409 = vld [vmem:[%s407] sm:$0xff]
                %410 = vst [vmem:[%s408] sm:$0xff] %v409
                %v411 = vld [vmem:[%s407 + $0x10] sm:$0xff]
                %412 = vst [vmem:[%s408 + $0x8] sm:$0xff] %v411
                %v413 = vld [vmem:[%s407 + $0x20] sm:$0xff]
                %414 = vst [vmem:[%s408 + $0x10] sm:$0xff] %v413
                %v415 = vld [vmem:[%s407 + $0x30] sm:$0xff]
                %416 = vst [vmem:[%s408 + $0x18] sm:$0xff] %v415
              $region129: #{tpu_custom_call.1} parent=123 // loop_footer
                %s406 = sadd.s32 1, %s402
              $region130: #{tpu_custom_call.1} parent=123 // loop_footer_branch
                %401 = sbr.rel target = $region126
              $region131: #{tpu_custom_call.1} parent=123 // loop_exit
                _
            $region124: #{tpu_custom_call.1} parent=115 // pred_fallthru
              _
          $region116: #{tpu_custom_call.1} parent=111 // pred_fallthru
            _
          %437 = vnop
        $region112: #{tpu_custom_call.1} parent=31 // pred_fallthru
          _
      $region32: #{tpu_custom_call.1} parent=5 // pred_fallthru
        _
      %p438 = scmp.le.s32.totalorder 1, %s16
      %p439 = scmp.lt.s32.totalorder %s16, 5
      %p440 = pnand %p438, %p439
      %p441 = pneg %p440
      // Predicated region
      $region147: #{tpu_custom_call.1} parent=5 // pred_check
        _
      $region148: #{tpu_custom_call.1} parent=5 // pred_check_branch
        %443 = sbr.rel (%p440) target = $region150
      $region149: #{tpu_custom_call.1} parent=5 // pred_region
        %s444 = ssub.s32 %s16, 1
        %s445 = sand.u32 %s127, 1
        %s446 = sand.u32 %s127, 1
        %s447 = smul.addr %s446, 32
        %s448 = scalar_lea.vmem [#allocation2], %s447
        // Predicated region
        $region151: #{tpu_custom_call.1} parent=149 // pred_check
          %p449 = pneg %p140
        $region152: #{tpu_custom_call.1} parent=149 // pred_check_branch
          %451 = sbr.rel (%p449) target = $region154
        $region153: #{tpu_custom_call.1} parent=149 // pred_region
          _
        $region154: #{tpu_custom_call.1} parent=149 // pred_fallthru
          _
        %s452 = sand.u32 %s161, 1
        %s453 = sand.u32 %s161, 1
        %s454 = smul.addr %s453, 32
        %s455 = scalar_lea.vmem [#allocation3], %s454
        // Predicated region
        $region155: #{tpu_custom_call.1} parent=149 // pred_check
          %p456 = pneg %p174
        $region156: #{tpu_custom_call.1} parent=149 // pred_check_branch
          %458 = sbr.rel (%p456) target = $region158
        $region157: #{tpu_custom_call.1} parent=149 // pred_region
          _
        $region158: #{tpu_custom_call.1} parent=149 // pred_fallthru
          _
        %s459 = sand.u32 %s195, 1
        %s460 = sand.u32 %s195, 1
        %s461 = smul.addr %s460, 32
        %s462 = scalar_lea.vmem [#allocation4], %s461
        // Predicated region
        $region159: #{tpu_custom_call.1} parent=149 // pred_check
          %p463 = pneg %p208
        $region160: #{tpu_custom_call.1} parent=149 // pred_check_branch
          %465 = sbr.rel (%p463) target = $region162
        $region161: #{tpu_custom_call.1} parent=149 // pred_region
          _
        $region162: #{tpu_custom_call.1} parent=149 // pred_fallthru
          _
        %p466 = pneg %p49
        %p467 = pneg %p46
        %p468 = pneg %p70
        %p469 = pneg %p67
        %p470 = pneg %p91
        %p471 = pneg %p88
        %p472 = pneg %p112
        %p473 = pneg %p109
        %s474 = sand.u32 %s127, 1
        %s475 = sand.u32 %s127, 1
        %s476 = smul.addr %s475, 32
        %s477 = scalar_lea.vmem [#allocation2], %s476
        %p478 = pneg %p140
        %p479 = pneg %p137
        %s480 = sand.u32 %s161, 1
        %s481 = sand.u32 %s161, 1
        %s482 = smul.addr %s481, 32
        %s483 = scalar_lea.vmem [#allocation3], %s482
        %p484 = pneg %p174
        %p485 = pneg %p171
        %s486 = sand.u32 %s195, 1
        %s487 = sand.u32 %s195, 1
        %s488 = smul.addr %s487, 32
        %s489 = scalar_lea.vmem [#allocation4], %s488
        %p490 = pneg %p208
        %p491 = pneg %p205
        %p492 = pneg %p236
        %p493 = pneg %p233
        %s494 = sand.u32 %s223, 1
        %s495 = scalar_lea.sflag [#allocation6], %s494
        %s496 = sand.u32 %s223, 1
        %s497 = smul.addr %s496, 128
        %s498 = scalar_lea.vmem [#allocation5], %s497
        %s499 = ssub.s32 %s26, 1
        %p500 = scmp.gt.s32.totalorder %s499, 0
        %s501 = scalar_select %p500, %s499, 0
        %s502 = sadd.s32 %s26, 1
        %p503 = scmp.lt.s32.totalorder %s502, 1
        %s504 = scalar_select %p503, %s502, 1
        %s505 = smul.u32 2, %s26
        %p506 = scmp.gt.s32.totalorder %s26, 0
        %s507 = scalar_select %p506, 1, 0
        %s508 = scvt.s32.f32 %s507
        %p509 = scmp.lt.s32.totalorder %s26, 1
        %s510 = scalar_select %p509, 1, 0
        %s511 = scvt.s32.f32 %s510
        %s512 = ssub.f32 1.0, %s508
        %s513 = ssub.f32 1.0, %s511
        %v514 = vld [vmem:[%s2] sm:$0xff]
        %v515 = vld [vmem:[%s2 + $0x8] sm:$0xff]
        %v516 = vlaneseq
        %v517 = vshrl.u32 %v516, 7
        %vm518 = vcmp.eq.s32.totalorder %v517, 0
        %v519 = vsel %vm518, 1, 0
        %v520 = vcvt.s32.f32 %v519
        %vm521 = vcmp.eq.s32.totalorder %v517, 7
        %v522 = vsel %vm521, 1, 0
        %v523 = vcvt.s32.f32 %v522
        %v524 = vld [vmem:[%s1] sm:$0x1]
        %v526 = vlaneseq
        %v527 = vshrl.u32 %v526, 7
        %v528 = vsub.s32 0, %v527
        %v529 = vrot.slane %v524, %v528
        %v531 = vstv %s512
        %v532 = vmul.f32 %v531, %v520
        %s533 = scalar_lea.vmem %s1, 16
        %v534 = vld [vmem:[%s533] sm:$0x1]
        %v536 = vlaneseq
        %v537 = vshrl.u32 %v536, 7
        %v538 = vsub.s32 0, %v537
        %v539 = vrot.slane %v534, %v538
        %v541 = vmul.f32 %v532, %v539
        %v542 = vsub.f32 %v529, %v541
        %s543 = scalar_lea.vmem %s1, 1
        %v544 = vld [vmem:[%s543] sm:$0x1]
        %v546 = vlaneseq
        %v547 = vshrl.u32 %v546, 7
        %v548 = vsub.s32 0, %v547
        %v549 = vrot.slane %v544, %v548
        %s551 = scalar_lea.vmem %s1, 17
        %v552 = vld [vmem:[%s551] sm:$0x1]
        %v554 = vlaneseq
        %v555 = vshrl.u32 %v554, 7
        %v556 = vsub.s32 0, %v555
        %v557 = vrot.slane %v552, %v556
        %v559 = vmul.f32 %v532, %v557
        %v560 = vsub.f32 %v549, %v559
        %s561 = scalar_lea.vmem %s1, 2
        %v562 = vld [vmem:[%s561] sm:$0x1]
        %v564 = vlaneseq
        %v565 = vshrl.u32 %v564, 7
        %v566 = vsub.s32 0, %v565
        %v567 = vrot.slane %v562, %v566
        %s569 = scalar_lea.vmem %s1, 18
        %v570 = vld [vmem:[%s569] sm:$0x1]
        %v572 = vlaneseq
        %v573 = vshrl.u32 %v572, 7
        %v574 = vsub.s32 0, %v573
        %v575 = vrot.slane %v570, %v574
        %v577 = vmul.f32 %v532, %v575
        %v578 = vsub.f32 %v567, %v577
        %s579 = scalar_lea.vmem %s1, 3
        %v580 = vld [vmem:[%s579] sm:$0x1]
        %v582 = vlaneseq
        %v583 = vshrl.u32 %v582, 7
        %v584 = vsub.s32 0, %v583
        %v585 = vrot.slane %v580, %v584
        %s587 = scalar_lea.vmem %s1, 19
        %v588 = vld [vmem:[%s587] sm:$0x1]
        %v590 = vlaneseq
        %v591 = vshrl.u32 %v590, 7
        %v592 = vsub.s32 0, %v591
        %v593 = vrot.slane %v588, %v592
        %v595 = vmul.f32 %v532, %v593
        %v596 = vsub.f32 %v585, %v595
        %s597 = scalar_lea.vmem %s1, 4
        %v598 = vld [vmem:[%s597] sm:$0x1]
        %v600 = vlaneseq
        %v601 = vshrl.u32 %v600, 7
        %v602 = vsub.s32 0, %v601
        %v603 = vrot.slane %v598, %v602
        %s605 = scalar_lea.vmem %s1, 20
        %v606 = vld [vmem:[%s605] sm:$0x1]
        %v608 = vlaneseq
        %v609 = vshrl.u32 %v608, 7
        %v610 = vsub.s32 0, %v609
        %v611 = vrot.slane %v606, %v610
        %v613 = vmul.f32 %v532, %v611
        %v614 = vsub.f32 %v603, %v613
        %s615 = scalar_lea.vmem %s1, 5
        %v616 = vld [vmem:[%s615] sm:$0x1]
        %v618 = vlaneseq
        %v619 = vshrl.u32 %v618, 7
        %v620 = vsub.s32 0, %v619
        %v621 = vrot.slane %v616, %v620
        %s623 = scalar_lea.vmem %s1, 21
        %v624 = vld [vmem:[%s623] sm:$0x1]
        %v626 = vlaneseq
        %v627 = vshrl.u32 %v626, 7
        %v628 = vsub.s32 0, %v627
        %v629 = vrot.slane %v624, %v628
        %v631 = vmul.f32 %v532, %v629
        %v632 = vsub.f32 %v621, %v631
        %s633 = scalar_lea.vmem %s1, 6
        %v634 = vld [vmem:[%s633] sm:$0x1]
        %v636 = vlaneseq
        %v637 = vshrl.u32 %v636, 7
        %v638 = vsub.s32 0, %v637
        %v639 = vrot.slane %v634, %v638
        %s641 = scalar_lea.vmem %s1, 22
        %v642 = vld [vmem:[%s641] sm:$0x1]
        %v644 = vlaneseq
        %v645 = vshrl.u32 %v644, 7
        %v646 = vsub.s32 0, %v645
        %v647 = vrot.slane %v642, %v646
        %v649 = vmul.f32 %v532, %v647
        %v650 = vsub.f32 %v639, %v649
        %s651 = scalar_lea.vmem %s1, 7
        %v652 = vld [vmem:[%s651] sm:$0x1]
        %v654 = vlaneseq
        %v655 = vshrl.u32 %v654, 7
        %v656 = vsub.s32 0, %v655
        %v657 = vrot.slane %v652, %v656
        %s659 = scalar_lea.vmem %s1, 23
        %v660 = vld [vmem:[%s659] sm:$0x1]
        %v662 = vlaneseq
        %v663 = vshrl.u32 %v662, 7
        %v664 = vsub.s32 0, %v663
        %v665 = vrot.slane %v660, %v664
        %v667 = vmul.f32 %v532, %v665
        %v668 = vsub.f32 %v657, %v667
        %s669 = scalar_lea.vmem %s1, 8
        %v670 = vld [vmem:[%s669] sm:$0x1]
        %v672 = vlaneseq
        %v673 = vshrl.u32 %v672, 7
        %v674 = vsub.s32 0, %v673
        %v675 = vrot.slane %v670, %v674
        %v677 = vstv %s513
        %v678 = vmul.f32 %v677, %v523
        %s679 = scalar_lea.vmem %s1, 40
        %v680 = vld [vmem:[%s679] sm:$0x1]
        %v682 = vlaneseq
        %v683 = vshrl.u32 %v682, 7
        %v684 = vsub.s32 0, %v683
        %v685 = vrot.slane %v680, %v684
        %v687 = vmul.f32 %v678, %v685
        %v688 = vsub.f32 %v675, %v687
        %s689 = scalar_lea.vmem %s1, 9
        %v690 = vld [vmem:[%s689] sm:$0x1]
        %v692 = vlaneseq
        %v693 = vshrl.u32 %v692, 7
        %v694 = vsub.s32 0, %v693
        %v695 = vrot.slane %v690, %v694
        %s697 = scalar_lea.vmem %s1, 41
        %v698 = vld [vmem:[%s697] sm:$0x1]
        %v700 = vlaneseq
        %v701 = vshrl.u32 %v700, 7
        %v702 = vsub.s32 0, %v701
        %v703 = vrot.slane %v698, %v702
        %v705 = vmul.f32 %v678, %v703
        %v706 = vsub.f32 %v695, %v705
        %s707 = scalar_lea.vmem %s1, 10
        %v708 = vld [vmem:[%s707] sm:$0x1]
        %v710 = vlaneseq
        %v711 = vshrl.u32 %v710, 7
        %v712 = vsub.s32 0, %v711
        %v713 = vrot.slane %v708, %v712
        %s715 = scalar_lea.vmem %s1, 42
        %v716 = vld [vmem:[%s715] sm:$0x1]
        %v718 = vlaneseq
        %v719 = vshrl.u32 %v718, 7
        %v720 = vsub.s32 0, %v719
        %v721 = vrot.slane %v716, %v720
        %v723 = vmul.f32 %v678, %v721
        %v724 = vsub.f32 %v713, %v723
        %s725 = scalar_lea.vmem %s1, 11
        %v726 = vld [vmem:[%s725] sm:$0x1]
        %v728 = vlaneseq
        %v729 = vshrl.u32 %v728, 7
        %v730 = vsub.s32 0, %v729
        %v731 = vrot.slane %v726, %v730
        %s733 = scalar_lea.vmem %s1, 43
        %v734 = vld [vmem:[%s733] sm:$0x1]
        %v736 = vlaneseq
        %v737 = vshrl.u32 %v736, 7
        %v738 = vsub.s32 0, %v737
        %v739 = vrot.slane %v734, %v738
        %v741 = vmul.f32 %v678, %v739
        %v742 = vsub.f32 %v731, %v741
        %s743 = scalar_lea.vmem %s1, 12
        %v744 = vld [vmem:[%s743] sm:$0x1]
        %v746 = vlaneseq
        %v747 = vshrl.u32 %v746, 7
        %v748 = vsub.s32 0, %v747
        %v749 = vrot.slane %v744, %v748
        %s751 = scalar_lea.vmem %s1, 44
        %v752 = vld [vmem:[%s751] sm:$0x1]
        %v754 = vlaneseq
        %v755 = vshrl.u32 %v754, 7
        %v756 = vsub.s32 0, %v755
        %v757 = vrot.slane %v752, %v756
        %v759 = vmul.f32 %v678, %v757
        %v760 = vsub.f32 %v749, %v759
        %s761 = scalar_lea.vmem %s1, 13
        %v762 = vld [vmem:[%s761] sm:$0x1]
        %v764 = vlaneseq
        %v765 = vshrl.u32 %v764, 7
        %v766 = vsub.s32 0, %v765
        %v767 = vrot.slane %v762, %v766
        %s769 = scalar_lea.vmem %s1, 45
        %v770 = vld [vmem:[%s769] sm:$0x1]
        %v772 = vlaneseq
        %v773 = vshrl.u32 %v772, 7
        %v774 = vsub.s32 0, %v773
        %v775 = vrot.slane %v770, %v774
        %v777 = vmul.f32 %v678, %v775
        %v778 = vsub.f32 %v767, %v777
        %s779 = scalar_lea.vmem %s1, 14
        %v780 = vld [vmem:[%s779] sm:$0x1]
        %v782 = vlaneseq
        %v783 = vshrl.u32 %v782, 7
        %v784 = vsub.s32 0, %v783
        %v785 = vrot.slane %v780, %v784
        %s787 = scalar_lea.vmem %s1, 46
        %v788 = vld [vmem:[%s787] sm:$0x1]
        %v790 = vlaneseq
        %v791 = vshrl.u32 %v790, 7
        %v792 = vsub.s32 0, %v791
        %v793 = vrot.slane %v788, %v792
        %v795 = vmul.f32 %v678, %v793
        %v796 = vsub.f32 %v785, %v795
        %s797 = scalar_lea.vmem %s1, 15
        %v798 = vld [vmem:[%s797] sm:$0x1]
        %v800 = vlaneseq
        %v801 = vshrl.u32 %v800, 7
        %v802 = vsub.s32 0, %v801
        %v803 = vrot.slane %v798, %v802
        %s805 = scalar_lea.vmem %s1, 47
        %v806 = vld [vmem:[%s805] sm:$0x1]
        %v808 = vlaneseq
        %v809 = vshrl.u32 %v808, 7
        %v810 = vsub.s32 0, %v809
        %v811 = vrot.slane %v806, %v810
        %v813 = vmul.f32 %v678, %v811
        %v814 = vsub.f32 %v803, %v813
        %v815 = vld [vmem:[%s455 + $0x7] sm:$0x1]
        %v816 = vstv %s508
        %v817 = vmul.f32 %v816, %v815
        %v818 = vld [vmem:[%s462] sm:$0x1]
        %v819 = vstv %s511
        %v820 = vmul.f32 %v819, %v818
        %v821 = vld [vmem:[%s448] sm:$0xff]
        %v823 = vrot.slane %v821, 7
        %v826 = vrot.slane %v820, 7
        %vm828 = vcmask 1040384
        %v829 = vsel %vm828, %v817, %v823
        %v830 = vsel %vm828, %v823, %v826
        %vm831 = vcmask 130048
        %v833 = vsel %vm831, %v829, 0
        %v836 = vsel %vm831, %v830, 0
        %838 = vmatprep.subr.mxu0 0.0
        %839 = vmatpush1.msra.mxu0 %v514
        %840 = vmatprep.subr.mxu0 0.0
        %841 = vmatpush1.msra.mxu0 %v515
        %842 = vmatprep.subr.mxu0 0.0
        %843 = vmatpush1.msra.mxu0 0.0
        %844 = vmatprep.subr.mxu0 0.0
        %845 = vmatpush1.msra.mxu0 0.0
        %846 = vmatprep.subr.mxu0 0.0
        %847 = vmatpush1.msra.mxu0 0.0
        %848 = vmatprep.subr.mxu0 0.0
        %849 = vmatpush1.msra.mxu0 0.0
        %850 = vmatprep.subr.mxu0 0.0
        %851 = vmatpush1.msra.mxu0 0.0
        %852 = vmatprep.subr.mxu0 0.0
        %853 = vmatpush1.msra.mxu0 0.0
        %854 = vmatprep.subr.mxu0 0.0
        %855 = vmatpush1.msra.mxu0 0.0
        %856 = vmatprep.subr.mxu0 0.0
        %857 = vmatpush1.msra.mxu0 0.0
        %858 = vmatprep.subr.mxu0 0.0
        %859 = vmatpush1.msra.mxu0 0.0
        %860 = vmatprep.subr.mxu0 0.0
        %861 = vmatpush1.msra.mxu0 0.0
        %862 = vmatprep.subr.mxu0 0.0
        %863 = vmatpush1.msra.mxu0 0.0
        %864 = vmatprep.subr.mxu0 0.0
        %865 = vmatpush1.msra.mxu0 0.0
        %866 = vmatprep.subr.mxu0 0.0
        %867 = vmatpush1.msra.mxu0 0.0
        %868 = vmatprep.subr.mxu0 0.0
        %869 = vmatpush1.msra.mxu0 0.0
        %870 = vmatprep.subr.mxu0 0.0
        %871 = vmatpush1.msra.mxu0 0.0
        %872 = vmatprep.subr.mxu0 0.0
        %873 = vmatpush1.msra.mxu0 0.0
        %874 = vmatprep.subr.mxu0 0.0
        %875 = vmatpush1.msra.mxu0 0.0
        %876 = vmatprep.subr.mxu0 0.0
        %877 = vmatpush1.msra.mxu0 0.0
        %878 = vmatprep.subr.mxu0 0.0
        %879 = vmatpush1.msra.mxu0 0.0
        %880 = vmatprep.subr.mxu0 0.0
        %881 = vmatpush1.msra.mxu0 0.0
        %882 = vmatprep.subr.mxu0 0.0
        %883 = vmatpush1.msra.mxu0 0.0
        %884 = vmatprep.subr.mxu0 0.0
        %885 = vmatpush1.msra.mxu0 0.0
        %886 = vmatprep.subr.mxu0 0.0
        %887 = vmatpush1.msra.mxu0 0.0
        %888 = vmatprep.subr.mxu0 0.0
        %889 = vmatpush1.msra.mxu0 0.0
        %890 = vmatprep.subr.mxu0 0.0
        %891 = vmatpush1.msra.mxu0 0.0
        %892 = vmatprep.subr.mxu0 0.0
        %893 = vmatpush1.msra.mxu0 0.0
        %894 = vmatprep.subr.mxu0 0.0
        %895 = vmatpush1.msra.mxu0 0.0
        %896 = vmatprep.subr.mxu0 0.0
        %897 = vmatpush1.msra.mxu0 0.0
        %898 = vmatprep.subr.mxu0 0.0
        %899 = vmatpush1.msra.mxu0 0.0
        %900 = vmatprep.subr.mxu0 0.0
        %901 = vmatpush1.msra.mxu0 0.0
        %902 = vmatprep.mubr.f32.mxu0 0.0
        %903 = vmatmul.mubr.f32.gmra.mrb[0].mxu0 %v833
        %v904 = vpop.f32.mrb[0].mxu0
        %v905 = vadd.f32 0.0, %v904
        %v906 = vpop.f32.mrb[0].mxu0
        %907 = vmatprep.mubr.f32.mxu0 0.0
        %908 = vmatmul.mubr.f32.gmra.mrb[0].mxu0 %v836
        %v909 = vpop.f32.mrb[0].mxu0
        %v910 = vadd.f32 0.0, %v909
        %v911 = vpop.f32.mrb[0].mxu0
        %912 = vdwg.mxu0
        %v913 = vld [vmem:[%s0] sm:$0x1]
        %v915 = vlaneseq
        %v916 = vshrl.u32 %v915, 7
        %v917 = vsub.s32 0, %v916
        %v918 = vrot.slane %v913, %v917
        %v920 = vmul.f32 %v918, %v905
        %v921 = vadd.f32 %v542, %v920
        %s922 = scalar_lea.vmem %s0, 36
        %v923 = vld [vmem:[%s922] sm:$0x1]
        %v925 = vlaneseq
        %v926 = vshrl.u32 %v925, 7
        %v927 = vsub.s32 0, %v926
        %v928 = vrot.slane %v923, %v927
        %v930 = vmul.f32 %v928, %v905
        %v931 = vadd.f32 %v560, %v930
        %s932 = scalar_lea.vmem %s0, 72
        %v933 = vld [vmem:[%s932] sm:$0x1]
        %v935 = vlaneseq
        %v936 = vshrl.u32 %v935, 7
        %v937 = vsub.s32 0, %v936
        %v938 = vrot.slane %v933, %v937
        %v940 = vmul.f32 %v938, %v905
        %v941 = vadd.f32 %v578, %v940
        %s942 = scalar_lea.vmem %s0, 108
        %v943 = vld [vmem:[%s942] sm:$0x1]
        %v945 = vlaneseq
        %v946 = vshrl.u32 %v945, 7
        %v947 = vsub.s32 0, %v946
        %v948 = vrot.slane %v943, %v947
        %v950 = vmul.f32 %v948, %v905
        %v951 = vadd.f32 %v596, %v950
        %s952 = scalar_lea.vmem %s0, 144
        %v953 = vld [vmem:[%s952] sm:$0x1]
        %v955 = vlaneseq
        %v956 = vshrl.u32 %v955, 7
        %v957 = vsub.s32 0, %v956
        %v958 = vrot.slane %v953, %v957
        %v960 = vmul.f32 %v958, %v905
        %v961 = vadd.f32 %v614, %v960
        %s962 = scalar_lea.vmem %s0, 180
        %v963 = vld [vmem:[%s962] sm:$0x1]
        %v965 = vlaneseq
        %v966 = vshrl.u32 %v965, 7
        %v967 = vsub.s32 0, %v966
        %v968 = vrot.slane %v963, %v967
        %v970 = vmul.f32 %v968, %v905
        %v971 = vadd.f32 %v632, %v970
        %s972 = scalar_lea.vmem %s0, 216
        %v973 = vld [vmem:[%s972] sm:$0x1]
        %v975 = vlaneseq
        %v976 = vshrl.u32 %v975, 7
        %v977 = vsub.s32 0, %v976
        %v978 = vrot.slane %v973, %v977
        %v980 = vmul.f32 %v978, %v905
        %v981 = vadd.f32 %v650, %v980
        %s982 = scalar_lea.vmem %s0, 252
        %v983 = vld [vmem:[%s982] sm:$0x1]
        %v985 = vlaneseq
        %v986 = vshrl.u32 %v985, 7
        %v987 = vsub.s32 0, %v986
        %v988 = vrot.slane %v983, %v987
        %v990 = vmul.f32 %v988, %v905
        %v991 = vadd.f32 %v668, %v990
        %s992 = scalar_lea.vmem %s0, 1
        %v993 = vld [vmem:[%s992] sm:$0x1]
        %v995 = vlaneseq
        %v996 = vshrl.u32 %v995, 7
        %v997 = vsub.s32 0, %v996
        %v998 = vrot.slane %v993, %v997
        %1001 = vrot.lane.b32.xlu0 %v905, 126
        %v1002 = vpop.permute.xlu0 %1001
        %v1004 = vmul.f32 %v998, %v1002
        %v1005 = vadd.f32 %v921, %v1004
        %s1006 = scalar_lea.vmem %s0, 37
        %v1007 = vld [vmem:[%s1006] sm:$0x1]
        %v1009 = vlaneseq
        %v1010 = vshrl.u32 %v1009, 7
        %v1011 = vsub.s32 0, %v1010
        %v1012 = vrot.slane %v1007, %v1011
        %v1014 = vmul.f32 %v1012, %v1002
        %v1015 = vadd.f32 %v931, %v1014
        %s1016 = scalar_lea.vmem %s0, 73
        %v1017 = vld [vmem:[%s1016] sm:$0x1]
        %v1019 = vlaneseq
        %v1020 = vshrl.u32 %v1019, 7
        %v1021 = vsub.s32 0, %v1020
        %v1022 = vrot.slane %v1017, %v1021
        %v1024 = vmul.f32 %v1022, %v1002
        %v1025 = vadd.f32 %v941, %v1024
        %s1026 = scalar_lea.vmem %s0, 109
        %v1027 = vld [vmem:[%s1026] sm:$0x1]
        %v1029 = vlaneseq
        %v1030 = vshrl.u32 %v1029, 7
        %v1031 = vsub.s32 0, %v1030
        %v1032 = vrot.slane %v1027, %v1031
        %v1034 = vmul.f32 %v1032, %v1002
        %v1035 = vadd.f32 %v951, %v1034
        %s1036 = scalar_lea.vmem %s0, 145
        %v1037 = vld [vmem:[%s1036] sm:$0x1]
        %v1039 = vlaneseq
        %v1040 = vshrl.u32 %v1039, 7
        %v1041 = vsub.s32 0, %v1040
        %v1042 = vrot.slane %v1037, %v1041
        %v1044 = vmul.f32 %v1042, %v1002
        %v1045 = vadd.f32 %v961, %v1044
        %s1046 = scalar_lea.vmem %s0, 181
        %v1047 = vld [vmem:[%s1046] sm:$0x1]
        %v1049 = vlaneseq
        %v1050 = vshrl.u32 %v1049, 7
        %v1051 = vsub.s32 0, %v1050
        %v1052 = vrot.slane %v1047, %v1051
        %v1054 = vmul.f32 %v1052, %v1002
        %v1055 = vadd.f32 %v971, %v1054
        %s1056 = scalar_lea.vmem %s0, 217
        %v1057 = vld [vmem:[%s1056] sm:$0x1]
        %v1059 = vlaneseq
        %v1060 = vshrl.u32 %v1059, 7
        %v1061 = vsub.s32 0, %v1060
        %v1062 = vrot.slane %v1057, %v1061
        %v1064 = vmul.f32 %v1062, %v1002
        %v1065 = vadd.f32 %v981, %v1064
        %s1066 = scalar_lea.vmem %s0, 253
        %v1067 = vld [vmem:[%s1066] sm:$0x1]
        %v1069 = vlaneseq
        %v1070 = vshrl.u32 %v1069, 7
        %v1071 = vsub.s32 0, %v1070
        %v1072 = vrot.slane %v1067, %v1071
        %v1074 = vmul.f32 %v1072, %v1002
        %v1075 = vadd.f32 %v991, %v1074
        %s1076 = scalar_lea.vmem %s0, 2
        %v1077 = vld [vmem:[%s1076] sm:$0x1]
        %v1079 = vlaneseq
        %v1080 = vshrl.u32 %v1079, 7
        %v1081 = vsub.s32 0, %v1080
        %v1082 = vrot.slane %v1077, %v1081
        %1084 = vrot.lane.b32.xlu0 %v905, 124
        %v1085 = vpop.permute.xlu0 %1084
        %v1087 = vmul.f32 %v1082, %v1085
        %v1088 = vadd.f32 %v1005, %v1087
        %s1089 = scalar_lea.vmem %s0, 38
        %v1090 = vld [vmem:[%s1089] sm:$0x1]
        %v1092 = vlaneseq
        %v1093 = vshrl.u32 %v1092, 7
        %v1094 = vsub.s32 0, %v1093
        %v1095 = vrot.slane %v1090, %v1094
        %v1097 = vmul.f32 %v1095, %v1085
        %v1098 = vadd.f32 %v1015, %v1097
        %s1099 = scalar_lea.vmem %s0, 74
        %v1100 = vld [vmem:[%s1099] sm:$0x1]
        %v1102 = vlaneseq
        %v1103 = vshrl.u32 %v1102, 7
        %v1104 = vsub.s32 0, %v1103
        %v1105 = vrot.slane %v1100, %v1104
        %v1107 = vmul.f32 %v1105, %v1085
        %v1108 = vadd.f32 %v1025, %v1107
        %s1109 = scalar_lea.vmem %s0, 110
        %v1110 = vld [vmem:[%s1109] sm:$0x1]
        %v1112 = vlaneseq
        %v1113 = vshrl.u32 %v1112, 7
        %v1114 = vsub.s32 0, %v1113
        %v1115 = vrot.slane %v1110, %v1114
        %v1117 = vmul.f32 %v1115, %v1085
        %v1118 = vadd.f32 %v1035, %v1117
        %s1119 = scalar_lea.vmem %s0, 146
        %v1120 = vld [vmem:[%s1119] sm:$0x1]
        %v1122 = vlaneseq
        %v1123 = vshrl.u32 %v1122, 7
        %v1124 = vsub.s32 0, %v1123
        %v1125 = vrot.slane %v1120, %v1124
        %v1127 = vmul.f32 %v1125, %v1085
        %v1128 = vadd.f32 %v1045, %v1127
        %s1129 = scalar_lea.vmem %s0, 182
        %v1130 = vld [vmem:[%s1129] sm:$0x1]
        %v1132 = vlaneseq
        %v1133 = vshrl.u32 %v1132, 7
        %v1134 = vsub.s32 0, %v1133
        %v1135 = vrot.slane %v1130, %v1134
        %v1137 = vmul.f32 %v1135, %v1085
        %v1138 = vadd.f32 %v1055, %v1137
        %s1139 = scalar_lea.vmem %s0, 218
        %v1140 = vld [vmem:[%s1139] sm:$0x1]
        %v1142 = vlaneseq
        %v1143 = vshrl.u32 %v1142, 7
        %v1144 = vsub.s32 0, %v1143
        %v1145 = vrot.slane %v1140, %v1144
        %v1147 = vmul.f32 %v1145, %v1085
        %v1148 = vadd.f32 %v1065, %v1147
        %s1149 = scalar_lea.vmem %s0, 254
        %v1150 = vld [vmem:[%s1149] sm:$0x1]
        %v1152 = vlaneseq
        %v1153 = vshrl.u32 %v1152, 7
        %v1154 = vsub.s32 0, %v1153
        %v1155 = vrot.slane %v1150, %v1154
        %v1157 = vmul.f32 %v1155, %v1085
        %v1158 = vadd.f32 %v1075, %v1157
        %s1159 = scalar_lea.vmem %s0, 3
        %v1160 = vld [vmem:[%s1159] sm:$0x1]
        %v1162 = vlaneseq
        %v1163 = vshrl.u32 %v1162, 7
        %v1164 = vsub.s32 0, %v1163
        %v1165 = vrot.slane %v1160, %v1164
        %v1167 = vmul.f32 %v1165, %v905
        %v1168 = vmul.f32 %v1165, %v910
        %vm1171 = vcmask 1046528
        %v1172 = vrot.slane %v1167, 1
        %v1173 = vrot.slane %v1168, 1
        %v1174 = vsel %vm1171, %v1172, %v1173
        %v1176 = vadd.f32 %v1088, %v1174
        %s1177 = scalar_lea.vmem %s0, 39
        %v1178 = vld [vmem:[%s1177] sm:$0x1]
        %v1180 = vlaneseq
        %v1181 = vshrl.u32 %v1180, 7
        %v1182 = vsub.s32 0, %v1181
        %v1183 = vrot.slane %v1178, %v1182
        %v1185 = vmul.f32 %v1183, %v905
        %v1186 = vmul.f32 %v1183, %v910
        %v1189 = vrot.slane %v1185, 1
        %v1190 = vrot.slane %v1186, 1
        %v1191 = vsel %vm1171, %v1189, %v1190
        %v1193 = vadd.f32 %v1098, %v1191
        %s1194 = scalar_lea.vmem %s0, 75
        %v1195 = vld [vmem:[%s1194] sm:$0x1]
        %v1197 = vlaneseq
        %v1198 = vshrl.u32 %v1197, 7
        %v1199 = vsub.s32 0, %v1198
        %v1200 = vrot.slane %v1195, %v1199
        %v1202 = vmul.f32 %v1200, %v905
        %v1203 = vmul.f32 %v1200, %v910
        %v1206 = vrot.slane %v1202, 1
        %v1207 = vrot.slane %v1203, 1
        %v1208 = vsel %vm1171, %v1206, %v1207
        %v1210 = vadd.f32 %v1108, %v1208
        %s1211 = scalar_lea.vmem %s0, 111
        %v1212 = vld [vmem:[%s1211] sm:$0x1]
        %v1214 = vlaneseq
        %v1215 = vshrl.u32 %v1214, 7
        %v1216 = vsub.s32 0, %v1215
        %v1217 = vrot.slane %v1212, %v1216
        %v1219 = vmul.f32 %v1217, %v905
        %v1220 = vmul.f32 %v1217, %v910
        %v1223 = vrot.slane %v1219, 1
        %v1224 = vrot.slane %v1220, 1
        %v1225 = vsel %vm1171, %v1223, %v1224
        %v1227 = vadd.f32 %v1118, %v1225
        %s1228 = scalar_lea.vmem %s0, 147
        %v1229 = vld [vmem:[%s1228] sm:$0x1]
        %v1231 = vlaneseq
        %v1232 = vshrl.u32 %v1231, 7
        %v1233 = vsub.s32 0, %v1232
        %v1234 = vrot.slane %v1229, %v1233
        %v1236 = vmul.f32 %v1234, %v905
        %v1237 = vmul.f32 %v1234, %v910
        %v1240 = vrot.slane %v1236, 1
        %v1241 = vrot.slane %v1237, 1
        %v1242 = vsel %vm1171, %v1240, %v1241
        %v1244 = vadd.f32 %v1128, %v1242
        %s1245 = scalar_lea.vmem %s0, 183
        %v1246 = vld [vmem:[%s1245] sm:$0x1]
        %v1248 = vlaneseq
        %v1249 = vshrl.u32 %v1248, 7
        %v1250 = vsub.s32 0, %v1249
        %v1251 = vrot.slane %v1246, %v1250
        %v1253 = vmul.f32 %v1251, %v905
        %v1254 = vmul.f32 %v1251, %v910
        %v1257 = vrot.slane %v1253, 1
        %v1258 = vrot.slane %v1254, 1
        %v1259 = vsel %vm1171, %v1257, %v1258
        %v1261 = vadd.f32 %v1138, %v1259
        %s1262 = scalar_lea.vmem %s0, 219
        %v1263 = vld [vmem:[%s1262] sm:$0x1]
        %v1265 = vlaneseq
        %v1266 = vshrl.u32 %v1265, 7
        %v1267 = vsub.s32 0, %v1266
        %v1268 = vrot.slane %v1263, %v1267
        %v1270 = vmul.f32 %v1268, %v905
        %v1271 = vmul.f32 %v1268, %v910
        %v1274 = vrot.slane %v1270, 1
        %v1275 = vrot.slane %v1271, 1
        %v1276 = vsel %vm1171, %v1274, %v1275
        %v1278 = vadd.f32 %v1148, %v1276
        %s1279 = scalar_lea.vmem %s0, 255
        %v1280 = vld [vmem:[%s1279] sm:$0x1]
        %v1282 = vlaneseq
        %v1283 = vshrl.u32 %v1282, 7
        %v1284 = vsub.s32 0, %v1283
        %v1285 = vrot.slane %v1280, %v1284
        %v1287 = vmul.f32 %v1285, %v905
        %v1288 = vmul.f32 %v1285, %v910
        %v1291 = vrot.slane %v1287, 1
        %v1292 = vrot.slane %v1288, 1
        %v1293 = vsel %vm1171, %v1291, %v1292
        %v1295 = vadd.f32 %v1158, %v1293
        %s1296 = scalar_lea.vmem %s0, 291
        %v1297 = vld [vmem:[%s1296] sm:$0x1]
        %v1299 = vlaneseq
        %v1300 = vshrl.u32 %v1299, 7
        %v1301 = vsub.s32 0, %v1300
        %v1302 = vrot.slane %v1297, %v1301
        %v1304 = vmul.f32 %v1302, %v905
        %v1305 = vmul.f32 %v1302, %v910
        %v1308 = vrot.slane %v1304, 1
        %v1309 = vrot.slane %v1305, 1
        %v1310 = vsel %vm1171, %v1308, %v1309
        %v1312 = vadd.f32 %v688, %v1310
        %s1313 = scalar_lea.vmem %s0, 327
        %v1314 = vld [vmem:[%s1313] sm:$0x1]
        %v1316 = vlaneseq
        %v1317 = vshrl.u32 %v1316, 7
        %v1318 = vsub.s32 0, %v1317
        %v1319 = vrot.slane %v1314, %v1318
        %v1321 = vmul.f32 %v1319, %v905
        %v1322 = vmul.f32 %v1319, %v910
        %v1325 = vrot.slane %v1321, 1
        %v1326 = vrot.slane %v1322, 1
        %v1327 = vsel %vm1171, %v1325, %v1326
        %v1329 = vadd.f32 %v706, %v1327
        %s1330 = scalar_lea.vmem %s0, 363
        %v1331 = vld [vmem:[%s1330] sm:$0x1]
        %v1333 = vlaneseq
        %v1334 = vshrl.u32 %v1333, 7
        %v1335 = vsub.s32 0, %v1334
        %v1336 = vrot.slane %v1331, %v1335
        %v1338 = vmul.f32 %v1336, %v905
        %v1339 = vmul.f32 %v1336, %v910
        %v1342 = vrot.slane %v1338, 1
        %v1343 = vrot.slane %v1339, 1
        %v1344 = vsel %vm1171, %v1342, %v1343
        %v1346 = vadd.f32 %v724, %v1344
        %s1347 = scalar_lea.vmem %s0, 399
        %v1348 = vld [vmem:[%s1347] sm:$0x1]
        %v1350 = vlaneseq
        %v1351 = vshrl.u32 %v1350, 7
        %v1352 = vsub.s32 0, %v1351
        %v1353 = vrot.slane %v1348, %v1352
        %v1355 = vmul.f32 %v1353, %v905
        %v1356 = vmul.f32 %v1353, %v910
        %v1359 = vrot.slane %v1355, 1
        %v1360 = vrot.slane %v1356, 1
        %v1361 = vsel %vm1171, %v1359, %v1360
        %v1363 = vadd.f32 %v742, %v1361
        %s1364 = scalar_lea.vmem %s0, 435
        %v1365 = vld [vmem:[%s1364] sm:$0x1]
        %v1367 = vlaneseq
        %v1368 = vshrl.u32 %v1367, 7
        %v1369 = vsub.s32 0, %v1368
        %v1370 = vrot.slane %v1365, %v1369
        %v1372 = vmul.f32 %v1370, %v905
        %v1373 = vmul.f32 %v1370, %v910
        %v1376 = vrot.slane %v1372, 1
        %v1377 = vrot.slane %v1373, 1
        %v1378 = vsel %vm1171, %v1376, %v1377
        %v1380 = vadd.f32 %v760, %v1378
        %s1381 = scalar_lea.vmem %s0, 471
        %v1382 = vld [vmem:[%s1381] sm:$0x1]
        %v1384 = vlaneseq
        %v1385 = vshrl.u32 %v1384, 7
        %v1386 = vsub.s32 0, %v1385
        %v1387 = vrot.slane %v1382, %v1386
        %v1389 = vmul.f32 %v1387, %v905
        %v1390 = vmul.f32 %v1387, %v910
        %v1393 = vrot.slane %v1389, 1
        %v1394 = vrot.slane %v1390, 1
        %v1395 = vsel %vm1171, %v1393, %v1394
        %v1397 = vadd.f32 %v778, %v1395
        %s1398 = scalar_lea.vmem %s0, 507
        %v1399 = vld [vmem:[%s1398] sm:$0x1]
        %v1401 = vlaneseq
        %v1402 = vshrl.u32 %v1401, 7
        %v1403 = vsub.s32 0, %v1402
        %v1404 = vrot.slane %v1399, %v1403
        %v1406 = vmul.f32 %v1404, %v905
        %v1407 = vmul.f32 %v1404, %v910
        %v1410 = vrot.slane %v1406, 1
        %v1411 = vrot.slane %v1407, 1
        %v1412 = vsel %vm1171, %v1410, %v1411
        %v1414 = vadd.f32 %v796, %v1412
        %s1415 = scalar_lea.vmem %s0, 543
        %v1416 = vld [vmem:[%s1415] sm:$0x1]
        %v1418 = vlaneseq
        %v1419 = vshrl.u32 %v1418, 7
        %v1420 = vsub.s32 0, %v1419
        %v1421 = vrot.slane %v1416, %v1420
        %v1423 = vmul.f32 %v1421, %v905
        %v1424 = vmul.f32 %v1421, %v910
        %v1427 = vrot.slane %v1423, 1
        %v1428 = vrot.slane %v1424, 1
        %v1429 = vsel %vm1171, %v1427, %v1428
        %v1431 = vadd.f32 %v814, %v1429
        %s1432 = scalar_lea.vmem %s0, 4
        %v1433 = vld [vmem:[%s1432] sm:$0x1]
        %v1435 = vlaneseq
        %v1436 = vshrl.u32 %v1435, 7
        %v1437 = vsub.s32 0, %v1436
        %v1438 = vrot.slane %v1433, %v1437
        %v1441 = vrot.slane %v905, 1
        %v1442 = vrot.slane %v910, 1
        %v1443 = vsel %vm1171, %v1441, %v1442
        %1444 = vrot.lane.b32.xlu0 %v1443, 126
        %v1445 = vpop.permute.xlu0 %1444
        %v1447 = vmul.f32 %v1438, %v1445
        %v1448 = vadd.f32 %v1176, %v1447
        %s1449 = scalar_lea.vmem %s0, 40
        %v1450 = vld [vmem:[%s1449] sm:$0x1]
        %v1452 = vlaneseq
        %v1453 = vshrl.u32 %v1452, 7
        %v1454 = vsub.s32 0, %v1453
        %v1455 = vrot.slane %v1450, %v1454
        %v1457 = vmul.f32 %v1455, %v1445
        %v1458 = vadd.f32 %v1193, %v1457
        %s1459 = scalar_lea.vmem %s0, 76
        %v1460 = vld [vmem:[%s1459] sm:$0x1]
        %v1462 = vlaneseq
        %v1463 = vshrl.u32 %v1462, 7
        %v1464 = vsub.s32 0, %v1463
        %v1465 = vrot.slane %v1460, %v1464
        %v1467 = vmul.f32 %v1465, %v1445
        %v1468 = vadd.f32 %v1210, %v1467
        %s1469 = scalar_lea.vmem %s0, 112
        %v1470 = vld [vmem:[%s1469] sm:$0x1]
        %v1472 = vlaneseq
        %v1473 = vshrl.u32 %v1472, 7
        %v1474 = vsub.s32 0, %v1473
        %v1475 = vrot.slane %v1470, %v1474
        %v1477 = vmul.f32 %v1475, %v1445
        %v1478 = vadd.f32 %v1227, %v1477
        %s1479 = scalar_lea.vmem %s0, 148
        %v1480 = vld [vmem:[%s1479] sm:$0x1]
        %v1482 = vlaneseq
        %v1483 = vshrl.u32 %v1482, 7
        %v1484 = vsub.s32 0, %v1483
        %v1485 = vrot.slane %v1480, %v1484
        %v1487 = vmul.f32 %v1485, %v1445
        %v1488 = vadd.f32 %v1244, %v1487
        %s1489 = scalar_lea.vmem %s0, 184
        %v1490 = vld [vmem:[%s1489] sm:$0x1]
        %v1492 = vlaneseq
        %v1493 = vshrl.u32 %v1492, 7
        %v1494 = vsub.s32 0, %v1493
        %v1495 = vrot.slane %v1490, %v1494
        %v1497 = vmul.f32 %v1495, %v1445
        %v1498 = vadd.f32 %v1261, %v1497
        %s1499 = scalar_lea.vmem %s0, 220
        %v1500 = vld [vmem:[%s1499] sm:$0x1]
        %v1502 = vlaneseq
        %v1503 = vshrl.u32 %v1502, 7
        %v1504 = vsub.s32 0, %v1503
        %v1505 = vrot.slane %v1500, %v1504
        %v1507 = vmul.f32 %v1505, %v1445
        %v1508 = vadd.f32 %v1278, %v1507
        %s1509 = scalar_lea.vmem %s0, 256
        %v1510 = vld [vmem:[%s1509] sm:$0x1]
        %v1512 = vlaneseq
        %v1513 = vshrl.u32 %v1512, 7
        %v1514 = vsub.s32 0, %v1513
        %v1515 = vrot.slane %v1510, %v1514
        %v1517 = vmul.f32 %v1515, %v1445
        %v1518 = vadd.f32 %v1295, %v1517
        %s1519 = scalar_lea.vmem %s0, 292
        %v1520 = vld [vmem:[%s1519] sm:$0x1]
        %v1522 = vlaneseq
        %v1523 = vshrl.u32 %v1522, 7
        %v1524 = vsub.s32 0, %v1523
        %v1525 = vrot.slane %v1520, %v1524
        %v1527 = vmul.f32 %v1525, %v1445
        %v1528 = vadd.f32 %v1312, %v1527
        %s1529 = scalar_lea.vmem %s0, 328
        %v1530 = vld [vmem:[%s1529] sm:$0x1]
        %v1532 = vlaneseq
        %v1533 = vshrl.u32 %v1532, 7
        %v1534 = vsub.s32 0, %v1533
        %v1535 = vrot.slane %v1530, %v1534
        %v1537 = vmul.f32 %v1535, %v1445
        %v1538 = vadd.f32 %v1329, %v1537
        %s1539 = scalar_lea.vmem %s0, 364
        %v1540 = vld [vmem:[%s1539] sm:$0x1]
        %v1542 = vlaneseq
        %v1543 = vshrl.u32 %v1542, 7
        %v1544 = vsub.s32 0, %v1543
        %v1545 = vrot.slane %v1540, %v1544
        %v1547 = vmul.f32 %v1545, %v1445
        %v1548 = vadd.f32 %v1346, %v1547
        %s1549 = scalar_lea.vmem %s0, 400
        %v1550 = vld [vmem:[%s1549] sm:$0x1]
        %v1552 = vlaneseq
        %v1553 = vshrl.u32 %v1552, 7
        %v1554 = vsub.s32 0, %v1553
        %v1555 = vrot.slane %v1550, %v1554
        %v1557 = vmul.f32 %v1555, %v1445
        %v1558 = vadd.f32 %v1363, %v1557
        %s1559 = scalar_lea.vmem %s0, 436
        %v1560 = vld [vmem:[%s1559] sm:$0x1]
        %v1562 = vlaneseq
        %v1563 = vshrl.u32 %v1562, 7
        %v1564 = vsub.s32 0, %v1563
        %v1565 = vrot.slane %v1560, %v1564
        %v1567 = vmul.f32 %v1565, %v1445
        %v1568 = vadd.f32 %v1380, %v1567
        %s1569 = scalar_lea.vmem %s0, 472
        %v1570 = vld [vmem:[%s1569] sm:$0x1]
        %v1572 = vlaneseq
        %v1573 = vshrl.u32 %v1572, 7
        %v1574 = vsub.s32 0, %v1573
        %v1575 = vrot.slane %v1570, %v1574
        %v1577 = vmul.f32 %v1575, %v1445
        %v1578 = vadd.f32 %v1397, %v1577
        %s1579 = scalar_lea.vmem %s0, 508
        %v1580 = vld [vmem:[%s1579] sm:$0x1]
        %v1582 = vlaneseq
        %v1583 = vshrl.u32 %v1582, 7
        %v1584 = vsub.s32 0, %v1583
        %v1585 = vrot.slane %v1580, %v1584
        %v1587 = vmul.f32 %v1585, %v1445
        %v1588 = vadd.f32 %v1414, %v1587
        %s1589 = scalar_lea.vmem %s0, 544
        %v1590 = vld [vmem:[%s1589] sm:$0x1]
        %v1592 = vlaneseq
        %v1593 = vshrl.u32 %v1592, 7
        %v1594 = vsub.s32 0, %v1593
        %v1595 = vrot.slane %v1590, %v1594
        %v1597 = vmul.f32 %v1595, %v1445
        %v1598 = vadd.f32 %v1431, %v1597
        %s1599 = scalar_lea.vmem %s0, 5
        %v1600 = vld [vmem:[%s1599] sm:$0x1]
        %v1602 = vlaneseq
        %v1603 = vshrl.u32 %v1602, 7
        %v1604 = vsub.s32 0, %v1603
        %v1605 = vrot.slane %v1600, %v1604
        %1607 = vrot.lane.b32.xlu0 %v1443, 124
        %v1608 = vpop.permute.xlu0 %1607
        %v1610 = vmul.f32 %v1605, %v1608
        %v1611 = vadd.f32 %v1448, %v1610
        %s1612 = scalar_lea.vmem %s0, 41
        %v1613 = vld [vmem:[%s1612] sm:$0x1]
        %v1615 = vlaneseq
        %v1616 = vshrl.u32 %v1615, 7
        %v1617 = vsub.s32 0, %v1616
        %v1618 = vrot.slane %v1613, %v1617
        %v1620 = vmul.f32 %v1618, %v1608
        %v1621 = vadd.f32 %v1458, %v1620
        %s1622 = scalar_lea.vmem %s0, 77
        %v1623 = vld [vmem:[%s1622] sm:$0x1]
        %v1625 = vlaneseq
        %v1626 = vshrl.u32 %v1625, 7
        %v1627 = vsub.s32 0, %v1626
        %v1628 = vrot.slane %v1623, %v1627
        %v1630 = vmul.f32 %v1628, %v1608
        %v1631 = vadd.f32 %v1468, %v1630
        %s1632 = scalar_lea.vmem %s0, 113
        %v1633 = vld [vmem:[%s1632] sm:$0x1]
        %v1635 = vlaneseq
        %v1636 = vshrl.u32 %v1635, 7
        %v1637 = vsub.s32 0, %v1636
        %v1638 = vrot.slane %v1633, %v1637
        %v1640 = vmul.f32 %v1638, %v1608
        %v1641 = vadd.f32 %v1478, %v1640
        %s1642 = scalar_lea.vmem %s0, 149
        %v1643 = vld [vmem:[%s1642] sm:$0x1]
        %v1645 = vlaneseq
        %v1646 = vshrl.u32 %v1645, 7
        %v1647 = vsub.s32 0, %v1646
        %v1648 = vrot.slane %v1643, %v1647
        %v1650 = vmul.f32 %v1648, %v1608
        %v1651 = vadd.f32 %v1488, %v1650
        %s1652 = scalar_lea.vmem %s0, 185
        %v1653 = vld [vmem:[%s1652] sm:$0x1]
        %v1655 = vlaneseq
        %v1656 = vshrl.u32 %v1655, 7
        %v1657 = vsub.s32 0, %v1656
        %v1658 = vrot.slane %v1653, %v1657
        %v1660 = vmul.f32 %v1658, %v1608
        %v1661 = vadd.f32 %v1498, %v1660
        %s1662 = scalar_lea.vmem %s0, 221
        %v1663 = vld [vmem:[%s1662] sm:$0x1]
        %v1665 = vlaneseq
        %v1666 = vshrl.u32 %v1665, 7
        %v1667 = vsub.s32 0, %v1666
        %v1668 = vrot.slane %v1663, %v1667
        %v1670 = vmul.f32 %v1668, %v1608
        %v1671 = vadd.f32 %v1508, %v1670
        %s1672 = scalar_lea.vmem %s0, 257
        %v1673 = vld [vmem:[%s1672] sm:$0x1]
        %v1675 = vlaneseq
        %v1676 = vshrl.u32 %v1675, 7
        %v1677 = vsub.s32 0, %v1676
        %v1678 = vrot.slane %v1673, %v1677
        %v1680 = vmul.f32 %v1678, %v1608
        %v1681 = vadd.f32 %v1518, %v1680
        %s1682 = scalar_lea.vmem %s0, 293
        %v1683 = vld [vmem:[%s1682] sm:$0x1]
        %v1685 = vlaneseq
        %v1686 = vshrl.u32 %v1685, 7
        %v1687 = vsub.s32 0, %v1686
        %v1688 = vrot.slane %v1683, %v1687
        %v1690 = vmul.f32 %v1688, %v1608
        %v1691 = vadd.f32 %v1528, %v1690
        %s1692 = scalar_lea.vmem %s0, 329
        %v1693 = vld [vmem:[%s1692] sm:$0x1]
        %v1695 = vlaneseq
        %v1696 = vshrl.u32 %v1695, 7
        %v1697 = vsub.s32 0, %v1696
        %v1698 = vrot.slane %v1693, %v1697
        %v1700 = vmul.f32 %v1698, %v1608
        %v1701 = vadd.f32 %v1538, %v1700
        %s1702 = scalar_lea.vmem %s0, 365
        %v1703 = vld [vmem:[%s1702] sm:$0x1]
        %v1705 = vlaneseq
        %v1706 = vshrl.u32 %v1705, 7
        %v1707 = vsub.s32 0, %v1706
        %v1708 = vrot.slane %v1703, %v1707
        %v1710 = vmul.f32 %v1708, %v1608
        %v1711 = vadd.f32 %v1548, %v1710
        %s1712 = scalar_lea.vmem %s0, 401
        %v1713 = vld [vmem:[%s1712] sm:$0x1]
        %v1715 = vlaneseq
        %v1716 = vshrl.u32 %v1715, 7
        %v1717 = vsub.s32 0, %v1716
        %v1718 = vrot.slane %v1713, %v1717
        %v1720 = vmul.f32 %v1718, %v1608
        %v1721 = vadd.f32 %v1558, %v1720
        %s1722 = scalar_lea.vmem %s0, 437
        %v1723 = vld [vmem:[%s1722] sm:$0x1]
        %v1725 = vlaneseq
        %v1726 = vshrl.u32 %v1725, 7
        %v1727 = vsub.s32 0, %v1726
        %v1728 = vrot.slane %v1723, %v1727
        %v1730 = vmul.f32 %v1728, %v1608
        %v1731 = vadd.f32 %v1568, %v1730
        %s1732 = scalar_lea.vmem %s0, 473
        %v1733 = vld [vmem:[%s1732] sm:$0x1]
        %v1735 = vlaneseq
        %v1736 = vshrl.u32 %v1735, 7
        %v1737 = vsub.s32 0, %v1736
        %v1738 = vrot.slane %v1733, %v1737
        %v1740 = vmul.f32 %v1738, %v1608
        %v1741 = vadd.f32 %v1578, %v1740
        %s1742 = scalar_lea.vmem %s0, 509
        %v1743 = vld [vmem:[%s1742] sm:$0x1]
        %v1745 = vlaneseq
        %v1746 = vshrl.u32 %v1745, 7
        %v1747 = vsub.s32 0, %v1746
        %v1748 = vrot.slane %v1743, %v1747
        %v1750 = vmul.f32 %v1748, %v1608
        %v1751 = vadd.f32 %v1588, %v1750
        %s1752 = scalar_lea.vmem %s0, 545
        %v1753 = vld [vmem:[%s1752] sm:$0x1]
        %v1755 = vlaneseq
        %v1756 = vshrl.u32 %v1755, 7
        %v1757 = vsub.s32 0, %v1756
        %v1758 = vrot.slane %v1753, %v1757
        %v1760 = vmul.f32 %v1758, %v1608
        %v1761 = vadd.f32 %v1598, %v1760
        %s1762 = scalar_lea.vmem %s0, 294
        %v1763 = vld [vmem:[%s1762] sm:$0x1]
        %v1765 = vlaneseq
        %v1766 = vshrl.u32 %v1765, 7
        %v1767 = vsub.s32 0, %v1766
        %v1768 = vrot.slane %v1763, %v1767
        %v1770 = vmul.f32 %v1768, %v905
        %v1771 = vmul.f32 %v1768, %v910
        %vm1774 = vcmask 1045504
        %v1775 = vrot.slane %v1770, 2
        %v1776 = vrot.slane %v1771, 2
        %v1777 = vsel %vm1774, %v1775, %v1776
        %v1779 = vadd.f32 %v1691, %v1777
        %s1780 = scalar_lea.vmem %s0, 330
        %v1781 = vld [vmem:[%s1780] sm:$0x1]
        %v1783 = vlaneseq
        %v1784 = vshrl.u32 %v1783, 7
        %v1785 = vsub.s32 0, %v1784
        %v1786 = vrot.slane %v1781, %v1785
        %v1788 = vmul.f32 %v1786, %v905
        %v1789 = vmul.f32 %v1786, %v910
        %v1792 = vrot.slane %v1788, 2
        %v1793 = vrot.slane %v1789, 2
        %v1794 = vsel %vm1774, %v1792, %v1793
        %v1796 = vadd.f32 %v1701, %v1794
        %s1797 = scalar_lea.vmem %s0, 366
        %v1798 = vld [vmem:[%s1797] sm:$0x1]
        %v1800 = vlaneseq
        %v1801 = vshrl.u32 %v1800, 7
        %v1802 = vsub.s32 0, %v1801
        %v1803 = vrot.slane %v1798, %v1802
        %v1805 = vmul.f32 %v1803, %v905
        %v1806 = vmul.f32 %v1803, %v910
        %v1809 = vrot.slane %v1805, 2
        %v1810 = vrot.slane %v1806, 2
        %v1811 = vsel %vm1774, %v1809, %v1810
        %v1813 = vadd.f32 %v1711, %v1811
        %s1814 = scalar_lea.vmem %s0, 402
        %v1815 = vld [vmem:[%s1814] sm:$0x1]
        %v1817 = vlaneseq
        %v1818 = vshrl.u32 %v1817, 7
        %v1819 = vsub.s32 0, %v1818
        %v1820 = vrot.slane %v1815, %v1819
        %v1822 = vmul.f32 %v1820, %v905
        %v1823 = vmul.f32 %v1820, %v910
        %v1826 = vrot.slane %v1822, 2
        %v1827 = vrot.slane %v1823, 2
        %v1828 = vsel %vm1774, %v1826, %v1827
        %v1830 = vadd.f32 %v1721, %v1828
        %s1831 = scalar_lea.vmem %s0, 438
        %v1832 = vld [vmem:[%s1831] sm:$0x1]
        %v1834 = vlaneseq
        %v1835 = vshrl.u32 %v1834, 7
        %v1836 = vsub.s32 0, %v1835
        %v1837 = vrot.slane %v1832, %v1836
        %v1839 = vmul.f32 %v1837, %v905
        %v1840 = vmul.f32 %v1837, %v910
        %v1843 = vrot.slane %v1839, 2
        %v1844 = vrot.slane %v1840, 2
        %v1845 = vsel %vm1774, %v1843, %v1844
        %v1847 = vadd.f32 %v1731, %v1845
        %s1848 = scalar_lea.vmem %s0, 474
        %v1849 = vld [vmem:[%s1848] sm:$0x1]
        %v1851 = vlaneseq
        %v1852 = vshrl.u32 %v1851, 7
        %v1853 = vsub.s32 0, %v1852
        %v1854 = vrot.slane %v1849, %v1853
        %v1856 = vmul.f32 %v1854, %v905
        %v1857 = vmul.f32 %v1854, %v910
        %v1860 = vrot.slane %v1856, 2
        %v1861 = vrot.slane %v1857, 2
        %v1862 = vsel %vm1774, %v1860, %v1861
        %v1864 = vadd.f32 %v1741, %v1862
        %s1865 = scalar_lea.vmem %s0, 510
        %v1866 = vld [vmem:[%s1865] sm:$0x1]
        %v1868 = vlaneseq
        %v1869 = vshrl.u32 %v1868, 7
        %v1870 = vsub.s32 0, %v1869
        %v1871 = vrot.slane %v1866, %v1870
        %v1873 = vmul.f32 %v1871, %v905
        %v1874 = vmul.f32 %v1871, %v910
        %v1877 = vrot.slane %v1873, 2
        %v1878 = vrot.slane %v1874, 2
        %v1879 = vsel %vm1774, %v1877, %v1878
        %v1881 = vadd.f32 %v1751, %v1879
        %s1882 = scalar_lea.vmem %s0, 546
        %v1883 = vld [vmem:[%s1882] sm:$0x1]
        %v1885 = vlaneseq
        %v1886 = vshrl.u32 %v1885, 7
        %v1887 = vsub.s32 0, %v1886
        %v1888 = vrot.slane %v1883, %v1887
        %v1890 = vmul.f32 %v1888, %v905
        %v1891 = vmul.f32 %v1888, %v910
        %v1894 = vrot.slane %v1890, 2
        %v1895 = vrot.slane %v1891, 2
        %v1896 = vsel %vm1774, %v1894, %v1895
        %v1898 = vadd.f32 %v1761, %v1896
        %s1899 = scalar_lea.vmem %s0, 295
        %v1900 = vld [vmem:[%s1899] sm:$0x1]
        %v1902 = vlaneseq
        %v1903 = vshrl.u32 %v1902, 7
        %v1904 = vsub.s32 0, %v1903
        %v1905 = vrot.slane %v1900, %v1904
        %v1907 = vrot.slane %v905, 2
        %v1908 = vrot.slane %v910, 2
        %v1909 = vsel %vm1774, %v1907, %v1908
        %1910 = vrot.lane.b32.xlu0 %v1909, 126
        %v1911 = vpop.permute.xlu0 %1910
        %v1913 = vmul.f32 %v1905, %v1911
        %v1914 = vadd.f32 %v1779, %v1913
        %s1915 = scalar_lea.vmem %s0, 331
        %v1916 = vld [vmem:[%s1915] sm:$0x1]
        %v1918 = vlaneseq
        %v1919 = vshrl.u32 %v1918, 7
        %v1920 = vsub.s32 0, %v1919
        %v1921 = vrot.slane %v1916, %v1920
        %v1923 = vmul.f32 %v1921, %v1911
        %v1924 = vadd.f32 %v1796, %v1923
        %s1925 = scalar_lea.vmem %s0, 367
        %v1926 = vld [vmem:[%s1925] sm:$0x1]
        %v1928 = vlaneseq
        %v1929 = vshrl.u32 %v1928, 7
        %v1930 = vsub.s32 0, %v1929
        %v1931 = vrot.slane %v1926, %v1930
        %v1933 = vmul.f32 %v1931, %v1911
        %v1934 = vadd.f32 %v1813, %v1933
        %s1935 = scalar_lea.vmem %s0, 403
        %v1936 = vld [vmem:[%s1935] sm:$0x1]
        %v1938 = vlaneseq
        %v1939 = vshrl.u32 %v1938, 7
        %v1940 = vsub.s32 0, %v1939
        %v1941 = vrot.slane %v1936, %v1940
        %v1943 = vmul.f32 %v1941, %v1911
        %v1944 = vadd.f32 %v1830, %v1943
        %s1945 = scalar_lea.vmem %s0, 439
        %v1946 = vld [vmem:[%s1945] sm:$0x1]
        %v1948 = vlaneseq
        %v1949 = vshrl.u32 %v1948, 7
        %v1950 = vsub.s32 0, %v1949
        %v1951 = vrot.slane %v1946, %v1950
        %v1953 = vmul.f32 %v1951, %v1911
        %v1954 = vadd.f32 %v1847, %v1953
        %s1955 = scalar_lea.vmem %s0, 475
        %v1956 = vld [vmem:[%s1955] sm:$0x1]
        %v1958 = vlaneseq
        %v1959 = vshrl.u32 %v1958, 7
        %v1960 = vsub.s32 0, %v1959
        %v1961 = vrot.slane %v1956, %v1960
        %v1963 = vmul.f32 %v1961, %v1911
        %v1964 = vadd.f32 %v1864, %v1963
        %s1965 = scalar_lea.vmem %s0, 511
        %v1966 = vld [vmem:[%s1965] sm:$0x1]
        %v1968 = vlaneseq
        %v1969 = vshrl.u32 %v1968, 7
        %v1970 = vsub.s32 0, %v1969
        %v1971 = vrot.slane %v1966, %v1970
        %v1973 = vmul.f32 %v1971, %v1911
        %v1974 = vadd.f32 %v1881, %v1973
        %s1975 = scalar_lea.vmem %s0, 547
        %v1976 = vld [vmem:[%s1975] sm:$0x1]
        %v1978 = vlaneseq
        %v1979 = vshrl.u32 %v1978, 7
        %v1980 = vsub.s32 0, %v1979
        %v1981 = vrot.slane %v1976, %v1980
        %v1983 = vmul.f32 %v1981, %v1911
        %v1984 = vadd.f32 %v1898, %v1983
        %s1985 = scalar_lea.vmem %s0, 296
        %v1986 = vld [vmem:[%s1985] sm:$0x1]
        %v1988 = vlaneseq
        %v1989 = vshrl.u32 %v1988, 7
        %v1990 = vsub.s32 0, %v1989
        %v1991 = vrot.slane %v1986, %v1990
        %1993 = vrot.lane.b32.xlu0 %v1909, 124
        %v1994 = vpop.permute.xlu0 %1993
        %v1996 = vmul.f32 %v1991, %v1994
        %v1997 = vadd.f32 %v1914, %v1996
        %s1998 = scalar_lea.vmem %s0, 332
        %v1999 = vld [vmem:[%s1998] sm:$0x1]
        %v2001 = vlaneseq
        %v2002 = vshrl.u32 %v2001, 7
        %v2003 = vsub.s32 0, %v2002
        %v2004 = vrot.slane %v1999, %v2003
        %v2006 = vmul.f32 %v2004, %v1994
        %v2007 = vadd.f32 %v1924, %v2006
        %s2008 = scalar_lea.vmem %s0, 368
        %v2009 = vld [vmem:[%s2008] sm:$0x1]
        %v2011 = vlaneseq
        %v2012 = vshrl.u32 %v2011, 7
        %v2013 = vsub.s32 0, %v2012
        %v2014 = vrot.slane %v2009, %v2013
        %v2016 = vmul.f32 %v2014, %v1994
        %v2017 = vadd.f32 %v1934, %v2016
        %s2018 = scalar_lea.vmem %s0, 404
        %v2019 = vld [vmem:[%s2018] sm:$0x1]
        %v2021 = vlaneseq
        %v2022 = vshrl.u32 %v2021, 7
        %v2023 = vsub.s32 0, %v2022
        %v2024 = vrot.slane %v2019, %v2023
        %v2026 = vmul.f32 %v2024, %v1994
        %v2027 = vadd.f32 %v1944, %v2026
        %s2028 = scalar_lea.vmem %s0, 440
        %v2029 = vld [vmem:[%s2028] sm:$0x1]
        %v2031 = vlaneseq
        %v2032 = vshrl.u32 %v2031, 7
        %v2033 = vsub.s32 0, %v2032
        %v2034 = vrot.slane %v2029, %v2033
        %v2036 = vmul.f32 %v2034, %v1994
        %v2037 = vadd.f32 %v1954, %v2036
        %s2038 = scalar_lea.vmem %s0, 476
        %v2039 = vld [vmem:[%s2038] sm:$0x1]
        %v2041 = vlaneseq
        %v2042 = vshrl.u32 %v2041, 7
        %v2043 = vsub.s32 0, %v2042
        %v2044 = vrot.slane %v2039, %v2043
        %v2046 = vmul.f32 %v2044, %v1994
        %v2047 = vadd.f32 %v1964, %v2046
        %s2048 = scalar_lea.vmem %s0, 512
        %v2049 = vld [vmem:[%s2048] sm:$0x1]
        %v2051 = vlaneseq
        %v2052 = vshrl.u32 %v2051, 7
        %v2053 = vsub.s32 0, %v2052
        %v2054 = vrot.slane %v2049, %v2053
        %v2056 = vmul.f32 %v2054, %v1994
        %v2057 = vadd.f32 %v1974, %v2056
        %s2058 = scalar_lea.vmem %s0, 548
        %v2059 = vld [vmem:[%s2058] sm:$0x1]
        %v2061 = vlaneseq
        %v2062 = vshrl.u32 %v2061, 7
        %v2063 = vsub.s32 0, %v2062
        %v2064 = vrot.slane %v2059, %v2063
        %v2066 = vmul.f32 %v2064, %v1994
        %v2067 = vadd.f32 %v1984, %v2066
        %s2068 = scalar_lea.vmem %s455, 8 [#allocation3]
        %v2069 = vld [vmem:[%s2068 + $0x7] sm:$0x1]
        %v2070 = vmul.f32 %v816, %v2069
        %s2071 = scalar_lea.vmem %s462, 8 [#allocation4]
        %v2072 = vld [vmem:[%s2071] sm:$0x1]
        %v2073 = vmul.f32 %v819, %v2072
        %s2074 = scalar_lea.vmem %s448, 8 [#allocation2]
        %v2075 = vld [vmem:[%s2074] sm:$0xff]
        %v2077 = vrot.slane %v2075, 7
        %v2080 = vrot.slane %v2073, 7
        %v2082 = vsel %vm828, %v2070, %v2077
        %v2083 = vsel %vm828, %v2077, %v2080
        %v2085 = vsel %vm831, %v2082, 0
        %v2088 = vsel %vm831, %v2083, 0
        %2090 = vmatprep.subr.mxu0 0.0
        %2091 = vmatpush1.msra.mxu0 %v514
        %2092 = vmatprep.subr.mxu0 0.0
        %2093 = vmatpush1.msra.mxu0 %v515
        %2094 = vmatprep.subr.mxu0 0.0
        %2095 = vmatpush1.msra.mxu0 0.0
        %2096 = vmatprep.subr.mxu0 0.0
        %2097 = vmatpush1.msra.mxu0 0.0
        %2098 = vmatprep.subr.mxu0 0.0
        %2099 = vmatpush1.msra.mxu0 0.0
        %2100 = vmatprep.subr.mxu0 0.0
        %2101 = vmatpush1.msra.mxu0 0.0
        %2102 = vmatprep.subr.mxu0 0.0
        %2103 = vmatpush1.msra.mxu0 0.0
        %2104 = vmatprep.subr.mxu0 0.0
        %2105 = vmatpush1.msra.mxu0 0.0
        %2106 = vmatprep.subr.mxu0 0.0
        %2107 = vmatpush1.msra.mxu0 0.0
        %2108 = vmatprep.subr.mxu0 0.0
        %2109 = vmatpush1.msra.mxu0 0.0
        %2110 = vmatprep.subr.mxu0 0.0
        %2111 = vmatpush1.msra.mxu0 0.0
        %2112 = vmatprep.subr.mxu0 0.0
        %2113 = vmatpush1.msra.mxu0 0.0
        %2114 = vmatprep.subr.mxu0 0.0
        %2115 = vmatpush1.msra.mxu0 0.0
        %2116 = vmatprep.subr.mxu0 0.0
        %2117 = vmatpush1.msra.mxu0 0.0
        %2118 = vmatprep.subr.mxu0 0.0
        %2119 = vmatpush1.msra.mxu0 0.0
        %2120 = vmatprep.subr.mxu0 0.0
        %2121 = vmatpush1.msra.mxu0 0.0
        %2122 = vmatprep.subr.mxu0 0.0
        %2123 = vmatpush1.msra.mxu0 0.0
        %2124 = vmatprep.subr.mxu0 0.0
        %2125 = vmatpush1.msra.mxu0 0.0
        %2126 = vmatprep.subr.mxu0 0.0
        %2127 = vmatpush1.msra.mxu0 0.0
        %2128 = vmatprep.subr.mxu0 0.0
        %2129 = vmatpush1.msra.mxu0 0.0
        %2130 = vmatprep.subr.mxu0 0.0
        %2131 = vmatpush1.msra.mxu0 0.0
        %2132 = vmatprep.subr.mxu0 0.0
        %2133 = vmatpush1.msra.mxu0 0.0
        %2134 = vmatprep.subr.mxu0 0.0
        %2135 = vmatpush1.msra.mxu0 0.0
        %2136 = vmatprep.subr.mxu0 0.0
        %2137 = vmatpush1.msra.mxu0 0.0
        %2138 = vmatprep.subr.mxu0 0.0
        %2139 = vmatpush1.msra.mxu0 0.0
        %2140 = vmatprep.subr.mxu0 0.0
        %2141 = vmatpush1.msra.mxu0 0.0
        %2142 = vmatprep.subr.mxu0 0.0
        %2143 = vmatpush1.msra.mxu0 0.0
        %2144 = vmatprep.subr.mxu0 0.0
        %2145 = vmatpush1.msra.mxu0 0.0
        %2146 = vmatprep.subr.mxu0 0.0
        %2147 = vmatpush1.msra.mxu0 0.0
        %2148 = vmatprep.subr.mxu0 0.0
        %2149 = vmatpush1.msra.mxu0 0.0
        %2150 = vmatprep.subr.mxu0 0.0
        %2151 = vmatpush1.msra.mxu0 0.0
        %2152 = vmatprep.subr.mxu0 0.0
        %2153 = vmatpush1.msra.mxu0 0.0
        %2154 = vmatprep.mubr.f32.mxu0 0.0
        %2155 = vmatmul.mubr.f32.gmra.mrb[0].mxu0 %v2085
        %v2156 = vpop.f32.mrb[0].mxu0
        %v2157 = vadd.f32 0.0, %v2156
        %v2158 = vpop.f32.mrb[0].mxu0
        %2159 = vmatprep.mubr.f32.mxu0 0.0
        %2160 = vmatmul.mubr.f32.gmra.mrb[0].mxu0 %v2088
        %v2161 = vpop.f32.mrb[0].mxu0
        %v2162 = vadd.f32 0.0, %v2161
        %v2163 = vpop.f32.mrb[0].mxu0
        %2164 = vdwg.mxu0
        %s2165 = scalar_lea.vmem %s0, 9
        %v2166 = vld [vmem:[%s2165] sm:$0x1]
        %v2168 = vlaneseq
        %v2169 = vshrl.u32 %v2168, 7
        %v2170 = vsub.s32 0, %v2169
        %v2171 = vrot.slane %v2166, %v2170
        %v2173 = vmul.f32 %v2171, %v2157
        %v2174 = vadd.f32 %v1611, %v2173
        %s2175 = scalar_lea.vmem %s0, 45
        %v2176 = vld [vmem:[%s2175] sm:$0x1]
        %v2178 = vlaneseq
        %v2179 = vshrl.u32 %v2178, 7
        %v2180 = vsub.s32 0, %v2179
        %v2181 = vrot.slane %v2176, %v2180
        %v2183 = vmul.f32 %v2181, %v2157
        %v2184 = vadd.f32 %v1621, %v2183
        %s2185 = scalar_lea.vmem %s0, 81
        %v2186 = vld [vmem:[%s2185] sm:$0x1]
        %v2188 = vlaneseq
        %v2189 = vshrl.u32 %v2188, 7
        %v2190 = vsub.s32 0, %v2189
        %v2191 = vrot.slane %v2186, %v2190
        %v2193 = vmul.f32 %v2191, %v2157
        %v2194 = vadd.f32 %v1631, %v2193
        %s2195 = scalar_lea.vmem %s0, 117
        %v2196 = vld [vmem:[%s2195] sm:$0x1]
        %v2198 = vlaneseq
        %v2199 = vshrl.u32 %v2198, 7
        %v2200 = vsub.s32 0, %v2199
        %v2201 = vrot.slane %v2196, %v2200
        %v2203 = vmul.f32 %v2201, %v2157
        %v2204 = vadd.f32 %v1641, %v2203
        %s2205 = scalar_lea.vmem %s0, 153
        %v2206 = vld [vmem:[%s2205] sm:$0x1]
        %v2208 = vlaneseq
        %v2209 = vshrl.u32 %v2208, 7
        %v2210 = vsub.s32 0, %v2209
        %v2211 = vrot.slane %v2206, %v2210
        %v2213 = vmul.f32 %v2211, %v2157
        %v2214 = vadd.f32 %v1651, %v2213
        %s2215 = scalar_lea.vmem %s0, 189
        %v2216 = vld [vmem:[%s2215] sm:$0x1]
        %v2218 = vlaneseq
        %v2219 = vshrl.u32 %v2218, 7
        %v2220 = vsub.s32 0, %v2219
        %v2221 = vrot.slane %v2216, %v2220
        %v2223 = vmul.f32 %v2221, %v2157
        %v2224 = vadd.f32 %v1661, %v2223
        %s2225 = scalar_lea.vmem %s0, 225
        %v2226 = vld [vmem:[%s2225] sm:$0x1]
        %v2228 = vlaneseq
        %v2229 = vshrl.u32 %v2228, 7
        %v2230 = vsub.s32 0, %v2229
        %v2231 = vrot.slane %v2226, %v2230
        %v2233 = vmul.f32 %v2231, %v2157
        %v2234 = vadd.f32 %v1671, %v2233
        %s2235 = scalar_lea.vmem %s0, 261
        %v2236 = vld [vmem:[%s2235] sm:$0x1]
        %v2238 = vlaneseq
        %v2239 = vshrl.u32 %v2238, 7
        %v2240 = vsub.s32 0, %v2239
        %v2241 = vrot.slane %v2236, %v2240
        %v2243 = vmul.f32 %v2241, %v2157
        %v2244 = vadd.f32 %v1681, %v2243
        %s2245 = scalar_lea.vmem %s0, 10
        %v2246 = vld [vmem:[%s2245] sm:$0x1]
        %v2248 = vlaneseq
        %v2249 = vshrl.u32 %v2248, 7
        %v2250 = vsub.s32 0, %v2249
        %v2251 = vrot.slane %v2246, %v2250
        %2254 = vrot.lane.b32.xlu0 %v2157, 126
        %v2255 = vpop.permute.xlu0 %2254
        %v2257 = vmul.f32 %v2251, %v2255
        %v2258 = vadd.f32 %v2174, %v2257
        %s2259 = scalar_lea.vmem %s0, 46
        %v2260 = vld [vmem:[%s2259] sm:$0x1]
        %v2262 = vlaneseq
        %v2263 = vshrl.u32 %v2262, 7
        %v2264 = vsub.s32 0, %v2263
        %v2265 = vrot.slane %v2260, %v2264
        %v2267 = vmul.f32 %v2265, %v2255
        %v2268 = vadd.f32 %v2184, %v2267
        %s2269 = scalar_lea.vmem %s0, 82
        %v2270 = vld [vmem:[%s2269] sm:$0x1]
        %v2272 = vlaneseq
        %v2273 = vshrl.u32 %v2272, 7
        %v2274 = vsub.s32 0, %v2273
        %v2275 = vrot.slane %v2270, %v2274
        %v2277 = vmul.f32 %v2275, %v2255
        %v2278 = vadd.f32 %v2194, %v2277
        %s2279 = scalar_lea.vmem %s0, 118
        %v2280 = vld [vmem:[%s2279] sm:$0x1]
        %v2282 = vlaneseq
        %v2283 = vshrl.u32 %v2282, 7
        %v2284 = vsub.s32 0, %v2283
        %v2285 = vrot.slane %v2280, %v2284
        %v2287 = vmul.f32 %v2285, %v2255
        %v2288 = vadd.f32 %v2204, %v2287
        %s2289 = scalar_lea.vmem %s0, 154
        %v2290 = vld [vmem:[%s2289] sm:$0x1]
        %v2292 = vlaneseq
        %v2293 = vshrl.u32 %v2292, 7
        %v2294 = vsub.s32 0, %v2293
        %v2295 = vrot.slane %v2290, %v2294
        %v2297 = vmul.f32 %v2295, %v2255
        %v2298 = vadd.f32 %v2214, %v2297
        %s2299 = scalar_lea.vmem %s0, 190
        %v2300 = vld [vmem:[%s2299] sm:$0x1]
        %v2302 = vlaneseq
        %v2303 = vshrl.u32 %v2302, 7
        %v2304 = vsub.s32 0, %v2303
        %v2305 = vrot.slane %v2300, %v2304
        %v2307 = vmul.f32 %v2305, %v2255
        %v2308 = vadd.f32 %v2224, %v2307
        %s2309 = scalar_lea.vmem %s0, 226
        %v2310 = vld [vmem:[%s2309] sm:$0x1]
        %v2312 = vlaneseq
        %v2313 = vshrl.u32 %v2312, 7
        %v2314 = vsub.s32 0, %v2313
        %v2315 = vrot.slane %v2310, %v2314
        %v2317 = vmul.f32 %v2315, %v2255
        %v2318 = vadd.f32 %v2234, %v2317
        %s2319 = scalar_lea.vmem %s0, 262
        %v2320 = vld [vmem:[%s2319] sm:$0x1]
        %v2322 = vlaneseq
        %v2323 = vshrl.u32 %v2322, 7
        %v2324 = vsub.s32 0, %v2323
        %v2325 = vrot.slane %v2320, %v2324
        %v2327 = vmul.f32 %v2325, %v2255
        %v2328 = vadd.f32 %v2244, %v2327
        %s2329 = scalar_lea.vmem %s0, 11
        %v2330 = vld [vmem:[%s2329] sm:$0x1]
        %v2332 = vlaneseq
        %v2333 = vshrl.u32 %v2332, 7
        %v2334 = vsub.s32 0, %v2333
        %v2335 = vrot.slane %v2330, %v2334
        %2337 = vrot.lane.b32.xlu0 %v2157, 124
        %v2338 = vpop.permute.xlu0 %2337
        %v2340 = vmul.f32 %v2335, %v2338
        %v2341 = vadd.f32 %v2258, %v2340
        %s2342 = scalar_lea.vmem %s0, 47
        %v2343 = vld [vmem:[%s2342] sm:$0x1]
        %v2345 = vlaneseq
        %v2346 = vshrl.u32 %v2345, 7
        %v2347 = vsub.s32 0, %v2346
        %v2348 = vrot.slane %v2343, %v2347
        %v2350 = vmul.f32 %v2348, %v2338
        %v2351 = vadd.f32 %v2268, %v2350
        %s2352 = scalar_lea.vmem %s0, 83
        %v2353 = vld [vmem:[%s2352] sm:$0x1]
        %v2355 = vlaneseq
        %v2356 = vshrl.u32 %v2355, 7
        %v2357 = vsub.s32 0, %v2356
        %v2358 = vrot.slane %v2353, %v2357
        %v2360 = vmul.f32 %v2358, %v2338
        %v2361 = vadd.f32 %v2278, %v2360
        %s2362 = scalar_lea.vmem %s0, 119
        %v2363 = vld [vmem:[%s2362] sm:$0x1]
        %v2365 = vlaneseq
        %v2366 = vshrl.u32 %v2365, 7
        %v2367 = vsub.s32 0, %v2366
        %v2368 = vrot.slane %v2363, %v2367
        %v2370 = vmul.f32 %v2368, %v2338
        %v2371 = vadd.f32 %v2288, %v2370
        %s2372 = scalar_lea.vmem %s0, 155
        %v2373 = vld [vmem:[%s2372] sm:$0x1]
        %v2375 = vlaneseq
        %v2376 = vshrl.u32 %v2375, 7
        %v2377 = vsub.s32 0, %v2376
        %v2378 = vrot.slane %v2373, %v2377
        %v2380 = vmul.f32 %v2378, %v2338
        %v2381 = vadd.f32 %v2298, %v2380
        %s2382 = scalar_lea.vmem %s0, 191
        %v2383 = vld [vmem:[%s2382] sm:$0x1]
        %v2385 = vlaneseq
        %v2386 = vshrl.u32 %v2385, 7
        %v2387 = vsub.s32 0, %v2386
        %v2388 = vrot.slane %v2383, %v2387
        %v2390 = vmul.f32 %v2388, %v2338
        %v2391 = vadd.f32 %v2308, %v2390
        %s2392 = scalar_lea.vmem %s0, 227
        %v2393 = vld [vmem:[%s2392] sm:$0x1]
        %v2395 = vlaneseq
        %v2396 = vshrl.u32 %v2395, 7
        %v2397 = vsub.s32 0, %v2396
        %v2398 = vrot.slane %v2393, %v2397
        %v2400 = vmul.f32 %v2398, %v2338
        %v2401 = vadd.f32 %v2318, %v2400
        %s2402 = scalar_lea.vmem %s0, 263
        %v2403 = vld [vmem:[%s2402] sm:$0x1]
        %v2405 = vlaneseq
        %v2406 = vshrl.u32 %v2405, 7
        %v2407 = vsub.s32 0, %v2406
        %v2408 = vrot.slane %v2403, %v2407
        %v2410 = vmul.f32 %v2408, %v2338
        %v2411 = vadd.f32 %v2328, %v2410
        %s2412 = scalar_lea.vmem %s0, 12
        %v2413 = vld [vmem:[%s2412] sm:$0x1]
        %v2415 = vlaneseq
        %v2416 = vshrl.u32 %v2415, 7
        %v2417 = vsub.s32 0, %v2416
        %v2418 = vrot.slane %v2413, %v2417
        %v2420 = vmul.f32 %v2418, %v2157
        %v2421 = vmul.f32 %v2418, %v2162
        %v2424 = vrot.slane %v2420, 1
        %v2425 = vrot.slane %v2421, 1
        %v2426 = vsel %vm1171, %v2424, %v2425
        %v2428 = vadd.f32 %v2341, %v2426
        %s2429 = scalar_lea.vmem %s0, 48
        %v2430 = vld [vmem:[%s2429] sm:$0x1]
        %v2432 = vlaneseq
        %v2433 = vshrl.u32 %v2432, 7
        %v2434 = vsub.s32 0, %v2433
        %v2435 = vrot.slane %v2430, %v2434
        %v2437 = vmul.f32 %v2435, %v2157
        %v2438 = vmul.f32 %v2435, %v2162
        %v2441 = vrot.slane %v2437, 1
        %v2442 = vrot.slane %v2438, 1
        %v2443 = vsel %vm1171, %v2441, %v2442
        %v2445 = vadd.f32 %v2351, %v2443
        %s2446 = scalar_lea.vmem %s0, 84
        %v2447 = vld [vmem:[%s2446] sm:$0x1]
        %v2449 = vlaneseq
        %v2450 = vshrl.u32 %v2449, 7
        %v2451 = vsub.s32 0, %v2450
        %v2452 = vrot.slane %v2447, %v2451
        %v2454 = vmul.f32 %v2452, %v2157
        %v2455 = vmul.f32 %v2452, %v2162
        %v2458 = vrot.slane %v2454, 1
        %v2459 = vrot.slane %v2455, 1
        %v2460 = vsel %vm1171, %v2458, %v2459
        %v2462 = vadd.f32 %v2361, %v2460
        %s2463 = scalar_lea.vmem %s0, 120
        %v2464 = vld [vmem:[%s2463] sm:$0x1]
        %v2466 = vlaneseq
        %v2467 = vshrl.u32 %v2466, 7
        %v2468 = vsub.s32 0, %v2467
        %v2469 = vrot.slane %v2464, %v2468
        %v2471 = vmul.f32 %v2469, %v2157
        %v2472 = vmul.f32 %v2469, %v2162
        %v2475 = vrot.slane %v2471, 1
        %v2476 = vrot.slane %v2472, 1
        %v2477 = vsel %vm1171, %v2475, %v2476
        %v2479 = vadd.f32 %v2371, %v2477
        %s2480 = scalar_lea.vmem %s0, 156
        %v2481 = vld [vmem:[%s2480] sm:$0x1]
        %v2483 = vlaneseq
        %v2484 = vshrl.u32 %v2483, 7
        %v2485 = vsub.s32 0, %v2484
        %v2486 = vrot.slane %v2481, %v2485
        %v2488 = vmul.f32 %v2486, %v2157
        %v2489 = vmul.f32 %v2486, %v2162
        %v2492 = vrot.slane %v2488, 1
        %v2493 = vrot.slane %v2489, 1
        %v2494 = vsel %vm1171, %v2492, %v2493
        %v2496 = vadd.f32 %v2381, %v2494
        %s2497 = scalar_lea.vmem %s0, 192
        %v2498 = vld [vmem:[%s2497] sm:$0x1]
        %v2500 = vlaneseq
        %v2501 = vshrl.u32 %v2500, 7
        %v2502 = vsub.s32 0, %v2501
        %v2503 = vrot.slane %v2498, %v2502
        %v2505 = vmul.f32 %v2503, %v2157
        %v2506 = vmul.f32 %v2503, %v2162
        %v2509 = vrot.slane %v2505, 1
        %v2510 = vrot.slane %v2506, 1
        %v2511 = vsel %vm1171, %v2509, %v2510
        %v2513 = vadd.f32 %v2391, %v2511
        %s2514 = scalar_lea.vmem %s0, 228
        %v2515 = vld [vmem:[%s2514] sm:$0x1]
        %v2517 = vlaneseq
        %v2518 = vshrl.u32 %v2517, 7
        %v2519 = vsub.s32 0, %v2518
        %v2520 = vrot.slane %v2515, %v2519
        %v2522 = vmul.f32 %v2520, %v2157
        %v2523 = vmul.f32 %v2520, %v2162
        %v2526 = vrot.slane %v2522, 1
        %v2527 = vrot.slane %v2523, 1
        %v2528 = vsel %vm1171, %v2526, %v2527
        %v2530 = vadd.f32 %v2401, %v2528
        %s2531 = scalar_lea.vmem %s0, 264
        %v2532 = vld [vmem:[%s2531] sm:$0x1]
        %v2534 = vlaneseq
        %v2535 = vshrl.u32 %v2534, 7
        %v2536 = vsub.s32 0, %v2535
        %v2537 = vrot.slane %v2532, %v2536
        %v2539 = vmul.f32 %v2537, %v2157
        %v2540 = vmul.f32 %v2537, %v2162
        %v2543 = vrot.slane %v2539, 1
        %v2544 = vrot.slane %v2540, 1
        %v2545 = vsel %vm1171, %v2543, %v2544
        %v2547 = vadd.f32 %v2411, %v2545
        %s2548 = scalar_lea.vmem %s0, 300
        %v2549 = vld [vmem:[%s2548] sm:$0x1]
        %v2551 = vlaneseq
        %v2552 = vshrl.u32 %v2551, 7
        %v2553 = vsub.s32 0, %v2552
        %v2554 = vrot.slane %v2549, %v2553
        %v2556 = vmul.f32 %v2554, %v2157
        %v2557 = vmul.f32 %v2554, %v2162
        %v2560 = vrot.slane %v2556, 1
        %v2561 = vrot.slane %v2557, 1
        %v2562 = vsel %vm1171, %v2560, %v2561
        %v2564 = vadd.f32 %v1997, %v2562
        %s2565 = scalar_lea.vmem %s0, 336
        %v2566 = vld [vmem:[%s2565] sm:$0x1]
        %v2568 = vlaneseq
        %v2569 = vshrl.u32 %v2568, 7
        %v2570 = vsub.s32 0, %v2569
        %v2571 = vrot.slane %v2566, %v2570
        %v2573 = vmul.f32 %v2571, %v2157
        %v2574 = vmul.f32 %v2571, %v2162
        %v2577 = vrot.slane %v2573, 1
        %v2578 = vrot.slane %v2574, 1
        %v2579 = vsel %vm1171, %v2577, %v2578
        %v2581 = vadd.f32 %v2007, %v2579
        %s2582 = scalar_lea.vmem %s0, 372
        %v2583 = vld [vmem:[%s2582] sm:$0x1]
        %v2585 = vlaneseq
        %v2586 = vshrl.u32 %v2585, 7
        %v2587 = vsub.s32 0, %v2586
        %v2588 = vrot.slane %v2583, %v2587
        %v2590 = vmul.f32 %v2588, %v2157
        %v2591 = vmul.f32 %v2588, %v2162
        %v2594 = vrot.slane %v2590, 1
        %v2595 = vrot.slane %v2591, 1
        %v2596 = vsel %vm1171, %v2594, %v2595
        %v2598 = vadd.f32 %v2017, %v2596
        %s2599 = scalar_lea.vmem %s0, 408
        %v2600 = vld [vmem:[%s2599] sm:$0x1]
        %v2602 = vlaneseq
        %v2603 = vshrl.u32 %v2602, 7
        %v2604 = vsub.s32 0, %v2603
        %v2605 = vrot.slane %v2600, %v2604
        %v2607 = vmul.f32 %v2605, %v2157
        %v2608 = vmul.f32 %v2605, %v2162
        %v2611 = vrot.slane %v2607, 1
        %v2612 = vrot.slane %v2608, 1
        %v2613 = vsel %vm1171, %v2611, %v2612
        %v2615 = vadd.f32 %v2027, %v2613
        %s2616 = scalar_lea.vmem %s0, 444
        %v2617 = vld [vmem:[%s2616] sm:$0x1]
        %v2619 = vlaneseq
        %v2620 = vshrl.u32 %v2619, 7
        %v2621 = vsub.s32 0, %v2620
        %v2622 = vrot.slane %v2617, %v2621
        %v2624 = vmul.f32 %v2622, %v2157
        %v2625 = vmul.f32 %v2622, %v2162
        %v2628 = vrot.slane %v2624, 1
        %v2629 = vrot.slane %v2625, 1
        %v2630 = vsel %vm1171, %v2628, %v2629
        %v2632 = vadd.f32 %v2037, %v2630
        %s2633 = scalar_lea.vmem %s0, 480
        %v2634 = vld [vmem:[%s2633] sm:$0x1]
        %v2636 = vlaneseq
        %v2637 = vshrl.u32 %v2636, 7
        %v2638 = vsub.s32 0, %v2637
        %v2639 = vrot.slane %v2634, %v2638
        %v2641 = vmul.f32 %v2639, %v2157
        %v2642 = vmul.f32 %v2639, %v2162
        %v2645 = vrot.slane %v2641, 1
        %v2646 = vrot.slane %v2642, 1
        %v2647 = vsel %vm1171, %v2645, %v2646
        %v2649 = vadd.f32 %v2047, %v2647
        %s2650 = scalar_lea.vmem %s0, 516
        %v2651 = vld [vmem:[%s2650] sm:$0x1]
        %v2653 = vlaneseq
        %v2654 = vshrl.u32 %v2653, 7
        %v2655 = vsub.s32 0, %v2654
        %v2656 = vrot.slane %v2651, %v2655
        %v2658 = vmul.f32 %v2656, %v2157
        %v2659 = vmul.f32 %v2656, %v2162
        %v2662 = vrot.slane %v2658, 1
        %v2663 = vrot.slane %v2659, 1
        %v2664 = vsel %vm1171, %v2662, %v2663
        %v2666 = vadd.f32 %v2057, %v2664
        %s2667 = scalar_lea.vmem %s0, 552
        %v2668 = vld [vmem:[%s2667] sm:$0x1]
        %v2670 = vlaneseq
        %v2671 = vshrl.u32 %v2670, 7
        %v2672 = vsub.s32 0, %v2671
        %v2673 = vrot.slane %v2668, %v2672
        %v2675 = vmul.f32 %v2673, %v2157
        %v2676 = vmul.f32 %v2673, %v2162
        %v2679 = vrot.slane %v2675, 1
        %v2680 = vrot.slane %v2676, 1
        %v2681 = vsel %vm1171, %v2679, %v2680
        %v2683 = vadd.f32 %v2067, %v2681
        %s2684 = scalar_lea.vmem %s0, 13
        %v2685 = vld [vmem:[%s2684] sm:$0x1]
        %v2687 = vlaneseq
        %v2688 = vshrl.u32 %v2687, 7
        %v2689 = vsub.s32 0, %v2688
        %v2690 = vrot.slane %v2685, %v2689
        %v2693 = vrot.slane %v2157, 1
        %v2694 = vrot.slane %v2162, 1
        %v2695 = vsel %vm1171, %v2693, %v2694
        %2696 = vrot.lane.b32.xlu0 %v2695, 126
        %v2697 = vpop.permute.xlu0 %2696
        %v2699 = vmul.f32 %v2690, %v2697
        %v2700 = vadd.f32 %v2428, %v2699
        %s2701 = scalar_lea.vmem %s0, 49
        %v2702 = vld [vmem:[%s2701] sm:$0x1]
        %v2704 = vlaneseq
        %v2705 = vshrl.u32 %v2704, 7
        %v2706 = vsub.s32 0, %v2705
        %v2707 = vrot.slane %v2702, %v2706
        %v2709 = vmul.f32 %v2707, %v2697
        %v2710 = vadd.f32 %v2445, %v2709
        %s2711 = scalar_lea.vmem %s0, 85
        %v2712 = vld [vmem:[%s2711] sm:$0x1]
        %v2714 = vlaneseq
        %v2715 = vshrl.u32 %v2714, 7
        %v2716 = vsub.s32 0, %v2715
        %v2717 = vrot.slane %v2712, %v2716
        %v2719 = vmul.f32 %v2717, %v2697
        %v2720 = vadd.f32 %v2462, %v2719
        %s2721 = scalar_lea.vmem %s0, 121
        %v2722 = vld [vmem:[%s2721] sm:$0x1]
        %v2724 = vlaneseq
        %v2725 = vshrl.u32 %v2724, 7
        %v2726 = vsub.s32 0, %v2725
        %v2727 = vrot.slane %v2722, %v2726
        %v2729 = vmul.f32 %v2727, %v2697
        %v2730 = vadd.f32 %v2479, %v2729
        %s2731 = scalar_lea.vmem %s0, 157
        %v2732 = vld [vmem:[%s2731] sm:$0x1]
        %v2734 = vlaneseq
        %v2735 = vshrl.u32 %v2734, 7
        %v2736 = vsub.s32 0, %v2735
        %v2737 = vrot.slane %v2732, %v2736
        %v2739 = vmul.f32 %v2737, %v2697
        %v2740 = vadd.f32 %v2496, %v2739
        %s2741 = scalar_lea.vmem %s0, 193
        %v2742 = vld [vmem:[%s2741] sm:$0x1]
        %v2744 = vlaneseq
        %v2745 = vshrl.u32 %v2744, 7
        %v2746 = vsub.s32 0, %v2745
        %v2747 = vrot.slane %v2742, %v2746
        %v2749 = vmul.f32 %v2747, %v2697
        %v2750 = vadd.f32 %v2513, %v2749
        %s2751 = scalar_lea.vmem %s0, 229
        %v2752 = vld [vmem:[%s2751] sm:$0x1]
        %v2754 = vlaneseq
        %v2755 = vshrl.u32 %v2754, 7
        %v2756 = vsub.s32 0, %v2755
        %v2757 = vrot.slane %v2752, %v2756
        %v2759 = vmul.f32 %v2757, %v2697
        %v2760 = vadd.f32 %v2530, %v2759
        %s2761 = scalar_lea.vmem %s0, 265
        %v2762 = vld [vmem:[%s2761] sm:$0x1]
        %v2764 = vlaneseq
        %v2765 = vshrl.u32 %v2764, 7
        %v2766 = vsub.s32 0, %v2765
        %v2767 = vrot.slane %v2762, %v2766
        %v2769 = vmul.f32 %v2767, %v2697
        %v2770 = vadd.f32 %v2547, %v2769
        %s2771 = scalar_lea.vmem %s0, 301
        %v2772 = vld [vmem:[%s2771] sm:$0x1]
        %v2774 = vlaneseq
        %v2775 = vshrl.u32 %v2774, 7
        %v2776 = vsub.s32 0, %v2775
        %v2777 = vrot.slane %v2772, %v2776
        %v2779 = vmul.f32 %v2777, %v2697
        %v2780 = vadd.f32 %v2564, %v2779
        %s2781 = scalar_lea.vmem %s0, 337
        %v2782 = vld [vmem:[%s2781] sm:$0x1]
        %v2784 = vlaneseq
        %v2785 = vshrl.u32 %v2784, 7
        %v2786 = vsub.s32 0, %v2785
        %v2787 = vrot.slane %v2782, %v2786
        %v2789 = vmul.f32 %v2787, %v2697
        %v2790 = vadd.f32 %v2581, %v2789
        %s2791 = scalar_lea.vmem %s0, 373
        %v2792 = vld [vmem:[%s2791] sm:$0x1]
        %v2794 = vlaneseq
        %v2795 = vshrl.u32 %v2794, 7
        %v2796 = vsub.s32 0, %v2795
        %v2797 = vrot.slane %v2792, %v2796
        %v2799 = vmul.f32 %v2797, %v2697
        %v2800 = vadd.f32 %v2598, %v2799
        %s2801 = scalar_lea.vmem %s0, 409
        %v2802 = vld [vmem:[%s2801] sm:$0x1]
        %v2804 = vlaneseq
        %v2805 = vshrl.u32 %v2804, 7
        %v2806 = vsub.s32 0, %v2805
        %v2807 = vrot.slane %v2802, %v2806
        %v2809 = vmul.f32 %v2807, %v2697
        %v2810 = vadd.f32 %v2615, %v2809
        %s2811 = scalar_lea.vmem %s0, 445
        %v2812 = vld [vmem:[%s2811] sm:$0x1]
        %v2814 = vlaneseq
        %v2815 = vshrl.u32 %v2814, 7
        %v2816 = vsub.s32 0, %v2815
        %v2817 = vrot.slane %v2812, %v2816
        %v2819 = vmul.f32 %v2817, %v2697
        %v2820 = vadd.f32 %v2632, %v2819
        %s2821 = scalar_lea.vmem %s0, 481
        %v2822 = vld [vmem:[%s2821] sm:$0x1]
        %v2824 = vlaneseq
        %v2825 = vshrl.u32 %v2824, 7
        %v2826 = vsub.s32 0, %v2825
        %v2827 = vrot.slane %v2822, %v2826
        %v2829 = vmul.f32 %v2827, %v2697
        %v2830 = vadd.f32 %v2649, %v2829
        %s2831 = scalar_lea.vmem %s0, 517
        %v2832 = vld [vmem:[%s2831] sm:$0x1]
        %v2834 = vlaneseq
        %v2835 = vshrl.u32 %v2834, 7
        %v2836 = vsub.s32 0, %v2835
        %v2837 = vrot.slane %v2832, %v2836
        %v2839 = vmul.f32 %v2837, %v2697
        %v2840 = vadd.f32 %v2666, %v2839
        %s2841 = scalar_lea.vmem %s0, 553
        %v2842 = vld [vmem:[%s2841] sm:$0x1]
        %v2844 = vlaneseq
        %v2845 = vshrl.u32 %v2844, 7
        %v2846 = vsub.s32 0, %v2845
        %v2847 = vrot.slane %v2842, %v2846
        %v2849 = vmul.f32 %v2847, %v2697
        %v2850 = vadd.f32 %v2683, %v2849
        %s2851 = scalar_lea.vmem %s0, 14
        %v2852 = vld [vmem:[%s2851] sm:$0x1]
        %v2854 = vlaneseq
        %v2855 = vshrl.u32 %v2854, 7
        %v2856 = vsub.s32 0, %v2855
        %v2857 = vrot.slane %v2852, %v2856
        %2859 = vrot.lane.b32.xlu0 %v2695, 124
        %v2860 = vpop.permute.xlu0 %2859
        %v2862 = vmul.f32 %v2857, %v2860
        %v2863 = vadd.f32 %v2700, %v2862
        %s2864 = scalar_lea.vmem %s0, 50
        %v2865 = vld [vmem:[%s2864] sm:$0x1]
        %v2867 = vlaneseq
        %v2868 = vshrl.u32 %v2867, 7
        %v2869 = vsub.s32 0, %v2868
        %v2870 = vrot.slane %v2865, %v2869
        %v2872 = vmul.f32 %v2870, %v2860
        %v2873 = vadd.f32 %v2710, %v2872
        %s2874 = scalar_lea.vmem %s0, 86
        %v2875 = vld [vmem:[%s2874] sm:$0x1]
        %v2877 = vlaneseq
        %v2878 = vshrl.u32 %v2877, 7
        %v2879 = vsub.s32 0, %v2878
        %v2880 = vrot.slane %v2875, %v2879
        %v2882 = vmul.f32 %v2880, %v2860
        %v2883 = vadd.f32 %v2720, %v2882
        %s2884 = scalar_lea.vmem %s0, 122
        %v2885 = vld [vmem:[%s2884] sm:$0x1]
        %v2887 = vlaneseq
        %v2888 = vshrl.u32 %v2887, 7
        %v2889 = vsub.s32 0, %v2888
        %v2890 = vrot.slane %v2885, %v2889
        %v2892 = vmul.f32 %v2890, %v2860
        %v2893 = vadd.f32 %v2730, %v2892
        %s2894 = scalar_lea.vmem %s0, 158
        %v2895 = vld [vmem:[%s2894] sm:$0x1]
        %v2897 = vlaneseq
        %v2898 = vshrl.u32 %v2897, 7
        %v2899 = vsub.s32 0, %v2898
        %v2900 = vrot.slane %v2895, %v2899
        %v2902 = vmul.f32 %v2900, %v2860
        %v2903 = vadd.f32 %v2740, %v2902
        %s2904 = scalar_lea.vmem %s0, 194
        %v2905 = vld [vmem:[%s2904] sm:$0x1]
        %v2907 = vlaneseq
        %v2908 = vshrl.u32 %v2907, 7
        %v2909 = vsub.s32 0, %v2908
        %v2910 = vrot.slane %v2905, %v2909
        %v2912 = vmul.f32 %v2910, %v2860
        %v2913 = vadd.f32 %v2750, %v2912
        %s2914 = scalar_lea.vmem %s0, 230
        %v2915 = vld [vmem:[%s2914] sm:$0x1]
        %v2917 = vlaneseq
        %v2918 = vshrl.u32 %v2917, 7
        %v2919 = vsub.s32 0, %v2918
        %v2920 = vrot.slane %v2915, %v2919
        %v2922 = vmul.f32 %v2920, %v2860
        %v2923 = vadd.f32 %v2760, %v2922
        %s2924 = scalar_lea.vmem %s0, 266
        %v2925 = vld [vmem:[%s2924] sm:$0x1]
        %v2927 = vlaneseq
        %v2928 = vshrl.u32 %v2927, 7
        %v2929 = vsub.s32 0, %v2928
        %v2930 = vrot.slane %v2925, %v2929
        %v2932 = vmul.f32 %v2930, %v2860
        %v2933 = vadd.f32 %v2770, %v2932
        %s2934 = scalar_lea.vmem %s0, 302
        %v2935 = vld [vmem:[%s2934] sm:$0x1]
        %v2937 = vlaneseq
        %v2938 = vshrl.u32 %v2937, 7
        %v2939 = vsub.s32 0, %v2938
        %v2940 = vrot.slane %v2935, %v2939
        %v2942 = vmul.f32 %v2940, %v2860
        %v2943 = vadd.f32 %v2780, %v2942
        %s2944 = scalar_lea.vmem %s0, 338
        %v2945 = vld [vmem:[%s2944] sm:$0x1]
        %v2947 = vlaneseq
        %v2948 = vshrl.u32 %v2947, 7
        %v2949 = vsub.s32 0, %v2948
        %v2950 = vrot.slane %v2945, %v2949
        %v2952 = vmul.f32 %v2950, %v2860
        %v2953 = vadd.f32 %v2790, %v2952
        %s2954 = scalar_lea.vmem %s0, 374
        %v2955 = vld [vmem:[%s2954] sm:$0x1]
        %v2957 = vlaneseq
        %v2958 = vshrl.u32 %v2957, 7
        %v2959 = vsub.s32 0, %v2958
        %v2960 = vrot.slane %v2955, %v2959
        %v2962 = vmul.f32 %v2960, %v2860
        %v2963 = vadd.f32 %v2800, %v2962
        %s2964 = scalar_lea.vmem %s0, 410
        %v2965 = vld [vmem:[%s2964] sm:$0x1]
        %v2967 = vlaneseq
        %v2968 = vshrl.u32 %v2967, 7
        %v2969 = vsub.s32 0, %v2968
        %v2970 = vrot.slane %v2965, %v2969
        %v2972 = vmul.f32 %v2970, %v2860
        %v2973 = vadd.f32 %v2810, %v2972
        %s2974 = scalar_lea.vmem %s0, 446
        %v2975 = vld [vmem:[%s2974] sm:$0x1]
        %v2977 = vlaneseq
        %v2978 = vshrl.u32 %v2977, 7
        %v2979 = vsub.s32 0, %v2978
        %v2980 = vrot.slane %v2975, %v2979
        %v2982 = vmul.f32 %v2980, %v2860
        %v2983 = vadd.f32 %v2820, %v2982
        %s2984 = scalar_lea.vmem %s0, 482
        %v2985 = vld [vmem:[%s2984] sm:$0x1]
        %v2987 = vlaneseq
        %v2988 = vshrl.u32 %v2987, 7
        %v2989 = vsub.s32 0, %v2988
        %v2990 = vrot.slane %v2985, %v2989
        %v2992 = vmul.f32 %v2990, %v2860
        %v2993 = vadd.f32 %v2830, %v2992
        %s2994 = scalar_lea.vmem %s0, 518
        %v2995 = vld [vmem:[%s2994] sm:$0x1]
        %v2997 = vlaneseq
        %v2998 = vshrl.u32 %v2997, 7
        %v2999 = vsub.s32 0, %v2998
        %v3000 = vrot.slane %v2995, %v2999
        %v3002 = vmul.f32 %v3000, %v2860
        %v3003 = vadd.f32 %v2840, %v3002
        %s3004 = scalar_lea.vmem %s0, 554
        %v3005 = vld [vmem:[%s3004] sm:$0x1]
        %v3007 = vlaneseq
        %v3008 = vshrl.u32 %v3007, 7
        %v3009 = vsub.s32 0, %v3008
        %v3010 = vrot.slane %v3005, %v3009
        %v3012 = vmul.f32 %v3010, %v2860
        %v3013 = vadd.f32 %v2850, %v3012
        %s3014 = scalar_lea.vmem %s0, 303
        %v3015 = vld [vmem:[%s3014] sm:$0x1]
        %v3017 = vlaneseq
        %v3018 = vshrl.u32 %v3017, 7
        %v3019 = vsub.s32 0, %v3018
        %v3020 = vrot.slane %v3015, %v3019
        %v3022 = vmul.f32 %v3020, %v2157
        %v3023 = vmul.f32 %v3020, %v2162
        %v3026 = vrot.slane %v3022, 2
        %v3027 = vrot.slane %v3023, 2
        %v3028 = vsel %vm1774, %v3026, %v3027
        %v3030 = vadd.f32 %v2943, %v3028
        %s3031 = scalar_lea.vmem %s0, 339
        %v3032 = vld [vmem:[%s3031] sm:$0x1]
        %v3034 = vlaneseq
        %v3035 = vshrl.u32 %v3034, 7
        %v3036 = vsub.s32 0, %v3035
        %v3037 = vrot.slane %v3032, %v3036
        %v3039 = vmul.f32 %v3037, %v2157
        %v3040 = vmul.f32 %v3037, %v2162
        %v3043 = vrot.slane %v3039, 2
        %v3044 = vrot.slane %v3040, 2
        %v3045 = vsel %vm1774, %v3043, %v3044
        %v3047 = vadd.f32 %v2953, %v3045
        %s3048 = scalar_lea.vmem %s0, 375
        %v3049 = vld [vmem:[%s3048] sm:$0x1]
        %v3051 = vlaneseq
        %v3052 = vshrl.u32 %v3051, 7
        %v3053 = vsub.s32 0, %v3052
        %v3054 = vrot.slane %v3049, %v3053
        %v3056 = vmul.f32 %v3054, %v2157
        %v3057 = vmul.f32 %v3054, %v2162
        %v3060 = vrot.slane %v3056, 2
        %v3061 = vrot.slane %v3057, 2
        %v3062 = vsel %vm1774, %v3060, %v3061
        %v3064 = vadd.f32 %v2963, %v3062
        %s3065 = scalar_lea.vmem %s0, 411
        %v3066 = vld [vmem:[%s3065] sm:$0x1]
        %v3068 = vlaneseq
        %v3069 = vshrl.u32 %v3068, 7
        %v3070 = vsub.s32 0, %v3069
        %v3071 = vrot.slane %v3066, %v3070
        %v3073 = vmul.f32 %v3071, %v2157
        %v3074 = vmul.f32 %v3071, %v2162
        %v3077 = vrot.slane %v3073, 2
        %v3078 = vrot.slane %v3074, 2
        %v3079 = vsel %vm1774, %v3077, %v3078
        %v3081 = vadd.f32 %v2973, %v3079
        %s3082 = scalar_lea.vmem %s0, 447
        %v3083 = vld [vmem:[%s3082] sm:$0x1]
        %v3085 = vlaneseq
        %v3086 = vshrl.u32 %v3085, 7
        %v3087 = vsub.s32 0, %v3086
        %v3088 = vrot.slane %v3083, %v3087
        %v3090 = vmul.f32 %v3088, %v2157
        %v3091 = vmul.f32 %v3088, %v2162
        %v3094 = vrot.slane %v3090, 2
        %v3095 = vrot.slane %v3091, 2
        %v3096 = vsel %vm1774, %v3094, %v3095
        %v3098 = vadd.f32 %v2983, %v3096
        %s3099 = scalar_lea.vmem %s0, 483
        %v3100 = vld [vmem:[%s3099] sm:$0x1]
        %v3102 = vlaneseq
        %v3103 = vshrl.u32 %v3102, 7
        %v3104 = vsub.s32 0, %v3103
        %v3105 = vrot.slane %v3100, %v3104
        %v3107 = vmul.f32 %v3105, %v2157
        %v3108 = vmul.f32 %v3105, %v2162
        %v3111 = vrot.slane %v3107, 2
        %v3112 = vrot.slane %v3108, 2
        %v3113 = vsel %vm1774, %v3111, %v3112
        %v3115 = vadd.f32 %v2993, %v3113
        %s3116 = scalar_lea.vmem %s0, 519
        %v3117 = vld [vmem:[%s3116] sm:$0x1]
        %v3119 = vlaneseq
        %v3120 = vshrl.u32 %v3119, 7
        %v3121 = vsub.s32 0, %v3120
        %v3122 = vrot.slane %v3117, %v3121
        %v3124 = vmul.f32 %v3122, %v2157
        %v3125 = vmul.f32 %v3122, %v2162
        %v3128 = vrot.slane %v3124, 2
        %v3129 = vrot.slane %v3125, 2
        %v3130 = vsel %vm1774, %v3128, %v3129
        %v3132 = vadd.f32 %v3003, %v3130
        %s3133 = scalar_lea.vmem %s0, 555
        %v3134 = vld [vmem:[%s3133] sm:$0x1]
        %v3136 = vlaneseq
        %v3137 = vshrl.u32 %v3136, 7
        %v3138 = vsub.s32 0, %v3137
        %v3139 = vrot.slane %v3134, %v3138
        %v3141 = vmul.f32 %v3139, %v2157
        %v3142 = vmul.f32 %v3139, %v2162
        %v3145 = vrot.slane %v3141, 2
        %v3146 = vrot.slane %v3142, 2
        %v3147 = vsel %vm1774, %v3145, %v3146
        %v3149 = vadd.f32 %v3013, %v3147
        %s3150 = scalar_lea.vmem %s0, 304
        %v3151 = vld [vmem:[%s3150] sm:$0x1]
        %v3153 = vlaneseq
        %v3154 = vshrl.u32 %v3153, 7
        %v3155 = vsub.s32 0, %v3154
        %v3156 = vrot.slane %v3151, %v3155
        %v3158 = vrot.slane %v2157, 2
        %v3159 = vrot.slane %v2162, 2
        %v3160 = vsel %vm1774, %v3158, %v3159
        %3161 = vrot.lane.b32.xlu0 %v3160, 126
        %v3162 = vpop.permute.xlu0 %3161
        %v3164 = vmul.f32 %v3156, %v3162
        %v3165 = vadd.f32 %v3030, %v3164
        %s3166 = scalar_lea.vmem %s0, 340
        %v3167 = vld [vmem:[%s3166] sm:$0x1]
        %v3169 = vlaneseq
        %v3170 = vshrl.u32 %v3169, 7
        %v3171 = vsub.s32 0, %v3170
        %v3172 = vrot.slane %v3167, %v3171
        %v3174 = vmul.f32 %v3172, %v3162
        %v3175 = vadd.f32 %v3047, %v3174
        %s3176 = scalar_lea.vmem %s0, 376
        %v3177 = vld [vmem:[%s3176] sm:$0x1]
        %v3179 = vlaneseq
        %v3180 = vshrl.u32 %v3179, 7
        %v3181 = vsub.s32 0, %v3180
        %v3182 = vrot.slane %v3177, %v3181
        %v3184 = vmul.f32 %v3182, %v3162
        %v3185 = vadd.f32 %v3064, %v3184
        %s3186 = scalar_lea.vmem %s0, 412
        %v3187 = vld [vmem:[%s3186] sm:$0x1]
        %v3189 = vlaneseq
        %v3190 = vshrl.u32 %v3189, 7
        %v3191 = vsub.s32 0, %v3190
        %v3192 = vrot.slane %v3187, %v3191
        %v3194 = vmul.f32 %v3192, %v3162
        %v3195 = vadd.f32 %v3081, %v3194
        %s3196 = scalar_lea.vmem %s0, 448
        %v3197 = vld [vmem:[%s3196] sm:$0x1]
        %v3199 = vlaneseq
        %v3200 = vshrl.u32 %v3199, 7
        %v3201 = vsub.s32 0, %v3200
        %v3202 = vrot.slane %v3197, %v3201
        %v3204 = vmul.f32 %v3202, %v3162
        %v3205 = vadd.f32 %v3098, %v3204
        %s3206 = scalar_lea.vmem %s0, 484
        %v3207 = vld [vmem:[%s3206] sm:$0x1]
        %v3209 = vlaneseq
        %v3210 = vshrl.u32 %v3209, 7
        %v3211 = vsub.s32 0, %v3210
        %v3212 = vrot.slane %v3207, %v3211
        %v3214 = vmul.f32 %v3212, %v3162
        %v3215 = vadd.f32 %v3115, %v3214
        %s3216 = scalar_lea.vmem %s0, 520
        %v3217 = vld [vmem:[%s3216] sm:$0x1]
        %v3219 = vlaneseq
        %v3220 = vshrl.u32 %v3219, 7
        %v3221 = vsub.s32 0, %v3220
        %v3222 = vrot.slane %v3217, %v3221
        %v3224 = vmul.f32 %v3222, %v3162
        %v3225 = vadd.f32 %v3132, %v3224
        %s3226 = scalar_lea.vmem %s0, 556
        %v3227 = vld [vmem:[%s3226] sm:$0x1]
        %v3229 = vlaneseq
        %v3230 = vshrl.u32 %v3229, 7
        %v3231 = vsub.s32 0, %v3230
        %v3232 = vrot.slane %v3227, %v3231
        %v3234 = vmul.f32 %v3232, %v3162
        %v3235 = vadd.f32 %v3149, %v3234
        %s3236 = scalar_lea.vmem %s0, 305
        %v3237 = vld [vmem:[%s3236] sm:$0x1]
        %v3239 = vlaneseq
        %v3240 = vshrl.u32 %v3239, 7
        %v3241 = vsub.s32 0, %v3240
        %v3242 = vrot.slane %v3237, %v3241
        %3244 = vrot.lane.b32.xlu0 %v3160, 124
        %v3245 = vpop.permute.xlu0 %3244
        %v3247 = vmul.f32 %v3242, %v3245
        %v3248 = vadd.f32 %v3165, %v3247
        %s3249 = scalar_lea.vmem %s0, 341
        %v3250 = vld [vmem:[%s3249] sm:$0x1]
        %v3252 = vlaneseq
        %v3253 = vshrl.u32 %v3252, 7
        %v3254 = vsub.s32 0, %v3253
        %v3255 = vrot.slane %v3250, %v3254
        %v3257 = vmul.f32 %v3255, %v3245
        %v3258 = vadd.f32 %v3175, %v3257
        %s3259 = scalar_lea.vmem %s0, 377
        %v3260 = vld [vmem:[%s3259] sm:$0x1]
        %v3262 = vlaneseq
        %v3263 = vshrl.u32 %v3262, 7
        %v3264 = vsub.s32 0, %v3263
        %v3265 = vrot.slane %v3260, %v3264
        %v3267 = vmul.f32 %v3265, %v3245
        %v3268 = vadd.f32 %v3185, %v3267
        %s3269 = scalar_lea.vmem %s0, 413
        %v3270 = vld [vmem:[%s3269] sm:$0x1]
        %v3272 = vlaneseq
        %v3273 = vshrl.u32 %v3272, 7
        %v3274 = vsub.s32 0, %v3273
        %v3275 = vrot.slane %v3270, %v3274
        %v3277 = vmul.f32 %v3275, %v3245
        %v3278 = vadd.f32 %v3195, %v3277
        %s3279 = scalar_lea.vmem %s0, 449
        %v3280 = vld [vmem:[%s3279] sm:$0x1]
        %v3282 = vlaneseq
        %v3283 = vshrl.u32 %v3282, 7
        %v3284 = vsub.s32 0, %v3283
        %v3285 = vrot.slane %v3280, %v3284
        %v3287 = vmul.f32 %v3285, %v3245
        %v3288 = vadd.f32 %v3205, %v3287
        %s3289 = scalar_lea.vmem %s0, 485
        %v3290 = vld [vmem:[%s3289] sm:$0x1]
        %v3292 = vlaneseq
        %v3293 = vshrl.u32 %v3292, 7
        %v3294 = vsub.s32 0, %v3293
        %v3295 = vrot.slane %v3290, %v3294
        %v3297 = vmul.f32 %v3295, %v3245
        %v3298 = vadd.f32 %v3215, %v3297
        %s3299 = scalar_lea.vmem %s0, 521
        %v3300 = vld [vmem:[%s3299] sm:$0x1]
        %v3302 = vlaneseq
        %v3303 = vshrl.u32 %v3302, 7
        %v3304 = vsub.s32 0, %v3303
        %v3305 = vrot.slane %v3300, %v3304
        %v3307 = vmul.f32 %v3305, %v3245
        %v3308 = vadd.f32 %v3225, %v3307
        %s3309 = scalar_lea.vmem %s0, 557
        %v3310 = vld [vmem:[%s3309] sm:$0x1]
        %v3312 = vlaneseq
        %v3313 = vshrl.u32 %v3312, 7
        %v3314 = vsub.s32 0, %v3313
        %v3315 = vrot.slane %v3310, %v3314
        %v3317 = vmul.f32 %v3315, %v3245
        %v3318 = vadd.f32 %v3235, %v3317
        %s3319 = scalar_lea.vmem %s455, 16 [#allocation3]
        %v3320 = vld [vmem:[%s3319 + $0x7] sm:$0x1]
        %v3321 = vmul.f32 %v816, %v3320
        %s3322 = scalar_lea.vmem %s462, 16 [#allocation4]
        %v3323 = vld [vmem:[%s3322] sm:$0x1]
        %v3324 = vmul.f32 %v819, %v3323
        %s3325 = scalar_lea.vmem %s448, 16 [#allocation2]
        %v3326 = vld [vmem:[%s3325] sm:$0xff]
        %v3328 = vrot.slane %v3326, 7
        %v3331 = vrot.slane %v3324, 7
        %v3333 = vsel %vm828, %v3321, %v3328
        %v3334 = vsel %vm828, %v3328, %v3331
        %v3336 = vsel %vm831, %v3333, 0
        %v3339 = vsel %vm831, %v3334, 0
        %3341 = vmatprep.subr.mxu0 0.0
        %3342 = vmatpush1.msra.mxu0 %v514
        %3343 = vmatprep.subr.mxu0 0.0
        %3344 = vmatpush1.msra.mxu0 %v515
        %3345 = vmatprep.subr.mxu0 0.0
        %3346 = vmatpush1.msra.mxu0 0.0
        %3347 = vmatprep.subr.mxu0 0.0
        %3348 = vmatpush1.msra.mxu0 0.0
        %3349 = vmatprep.subr.mxu0 0.0
        %3350 = vmatpush1.msra.mxu0 0.0
        %3351 = vmatprep.subr.mxu0 0.0
        %3352 = vmatpush1.msra.mxu0 0.0
        %3353 = vmatprep.subr.mxu0 0.0
        %3354 = vmatpush1.msra.mxu0 0.0
        %3355 = vmatprep.subr.mxu0 0.0
        %3356 = vmatpush1.msra.mxu0 0.0
        %3357 = vmatprep.subr.mxu0 0.0
        %3358 = vmatpush1.msra.mxu0 0.0
        %3359 = vmatprep.subr.mxu0 0.0
        %3360 = vmatpush1.msra.mxu0 0.0
        %3361 = vmatprep.subr.mxu0 0.0
        %3362 = vmatpush1.msra.mxu0 0.0
        %3363 = vmatprep.subr.mxu0 0.0
        %3364 = vmatpush1.msra.mxu0 0.0
        %3365 = vmatprep.subr.mxu0 0.0
        %3366 = vmatpush1.msra.mxu0 0.0
        %3367 = vmatprep.subr.mxu0 0.0
        %3368 = vmatpush1.msra.mxu0 0.0
        %3369 = vmatprep.subr.mxu0 0.0
        %3370 = vmatpush1.msra.mxu0 0.0
        %3371 = vmatprep.subr.mxu0 0.0
        %3372 = vmatpush1.msra.mxu0 0.0
        %3373 = vmatprep.subr.mxu0 0.0
        %3374 = vmatpush1.msra.mxu0 0.0
        %3375 = vmatprep.subr.mxu0 0.0
        %3376 = vmatpush1.msra.mxu0 0.0
        %3377 = vmatprep.subr.mxu0 0.0
        %3378 = vmatpush1.msra.mxu0 0.0
        %3379 = vmatprep.subr.mxu0 0.0
        %3380 = vmatpush1.msra.mxu0 0.0
        %3381 = vmatprep.subr.mxu0 0.0
        %3382 = vmatpush1.msra.mxu0 0.0
        %3383 = vmatprep.subr.mxu0 0.0
        %3384 = vmatpush1.msra.mxu0 0.0
        %3385 = vmatprep.subr.mxu0 0.0
        %3386 = vmatpush1.msra.mxu0 0.0
        %3387 = vmatprep.subr.mxu0 0.0
        %3388 = vmatpush1.msra.mxu0 0.0
        %3389 = vmatprep.subr.mxu0 0.0
        %3390 = vmatpush1.msra.mxu0 0.0
        %3391 = vmatprep.subr.mxu0 0.0
        %3392 = vmatpush1.msra.mxu0 0.0
        %3393 = vmatprep.subr.mxu0 0.0
        %3394 = vmatpush1.msra.mxu0 0.0
        %3395 = vmatprep.subr.mxu0 0.0
        %3396 = vmatpush1.msra.mxu0 0.0
        %3397 = vmatprep.subr.mxu0 0.0
        %3398 = vmatpush1.msra.mxu0 0.0
        %3399 = vmatprep.subr.mxu0 0.0
        %3400 = vmatpush1.msra.mxu0 0.0
        %3401 = vmatprep.subr.mxu0 0.0
        %3402 = vmatpush1.msra.mxu0 0.0
        %3403 = vmatprep.subr.mxu0 0.0
        %3404 = vmatpush1.msra.mxu0 0.0
        %3405 = vmatprep.mubr.f32.mxu0 0.0
        %3406 = vmatmul.mubr.f32.gmra.mrb[0].mxu0 %v3336
        %v3407 = vpop.f32.mrb[0].mxu0
        %v3408 = vadd.f32 0.0, %v3407
        %v3409 = vpop.f32.mrb[0].mxu0
        %3410 = vmatprep.mubr.f32.mxu0 0.0
        %3411 = vmatmul.mubr.f32.gmra.mrb[0].mxu0 %v3339
        %v3412 = vpop.f32.mrb[0].mxu0
        %v3413 = vadd.f32 0.0, %v3412
        %v3414 = vpop.f32.mrb[0].mxu0
        %3415 = vdwg.mxu0
        %s3416 = scalar_lea.vmem %s0, 18
        %v3417 = vld [vmem:[%s3416] sm:$0x1]
        %v3419 = vlaneseq
        %v3420 = vshrl.u32 %v3419, 7
        %v3421 = vsub.s32 0, %v3420
        %v3422 = vrot.slane %v3417, %v3421
        %v3424 = vmul.f32 %v3422, %v3408
        %v3425 = vadd.f32 %v2863, %v3424
        %s3426 = scalar_lea.vmem %s0, 54
        %v3427 = vld [vmem:[%s3426] sm:$0x1]
        %v3429 = vlaneseq
        %v3430 = vshrl.u32 %v3429, 7
        %v3431 = vsub.s32 0, %v3430
        %v3432 = vrot.slane %v3427, %v3431
        %v3434 = vmul.f32 %v3432, %v3408
        %v3435 = vadd.f32 %v2873, %v3434
        %s3436 = scalar_lea.vmem %s0, 90
        %v3437 = vld [vmem:[%s3436] sm:$0x1]
        %v3439 = vlaneseq
        %v3440 = vshrl.u32 %v3439, 7
        %v3441 = vsub.s32 0, %v3440
        %v3442 = vrot.slane %v3437, %v3441
        %v3444 = vmul.f32 %v3442, %v3408
        %v3445 = vadd.f32 %v2883, %v3444
        %s3446 = scalar_lea.vmem %s0, 126
        %v3447 = vld [vmem:[%s3446] sm:$0x1]
        %v3449 = vlaneseq
        %v3450 = vshrl.u32 %v3449, 7
        %v3451 = vsub.s32 0, %v3450
        %v3452 = vrot.slane %v3447, %v3451
        %v3454 = vmul.f32 %v3452, %v3408
        %v3455 = vadd.f32 %v2893, %v3454
        %s3456 = scalar_lea.vmem %s0, 162
        %v3457 = vld [vmem:[%s3456] sm:$0x1]
        %v3459 = vlaneseq
        %v3460 = vshrl.u32 %v3459, 7
        %v3461 = vsub.s32 0, %v3460
        %v3462 = vrot.slane %v3457, %v3461
        %v3464 = vmul.f32 %v3462, %v3408
        %v3465 = vadd.f32 %v2903, %v3464
        %s3466 = scalar_lea.vmem %s0, 198
        %v3467 = vld [vmem:[%s3466] sm:$0x1]
        %v3469 = vlaneseq
        %v3470 = vshrl.u32 %v3469, 7
        %v3471 = vsub.s32 0, %v3470
        %v3472 = vrot.slane %v3467, %v3471
        %v3474 = vmul.f32 %v3472, %v3408
        %v3475 = vadd.f32 %v2913, %v3474
        %s3476 = scalar_lea.vmem %s0, 234
        %v3477 = vld [vmem:[%s3476] sm:$0x1]
        %v3479 = vlaneseq
        %v3480 = vshrl.u32 %v3479, 7
        %v3481 = vsub.s32 0, %v3480
        %v3482 = vrot.slane %v3477, %v3481
        %v3484 = vmul.f32 %v3482, %v3408
        %v3485 = vadd.f32 %v2923, %v3484
        %s3486 = scalar_lea.vmem %s0, 270
        %v3487 = vld [vmem:[%s3486] sm:$0x1]
        %v3489 = vlaneseq
        %v3490 = vshrl.u32 %v3489, 7
        %v3491 = vsub.s32 0, %v3490
        %v3492 = vrot.slane %v3487, %v3491
        %v3494 = vmul.f32 %v3492, %v3408
        %v3495 = vadd.f32 %v2933, %v3494
        %s3496 = scalar_lea.vmem %s0, 19
        %v3497 = vld [vmem:[%s3496] sm:$0x1]
        %v3499 = vlaneseq
        %v3500 = vshrl.u32 %v3499, 7
        %v3501 = vsub.s32 0, %v3500
        %v3502 = vrot.slane %v3497, %v3501
        %3505 = vrot.lane.b32.xlu0 %v3408, 126
        %v3506 = vpop.permute.xlu0 %3505
        %v3508 = vmul.f32 %v3502, %v3506
        %v3509 = vadd.f32 %v3425, %v3508
        %s3510 = scalar_lea.vmem %s0, 55
        %v3511 = vld [vmem:[%s3510] sm:$0x1]
        %v3513 = vlaneseq
        %v3514 = vshrl.u32 %v3513, 7
        %v3515 = vsub.s32 0, %v3514
        %v3516 = vrot.slane %v3511, %v3515
        %v3518 = vmul.f32 %v3516, %v3506
        %v3519 = vadd.f32 %v3435, %v3518
        %s3520 = scalar_lea.vmem %s0, 91
        %v3521 = vld [vmem:[%s3520] sm:$0x1]
        %v3523 = vlaneseq
        %v3524 = vshrl.u32 %v3523, 7
        %v3525 = vsub.s32 0, %v3524
        %v3526 = vrot.slane %v3521, %v3525
        %v3528 = vmul.f32 %v3526, %v3506
        %v3529 = vadd.f32 %v3445, %v3528
        %s3530 = scalar_lea.vmem %s0, 127
        %v3531 = vld [vmem:[%s3530] sm:$0x1]
        %v3533 = vlaneseq
        %v3534 = vshrl.u32 %v3533, 7
        %v3535 = vsub.s32 0, %v3534
        %v3536 = vrot.slane %v3531, %v3535
        %v3538 = vmul.f32 %v3536, %v3506
        %v3539 = vadd.f32 %v3455, %v3538
        %s3540 = scalar_lea.vmem %s0, 163
        %v3541 = vld [vmem:[%s3540] sm:$0x1]
        %v3543 = vlaneseq
        %v3544 = vshrl.u32 %v3543, 7
        %v3545 = vsub.s32 0, %v3544
        %v3546 = vrot.slane %v3541, %v3545
        %v3548 = vmul.f32 %v3546, %v3506
        %v3549 = vadd.f32 %v3465, %v3548
        %s3550 = scalar_lea.vmem %s0, 199
        %v3551 = vld [vmem:[%s3550] sm:$0x1]
        %v3553 = vlaneseq
        %v3554 = vshrl.u32 %v3553, 7
        %v3555 = vsub.s32 0, %v3554
        %v3556 = vrot.slane %v3551, %v3555
        %v3558 = vmul.f32 %v3556, %v3506
        %v3559 = vadd.f32 %v3475, %v3558
        %s3560 = scalar_lea.vmem %s0, 235
        %v3561 = vld [vmem:[%s3560] sm:$0x1]
        %v3563 = vlaneseq
        %v3564 = vshrl.u32 %v3563, 7
        %v3565 = vsub.s32 0, %v3564
        %v3566 = vrot.slane %v3561, %v3565
        %v3568 = vmul.f32 %v3566, %v3506
        %v3569 = vadd.f32 %v3485, %v3568
        %s3570 = scalar_lea.vmem %s0, 271
        %v3571 = vld [vmem:[%s3570] sm:$0x1]
        %v3573 = vlaneseq
        %v3574 = vshrl.u32 %v3573, 7
        %v3575 = vsub.s32 0, %v3574
        %v3576 = vrot.slane %v3571, %v3575
        %v3578 = vmul.f32 %v3576, %v3506
        %v3579 = vadd.f32 %v3495, %v3578
        %s3580 = scalar_lea.vmem %s0, 20
        %v3581 = vld [vmem:[%s3580] sm:$0x1]
        %v3583 = vlaneseq
        %v3584 = vshrl.u32 %v3583, 7
        %v3585 = vsub.s32 0, %v3584
        %v3586 = vrot.slane %v3581, %v3585
        %3588 = vrot.lane.b32.xlu0 %v3408, 124
        %v3589 = vpop.permute.xlu0 %3588
        %v3591 = vmul.f32 %v3586, %v3589
        %v3592 = vadd.f32 %v3509, %v3591
        %s3593 = scalar_lea.vmem %s0, 56
        %v3594 = vld [vmem:[%s3593] sm:$0x1]
        %v3596 = vlaneseq
        %v3597 = vshrl.u32 %v3596, 7
        %v3598 = vsub.s32 0, %v3597
        %v3599 = vrot.slane %v3594, %v3598
        %v3601 = vmul.f32 %v3599, %v3589
        %v3602 = vadd.f32 %v3519, %v3601
        %s3603 = scalar_lea.vmem %s0, 92
        %v3604 = vld [vmem:[%s3603] sm:$0x1]
        %v3606 = vlaneseq
        %v3607 = vshrl.u32 %v3606, 7
        %v3608 = vsub.s32 0, %v3607
        %v3609 = vrot.slane %v3604, %v3608
        %v3611 = vmul.f32 %v3609, %v3589
        %v3612 = vadd.f32 %v3529, %v3611
        %s3613 = scalar_lea.vmem %s0, 128
        %v3614 = vld [vmem:[%s3613] sm:$0x1]
        %v3616 = vlaneseq
        %v3617 = vshrl.u32 %v3616, 7
        %v3618 = vsub.s32 0, %v3617
        %v3619 = vrot.slane %v3614, %v3618
        %v3621 = vmul.f32 %v3619, %v3589
        %v3622 = vadd.f32 %v3539, %v3621
        %s3623 = scalar_lea.vmem %s0, 164
        %v3624 = vld [vmem:[%s3623] sm:$0x1]
        %v3626 = vlaneseq
        %v3627 = vshrl.u32 %v3626, 7
        %v3628 = vsub.s32 0, %v3627
        %v3629 = vrot.slane %v3624, %v3628
        %v3631 = vmul.f32 %v3629, %v3589
        %v3632 = vadd.f32 %v3549, %v3631
        %s3633 = scalar_lea.vmem %s0, 200
        %v3634 = vld [vmem:[%s3633] sm:$0x1]
        %v3636 = vlaneseq
        %v3637 = vshrl.u32 %v3636, 7
        %v3638 = vsub.s32 0, %v3637
        %v3639 = vrot.slane %v3634, %v3638
        %v3641 = vmul.f32 %v3639, %v3589
        %v3642 = vadd.f32 %v3559, %v3641
        %s3643 = scalar_lea.vmem %s0, 236
        %v3644 = vld [vmem:[%s3643] sm:$0x1]
        %v3646 = vlaneseq
        %v3647 = vshrl.u32 %v3646, 7
        %v3648 = vsub.s32 0, %v3647
        %v3649 = vrot.slane %v3644, %v3648
        %v3651 = vmul.f32 %v3649, %v3589
        %v3652 = vadd.f32 %v3569, %v3651
        %s3653 = scalar_lea.vmem %s0, 272
        %v3654 = vld [vmem:[%s3653] sm:$0x1]
        %v3656 = vlaneseq
        %v3657 = vshrl.u32 %v3656, 7
        %v3658 = vsub.s32 0, %v3657
        %v3659 = vrot.slane %v3654, %v3658
        %v3661 = vmul.f32 %v3659, %v3589
        %v3662 = vadd.f32 %v3579, %v3661
        %s3663 = scalar_lea.vmem %s0, 21
        %v3664 = vld [vmem:[%s3663] sm:$0x1]
        %v3666 = vlaneseq
        %v3667 = vshrl.u32 %v3666, 7
        %v3668 = vsub.s32 0, %v3667
        %v3669 = vrot.slane %v3664, %v3668
        %v3671 = vmul.f32 %v3669, %v3408
        %v3672 = vmul.f32 %v3669, %v3413
        %v3675 = vrot.slane %v3671, 1
        %v3676 = vrot.slane %v3672, 1
        %v3677 = vsel %vm1171, %v3675, %v3676
        %v3679 = vadd.f32 %v3592, %v3677
        %s3680 = scalar_lea.vmem %s0, 57
        %v3681 = vld [vmem:[%s3680] sm:$0x1]
        %v3683 = vlaneseq
        %v3684 = vshrl.u32 %v3683, 7
        %v3685 = vsub.s32 0, %v3684
        %v3686 = vrot.slane %v3681, %v3685
        %v3688 = vmul.f32 %v3686, %v3408
        %v3689 = vmul.f32 %v3686, %v3413
        %v3692 = vrot.slane %v3688, 1
        %v3693 = vrot.slane %v3689, 1
        %v3694 = vsel %vm1171, %v3692, %v3693
        %v3696 = vadd.f32 %v3602, %v3694
        %s3697 = scalar_lea.vmem %s0, 93
        %v3698 = vld [vmem:[%s3697] sm:$0x1]
        %v3700 = vlaneseq
        %v3701 = vshrl.u32 %v3700, 7
        %v3702 = vsub.s32 0, %v3701
        %v3703 = vrot.slane %v3698, %v3702
        %v3705 = vmul.f32 %v3703, %v3408
        %v3706 = vmul.f32 %v3703, %v3413
        %v3709 = vrot.slane %v3705, 1
        %v3710 = vrot.slane %v3706, 1
        %v3711 = vsel %vm1171, %v3709, %v3710
        %v3713 = vadd.f32 %v3612, %v3711
        %s3714 = scalar_lea.vmem %s0, 129
        %v3715 = vld [vmem:[%s3714] sm:$0x1]
        %v3717 = vlaneseq
        %v3718 = vshrl.u32 %v3717, 7
        %v3719 = vsub.s32 0, %v3718
        %v3720 = vrot.slane %v3715, %v3719
        %v3722 = vmul.f32 %v3720, %v3408
        %v3723 = vmul.f32 %v3720, %v3413
        %v3726 = vrot.slane %v3722, 1
        %v3727 = vrot.slane %v3723, 1
        %v3728 = vsel %vm1171, %v3726, %v3727
        %v3730 = vadd.f32 %v3622, %v3728
        %s3731 = scalar_lea.vmem %s0, 165
        %v3732 = vld [vmem:[%s3731] sm:$0x1]
        %v3734 = vlaneseq
        %v3735 = vshrl.u32 %v3734, 7
        %v3736 = vsub.s32 0, %v3735
        %v3737 = vrot.slane %v3732, %v3736
        %v3739 = vmul.f32 %v3737, %v3408
        %v3740 = vmul.f32 %v3737, %v3413
        %v3743 = vrot.slane %v3739, 1
        %v3744 = vrot.slane %v3740, 1
        %v3745 = vsel %vm1171, %v3743, %v3744
        %v3747 = vadd.f32 %v3632, %v3745
        %s3748 = scalar_lea.vmem %s0, 201
        %v3749 = vld [vmem:[%s3748] sm:$0x1]
        %v3751 = vlaneseq
        %v3752 = vshrl.u32 %v3751, 7
        %v3753 = vsub.s32 0, %v3752
        %v3754 = vrot.slane %v3749, %v3753
        %v3756 = vmul.f32 %v3754, %v3408
        %v3757 = vmul.f32 %v3754, %v3413
        %v3760 = vrot.slane %v3756, 1
        %v3761 = vrot.slane %v3757, 1
        %v3762 = vsel %vm1171, %v3760, %v3761
        %v3764 = vadd.f32 %v3642, %v3762
        %s3765 = scalar_lea.vmem %s0, 237
        %v3766 = vld [vmem:[%s3765] sm:$0x1]
        %v3768 = vlaneseq
        %v3769 = vshrl.u32 %v3768, 7
        %v3770 = vsub.s32 0, %v3769
        %v3771 = vrot.slane %v3766, %v3770
        %v3773 = vmul.f32 %v3771, %v3408
        %v3774 = vmul.f32 %v3771, %v3413
        %v3777 = vrot.slane %v3773, 1
        %v3778 = vrot.slane %v3774, 1
        %v3779 = vsel %vm1171, %v3777, %v3778
        %v3781 = vadd.f32 %v3652, %v3779
        %s3782 = scalar_lea.vmem %s0, 273
        %v3783 = vld [vmem:[%s3782] sm:$0x1]
        %v3785 = vlaneseq
        %v3786 = vshrl.u32 %v3785, 7
        %v3787 = vsub.s32 0, %v3786
        %v3788 = vrot.slane %v3783, %v3787
        %v3790 = vmul.f32 %v3788, %v3408
        %v3791 = vmul.f32 %v3788, %v3413
        %v3794 = vrot.slane %v3790, 1
        %v3795 = vrot.slane %v3791, 1
        %v3796 = vsel %vm1171, %v3794, %v3795
        %v3798 = vadd.f32 %v3662, %v3796
        %s3799 = scalar_lea.vmem %s0, 309
        %v3800 = vld [vmem:[%s3799] sm:$0x1]
        %v3802 = vlaneseq
        %v3803 = vshrl.u32 %v3802, 7
        %v3804 = vsub.s32 0, %v3803
        %v3805 = vrot.slane %v3800, %v3804
        %v3807 = vmul.f32 %v3805, %v3408
        %v3808 = vmul.f32 %v3805, %v3413
        %v3811 = vrot.slane %v3807, 1
        %v3812 = vrot.slane %v3808, 1
        %v3813 = vsel %vm1171, %v3811, %v3812
        %v3815 = vadd.f32 %v3248, %v3813
        %s3816 = scalar_lea.vmem %s0, 345
        %v3817 = vld [vmem:[%s3816] sm:$0x1]
        %v3819 = vlaneseq
        %v3820 = vshrl.u32 %v3819, 7
        %v3821 = vsub.s32 0, %v3820
        %v3822 = vrot.slane %v3817, %v3821
        %v3824 = vmul.f32 %v3822, %v3408
        %v3825 = vmul.f32 %v3822, %v3413
        %v3828 = vrot.slane %v3824, 1
        %v3829 = vrot.slane %v3825, 1
        %v3830 = vsel %vm1171, %v3828, %v3829
        %v3832 = vadd.f32 %v3258, %v3830
        %s3833 = scalar_lea.vmem %s0, 381
        %v3834 = vld [vmem:[%s3833] sm:$0x1]
        %v3836 = vlaneseq
        %v3837 = vshrl.u32 %v3836, 7
        %v3838 = vsub.s32 0, %v3837
        %v3839 = vrot.slane %v3834, %v3838
        %v3841 = vmul.f32 %v3839, %v3408
        %v3842 = vmul.f32 %v3839, %v3413
        %v3845 = vrot.slane %v3841, 1
        %v3846 = vrot.slane %v3842, 1
        %v3847 = vsel %vm1171, %v3845, %v3846
        %v3849 = vadd.f32 %v3268, %v3847
        %s3850 = scalar_lea.vmem %s0, 417
        %v3851 = vld [vmem:[%s3850] sm:$0x1]
        %v3853 = vlaneseq
        %v3854 = vshrl.u32 %v3853, 7
        %v3855 = vsub.s32 0, %v3854
        %v3856 = vrot.slane %v3851, %v3855
        %v3858 = vmul.f32 %v3856, %v3408
        %v3859 = vmul.f32 %v3856, %v3413
        %v3862 = vrot.slane %v3858, 1
        %v3863 = vrot.slane %v3859, 1
        %v3864 = vsel %vm1171, %v3862, %v3863
        %v3866 = vadd.f32 %v3278, %v3864
        %s3867 = scalar_lea.vmem %s0, 453
        %v3868 = vld [vmem:[%s3867] sm:$0x1]
        %v3870 = vlaneseq
        %v3871 = vshrl.u32 %v3870, 7
        %v3872 = vsub.s32 0, %v3871
        %v3873 = vrot.slane %v3868, %v3872
        %v3875 = vmul.f32 %v3873, %v3408
        %v3876 = vmul.f32 %v3873, %v3413
        %v3879 = vrot.slane %v3875, 1
        %v3880 = vrot.slane %v3876, 1
        %v3881 = vsel %vm1171, %v3879, %v3880
        %v3883 = vadd.f32 %v3288, %v3881
        %s3884 = scalar_lea.vmem %s0, 489
        %v3885 = vld [vmem:[%s3884] sm:$0x1]
        %v3887 = vlaneseq
        %v3888 = vshrl.u32 %v3887, 7
        %v3889 = vsub.s32 0, %v3888
        %v3890 = vrot.slane %v3885, %v3889
        %v3892 = vmul.f32 %v3890, %v3408
        %v3893 = vmul.f32 %v3890, %v3413
        %v3896 = vrot.slane %v3892, 1
        %v3897 = vrot.slane %v3893, 1
        %v3898 = vsel %vm1171, %v3896, %v3897
        %v3900 = vadd.f32 %v3298, %v3898
        %s3901 = scalar_lea.vmem %s0, 525
        %v3902 = vld [vmem:[%s3901] sm:$0x1]
        %v3904 = vlaneseq
        %v3905 = vshrl.u32 %v3904, 7
        %v3906 = vsub.s32 0, %v3905
        %v3907 = vrot.slane %v3902, %v3906
        %v3909 = vmul.f32 %v3907, %v3408
        %v3910 = vmul.f32 %v3907, %v3413
        %v3913 = vrot.slane %v3909, 1
        %v3914 = vrot.slane %v3910, 1
        %v3915 = vsel %vm1171, %v3913, %v3914
        %v3917 = vadd.f32 %v3308, %v3915
        %s3918 = scalar_lea.vmem %s0, 561
        %v3919 = vld [vmem:[%s3918] sm:$0x1]
        %v3921 = vlaneseq
        %v3922 = vshrl.u32 %v3921, 7
        %v3923 = vsub.s32 0, %v3922
        %v3924 = vrot.slane %v3919, %v3923
        %v3926 = vmul.f32 %v3924, %v3408
        %v3927 = vmul.f32 %v3924, %v3413
        %v3930 = vrot.slane %v3926, 1
        %v3931 = vrot.slane %v3927, 1
        %v3932 = vsel %vm1171, %v3930, %v3931
        %v3934 = vadd.f32 %v3318, %v3932
        %s3935 = scalar_lea.vmem %s0, 22
        %v3936 = vld [vmem:[%s3935] sm:$0x1]
        %v3938 = vlaneseq
        %v3939 = vshrl.u32 %v3938, 7
        %v3940 = vsub.s32 0, %v3939
        %v3941 = vrot.slane %v3936, %v3940
        %v3944 = vrot.slane %v3408, 1
        %v3945 = vrot.slane %v3413, 1
        %v3946 = vsel %vm1171, %v3944, %v3945
        %3947 = vrot.lane.b32.xlu0 %v3946, 126
        %v3948 = vpop.permute.xlu0 %3947
        %v3950 = vmul.f32 %v3941, %v3948
        %v3951 = vadd.f32 %v3679, %v3950
        %s3952 = scalar_lea.vmem %s0, 58
        %v3953 = vld [vmem:[%s3952] sm:$0x1]
        %v3955 = vlaneseq
        %v3956 = vshrl.u32 %v3955, 7
        %v3957 = vsub.s32 0, %v3956
        %v3958 = vrot.slane %v3953, %v3957
        %v3960 = vmul.f32 %v3958, %v3948
        %v3961 = vadd.f32 %v3696, %v3960
        %s3962 = scalar_lea.vmem %s0, 94
        %v3963 = vld [vmem:[%s3962] sm:$0x1]
        %v3965 = vlaneseq
        %v3966 = vshrl.u32 %v3965, 7
        %v3967 = vsub.s32 0, %v3966
        %v3968 = vrot.slane %v3963, %v3967
        %v3970 = vmul.f32 %v3968, %v3948
        %v3971 = vadd.f32 %v3713, %v3970
        %s3972 = scalar_lea.vmem %s0, 130
        %v3973 = vld [vmem:[%s3972] sm:$0x1]
        %v3975 = vlaneseq
        %v3976 = vshrl.u32 %v3975, 7
        %v3977 = vsub.s32 0, %v3976
        %v3978 = vrot.slane %v3973, %v3977
        %v3980 = vmul.f32 %v3978, %v3948
        %v3981 = vadd.f32 %v3730, %v3980
        %s3982 = scalar_lea.vmem %s0, 166
        %v3983 = vld [vmem:[%s3982] sm:$0x1]
        %v3985 = vlaneseq
        %v3986 = vshrl.u32 %v3985, 7
        %v3987 = vsub.s32 0, %v3986
        %v3988 = vrot.slane %v3983, %v3987
        %v3990 = vmul.f32 %v3988, %v3948
        %v3991 = vadd.f32 %v3747, %v3990
        %s3992 = scalar_lea.vmem %s0, 202
        %v3993 = vld [vmem:[%s3992] sm:$0x1]
        %v3995 = vlaneseq
        %v3996 = vshrl.u32 %v3995, 7
        %v3997 = vsub.s32 0, %v3996
        %v3998 = vrot.slane %v3993, %v3997
        %v4000 = vmul.f32 %v3998, %v3948
        %v4001 = vadd.f32 %v3764, %v4000
        %s4002 = scalar_lea.vmem %s0, 238
        %v4003 = vld [vmem:[%s4002] sm:$0x1]
        %v4005 = vlaneseq
        %v4006 = vshrl.u32 %v4005, 7
        %v4007 = vsub.s32 0, %v4006
        %v4008 = vrot.slane %v4003, %v4007
        %v4010 = vmul.f32 %v4008, %v3948
        %v4011 = vadd.f32 %v3781, %v4010
        %s4012 = scalar_lea.vmem %s0, 274
        %v4013 = vld [vmem:[%s4012] sm:$0x1]
        %v4015 = vlaneseq
        %v4016 = vshrl.u32 %v4015, 7
        %v4017 = vsub.s32 0, %v4016
        %v4018 = vrot.slane %v4013, %v4017
        %v4020 = vmul.f32 %v4018, %v3948
        %v4021 = vadd.f32 %v3798, %v4020
        %s4022 = scalar_lea.vmem %s0, 310
        %v4023 = vld [vmem:[%s4022] sm:$0x1]
        %v4025 = vlaneseq
        %v4026 = vshrl.u32 %v4025, 7
        %v4027 = vsub.s32 0, %v4026
        %v4028 = vrot.slane %v4023, %v4027
        %v4030 = vmul.f32 %v4028, %v3948
        %v4031 = vadd.f32 %v3815, %v4030
        %s4032 = scalar_lea.vmem %s0, 346
        %v4033 = vld [vmem:[%s4032] sm:$0x1]
        %v4035 = vlaneseq
        %v4036 = vshrl.u32 %v4035, 7
        %v4037 = vsub.s32 0, %v4036
        %v4038 = vrot.slane %v4033, %v4037
        %v4040 = vmul.f32 %v4038, %v3948
        %v4041 = vadd.f32 %v3832, %v4040
        %s4042 = scalar_lea.vmem %s0, 382
        %v4043 = vld [vmem:[%s4042] sm:$0x1]
        %v4045 = vlaneseq
        %v4046 = vshrl.u32 %v4045, 7
        %v4047 = vsub.s32 0, %v4046
        %v4048 = vrot.slane %v4043, %v4047
        %v4050 = vmul.f32 %v4048, %v3948
        %v4051 = vadd.f32 %v3849, %v4050
        %s4052 = scalar_lea.vmem %s0, 418
        %v4053 = vld [vmem:[%s4052] sm:$0x1]
        %v4055 = vlaneseq
        %v4056 = vshrl.u32 %v4055, 7
        %v4057 = vsub.s32 0, %v4056
        %v4058 = vrot.slane %v4053, %v4057
        %v4060 = vmul.f32 %v4058, %v3948
        %v4061 = vadd.f32 %v3866, %v4060
        %s4062 = scalar_lea.vmem %s0, 454
        %v4063 = vld [vmem:[%s4062] sm:$0x1]
        %v4065 = vlaneseq
        %v4066 = vshrl.u32 %v4065, 7
        %v4067 = vsub.s32 0, %v4066
        %v4068 = vrot.slane %v4063, %v4067
        %v4070 = vmul.f32 %v4068, %v3948
        %v4071 = vadd.f32 %v3883, %v4070
        %s4072 = scalar_lea.vmem %s0, 490
        %v4073 = vld [vmem:[%s4072] sm:$0x1]
        %v4075 = vlaneseq
        %v4076 = vshrl.u32 %v4075, 7
        %v4077 = vsub.s32 0, %v4076
        %v4078 = vrot.slane %v4073, %v4077
        %v4080 = vmul.f32 %v4078, %v3948
        %v4081 = vadd.f32 %v3900, %v4080
        %s4082 = scalar_lea.vmem %s0, 526
        %v4083 = vld [vmem:[%s4082] sm:$0x1]
        %v4085 = vlaneseq
        %v4086 = vshrl.u32 %v4085, 7
        %v4087 = vsub.s32 0, %v4086
        %v4088 = vrot.slane %v4083, %v4087
        %v4090 = vmul.f32 %v4088, %v3948
        %v4091 = vadd.f32 %v3917, %v4090
        %s4092 = scalar_lea.vmem %s0, 562
        %v4093 = vld [vmem:[%s4092] sm:$0x1]
        %v4095 = vlaneseq
        %v4096 = vshrl.u32 %v4095, 7
        %v4097 = vsub.s32 0, %v4096
        %v4098 = vrot.slane %v4093, %v4097
        %v4100 = vmul.f32 %v4098, %v3948
        %v4101 = vadd.f32 %v3934, %v4100
        %s4102 = scalar_lea.vmem %s0, 23
        %v4103 = vld [vmem:[%s4102] sm:$0x1]
        %v4105 = vlaneseq
        %v4106 = vshrl.u32 %v4105, 7
        %v4107 = vsub.s32 0, %v4106
        %v4108 = vrot.slane %v4103, %v4107
        %4110 = vrot.lane.b32.xlu0 %v3946, 124
        %v4111 = vpop.permute.xlu0 %4110
        %v4113 = vmul.f32 %v4108, %v4111
        %v4114 = vadd.f32 %v3951, %v4113
        %s4115 = scalar_lea.vmem %s0, 59
        %v4116 = vld [vmem:[%s4115] sm:$0x1]
        %v4118 = vlaneseq
        %v4119 = vshrl.u32 %v4118, 7
        %v4120 = vsub.s32 0, %v4119
        %v4121 = vrot.slane %v4116, %v4120
        %v4123 = vmul.f32 %v4121, %v4111
        %v4124 = vadd.f32 %v3961, %v4123
        %s4125 = scalar_lea.vmem %s0, 95
        %v4126 = vld [vmem:[%s4125] sm:$0x1]
        %v4128 = vlaneseq
        %v4129 = vshrl.u32 %v4128, 7
        %v4130 = vsub.s32 0, %v4129
        %v4131 = vrot.slane %v4126, %v4130
        %v4133 = vmul.f32 %v4131, %v4111
        %v4134 = vadd.f32 %v3971, %v4133
        %s4135 = scalar_lea.vmem %s0, 131
        %v4136 = vld [vmem:[%s4135] sm:$0x1]
        %v4138 = vlaneseq
        %v4139 = vshrl.u32 %v4138, 7
        %v4140 = vsub.s32 0, %v4139
        %v4141 = vrot.slane %v4136, %v4140
        %v4143 = vmul.f32 %v4141, %v4111
        %v4144 = vadd.f32 %v3981, %v4143
        %s4145 = scalar_lea.vmem %s0, 167
        %v4146 = vld [vmem:[%s4145] sm:$0x1]
        %v4148 = vlaneseq
        %v4149 = vshrl.u32 %v4148, 7
        %v4150 = vsub.s32 0, %v4149
        %v4151 = vrot.slane %v4146, %v4150
        %v4153 = vmul.f32 %v4151, %v4111
        %v4154 = vadd.f32 %v3991, %v4153
        %s4155 = scalar_lea.vmem %s0, 203
        %v4156 = vld [vmem:[%s4155] sm:$0x1]
        %v4158 = vlaneseq
        %v4159 = vshrl.u32 %v4158, 7
        %v4160 = vsub.s32 0, %v4159
        %v4161 = vrot.slane %v4156, %v4160
        %v4163 = vmul.f32 %v4161, %v4111
        %v4164 = vadd.f32 %v4001, %v4163
        %s4165 = scalar_lea.vmem %s0, 239
        %v4166 = vld [vmem:[%s4165] sm:$0x1]
        %v4168 = vlaneseq
        %v4169 = vshrl.u32 %v4168, 7
        %v4170 = vsub.s32 0, %v4169
        %v4171 = vrot.slane %v4166, %v4170
        %v4173 = vmul.f32 %v4171, %v4111
        %v4174 = vadd.f32 %v4011, %v4173
        %s4175 = scalar_lea.vmem %s0, 275
        %v4176 = vld [vmem:[%s4175] sm:$0x1]
        %v4178 = vlaneseq
        %v4179 = vshrl.u32 %v4178, 7
        %v4180 = vsub.s32 0, %v4179
        %v4181 = vrot.slane %v4176, %v4180
        %v4183 = vmul.f32 %v4181, %v4111
        %v4184 = vadd.f32 %v4021, %v4183
        %s4185 = scalar_lea.vmem %s0, 311
        %v4186 = vld [vmem:[%s4185] sm:$0x1]
        %v4188 = vlaneseq
        %v4189 = vshrl.u32 %v4188, 7
        %v4190 = vsub.s32 0, %v4189
        %v4191 = vrot.slane %v4186, %v4190
        %v4193 = vmul.f32 %v4191, %v4111
        %v4194 = vadd.f32 %v4031, %v4193
        %s4195 = scalar_lea.vmem %s0, 347
        %v4196 = vld [vmem:[%s4195] sm:$0x1]
        %v4198 = vlaneseq
        %v4199 = vshrl.u32 %v4198, 7
        %v4200 = vsub.s32 0, %v4199
        %v4201 = vrot.slane %v4196, %v4200
        %v4203 = vmul.f32 %v4201, %v4111
        %v4204 = vadd.f32 %v4041, %v4203
        %s4205 = scalar_lea.vmem %s0, 383
        %v4206 = vld [vmem:[%s4205] sm:$0x1]
        %v4208 = vlaneseq
        %v4209 = vshrl.u32 %v4208, 7
        %v4210 = vsub.s32 0, %v4209
        %v4211 = vrot.slane %v4206, %v4210
        %v4213 = vmul.f32 %v4211, %v4111
        %v4214 = vadd.f32 %v4051, %v4213
        %s4215 = scalar_lea.vmem %s0, 419
        %v4216 = vld [vmem:[%s4215] sm:$0x1]
        %v4218 = vlaneseq
        %v4219 = vshrl.u32 %v4218, 7
        %v4220 = vsub.s32 0, %v4219
        %v4221 = vrot.slane %v4216, %v4220
        %v4223 = vmul.f32 %v4221, %v4111
        %v4224 = vadd.f32 %v4061, %v4223
        %s4225 = scalar_lea.vmem %s0, 455
        %v4226 = vld [vmem:[%s4225] sm:$0x1]
        %v4228 = vlaneseq
        %v4229 = vshrl.u32 %v4228, 7
        %v4230 = vsub.s32 0, %v4229
        %v4231 = vrot.slane %v4226, %v4230
        %v4233 = vmul.f32 %v4231, %v4111
        %v4234 = vadd.f32 %v4071, %v4233
        %s4235 = scalar_lea.vmem %s0, 491
        %v4236 = vld [vmem:[%s4235] sm:$0x1]
        %v4238 = vlaneseq
        %v4239 = vshrl.u32 %v4238, 7
        %v4240 = vsub.s32 0, %v4239
        %v4241 = vrot.slane %v4236, %v4240
        %v4243 = vmul.f32 %v4241, %v4111
        %v4244 = vadd.f32 %v4081, %v4243
        %s4245 = scalar_lea.vmem %s0, 527
        %v4246 = vld [vmem:[%s4245] sm:$0x1]
        %v4248 = vlaneseq
        %v4249 = vshrl.u32 %v4248, 7
        %v4250 = vsub.s32 0, %v4249
        %v4251 = vrot.slane %v4246, %v4250
        %v4253 = vmul.f32 %v4251, %v4111
        %v4254 = vadd.f32 %v4091, %v4253
        %s4255 = scalar_lea.vmem %s0, 563
        %v4256 = vld [vmem:[%s4255] sm:$0x1]
        %v4258 = vlaneseq
        %v4259 = vshrl.u32 %v4258, 7
        %v4260 = vsub.s32 0, %v4259
        %v4261 = vrot.slane %v4256, %v4260
        %v4263 = vmul.f32 %v4261, %v4111
        %v4264 = vadd.f32 %v4101, %v4263
        %s4265 = scalar_lea.vmem %s0, 312
        %v4266 = vld [vmem:[%s4265] sm:$0x1]
        %v4268 = vlaneseq
        %v4269 = vshrl.u32 %v4268, 7
        %v4270 = vsub.s32 0, %v4269
        %v4271 = vrot.slane %v4266, %v4270
        %v4273 = vmul.f32 %v4271, %v3408
        %v4274 = vmul.f32 %v4271, %v3413
        %v4277 = vrot.slane %v4273, 2
        %v4278 = vrot.slane %v4274, 2
        %v4279 = vsel %vm1774, %v4277, %v4278
        %v4281 = vadd.f32 %v4194, %v4279
        %s4282 = scalar_lea.vmem %s0, 348
        %v4283 = vld [vmem:[%s4282] sm:$0x1]
        %v4285 = vlaneseq
        %v4286 = vshrl.u32 %v4285, 7
        %v4287 = vsub.s32 0, %v4286
        %v4288 = vrot.slane %v4283, %v4287
        %v4290 = vmul.f32 %v4288, %v3408
        %v4291 = vmul.f32 %v4288, %v3413
        %v4294 = vrot.slane %v4290, 2
        %v4295 = vrot.slane %v4291, 2
        %v4296 = vsel %vm1774, %v4294, %v4295
        %v4298 = vadd.f32 %v4204, %v4296
        %s4299 = scalar_lea.vmem %s0, 384
        %v4300 = vld [vmem:[%s4299] sm:$0x1]
        %v4302 = vlaneseq
        %v4303 = vshrl.u32 %v4302, 7
        %v4304 = vsub.s32 0, %v4303
        %v4305 = vrot.slane %v4300, %v4304
        %v4307 = vmul.f32 %v4305, %v3408
        %v4308 = vmul.f32 %v4305, %v3413
        %v4311 = vrot.slane %v4307, 2
        %v4312 = vrot.slane %v4308, 2
        %v4313 = vsel %vm1774, %v4311, %v4312
        %v4315 = vadd.f32 %v4214, %v4313
        %s4316 = scalar_lea.vmem %s0, 420
        %v4317 = vld [vmem:[%s4316] sm:$0x1]
        %v4319 = vlaneseq
        %v4320 = vshrl.u32 %v4319, 7
        %v4321 = vsub.s32 0, %v4320
        %v4322 = vrot.slane %v4317, %v4321
        %v4324 = vmul.f32 %v4322, %v3408
        %v4325 = vmul.f32 %v4322, %v3413
        %v4328 = vrot.slane %v4324, 2
        %v4329 = vrot.slane %v4325, 2
        %v4330 = vsel %vm1774, %v4328, %v4329
        %v4332 = vadd.f32 %v4224, %v4330
        %s4333 = scalar_lea.vmem %s0, 456
        %v4334 = vld [vmem:[%s4333] sm:$0x1]
        %v4336 = vlaneseq
        %v4337 = vshrl.u32 %v4336, 7
        %v4338 = vsub.s32 0, %v4337
        %v4339 = vrot.slane %v4334, %v4338
        %v4341 = vmul.f32 %v4339, %v3408
        %v4342 = vmul.f32 %v4339, %v3413
        %v4345 = vrot.slane %v4341, 2
        %v4346 = vrot.slane %v4342, 2
        %v4347 = vsel %vm1774, %v4345, %v4346
        %v4349 = vadd.f32 %v4234, %v4347
        %s4350 = scalar_lea.vmem %s0, 492
        %v4351 = vld [vmem:[%s4350] sm:$0x1]
        %v4353 = vlaneseq
        %v4354 = vshrl.u32 %v4353, 7
        %v4355 = vsub.s32 0, %v4354
        %v4356 = vrot.slane %v4351, %v4355
        %v4358 = vmul.f32 %v4356, %v3408
        %v4359 = vmul.f32 %v4356, %v3413
        %v4362 = vrot.slane %v4358, 2
        %v4363 = vrot.slane %v4359, 2
        %v4364 = vsel %vm1774, %v4362, %v4363
        %v4366 = vadd.f32 %v4244, %v4364
        %s4367 = scalar_lea.vmem %s0, 528
        %v4368 = vld [vmem:[%s4367] sm:$0x1]
        %v4370 = vlaneseq
        %v4371 = vshrl.u32 %v4370, 7
        %v4372 = vsub.s32 0, %v4371
        %v4373 = vrot.slane %v4368, %v4372
        %v4375 = vmul.f32 %v4373, %v3408
        %v4376 = vmul.f32 %v4373, %v3413
        %v4379 = vrot.slane %v4375, 2
        %v4380 = vrot.slane %v4376, 2
        %v4381 = vsel %vm1774, %v4379, %v4380
        %v4383 = vadd.f32 %v4254, %v4381
        %s4384 = scalar_lea.vmem %s0, 564
        %v4385 = vld [vmem:[%s4384] sm:$0x1]
        %v4387 = vlaneseq
        %v4388 = vshrl.u32 %v4387, 7
        %v4389 = vsub.s32 0, %v4388
        %v4390 = vrot.slane %v4385, %v4389
        %v4392 = vmul.f32 %v4390, %v3408
        %v4393 = vmul.f32 %v4390, %v3413
        %v4396 = vrot.slane %v4392, 2
        %v4397 = vrot.slane %v4393, 2
        %v4398 = vsel %vm1774, %v4396, %v4397
        %v4400 = vadd.f32 %v4264, %v4398
        %s4401 = scalar_lea.vmem %s0, 313
        %v4402 = vld [vmem:[%s4401] sm:$0x1]
        %v4404 = vlaneseq
        %v4405 = vshrl.u32 %v4404, 7
        %v4406 = vsub.s32 0, %v4405
        %v4407 = vrot.slane %v4402, %v4406
        %v4409 = vrot.slane %v3408, 2
        %v4410 = vrot.slane %v3413, 2
        %v4411 = vsel %vm1774, %v4409, %v4410
        %4412 = vrot.lane.b32.xlu0 %v4411, 126
        %v4413 = vpop.permute.xlu0 %4412
        %v4415 = vmul.f32 %v4407, %v4413
        %v4416 = vadd.f32 %v4281, %v4415
        %s4417 = scalar_lea.vmem %s0, 349
        %v4418 = vld [vmem:[%s4417] sm:$0x1]
        %v4420 = vlaneseq
        %v4421 = vshrl.u32 %v4420, 7
        %v4422 = vsub.s32 0, %v4421
        %v4423 = vrot.slane %v4418, %v4422
        %v4425 = vmul.f32 %v4423, %v4413
        %v4426 = vadd.f32 %v4298, %v4425
        %s4427 = scalar_lea.vmem %s0, 385
        %v4428 = vld [vmem:[%s4427] sm:$0x1]
        %v4430 = vlaneseq
        %v4431 = vshrl.u32 %v4430, 7
        %v4432 = vsub.s32 0, %v4431
        %v4433 = vrot.slane %v4428, %v4432
        %v4435 = vmul.f32 %v4433, %v4413
        %v4436 = vadd.f32 %v4315, %v4435
        %s4437 = scalar_lea.vmem %s0, 421
        %v4438 = vld [vmem:[%s4437] sm:$0x1]
        %v4440 = vlaneseq
        %v4441 = vshrl.u32 %v4440, 7
        %v4442 = vsub.s32 0, %v4441
        %v4443 = vrot.slane %v4438, %v4442
        %v4445 = vmul.f32 %v4443, %v4413
        %v4446 = vadd.f32 %v4332, %v4445
        %s4447 = scalar_lea.vmem %s0, 457
        %v4448 = vld [vmem:[%s4447] sm:$0x1]
        %v4450 = vlaneseq
        %v4451 = vshrl.u32 %v4450, 7
        %v4452 = vsub.s32 0, %v4451
        %v4453 = vrot.slane %v4448, %v4452
        %v4455 = vmul.f32 %v4453, %v4413
        %v4456 = vadd.f32 %v4349, %v4455
        %s4457 = scalar_lea.vmem %s0, 493
        %v4458 = vld [vmem:[%s4457] sm:$0x1]
        %v4460 = vlaneseq
        %v4461 = vshrl.u32 %v4460, 7
        %v4462 = vsub.s32 0, %v4461
        %v4463 = vrot.slane %v4458, %v4462
        %v4465 = vmul.f32 %v4463, %v4413
        %v4466 = vadd.f32 %v4366, %v4465
        %s4467 = scalar_lea.vmem %s0, 529
        %v4468 = vld [vmem:[%s4467] sm:$0x1]
        %v4470 = vlaneseq
        %v4471 = vshrl.u32 %v4470, 7
        %v4472 = vsub.s32 0, %v4471
        %v4473 = vrot.slane %v4468, %v4472
        %v4475 = vmul.f32 %v4473, %v4413
        %v4476 = vadd.f32 %v4383, %v4475
        %s4477 = scalar_lea.vmem %s0, 565
        %v4478 = vld [vmem:[%s4477] sm:$0x1]
        %v4480 = vlaneseq
        %v4481 = vshrl.u32 %v4480, 7
        %v4482 = vsub.s32 0, %v4481
        %v4483 = vrot.slane %v4478, %v4482
        %v4485 = vmul.f32 %v4483, %v4413
        %v4486 = vadd.f32 %v4400, %v4485
        %s4487 = scalar_lea.vmem %s0, 314
        %v4488 = vld [vmem:[%s4487] sm:$0x1]
        %v4490 = vlaneseq
        %v4491 = vshrl.u32 %v4490, 7
        %v4492 = vsub.s32 0, %v4491
        %v4493 = vrot.slane %v4488, %v4492
        %4495 = vrot.lane.b32.xlu0 %v4411, 124
        %v4496 = vpop.permute.xlu0 %4495
        %v4498 = vmul.f32 %v4493, %v4496
        %v4499 = vadd.f32 %v4416, %v4498
        %s4500 = scalar_lea.vmem %s0, 350
        %v4501 = vld [vmem:[%s4500] sm:$0x1]
        %v4503 = vlaneseq
        %v4504 = vshrl.u32 %v4503, 7
        %v4505 = vsub.s32 0, %v4504
        %v4506 = vrot.slane %v4501, %v4505
        %v4508 = vmul.f32 %v4506, %v4496
        %v4509 = vadd.f32 %v4426, %v4508
        %s4510 = scalar_lea.vmem %s0, 386
        %v4511 = vld [vmem:[%s4510] sm:$0x1]
        %v4513 = vlaneseq
        %v4514 = vshrl.u32 %v4513, 7
        %v4515 = vsub.s32 0, %v4514
        %v4516 = vrot.slane %v4511, %v4515
        %v4518 = vmul.f32 %v4516, %v4496
        %v4519 = vadd.f32 %v4436, %v4518
        %s4520 = scalar_lea.vmem %s0, 422
        %v4521 = vld [vmem:[%s4520] sm:$0x1]
        %v4523 = vlaneseq
        %v4524 = vshrl.u32 %v4523, 7
        %v4525 = vsub.s32 0, %v4524
        %v4526 = vrot.slane %v4521, %v4525
        %v4528 = vmul.f32 %v4526, %v4496
        %v4529 = vadd.f32 %v4446, %v4528
        %s4530 = scalar_lea.vmem %s0, 458
        %v4531 = vld [vmem:[%s4530] sm:$0x1]
        %v4533 = vlaneseq
        %v4534 = vshrl.u32 %v4533, 7
        %v4535 = vsub.s32 0, %v4534
        %v4536 = vrot.slane %v4531, %v4535
        %v4538 = vmul.f32 %v4536, %v4496
        %v4539 = vadd.f32 %v4456, %v4538
        %s4540 = scalar_lea.vmem %s0, 494
        %v4541 = vld [vmem:[%s4540] sm:$0x1]
        %v4543 = vlaneseq
        %v4544 = vshrl.u32 %v4543, 7
        %v4545 = vsub.s32 0, %v4544
        %v4546 = vrot.slane %v4541, %v4545
        %v4548 = vmul.f32 %v4546, %v4496
        %v4549 = vadd.f32 %v4466, %v4548
        %s4550 = scalar_lea.vmem %s0, 530
        %v4551 = vld [vmem:[%s4550] sm:$0x1]
        %v4553 = vlaneseq
        %v4554 = vshrl.u32 %v4553, 7
        %v4555 = vsub.s32 0, %v4554
        %v4556 = vrot.slane %v4551, %v4555
        %v4558 = vmul.f32 %v4556, %v4496
        %v4559 = vadd.f32 %v4476, %v4558
        %s4560 = scalar_lea.vmem %s0, 566
        %v4561 = vld [vmem:[%s4560] sm:$0x1]
        %v4563 = vlaneseq
        %v4564 = vshrl.u32 %v4563, 7
        %v4565 = vsub.s32 0, %v4564
        %v4566 = vrot.slane %v4561, %v4565
        %v4568 = vmul.f32 %v4566, %v4496
        %v4569 = vadd.f32 %v4486, %v4568
        %s4570 = scalar_lea.vmem %s455, 24 [#allocation3]
        %v4571 = vld [vmem:[%s4570 + $0x7] sm:$0x1]
        %v4572 = vmul.f32 %v816, %v4571
        %s4573 = scalar_lea.vmem %s462, 24 [#allocation4]
        %v4574 = vld [vmem:[%s4573] sm:$0x1]
        %v4575 = vmul.f32 %v819, %v4574
        %s4576 = scalar_lea.vmem %s448, 24 [#allocation2]
        %v4577 = vld [vmem:[%s4576] sm:$0xff]
        %v4579 = vrot.slane %v4577, 7
        %v4582 = vrot.slane %v4575, 7
        %v4584 = vsel %vm828, %v4572, %v4579
        %v4585 = vsel %vm828, %v4579, %v4582
        %v4587 = vsel %vm831, %v4584, 0
        %v4590 = vsel %vm831, %v4585, 0
        %4592 = vmatprep.subr.mxu0 0.0
        %4593 = vmatpush1.msra.mxu0 %v514
        %4594 = vmatprep.subr.mxu0 0.0
        %4595 = vmatpush1.msra.mxu0 %v515
        %4596 = vmatprep.subr.mxu0 0.0
        %4597 = vmatpush1.msra.mxu0 0.0
        %4598 = vmatprep.subr.mxu0 0.0
        %4599 = vmatpush1.msra.mxu0 0.0
        %4600 = vmatprep.subr.mxu0 0.0
        %4601 = vmatpush1.msra.mxu0 0.0
        %4602 = vmatprep.subr.mxu0 0.0
        %4603 = vmatpush1.msra.mxu0 0.0
        %4604 = vmatprep.subr.mxu0 0.0
        %4605 = vmatpush1.msra.mxu0 0.0
        %4606 = vmatprep.subr.mxu0 0.0
        %4607 = vmatpush1.msra.mxu0 0.0
        %4608 = vmatprep.subr.mxu0 0.0
        %4609 = vmatpush1.msra.mxu0 0.0
        %4610 = vmatprep.subr.mxu0 0.0
        %4611 = vmatpush1.msra.mxu0 0.0
        %4612 = vmatprep.subr.mxu0 0.0
        %4613 = vmatpush1.msra.mxu0 0.0
        %4614 = vmatprep.subr.mxu0 0.0
        %4615 = vmatpush1.msra.mxu0 0.0
        %4616 = vmatprep.subr.mxu0 0.0
        %4617 = vmatpush1.msra.mxu0 0.0
        %4618 = vmatprep.subr.mxu0 0.0
        %4619 = vmatpush1.msra.mxu0 0.0
        %4620 = vmatprep.subr.mxu0 0.0
        %4621 = vmatpush1.msra.mxu0 0.0
        %4622 = vmatprep.subr.mxu0 0.0
        %4623 = vmatpush1.msra.mxu0 0.0
        %4624 = vmatprep.subr.mxu0 0.0
        %4625 = vmatpush1.msra.mxu0 0.0
        %4626 = vmatprep.subr.mxu0 0.0
        %4627 = vmatpush1.msra.mxu0 0.0
        %4628 = vmatprep.subr.mxu0 0.0
        %4629 = vmatpush1.msra.mxu0 0.0
        %4630 = vmatprep.subr.mxu0 0.0
        %4631 = vmatpush1.msra.mxu0 0.0
        %4632 = vmatprep.subr.mxu0 0.0
        %4633 = vmatpush1.msra.mxu0 0.0
        %4634 = vmatprep.subr.mxu0 0.0
        %4635 = vmatpush1.msra.mxu0 0.0
        %4636 = vmatprep.subr.mxu0 0.0
        %4637 = vmatpush1.msra.mxu0 0.0
        %4638 = vmatprep.subr.mxu0 0.0
        %4639 = vmatpush1.msra.mxu0 0.0
        %4640 = vmatprep.subr.mxu0 0.0
        %4641 = vmatpush1.msra.mxu0 0.0
        %4642 = vmatprep.subr.mxu0 0.0
        %4643 = vmatpush1.msra.mxu0 0.0
        %4644 = vmatprep.subr.mxu0 0.0
        %4645 = vmatpush1.msra.mxu0 0.0
        %4646 = vmatprep.subr.mxu0 0.0
        %4647 = vmatpush1.msra.mxu0 0.0
        %4648 = vmatprep.subr.mxu0 0.0
        %4649 = vmatpush1.msra.mxu0 0.0
        %4650 = vmatprep.subr.mxu0 0.0
        %4651 = vmatpush1.msra.mxu0 0.0
        %4652 = vmatprep.subr.mxu0 0.0
        %4653 = vmatpush1.msra.mxu0 0.0
        %4654 = vmatprep.subr.mxu0 0.0
        %4655 = vmatpush1.msra.mxu0 0.0
        %4656 = vmatprep.mubr.f32.mxu0 0.0
        %4657 = vmatmul.mubr.f32.gmra.mrb[0].mxu0 %v4587
        %v4658 = vpop.f32.mrb[0].mxu0
        %v4659 = vadd.f32 0.0, %v4658
        %v4660 = vpop.f32.mrb[0].mxu0
        %4661 = vmatprep.mubr.f32.mxu0 0.0
        %4662 = vmatmul.mubr.f32.gmra.mrb[0].mxu0 %v4590
        %v4663 = vpop.f32.mrb[0].mxu0
        %v4664 = vadd.f32 0.0, %v4663
        %v4665 = vpop.f32.mrb[0].mxu0
        %4666 = vdwg.mxu0
        %s4667 = scalar_lea.vmem %s0, 27
        %v4668 = vld [vmem:[%s4667] sm:$0x1]
        %v4670 = vlaneseq
        %v4671 = vshrl.u32 %v4670, 7
        %v4672 = vsub.s32 0, %v4671
        %v4673 = vrot.slane %v4668, %v4672
        %v4675 = vmul.f32 %v4673, %v4659
        %v4676 = vadd.f32 %v4114, %v4675
        %s4677 = scalar_lea.vmem %s0, 63
        %v4678 = vld [vmem:[%s4677] sm:$0x1]
        %v4680 = vlaneseq
        %v4681 = vshrl.u32 %v4680, 7
        %v4682 = vsub.s32 0, %v4681
        %v4683 = vrot.slane %v4678, %v4682
        %v4685 = vmul.f32 %v4683, %v4659
        %v4686 = vadd.f32 %v4124, %v4685
        %s4687 = scalar_lea.vmem %s0, 99
        %v4688 = vld [vmem:[%s4687] sm:$0x1]
        %v4690 = vlaneseq
        %v4691 = vshrl.u32 %v4690, 7
        %v4692 = vsub.s32 0, %v4691
        %v4693 = vrot.slane %v4688, %v4692
        %v4695 = vmul.f32 %v4693, %v4659
        %v4696 = vadd.f32 %v4134, %v4695
        %s4697 = scalar_lea.vmem %s0, 135
        %v4698 = vld [vmem:[%s4697] sm:$0x1]
        %v4700 = vlaneseq
        %v4701 = vshrl.u32 %v4700, 7
        %v4702 = vsub.s32 0, %v4701
        %v4703 = vrot.slane %v4698, %v4702
        %v4705 = vmul.f32 %v4703, %v4659
        %v4706 = vadd.f32 %v4144, %v4705
        %s4707 = scalar_lea.vmem %s0, 171
        %v4708 = vld [vmem:[%s4707] sm:$0x1]
        %v4710 = vlaneseq
        %v4711 = vshrl.u32 %v4710, 7
        %v4712 = vsub.s32 0, %v4711
        %v4713 = vrot.slane %v4708, %v4712
        %v4715 = vmul.f32 %v4713, %v4659
        %v4716 = vadd.f32 %v4154, %v4715
        %s4717 = scalar_lea.vmem %s0, 207
        %v4718 = vld [vmem:[%s4717] sm:$0x1]
        %v4720 = vlaneseq
        %v4721 = vshrl.u32 %v4720, 7
        %v4722 = vsub.s32 0, %v4721
        %v4723 = vrot.slane %v4718, %v4722
        %v4725 = vmul.f32 %v4723, %v4659
        %v4726 = vadd.f32 %v4164, %v4725
        %s4727 = scalar_lea.vmem %s0, 243
        %v4728 = vld [vmem:[%s4727] sm:$0x1]
        %v4730 = vlaneseq
        %v4731 = vshrl.u32 %v4730, 7
        %v4732 = vsub.s32 0, %v4731
        %v4733 = vrot.slane %v4728, %v4732
        %v4735 = vmul.f32 %v4733, %v4659
        %v4736 = vadd.f32 %v4174, %v4735
        %s4737 = scalar_lea.vmem %s0, 279
        %v4738 = vld [vmem:[%s4737] sm:$0x1]
        %v4740 = vlaneseq
        %v4741 = vshrl.u32 %v4740, 7
        %v4742 = vsub.s32 0, %v4741
        %v4743 = vrot.slane %v4738, %v4742
        %v4745 = vmul.f32 %v4743, %v4659
        %v4746 = vadd.f32 %v4184, %v4745
        %s4747 = scalar_lea.vmem %s0, 28
        %v4748 = vld [vmem:[%s4747] sm:$0x1]
        %v4750 = vlaneseq
        %v4751 = vshrl.u32 %v4750, 7
        %v4752 = vsub.s32 0, %v4751
        %v4753 = vrot.slane %v4748, %v4752
        %4756 = vrot.lane.b32.xlu0 %v4659, 126
        %v4757 = vpop.permute.xlu0 %4756
        %v4759 = vmul.f32 %v4753, %v4757
        %v4760 = vadd.f32 %v4676, %v4759
        %s4761 = scalar_lea.vmem %s0, 64
        %v4762 = vld [vmem:[%s4761] sm:$0x1]
        %v4764 = vlaneseq
        %v4765 = vshrl.u32 %v4764, 7
        %v4766 = vsub.s32 0, %v4765
        %v4767 = vrot.slane %v4762, %v4766
        %v4769 = vmul.f32 %v4767, %v4757
        %v4770 = vadd.f32 %v4686, %v4769
        %s4771 = scalar_lea.vmem %s0, 100
        %v4772 = vld [vmem:[%s4771] sm:$0x1]
        %v4774 = vlaneseq
        %v4775 = vshrl.u32 %v4774, 7
        %v4776 = vsub.s32 0, %v4775
        %v4777 = vrot.slane %v4772, %v4776
        %v4779 = vmul.f32 %v4777, %v4757
        %v4780 = vadd.f32 %v4696, %v4779
        %s4781 = scalar_lea.vmem %s0, 136
        %v4782 = vld [vmem:[%s4781] sm:$0x1]
        %v4784 = vlaneseq
        %v4785 = vshrl.u32 %v4784, 7
        %v4786 = vsub.s32 0, %v4785
        %v4787 = vrot.slane %v4782, %v4786
        %v4789 = vmul.f32 %v4787, %v4757
        %v4790 = vadd.f32 %v4706, %v4789
        %s4791 = scalar_lea.vmem %s0, 172
        %v4792 = vld [vmem:[%s4791] sm:$0x1]
        %v4794 = vlaneseq
        %v4795 = vshrl.u32 %v4794, 7
        %v4796 = vsub.s32 0, %v4795
        %v4797 = vrot.slane %v4792, %v4796
        %v4799 = vmul.f32 %v4797, %v4757
        %v4800 = vadd.f32 %v4716, %v4799
        %s4801 = scalar_lea.vmem %s0, 208
        %v4802 = vld [vmem:[%s4801] sm:$0x1]
        %v4804 = vlaneseq
        %v4805 = vshrl.u32 %v4804, 7
        %v4806 = vsub.s32 0, %v4805
        %v4807 = vrot.slane %v4802, %v4806
        %v4809 = vmul.f32 %v4807, %v4757
        %v4810 = vadd.f32 %v4726, %v4809
        %s4811 = scalar_lea.vmem %s0, 244
        %v4812 = vld [vmem:[%s4811] sm:$0x1]
        %v4814 = vlaneseq
        %v4815 = vshrl.u32 %v4814, 7
        %v4816 = vsub.s32 0, %v4815
        %v4817 = vrot.slane %v4812, %v4816
        %v4819 = vmul.f32 %v4817, %v4757
        %v4820 = vadd.f32 %v4736, %v4819
        %s4821 = scalar_lea.vmem %s0, 280
        %v4822 = vld [vmem:[%s4821] sm:$0x1]
        %v4824 = vlaneseq
        %v4825 = vshrl.u32 %v4824, 7
        %v4826 = vsub.s32 0, %v4825
        %v4827 = vrot.slane %v4822, %v4826
        %v4829 = vmul.f32 %v4827, %v4757
        %v4830 = vadd.f32 %v4746, %v4829
        %s4831 = scalar_lea.vmem %s0, 29
        %v4832 = vld [vmem:[%s4831] sm:$0x1]
        %v4834 = vlaneseq
        %v4835 = vshrl.u32 %v4834, 7
        %v4836 = vsub.s32 0, %v4835
        %v4837 = vrot.slane %v4832, %v4836
        %4839 = vrot.lane.b32.xlu0 %v4659, 124
        %v4840 = vpop.permute.xlu0 %4839
        %v4842 = vmul.f32 %v4837, %v4840
        %v4843 = vadd.f32 %v4760, %v4842
        %s4844 = scalar_lea.vmem %s0, 65
        %v4845 = vld [vmem:[%s4844] sm:$0x1]
        %v4847 = vlaneseq
        %v4848 = vshrl.u32 %v4847, 7
        %v4849 = vsub.s32 0, %v4848
        %v4850 = vrot.slane %v4845, %v4849
        %v4852 = vmul.f32 %v4850, %v4840
        %v4853 = vadd.f32 %v4770, %v4852
        %s4854 = scalar_lea.vmem %s0, 101
        %v4855 = vld [vmem:[%s4854] sm:$0x1]
        %v4857 = vlaneseq
        %v4858 = vshrl.u32 %v4857, 7
        %v4859 = vsub.s32 0, %v4858
        %v4860 = vrot.slane %v4855, %v4859
        %v4862 = vmul.f32 %v4860, %v4840
        %v4863 = vadd.f32 %v4780, %v4862
        %s4864 = scalar_lea.vmem %s0, 137
        %v4865 = vld [vmem:[%s4864] sm:$0x1]
        %v4867 = vlaneseq
        %v4868 = vshrl.u32 %v4867, 7
        %v4869 = vsub.s32 0, %v4868
        %v4870 = vrot.slane %v4865, %v4869
        %v4872 = vmul.f32 %v4870, %v4840
        %v4873 = vadd.f32 %v4790, %v4872
        %s4874 = scalar_lea.vmem %s0, 173
        %v4875 = vld [vmem:[%s4874] sm:$0x1]
        %v4877 = vlaneseq
        %v4878 = vshrl.u32 %v4877, 7
        %v4879 = vsub.s32 0, %v4878
        %v4880 = vrot.slane %v4875, %v4879
        %v4882 = vmul.f32 %v4880, %v4840
        %v4883 = vadd.f32 %v4800, %v4882
        %s4884 = scalar_lea.vmem %s0, 209
        %v4885 = vld [vmem:[%s4884] sm:$0x1]
        %v4887 = vlaneseq
        %v4888 = vshrl.u32 %v4887, 7
        %v4889 = vsub.s32 0, %v4888
        %v4890 = vrot.slane %v4885, %v4889
        %v4892 = vmul.f32 %v4890, %v4840
        %v4893 = vadd.f32 %v4810, %v4892
        %s4894 = scalar_lea.vmem %s0, 245
        %v4895 = vld [vmem:[%s4894] sm:$0x1]
        %v4897 = vlaneseq
        %v4898 = vshrl.u32 %v4897, 7
        %v4899 = vsub.s32 0, %v4898
        %v4900 = vrot.slane %v4895, %v4899
        %v4902 = vmul.f32 %v4900, %v4840
        %v4903 = vadd.f32 %v4820, %v4902
        %s4904 = scalar_lea.vmem %s0, 281
        %v4905 = vld [vmem:[%s4904] sm:$0x1]
        %v4907 = vlaneseq
        %v4908 = vshrl.u32 %v4907, 7
        %v4909 = vsub.s32 0, %v4908
        %v4910 = vrot.slane %v4905, %v4909
        %v4912 = vmul.f32 %v4910, %v4840
        %v4913 = vadd.f32 %v4830, %v4912
        %s4914 = scalar_lea.vmem %s0, 30
        %v4915 = vld [vmem:[%s4914] sm:$0x1]
        %v4917 = vlaneseq
        %v4918 = vshrl.u32 %v4917, 7
        %v4919 = vsub.s32 0, %v4918
        %v4920 = vrot.slane %v4915, %v4919
        %v4922 = vmul.f32 %v4920, %v4659
        %v4923 = vmul.f32 %v4920, %v4664
        %v4926 = vrot.slane %v4922, 1
        %v4927 = vrot.slane %v4923, 1
        %v4928 = vsel %vm1171, %v4926, %v4927
        %v4930 = vadd.f32 %v4843, %v4928
        %s4931 = scalar_lea.vmem %s0, 66
        %v4932 = vld [vmem:[%s4931] sm:$0x1]
        %v4934 = vlaneseq
        %v4935 = vshrl.u32 %v4934, 7
        %v4936 = vsub.s32 0, %v4935
        %v4937 = vrot.slane %v4932, %v4936
        %v4939 = vmul.f32 %v4937, %v4659
        %v4940 = vmul.f32 %v4937, %v4664
        %v4943 = vrot.slane %v4939, 1
        %v4944 = vrot.slane %v4940, 1
        %v4945 = vsel %vm1171, %v4943, %v4944
        %v4947 = vadd.f32 %v4853, %v4945
        %s4948 = scalar_lea.vmem %s0, 102
        %v4949 = vld [vmem:[%s4948] sm:$0x1]
        %v4951 = vlaneseq
        %v4952 = vshrl.u32 %v4951, 7
        %v4953 = vsub.s32 0, %v4952
        %v4954 = vrot.slane %v4949, %v4953
        %v4956 = vmul.f32 %v4954, %v4659
        %v4957 = vmul.f32 %v4954, %v4664
        %v4960 = vrot.slane %v4956, 1
        %v4961 = vrot.slane %v4957, 1
        %v4962 = vsel %vm1171, %v4960, %v4961
        %v4964 = vadd.f32 %v4863, %v4962
        %s4965 = scalar_lea.vmem %s0, 138
        %v4966 = vld [vmem:[%s4965] sm:$0x1]
        %v4968 = vlaneseq
        %v4969 = vshrl.u32 %v4968, 7
        %v4970 = vsub.s32 0, %v4969
        %v4971 = vrot.slane %v4966, %v4970
        %v4973 = vmul.f32 %v4971, %v4659
        %v4974 = vmul.f32 %v4971, %v4664
        %v4977 = vrot.slane %v4973, 1
        %v4978 = vrot.slane %v4974, 1
        %v4979 = vsel %vm1171, %v4977, %v4978
        %v4981 = vadd.f32 %v4873, %v4979
        %s4982 = scalar_lea.vmem %s0, 174
        %v4983 = vld [vmem:[%s4982] sm:$0x1]
        %v4985 = vlaneseq
        %v4986 = vshrl.u32 %v4985, 7
        %v4987 = vsub.s32 0, %v4986
        %v4988 = vrot.slane %v4983, %v4987
        %v4990 = vmul.f32 %v4988, %v4659
        %v4991 = vmul.f32 %v4988, %v4664
        %v4994 = vrot.slane %v4990, 1
        %v4995 = vrot.slane %v4991, 1
        %v4996 = vsel %vm1171, %v4994, %v4995
        %v4998 = vadd.f32 %v4883, %v4996
        %s4999 = scalar_lea.vmem %s0, 210
        %v5000 = vld [vmem:[%s4999] sm:$0x1]
        %v5002 = vlaneseq
        %v5003 = vshrl.u32 %v5002, 7
        %v5004 = vsub.s32 0, %v5003
        %v5005 = vrot.slane %v5000, %v5004
        %v5007 = vmul.f32 %v5005, %v4659
        %v5008 = vmul.f32 %v5005, %v4664
        %v5011 = vrot.slane %v5007, 1
        %v5012 = vrot.slane %v5008, 1
        %v5013 = vsel %vm1171, %v5011, %v5012
        %v5015 = vadd.f32 %v4893, %v5013
        %s5016 = scalar_lea.vmem %s0, 246
        %v5017 = vld [vmem:[%s5016] sm:$0x1]
        %v5019 = vlaneseq
        %v5020 = vshrl.u32 %v5019, 7
        %v5021 = vsub.s32 0, %v5020
        %v5022 = vrot.slane %v5017, %v5021
        %v5024 = vmul.f32 %v5022, %v4659
        %v5025 = vmul.f32 %v5022, %v4664
        %v5028 = vrot.slane %v5024, 1
        %v5029 = vrot.slane %v5025, 1
        %v5030 = vsel %vm1171, %v5028, %v5029
        %v5032 = vadd.f32 %v4903, %v5030
        %s5033 = scalar_lea.vmem %s0, 282
        %v5034 = vld [vmem:[%s5033] sm:$0x1]
        %v5036 = vlaneseq
        %v5037 = vshrl.u32 %v5036, 7
        %v5038 = vsub.s32 0, %v5037
        %v5039 = vrot.slane %v5034, %v5038
        %v5041 = vmul.f32 %v5039, %v4659
        %v5042 = vmul.f32 %v5039, %v4664
        %v5045 = vrot.slane %v5041, 1
        %v5046 = vrot.slane %v5042, 1
        %v5047 = vsel %vm1171, %v5045, %v5046
        %v5049 = vadd.f32 %v4913, %v5047
        %s5050 = scalar_lea.vmem %s0, 318
        %v5051 = vld [vmem:[%s5050] sm:$0x1]
        %v5053 = vlaneseq
        %v5054 = vshrl.u32 %v5053, 7
        %v5055 = vsub.s32 0, %v5054
        %v5056 = vrot.slane %v5051, %v5055
        %v5058 = vmul.f32 %v5056, %v4659
        %v5059 = vmul.f32 %v5056, %v4664
        %v5062 = vrot.slane %v5058, 1
        %v5063 = vrot.slane %v5059, 1
        %v5064 = vsel %vm1171, %v5062, %v5063
        %v5066 = vadd.f32 %v4499, %v5064
        %s5067 = scalar_lea.vmem %s0, 354
        %v5068 = vld [vmem:[%s5067] sm:$0x1]
        %v5070 = vlaneseq
        %v5071 = vshrl.u32 %v5070, 7
        %v5072 = vsub.s32 0, %v5071
        %v5073 = vrot.slane %v5068, %v5072
        %v5075 = vmul.f32 %v5073, %v4659
        %v5076 = vmul.f32 %v5073, %v4664
        %v5079 = vrot.slane %v5075, 1
        %v5080 = vrot.slane %v5076, 1
        %v5081 = vsel %vm1171, %v5079, %v5080
        %v5083 = vadd.f32 %v4509, %v5081
        %s5084 = scalar_lea.vmem %s0, 390
        %v5085 = vld [vmem:[%s5084] sm:$0x1]
        %v5087 = vlaneseq
        %v5088 = vshrl.u32 %v5087, 7
        %v5089 = vsub.s32 0, %v5088
        %v5090 = vrot.slane %v5085, %v5089
        %v5092 = vmul.f32 %v5090, %v4659
        %v5093 = vmul.f32 %v5090, %v4664
        %v5096 = vrot.slane %v5092, 1
        %v5097 = vrot.slane %v5093, 1
        %v5098 = vsel %vm1171, %v5096, %v5097
        %v5100 = vadd.f32 %v4519, %v5098
        %s5101 = scalar_lea.vmem %s0, 426
        %v5102 = vld [vmem:[%s5101] sm:$0x1]
        %v5104 = vlaneseq
        %v5105 = vshrl.u32 %v5104, 7
        %v5106 = vsub.s32 0, %v5105
        %v5107 = vrot.slane %v5102, %v5106
        %v5109 = vmul.f32 %v5107, %v4659
        %v5110 = vmul.f32 %v5107, %v4664
        %v5113 = vrot.slane %v5109, 1
        %v5114 = vrot.slane %v5110, 1
        %v5115 = vsel %vm1171, %v5113, %v5114
        %v5117 = vadd.f32 %v4529, %v5115
        %s5118 = scalar_lea.vmem %s0, 462
        %v5119 = vld [vmem:[%s5118] sm:$0x1]
        %v5121 = vlaneseq
        %v5122 = vshrl.u32 %v5121, 7
        %v5123 = vsub.s32 0, %v5122
        %v5124 = vrot.slane %v5119, %v5123
        %v5126 = vmul.f32 %v5124, %v4659
        %v5127 = vmul.f32 %v5124, %v4664
        %v5130 = vrot.slane %v5126, 1
        %v5131 = vrot.slane %v5127, 1
        %v5132 = vsel %vm1171, %v5130, %v5131
        %v5134 = vadd.f32 %v4539, %v5132
        %s5135 = scalar_lea.vmem %s0, 498
        %v5136 = vld [vmem:[%s5135] sm:$0x1]
        %v5138 = vlaneseq
        %v5139 = vshrl.u32 %v5138, 7
        %v5140 = vsub.s32 0, %v5139
        %v5141 = vrot.slane %v5136, %v5140
        %v5143 = vmul.f32 %v5141, %v4659
        %v5144 = vmul.f32 %v5141, %v4664
        %v5147 = vrot.slane %v5143, 1
        %v5148 = vrot.slane %v5144, 1
        %v5149 = vsel %vm1171, %v5147, %v5148
        %v5151 = vadd.f32 %v4549, %v5149
        %s5152 = scalar_lea.vmem %s0, 534
        %v5153 = vld [vmem:[%s5152] sm:$0x1]
        %v5155 = vlaneseq
        %v5156 = vshrl.u32 %v5155, 7
        %v5157 = vsub.s32 0, %v5156
        %v5158 = vrot.slane %v5153, %v5157
        %v5160 = vmul.f32 %v5158, %v4659
        %v5161 = vmul.f32 %v5158, %v4664
        %v5164 = vrot.slane %v5160, 1
        %v5165 = vrot.slane %v5161, 1
        %v5166 = vsel %vm1171, %v5164, %v5165
        %v5168 = vadd.f32 %v4559, %v5166
        %s5169 = scalar_lea.vmem %s0, 570
        %v5170 = vld [vmem:[%s5169] sm:$0x1]
        %v5172 = vlaneseq
        %v5173 = vshrl.u32 %v5172, 7
        %v5174 = vsub.s32 0, %v5173
        %v5175 = vrot.slane %v5170, %v5174
        %v5177 = vmul.f32 %v5175, %v4659
        %v5178 = vmul.f32 %v5175, %v4664
        %v5181 = vrot.slane %v5177, 1
        %v5182 = vrot.slane %v5178, 1
        %v5183 = vsel %vm1171, %v5181, %v5182
        %v5185 = vadd.f32 %v4569, %v5183
        %s5186 = scalar_lea.vmem %s0, 31
        %v5187 = vld [vmem:[%s5186] sm:$0x1]
        %v5189 = vlaneseq
        %v5190 = vshrl.u32 %v5189, 7
        %v5191 = vsub.s32 0, %v5190
        %v5192 = vrot.slane %v5187, %v5191
        %v5195 = vrot.slane %v4659, 1
        %v5196 = vrot.slane %v4664, 1
        %v5197 = vsel %vm1171, %v5195, %v5196
        %5198 = vrot.lane.b32.xlu0 %v5197, 126
        %v5199 = vpop.permute.xlu0 %5198
        %v5201 = vmul.f32 %v5192, %v5199
        %v5202 = vadd.f32 %v4930, %v5201
        %s5203 = scalar_lea.vmem %s0, 67
        %v5204 = vld [vmem:[%s5203] sm:$0x1]
        %v5206 = vlaneseq
        %v5207 = vshrl.u32 %v5206, 7
        %v5208 = vsub.s32 0, %v5207
        %v5209 = vrot.slane %v5204, %v5208
        %v5211 = vmul.f32 %v5209, %v5199
        %v5212 = vadd.f32 %v4947, %v5211
        %s5213 = scalar_lea.vmem %s0, 103
        %v5214 = vld [vmem:[%s5213] sm:$0x1]
        %v5216 = vlaneseq
        %v5217 = vshrl.u32 %v5216, 7
        %v5218 = vsub.s32 0, %v5217
        %v5219 = vrot.slane %v5214, %v5218
        %v5221 = vmul.f32 %v5219, %v5199
        %v5222 = vadd.f32 %v4964, %v5221
        %s5223 = scalar_lea.vmem %s0, 139
        %v5224 = vld [vmem:[%s5223] sm:$0x1]
        %v5226 = vlaneseq
        %v5227 = vshrl.u32 %v5226, 7
        %v5228 = vsub.s32 0, %v5227
        %v5229 = vrot.slane %v5224, %v5228
        %v5231 = vmul.f32 %v5229, %v5199
        %v5232 = vadd.f32 %v4981, %v5231
        %s5233 = scalar_lea.vmem %s0, 175
        %v5234 = vld [vmem:[%s5233] sm:$0x1]
        %v5236 = vlaneseq
        %v5237 = vshrl.u32 %v5236, 7
        %v5238 = vsub.s32 0, %v5237
        %v5239 = vrot.slane %v5234, %v5238
        %v5241 = vmul.f32 %v5239, %v5199
        %v5242 = vadd.f32 %v4998, %v5241
        %s5243 = scalar_lea.vmem %s0, 211
        %v5244 = vld [vmem:[%s5243] sm:$0x1]
        %v5246 = vlaneseq
        %v5247 = vshrl.u32 %v5246, 7
        %v5248 = vsub.s32 0, %v5247
        %v5249 = vrot.slane %v5244, %v5248
        %v5251 = vmul.f32 %v5249, %v5199
        %v5252 = vadd.f32 %v5015, %v5251
        %s5253 = scalar_lea.vmem %s0, 247
        %v5254 = vld [vmem:[%s5253] sm:$0x1]
        %v5256 = vlaneseq
        %v5257 = vshrl.u32 %v5256, 7
        %v5258 = vsub.s32 0, %v5257
        %v5259 = vrot.slane %v5254, %v5258
        %v5261 = vmul.f32 %v5259, %v5199
        %v5262 = vadd.f32 %v5032, %v5261
        %s5263 = scalar_lea.vmem %s0, 283
        %v5264 = vld [vmem:[%s5263] sm:$0x1]
        %v5266 = vlaneseq
        %v5267 = vshrl.u32 %v5266, 7
        %v5268 = vsub.s32 0, %v5267
        %v5269 = vrot.slane %v5264, %v5268
        %v5271 = vmul.f32 %v5269, %v5199
        %v5272 = vadd.f32 %v5049, %v5271
        %s5273 = scalar_lea.vmem %s0, 319
        %v5274 = vld [vmem:[%s5273] sm:$0x1]
        %v5276 = vlaneseq
        %v5277 = vshrl.u32 %v5276, 7
        %v5278 = vsub.s32 0, %v5277
        %v5279 = vrot.slane %v5274, %v5278
        %v5281 = vmul.f32 %v5279, %v5199
        %v5282 = vadd.f32 %v5066, %v5281
        %s5283 = scalar_lea.vmem %s0, 355
        %v5284 = vld [vmem:[%s5283] sm:$0x1]
        %v5286 = vlaneseq
        %v5287 = vshrl.u32 %v5286, 7
        %v5288 = vsub.s32 0, %v5287
        %v5289 = vrot.slane %v5284, %v5288
        %v5291 = vmul.f32 %v5289, %v5199
        %v5292 = vadd.f32 %v5083, %v5291
        %s5293 = scalar_lea.vmem %s0, 391
        %v5294 = vld [vmem:[%s5293] sm:$0x1]
        %v5296 = vlaneseq
        %v5297 = vshrl.u32 %v5296, 7
        %v5298 = vsub.s32 0, %v5297
        %v5299 = vrot.slane %v5294, %v5298
        %v5301 = vmul.f32 %v5299, %v5199
        %v5302 = vadd.f32 %v5100, %v5301
        %s5303 = scalar_lea.vmem %s0, 427
        %v5304 = vld [vmem:[%s5303] sm:$0x1]
        %v5306 = vlaneseq
        %v5307 = vshrl.u32 %v5306, 7
        %v5308 = vsub.s32 0, %v5307
        %v5309 = vrot.slane %v5304, %v5308
        %v5311 = vmul.f32 %v5309, %v5199
        %v5312 = vadd.f32 %v5117, %v5311
        %s5313 = scalar_lea.vmem %s0, 463
        %v5314 = vld [vmem:[%s5313] sm:$0x1]
        %v5316 = vlaneseq
        %v5317 = vshrl.u32 %v5316, 7
        %v5318 = vsub.s32 0, %v5317
        %v5319 = vrot.slane %v5314, %v5318
        %v5321 = vmul.f32 %v5319, %v5199
        %v5322 = vadd.f32 %v5134, %v5321
        %s5323 = scalar_lea.vmem %s0, 499
        %v5324 = vld [vmem:[%s5323] sm:$0x1]
        %v5326 = vlaneseq
        %v5327 = vshrl.u32 %v5326, 7
        %v5328 = vsub.s32 0, %v5327
        %v5329 = vrot.slane %v5324, %v5328
        %v5331 = vmul.f32 %v5329, %v5199
        %v5332 = vadd.f32 %v5151, %v5331
        %s5333 = scalar_lea.vmem %s0, 535
        %v5334 = vld [vmem:[%s5333] sm:$0x1]
        %v5336 = vlaneseq
        %v5337 = vshrl.u32 %v5336, 7
        %v5338 = vsub.s32 0, %v5337
        %v5339 = vrot.slane %v5334, %v5338
        %v5341 = vmul.f32 %v5339, %v5199
        %v5342 = vadd.f32 %v5168, %v5341
        %s5343 = scalar_lea.vmem %s0, 571
        %v5344 = vld [vmem:[%s5343] sm:$0x1]
        %v5346 = vlaneseq
        %v5347 = vshrl.u32 %v5346, 7
        %v5348 = vsub.s32 0, %v5347
        %v5349 = vrot.slane %v5344, %v5348
        %v5351 = vmul.f32 %v5349, %v5199
        %v5352 = vadd.f32 %v5185, %v5351
        %s5353 = scalar_lea.vmem %s0, 32
        %v5354 = vld [vmem:[%s5353] sm:$0x1]
        %v5356 = vlaneseq
        %v5357 = vshrl.u32 %v5356, 7
        %v5358 = vsub.s32 0, %v5357
        %v5359 = vrot.slane %v5354, %v5358
        %5361 = vrot.lane.b32.xlu0 %v5197, 124
        %v5362 = vpop.permute.xlu0 %5361
        %v5364 = vmul.f32 %v5359, %v5362
        %v5365 = vadd.f32 %v5202, %v5364
        %s5366 = scalar_lea.vmem %s0, 68
        %v5367 = vld [vmem:[%s5366] sm:$0x1]
        %v5369 = vlaneseq
        %v5370 = vshrl.u32 %v5369, 7
        %v5371 = vsub.s32 0, %v5370
        %v5372 = vrot.slane %v5367, %v5371
        %v5374 = vmul.f32 %v5372, %v5362
        %v5375 = vadd.f32 %v5212, %v5374
        %s5376 = scalar_lea.vmem %s0, 104
        %v5377 = vld [vmem:[%s5376] sm:$0x1]
        %v5379 = vlaneseq
        %v5380 = vshrl.u32 %v5379, 7
        %v5381 = vsub.s32 0, %v5380
        %v5382 = vrot.slane %v5377, %v5381
        %v5384 = vmul.f32 %v5382, %v5362
        %v5385 = vadd.f32 %v5222, %v5384
        %s5386 = scalar_lea.vmem %s0, 140
        %v5387 = vld [vmem:[%s5386] sm:$0x1]
        %v5389 = vlaneseq
        %v5390 = vshrl.u32 %v5389, 7
        %v5391 = vsub.s32 0, %v5390
        %v5392 = vrot.slane %v5387, %v5391
        %v5394 = vmul.f32 %v5392, %v5362
        %v5395 = vadd.f32 %v5232, %v5394
        %s5396 = scalar_lea.vmem %s0, 176
        %v5397 = vld [vmem:[%s5396] sm:$0x1]
        %v5399 = vlaneseq
        %v5400 = vshrl.u32 %v5399, 7
        %v5401 = vsub.s32 0, %v5400
        %v5402 = vrot.slane %v5397, %v5401
        %v5404 = vmul.f32 %v5402, %v5362
        %v5405 = vadd.f32 %v5242, %v5404
        %s5406 = scalar_lea.vmem %s0, 212
        %v5407 = vld [vmem:[%s5406] sm:$0x1]
        %v5409 = vlaneseq
        %v5410 = vshrl.u32 %v5409, 7
        %v5411 = vsub.s32 0, %v5410
        %v5412 = vrot.slane %v5407, %v5411
        %v5414 = vmul.f32 %v5412, %v5362
        %v5415 = vadd.f32 %v5252, %v5414
        %s5416 = scalar_lea.vmem %s0, 248
        %v5417 = vld [vmem:[%s5416] sm:$0x1]
        %v5419 = vlaneseq
        %v5420 = vshrl.u32 %v5419, 7
        %v5421 = vsub.s32 0, %v5420
        %v5422 = vrot.slane %v5417, %v5421
        %v5424 = vmul.f32 %v5422, %v5362
        %v5425 = vadd.f32 %v5262, %v5424
        %s5426 = scalar_lea.vmem %s0, 284
        %v5427 = vld [vmem:[%s5426] sm:$0x1]
        %v5429 = vlaneseq
        %v5430 = vshrl.u32 %v5429, 7
        %v5431 = vsub.s32 0, %v5430
        %v5432 = vrot.slane %v5427, %v5431
        %v5434 = vmul.f32 %v5432, %v5362
        %v5435 = vadd.f32 %v5272, %v5434
        %s5436 = scalar_lea.vmem %s0, 320
        %v5437 = vld [vmem:[%s5436] sm:$0x1]
        %v5439 = vlaneseq
        %v5440 = vshrl.u32 %v5439, 7
        %v5441 = vsub.s32 0, %v5440
        %v5442 = vrot.slane %v5437, %v5441
        %v5444 = vmul.f32 %v5442, %v5362
        %v5445 = vadd.f32 %v5282, %v5444
        %s5446 = scalar_lea.vmem %s0, 356
        %v5447 = vld [vmem:[%s5446] sm:$0x1]
        %v5449 = vlaneseq
        %v5450 = vshrl.u32 %v5449, 7
        %v5451 = vsub.s32 0, %v5450
        %v5452 = vrot.slane %v5447, %v5451
        %v5454 = vmul.f32 %v5452, %v5362
        %v5455 = vadd.f32 %v5292, %v5454
        %s5456 = scalar_lea.vmem %s0, 392
        %v5457 = vld [vmem:[%s5456] sm:$0x1]
        %v5459 = vlaneseq
        %v5460 = vshrl.u32 %v5459, 7
        %v5461 = vsub.s32 0, %v5460
        %v5462 = vrot.slane %v5457, %v5461
        %v5464 = vmul.f32 %v5462, %v5362
        %v5465 = vadd.f32 %v5302, %v5464
        %s5466 = scalar_lea.vmem %s0, 428
        %v5467 = vld [vmem:[%s5466] sm:$0x1]
        %v5469 = vlaneseq
        %v5470 = vshrl.u32 %v5469, 7
        %v5471 = vsub.s32 0, %v5470
        %v5472 = vrot.slane %v5467, %v5471
        %v5474 = vmul.f32 %v5472, %v5362
        %v5475 = vadd.f32 %v5312, %v5474
        %s5476 = scalar_lea.vmem %s0, 464
        %v5477 = vld [vmem:[%s5476] sm:$0x1]
        %v5479 = vlaneseq
        %v5480 = vshrl.u32 %v5479, 7
        %v5481 = vsub.s32 0, %v5480
        %v5482 = vrot.slane %v5477, %v5481
        %v5484 = vmul.f32 %v5482, %v5362
        %v5485 = vadd.f32 %v5322, %v5484
        %s5486 = scalar_lea.vmem %s0, 500
        %v5487 = vld [vmem:[%s5486] sm:$0x1]
        %v5489 = vlaneseq
        %v5490 = vshrl.u32 %v5489, 7
        %v5491 = vsub.s32 0, %v5490
        %v5492 = vrot.slane %v5487, %v5491
        %v5494 = vmul.f32 %v5492, %v5362
        %v5495 = vadd.f32 %v5332, %v5494
        %s5496 = scalar_lea.vmem %s0, 536
        %v5497 = vld [vmem:[%s5496] sm:$0x1]
        %v5499 = vlaneseq
        %v5500 = vshrl.u32 %v5499, 7
        %v5501 = vsub.s32 0, %v5500
        %v5502 = vrot.slane %v5497, %v5501
        %v5504 = vmul.f32 %v5502, %v5362
        %v5505 = vadd.f32 %v5342, %v5504
        %s5506 = scalar_lea.vmem %s0, 572
        %v5507 = vld [vmem:[%s5506] sm:$0x1]
        %v5509 = vlaneseq
        %v5510 = vshrl.u32 %v5509, 7
        %v5511 = vsub.s32 0, %v5510
        %v5512 = vrot.slane %v5507, %v5511
        %v5514 = vmul.f32 %v5512, %v5362
        %v5515 = vadd.f32 %v5352, %v5514
        %s5516 = scalar_lea.vmem %s0, 321
        %v5517 = vld [vmem:[%s5516] sm:$0x1]
        %v5519 = vlaneseq
        %v5520 = vshrl.u32 %v5519, 7
        %v5521 = vsub.s32 0, %v5520
        %v5522 = vrot.slane %v5517, %v5521
        %v5524 = vmul.f32 %v5522, %v4659
        %v5525 = vmul.f32 %v5522, %v4664
        %v5528 = vrot.slane %v5524, 2
        %v5529 = vrot.slane %v5525, 2
        %v5530 = vsel %vm1774, %v5528, %v5529
        %v5532 = vadd.f32 %v5445, %v5530
        %s5533 = scalar_lea.vmem %s0, 357
        %v5534 = vld [vmem:[%s5533] sm:$0x1]
        %v5536 = vlaneseq
        %v5537 = vshrl.u32 %v5536, 7
        %v5538 = vsub.s32 0, %v5537
        %v5539 = vrot.slane %v5534, %v5538
        %v5541 = vmul.f32 %v5539, %v4659
        %v5542 = vmul.f32 %v5539, %v4664
        %v5545 = vrot.slane %v5541, 2
        %v5546 = vrot.slane %v5542, 2
        %v5547 = vsel %vm1774, %v5545, %v5546
        %v5549 = vadd.f32 %v5455, %v5547
        %s5550 = scalar_lea.vmem %s0, 393
        %v5551 = vld [vmem:[%s5550] sm:$0x1]
        %v5553 = vlaneseq
        %v5554 = vshrl.u32 %v5553, 7
        %v5555 = vsub.s32 0, %v5554
        %v5556 = vrot.slane %v5551, %v5555
        %v5558 = vmul.f32 %v5556, %v4659
        %v5559 = vmul.f32 %v5556, %v4664
        %v5562 = vrot.slane %v5558, 2
        %v5563 = vrot.slane %v5559, 2
        %v5564 = vsel %vm1774, %v5562, %v5563
        %v5566 = vadd.f32 %v5465, %v5564
        %s5567 = scalar_lea.vmem %s0, 429
        %v5568 = vld [vmem:[%s5567] sm:$0x1]
        %v5570 = vlaneseq
        %v5571 = vshrl.u32 %v5570, 7
        %v5572 = vsub.s32 0, %v5571
        %v5573 = vrot.slane %v5568, %v5572
        %v5575 = vmul.f32 %v5573, %v4659
        %v5576 = vmul.f32 %v5573, %v4664
        %v5579 = vrot.slane %v5575, 2
        %v5580 = vrot.slane %v5576, 2
        %v5581 = vsel %vm1774, %v5579, %v5580
        %v5583 = vadd.f32 %v5475, %v5581
        %s5584 = scalar_lea.vmem %s0, 465
        %v5585 = vld [vmem:[%s5584] sm:$0x1]
        %v5587 = vlaneseq
        %v5588 = vshrl.u32 %v5587, 7
        %v5589 = vsub.s32 0, %v5588
        %v5590 = vrot.slane %v5585, %v5589
        %v5592 = vmul.f32 %v5590, %v4659
        %v5593 = vmul.f32 %v5590, %v4664
        %v5596 = vrot.slane %v5592, 2
        %v5597 = vrot.slane %v5593, 2
        %v5598 = vsel %vm1774, %v5596, %v5597
        %v5600 = vadd.f32 %v5485, %v5598
        %s5601 = scalar_lea.vmem %s0, 501
        %v5602 = vld [vmem:[%s5601] sm:$0x1]
        %v5604 = vlaneseq
        %v5605 = vshrl.u32 %v5604, 7
        %v5606 = vsub.s32 0, %v5605
        %v5607 = vrot.slane %v5602, %v5606
        %v5609 = vmul.f32 %v5607, %v4659
        %v5610 = vmul.f32 %v5607, %v4664
        %v5613 = vrot.slane %v5609, 2
        %v5614 = vrot.slane %v5610, 2
        %v5615 = vsel %vm1774, %v5613, %v5614
        %v5617 = vadd.f32 %v5495, %v5615
        %s5618 = scalar_lea.vmem %s0, 537
        %v5619 = vld [vmem:[%s5618] sm:$0x1]
        %v5621 = vlaneseq
        %v5622 = vshrl.u32 %v5621, 7
        %v5623 = vsub.s32 0, %v5622
        %v5624 = vrot.slane %v5619, %v5623
        %v5626 = vmul.f32 %v5624, %v4659
        %v5627 = vmul.f32 %v5624, %v4664
        %v5630 = vrot.slane %v5626, 2
        %v5631 = vrot.slane %v5627, 2
        %v5632 = vsel %vm1774, %v5630, %v5631
        %v5634 = vadd.f32 %v5505, %v5632
        %s5635 = scalar_lea.vmem %s0, 573
        %v5636 = vld [vmem:[%s5635] sm:$0x1]
        %v5638 = vlaneseq
        %v5639 = vshrl.u32 %v5638, 7
        %v5640 = vsub.s32 0, %v5639
        %v5641 = vrot.slane %v5636, %v5640
        %v5643 = vmul.f32 %v5641, %v4659
        %v5644 = vmul.f32 %v5641, %v4664
        %v5647 = vrot.slane %v5643, 2
        %v5648 = vrot.slane %v5644, 2
        %v5649 = vsel %vm1774, %v5647, %v5648
        %v5651 = vadd.f32 %v5515, %v5649
        %s5652 = scalar_lea.vmem %s0, 322
        %v5653 = vld [vmem:[%s5652] sm:$0x1]
        %v5655 = vlaneseq
        %v5656 = vshrl.u32 %v5655, 7
        %v5657 = vsub.s32 0, %v5656
        %v5658 = vrot.slane %v5653, %v5657
        %v5660 = vrot.slane %v4659, 2
        %v5661 = vrot.slane %v4664, 2
        %v5662 = vsel %vm1774, %v5660, %v5661
        %5663 = vrot.lane.b32.xlu0 %v5662, 126
        %v5664 = vpop.permute.xlu0 %5663
        %v5666 = vmul.f32 %v5658, %v5664
        %v5667 = vadd.f32 %v5532, %v5666
        %s5668 = scalar_lea.vmem %s0, 358
        %v5669 = vld [vmem:[%s5668] sm:$0x1]
        %v5671 = vlaneseq
        %v5672 = vshrl.u32 %v5671, 7
        %v5673 = vsub.s32 0, %v5672
        %v5674 = vrot.slane %v5669, %v5673
        %v5676 = vmul.f32 %v5674, %v5664
        %v5677 = vadd.f32 %v5549, %v5676
        %s5678 = scalar_lea.vmem %s0, 394
        %v5679 = vld [vmem:[%s5678] sm:$0x1]
        %v5681 = vlaneseq
        %v5682 = vshrl.u32 %v5681, 7
        %v5683 = vsub.s32 0, %v5682
        %v5684 = vrot.slane %v5679, %v5683
        %v5686 = vmul.f32 %v5684, %v5664
        %v5687 = vadd.f32 %v5566, %v5686
        %s5688 = scalar_lea.vmem %s0, 430
        %v5689 = vld [vmem:[%s5688] sm:$0x1]
        %v5691 = vlaneseq
        %v5692 = vshrl.u32 %v5691, 7
        %v5693 = vsub.s32 0, %v5692
        %v5694 = vrot.slane %v5689, %v5693
        %v5696 = vmul.f32 %v5694, %v5664
        %v5697 = vadd.f32 %v5583, %v5696
        %s5698 = scalar_lea.vmem %s0, 466
        %v5699 = vld [vmem:[%s5698] sm:$0x1]
        %v5701 = vlaneseq
        %v5702 = vshrl.u32 %v5701, 7
        %v5703 = vsub.s32 0, %v5702
        %v5704 = vrot.slane %v5699, %v5703
        %v5706 = vmul.f32 %v5704, %v5664
        %v5707 = vadd.f32 %v5600, %v5706
        %s5708 = scalar_lea.vmem %s0, 502
        %v5709 = vld [vmem:[%s5708] sm:$0x1]
        %v5711 = vlaneseq
        %v5712 = vshrl.u32 %v5711, 7
        %v5713 = vsub.s32 0, %v5712
        %v5714 = vrot.slane %v5709, %v5713
        %v5716 = vmul.f32 %v5714, %v5664
        %v5717 = vadd.f32 %v5617, %v5716
        %s5718 = scalar_lea.vmem %s0, 538
        %v5719 = vld [vmem:[%s5718] sm:$0x1]
        %v5721 = vlaneseq
        %v5722 = vshrl.u32 %v5721, 7
        %v5723 = vsub.s32 0, %v5722
        %v5724 = vrot.slane %v5719, %v5723
        %v5726 = vmul.f32 %v5724, %v5664
        %v5727 = vadd.f32 %v5634, %v5726
        %s5728 = scalar_lea.vmem %s0, 574
        %v5729 = vld [vmem:[%s5728] sm:$0x1]
        %v5731 = vlaneseq
        %v5732 = vshrl.u32 %v5731, 7
        %v5733 = vsub.s32 0, %v5732
        %v5734 = vrot.slane %v5729, %v5733
        %v5736 = vmul.f32 %v5734, %v5664
        %v5737 = vadd.f32 %v5651, %v5736
        %s5738 = scalar_lea.vmem %s0, 323
        %v5739 = vld [vmem:[%s5738] sm:$0x1]
        %v5741 = vlaneseq
        %v5742 = vshrl.u32 %v5741, 7
        %v5743 = vsub.s32 0, %v5742
        %v5744 = vrot.slane %v5739, %v5743
        %5746 = vrot.lane.b32.xlu0 %v5662, 124
        %v5747 = vpop.permute.xlu0 %5746
        %v5749 = vmul.f32 %v5744, %v5747
        %v5750 = vadd.f32 %v5667, %v5749
        %s5751 = scalar_lea.vmem %s0, 359
        %v5752 = vld [vmem:[%s5751] sm:$0x1]
        %v5754 = vlaneseq
        %v5755 = vshrl.u32 %v5754, 7
        %v5756 = vsub.s32 0, %v5755
        %v5757 = vrot.slane %v5752, %v5756
        %v5759 = vmul.f32 %v5757, %v5747
        %v5760 = vadd.f32 %v5677, %v5759
        %s5761 = scalar_lea.vmem %s0, 395
        %v5762 = vld [vmem:[%s5761] sm:$0x1]
        %v5764 = vlaneseq
        %v5765 = vshrl.u32 %v5764, 7
        %v5766 = vsub.s32 0, %v5765
        %v5767 = vrot.slane %v5762, %v5766
        %v5769 = vmul.f32 %v5767, %v5747
        %v5770 = vadd.f32 %v5687, %v5769
        %s5771 = scalar_lea.vmem %s0, 431
        %v5772 = vld [vmem:[%s5771] sm:$0x1]
        %v5774 = vlaneseq
        %v5775 = vshrl.u32 %v5774, 7
        %v5776 = vsub.s32 0, %v5775
        %v5777 = vrot.slane %v5772, %v5776
        %v5779 = vmul.f32 %v5777, %v5747
        %v5780 = vadd.f32 %v5697, %v5779
        %s5781 = scalar_lea.vmem %s0, 467
        %v5782 = vld [vmem:[%s5781] sm:$0x1]
        %v5784 = vlaneseq
        %v5785 = vshrl.u32 %v5784, 7
        %v5786 = vsub.s32 0, %v5785
        %v5787 = vrot.slane %v5782, %v5786
        %v5789 = vmul.f32 %v5787, %v5747
        %v5790 = vadd.f32 %v5707, %v5789
        %s5791 = scalar_lea.vmem %s0, 503
        %v5792 = vld [vmem:[%s5791] sm:$0x1]
        %v5794 = vlaneseq
        %v5795 = vshrl.u32 %v5794, 7
        %v5796 = vsub.s32 0, %v5795
        %v5797 = vrot.slane %v5792, %v5796
        %v5799 = vmul.f32 %v5797, %v5747
        %v5800 = vadd.f32 %v5717, %v5799
        %s5801 = scalar_lea.vmem %s0, 539
        %v5802 = vld [vmem:[%s5801] sm:$0x1]
        %v5804 = vlaneseq
        %v5805 = vshrl.u32 %v5804, 7
        %v5806 = vsub.s32 0, %v5805
        %v5807 = vrot.slane %v5802, %v5806
        %v5809 = vmul.f32 %v5807, %v5747
        %v5810 = vadd.f32 %v5727, %v5809
        %s5811 = scalar_lea.vmem %s0, 575
        %v5812 = vld [vmem:[%s5811] sm:$0x1]
        %v5814 = vlaneseq
        %v5815 = vshrl.u32 %v5814, 7
        %v5816 = vsub.s32 0, %v5815
        %v5817 = vrot.slane %v5812, %v5816
        %v5819 = vmul.f32 %v5817, %v5747
        %v5820 = vadd.f32 %v5737, %v5819
        %v5821 = vld [vmem:[%s3] sm:$0xff]
        %v5822 = vld [vmem:[%s3 + $0x8] sm:$0xff]
        %v5824 = vsel %vm831, %v5821, 0
        %v5827 = vsel %vm831, %v5822, 0
        %5829 = vmatprep.subr.mxu0 0.0
        %5830 = vmatpush1.msra.mxu0 %v5365
        %5831 = vmatprep.subr.mxu0 0.0
        %5832 = vmatpush1.msra.mxu0 %v5750
        %5833 = vmatprep.subr.mxu0 0.0
        %5834 = vmatpush1.msra.mxu0 0.0
        %5835 = vmatprep.subr.mxu0 0.0
        %5836 = vmatpush1.msra.mxu0 0.0
        %5837 = vmatprep.subr.mxu0 0.0
        %5838 = vmatpush1.msra.mxu0 0.0
        %5839 = vmatprep.subr.mxu0 0.0
        %5840 = vmatpush1.msra.mxu0 0.0
        %5841 = vmatprep.subr.mxu0 0.0
        %5842 = vmatpush1.msra.mxu0 0.0
        %5843 = vmatprep.subr.mxu0 0.0
        %5844 = vmatpush1.msra.mxu0 0.0
        %5845 = vmatprep.subr.mxu0 0.0
        %5846 = vmatpush1.msra.mxu0 0.0
        %5847 = vmatprep.subr.mxu0 0.0
        %5848 = vmatpush1.msra.mxu0 0.0
        %5849 = vmatprep.subr.mxu0 0.0
        %5850 = vmatpush1.msra.mxu0 0.0
        %5851 = vmatprep.subr.mxu0 0.0
        %5852 = vmatpush1.msra.mxu0 0.0
        %5853 = vmatprep.subr.mxu0 0.0
        %5854 = vmatpush1.msra.mxu0 0.0
        %5855 = vmatprep.subr.mxu0 0.0
        %5856 = vmatpush1.msra.mxu0 0.0
        %5857 = vmatprep.subr.mxu0 0.0
        %5858 = vmatpush1.msra.mxu0 0.0
        %5859 = vmatprep.subr.mxu0 0.0
        %5860 = vmatpush1.msra.mxu0 0.0
        %5861 = vmatprep.subr.mxu0 0.0
        %5862 = vmatpush1.msra.mxu0 0.0
        %5863 = vmatprep.subr.mxu0 0.0
        %5864 = vmatpush1.msra.mxu0 0.0
        %5865 = vmatprep.subr.mxu0 0.0
        %5866 = vmatpush1.msra.mxu0 0.0
        %5867 = vmatprep.subr.mxu0 0.0
        %5868 = vmatpush1.msra.mxu0 0.0
        %5869 = vmatprep.subr.mxu0 0.0
        %5870 = vmatpush1.msra.mxu0 0.0
        %5871 = vmatprep.subr.mxu0 0.0
        %5872 = vmatpush1.msra.mxu0 0.0
        %5873 = vmatprep.subr.mxu0 0.0
        %5874 = vmatpush1.msra.mxu0 0.0
        %5875 = vmatprep.subr.mxu0 0.0
        %5876 = vmatpush1.msra.mxu0 0.0
        %5877 = vmatprep.subr.mxu0 0.0
        %5878 = vmatpush1.msra.mxu0 0.0
        %5879 = vmatprep.subr.mxu0 0.0
        %5880 = vmatpush1.msra.mxu0 0.0
        %5881 = vmatprep.subr.mxu0 0.0
        %5882 = vmatpush1.msra.mxu0 0.0
        %5883 = vmatprep.subr.mxu0 0.0
        %5884 = vmatpush1.msra.mxu0 0.0
        %5885 = vmatprep.subr.mxu0 0.0
        %5886 = vmatpush1.msra.mxu0 0.0
        %5887 = vmatprep.subr.mxu0 0.0
        %5888 = vmatpush1.msra.mxu0 0.0
        %5889 = vmatprep.subr.mxu0 0.0
        %5890 = vmatpush1.msra.mxu0 0.0
        %5891 = vmatprep.subr.mxu0 0.0
        %5892 = vmatpush1.msra.mxu0 0.0
        %5893 = vmatprep.mubr.f32.mxu0 0.0
        %5894 = vmatmul.mubr.f32.gmra.mrb[0].mxu0 %v5824
        %v5895 = vpop.f32.mrb[0].mxu0
        %v5896 = vadd.f32 0.0, %v5895
        %v5897 = vpop.f32.mrb[0].mxu0
        %5898 = vmatprep.mubr.f32.mxu0 0.0
        %5899 = vmatmul.mubr.f32.gmra.mrb[0].mxu0 %v5827
        %v5900 = vpop.f32.mrb[0].mxu0
        %v5901 = vadd.f32 0.0, %v5900
        %v5902 = vpop.f32.mrb[0].mxu0
        %5903 = vdwg.mxu0
        %vm5904 = vcmask 261120
        %5905 = vst.msk [vmem:[%s498] sm:$0xff] %vm5904, %v5896
        %5906 = vst.msk [vmem:[%s498 + $0x8] sm:$0xff] %vm5904, %v5901
        %5907 = vmatprep.subr.mxu0 0.0
        %5908 = vmatpush1.msra.mxu0 %v5375
        %5909 = vmatprep.subr.mxu0 0.0
        %5910 = vmatpush1.msra.mxu0 %v5760
        %5911 = vmatprep.subr.mxu0 0.0
        %5912 = vmatpush1.msra.mxu0 0.0
        %5913 = vmatprep.subr.mxu0 0.0
        %5914 = vmatpush1.msra.mxu0 0.0
        %5915 = vmatprep.subr.mxu0 0.0
        %5916 = vmatpush1.msra.mxu0 0.0
        %5917 = vmatprep.subr.mxu0 0.0
        %5918 = vmatpush1.msra.mxu0 0.0
        %5919 = vmatprep.subr.mxu0 0.0
        %5920 = vmatpush1.msra.mxu0 0.0
        %5921 = vmatprep.subr.mxu0 0.0
        %5922 = vmatpush1.msra.mxu0 0.0
        %5923 = vmatprep.subr.mxu0 0.0
        %5924 = vmatpush1.msra.mxu0 0.0
        %5925 = vmatprep.subr.mxu0 0.0
        %5926 = vmatpush1.msra.mxu0 0.0
        %5927 = vmatprep.subr.mxu0 0.0
        %5928 = vmatpush1.msra.mxu0 0.0
        %5929 = vmatprep.subr.mxu0 0.0
        %5930 = vmatpush1.msra.mxu0 0.0
        %5931 = vmatprep.subr.mxu0 0.0
        %5932 = vmatpush1.msra.mxu0 0.0
        %5933 = vmatprep.subr.mxu0 0.0
        %5934 = vmatpush1.msra.mxu0 0.0
        %5935 = vmatprep.subr.mxu0 0.0
        %5936 = vmatpush1.msra.mxu0 0.0
        %5937 = vmatprep.subr.mxu0 0.0
        %5938 = vmatpush1.msra.mxu0 0.0
        %5939 = vmatprep.subr.mxu0 0.0
        %5940 = vmatpush1.msra.mxu0 0.0
        %5941 = vmatprep.subr.mxu0 0.0
        %5942 = vmatpush1.msra.mxu0 0.0
        %5943 = vmatprep.subr.mxu0 0.0
        %5944 = vmatpush1.msra.mxu0 0.0
        %5945 = vmatprep.subr.mxu0 0.0
        %5946 = vmatpush1.msra.mxu0 0.0
        %5947 = vmatprep.subr.mxu0 0.0
        %5948 = vmatpush1.msra.mxu0 0.0
        %5949 = vmatprep.subr.mxu0 0.0
        %5950 = vmatpush1.msra.mxu0 0.0
        %5951 = vmatprep.subr.mxu0 0.0
        %5952 = vmatpush1.msra.mxu0 0.0
        %5953 = vmatprep.subr.mxu0 0.0
        %5954 = vmatpush1.msra.mxu0 0.0
        %5955 = vmatprep.subr.mxu0 0.0
        %5956 = vmatpush1.msra.mxu0 0.0
        %5957 = vmatprep.subr.mxu0 0.0
        %5958 = vmatpush1.msra.mxu0 0.0
        %5959 = vmatprep.subr.mxu0 0.0
        %5960 = vmatpush1.msra.mxu0 0.0
        %5961 = vmatprep.subr.mxu0 0.0
        %5962 = vmatpush1.msra.mxu0 0.0
        %5963 = vmatprep.subr.mxu0 0.0
        %5964 = vmatpush1.msra.mxu0 0.0
        %5965 = vmatprep.subr.mxu0 0.0
        %5966 = vmatpush1.msra.mxu0 0.0
        %5967 = vmatprep.subr.mxu0 0.0
        %5968 = vmatpush1.msra.mxu0 0.0
        %5969 = vmatprep.subr.mxu0 0.0
        %5970 = vmatpush1.msra.mxu0 0.0
        %5971 = vmatprep.mubr.f32.mxu0 0.0
        %5972 = vmatmul.mubr.f32.gmra.mrb[0].mxu0 %v5824
        %v5973 = vpop.f32.mrb[0].mxu0
        %v5974 = vadd.f32 0.0, %v5973
        %v5975 = vpop.f32.mrb[0].mxu0
        %5976 = vmatprep.mubr.f32.mxu0 0.0
        %5977 = vmatmul.mubr.f32.gmra.mrb[0].mxu0 %v5827
        %v5978 = vpop.f32.mrb[0].mxu0
        %v5979 = vadd.f32 0.0, %v5978
        %v5980 = vpop.f32.mrb[0].mxu0
        %5981 = vdwg.mxu0
        %s5982 = scalar_lea.vmem %s498, 16 [#allocation5]
        %5983 = vst.msk [vmem:[%s5982] sm:$0xff] %vm5904, %v5974
        %5984 = vst.msk [vmem:[%s5982 + $0x8] sm:$0xff] %vm5904, %v5979
        %5985 = vmatprep.subr.mxu0 0.0
        %5986 = vmatpush1.msra.mxu0 %v5385
        %5987 = vmatprep.subr.mxu0 0.0
        %5988 = vmatpush1.msra.mxu0 %v5770
        %5989 = vmatprep.subr.mxu0 0.0
        %5990 = vmatpush1.msra.mxu0 0.0
        %5991 = vmatprep.subr.mxu0 0.0
        %5992 = vmatpush1.msra.mxu0 0.0
        %5993 = vmatprep.subr.mxu0 0.0
        %5994 = vmatpush1.msra.mxu0 0.0
        %5995 = vmatprep.subr.mxu0 0.0
        %5996 = vmatpush1.msra.mxu0 0.0
        %5997 = vmatprep.subr.mxu0 0.0
        %5998 = vmatpush1.msra.mxu0 0.0
        %5999 = vmatprep.subr.mxu0 0.0
        %6000 = vmatpush1.msra.mxu0 0.0
        %6001 = vmatprep.subr.mxu0 0.0
        %6002 = vmatpush1.msra.mxu0 0.0
        %6003 = vmatprep.subr.mxu0 0.0
        %6004 = vmatpush1.msra.mxu0 0.0
        %6005 = vmatprep.subr.mxu0 0.0
        %6006 = vmatpush1.msra.mxu0 0.0
        %6007 = vmatprep.subr.mxu0 0.0
        %6008 = vmatpush1.msra.mxu0 0.0
        %6009 = vmatprep.subr.mxu0 0.0
        %6010 = vmatpush1.msra.mxu0 0.0
        %6011 = vmatprep.subr.mxu0 0.0
        %6012 = vmatpush1.msra.mxu0 0.0
        %6013 = vmatprep.subr.mxu0 0.0
        %6014 = vmatpush1.msra.mxu0 0.0
        %6015 = vmatprep.subr.mxu0 0.0
        %6016 = vmatpush1.msra.mxu0 0.0
        %6017 = vmatprep.subr.mxu0 0.0
        %6018 = vmatpush1.msra.mxu0 0.0
        %6019 = vmatprep.subr.mxu0 0.0
        %6020 = vmatpush1.msra.mxu0 0.0
        %6021 = vmatprep.subr.mxu0 0.0
        %6022 = vmatpush1.msra.mxu0 0.0
        %6023 = vmatprep.subr.mxu0 0.0
        %6024 = vmatpush1.msra.mxu0 0.0
        %6025 = vmatprep.subr.mxu0 0.0
        %6026 = vmatpush1.msra.mxu0 0.0
        %6027 = vmatprep.subr.mxu0 0.0
        %6028 = vmatpush1.msra.mxu0 0.0
        %6029 = vmatprep.subr.mxu0 0.0
        %6030 = vmatpush1.msra.mxu0 0.0
        %6031 = vmatprep.subr.mxu0 0.0
        %6032 = vmatpush1.msra.mxu0 0.0
        %6033 = vmatprep.subr.mxu0 0.0
        %6034 = vmatpush1.msra.mxu0 0.0
        %6035 = vmatprep.subr.mxu0 0.0
        %6036 = vmatpush1.msra.mxu0 0.0
        %6037 = vmatprep.subr.mxu0 0.0
        %6038 = vmatpush1.msra.mxu0 0.0
        %6039 = vmatprep.subr.mxu0 0.0
        %6040 = vmatpush1.msra.mxu0 0.0
        %6041 = vmatprep.subr.mxu0 0.0
        %6042 = vmatpush1.msra.mxu0 0.0
        %6043 = vmatprep.subr.mxu0 0.0
        %6044 = vmatpush1.msra.mxu0 0.0
        %6045 = vmatprep.subr.mxu0 0.0
        %6046 = vmatpush1.msra.mxu0 0.0
        %6047 = vmatprep.subr.mxu0 0.0
        %6048 = vmatpush1.msra.mxu0 0.0
        %6049 = vmatprep.mubr.f32.mxu0 0.0
        %6050 = vmatmul.mubr.f32.gmra.mrb[0].mxu0 %v5824
        %v6051 = vpop.f32.mrb[0].mxu0
        %v6052 = vadd.f32 0.0, %v6051
        %v6053 = vpop.f32.mrb[0].mxu0
        %6054 = vmatprep.mubr.f32.mxu0 0.0
        %6055 = vmatmul.mubr.f32.gmra.mrb[0].mxu0 %v5827
        %v6056 = vpop.f32.mrb[0].mxu0
        %v6057 = vadd.f32 0.0, %v6056
        %v6058 = vpop.f32.mrb[0].mxu0
        %6059 = vdwg.mxu0
        %s6060 = scalar_lea.vmem %s498, 32 [#allocation5]
        %6061 = vst.msk [vmem:[%s6060] sm:$0xff] %vm5904, %v6052
        %6062 = vst.msk [vmem:[%s6060 + $0x8] sm:$0xff] %vm5904, %v6057
        %6063 = vmatprep.subr.mxu0 0.0
        %6064 = vmatpush1.msra.mxu0 %v5395
        %6065 = vmatprep.subr.mxu0 0.0
        %6066 = vmatpush1.msra.mxu0 %v5780
        %6067 = vmatprep.subr.mxu0 0.0
        %6068 = vmatpush1.msra.mxu0 0.0
        %6069 = vmatprep.subr.mxu0 0.0
        %6070 = vmatpush1.msra.mxu0 0.0
        %6071 = vmatprep.subr.mxu0 0.0
        %6072 = vmatpush1.msra.mxu0 0.0
        %6073 = vmatprep.subr.mxu0 0.0
        %6074 = vmatpush1.msra.mxu0 0.0
        %6075 = vmatprep.subr.mxu0 0.0
        %6076 = vmatpush1.msra.mxu0 0.0
        %6077 = vmatprep.subr.mxu0 0.0
        %6078 = vmatpush1.msra.mxu0 0.0
        %6079 = vmatprep.subr.mxu0 0.0
        %6080 = vmatpush1.msra.mxu0 0.0
        %6081 = vmatprep.subr.mxu0 0.0
        %6082 = vmatpush1.msra.mxu0 0.0
        %6083 = vmatprep.subr.mxu0 0.0
        %6084 = vmatpush1.msra.mxu0 0.0
        %6085 = vmatprep.subr.mxu0 0.0
        %6086 = vmatpush1.msra.mxu0 0.0
        %6087 = vmatprep.subr.mxu0 0.0
        %6088 = vmatpush1.msra.mxu0 0.0
        %6089 = vmatprep.subr.mxu0 0.0
        %6090 = vmatpush1.msra.mxu0 0.0
        %6091 = vmatprep.subr.mxu0 0.0
        %6092 = vmatpush1.msra.mxu0 0.0
        %6093 = vmatprep.subr.mxu0 0.0
        %6094 = vmatpush1.msra.mxu0 0.0
        %6095 = vmatprep.subr.mxu0 0.0
        %6096 = vmatpush1.msra.mxu0 0.0
        %6097 = vmatprep.subr.mxu0 0.0
        %6098 = vmatpush1.msra.mxu0 0.0
        %6099 = vmatprep.subr.mxu0 0.0
        %6100 = vmatpush1.msra.mxu0 0.0
        %6101 = vmatprep.subr.mxu0 0.0
        %6102 = vmatpush1.msra.mxu0 0.0
        %6103 = vmatprep.subr.mxu0 0.0
        %6104 = vmatpush1.msra.mxu0 0.0
        %6105 = vmatprep.subr.mxu0 0.0
        %6106 = vmatpush1.msra.mxu0 0.0
        %6107 = vmatprep.subr.mxu0 0.0
        %6108 = vmatpush1.msra.mxu0 0.0
        %6109 = vmatprep.subr.mxu0 0.0
        %6110 = vmatpush1.msra.mxu0 0.0
        %6111 = vmatprep.subr.mxu0 0.0
        %6112 = vmatpush1.msra.mxu0 0.0
        %6113 = vmatprep.subr.mxu0 0.0
        %6114 = vmatpush1.msra.mxu0 0.0
        %6115 = vmatprep.subr.mxu0 0.0
        %6116 = vmatpush1.msra.mxu0 0.0
        %6117 = vmatprep.subr.mxu0 0.0
        %6118 = vmatpush1.msra.mxu0 0.0
        %6119 = vmatprep.subr.mxu0 0.0
        %6120 = vmatpush1.msra.mxu0 0.0
        %6121 = vmatprep.subr.mxu0 0.0
        %6122 = vmatpush1.msra.mxu0 0.0
        %6123 = vmatprep.subr.mxu0 0.0
        %6124 = vmatpush1.msra.mxu0 0.0
        %6125 = vmatprep.subr.mxu0 0.0
        %6126 = vmatpush1.msra.mxu0 0.0
        %6127 = vmatprep.mubr.f32.mxu0 0.0
        %6128 = vmatmul.mubr.f32.gmra.mrb[0].mxu0 %v5824
        %v6129 = vpop.f32.mrb[0].mxu0
        %v6130 = vadd.f32 0.0, %v6129
        %v6131 = vpop.f32.mrb[0].mxu0
        %6132 = vmatprep.mubr.f32.mxu0 0.0
        %6133 = vmatmul.mubr.f32.gmra.mrb[0].mxu0 %v5827
        %v6134 = vpop.f32.mrb[0].mxu0
        %v6135 = vadd.f32 0.0, %v6134
        %v6136 = vpop.f32.mrb[0].mxu0
        %6137 = vdwg.mxu0
        %s6138 = scalar_lea.vmem %s498, 48 [#allocation5]
        %6139 = vst.msk [vmem:[%s6138] sm:$0xff] %vm5904, %v6130
        %6140 = vst.msk [vmem:[%s6138 + $0x8] sm:$0xff] %vm5904, %v6135
        %6141 = vmatprep.subr.mxu0 0.0
        %6142 = vmatpush1.msra.mxu0 %v5405
        %6143 = vmatprep.subr.mxu0 0.0
        %6144 = vmatpush1.msra.mxu0 %v5790
        %6145 = vmatprep.subr.mxu0 0.0
        %6146 = vmatpush1.msra.mxu0 0.0
        %6147 = vmatprep.subr.mxu0 0.0
        %6148 = vmatpush1.msra.mxu0 0.0
        %6149 = vmatprep.subr.mxu0 0.0
        %6150 = vmatpush1.msra.mxu0 0.0
        %6151 = vmatprep.subr.mxu0 0.0
        %6152 = vmatpush1.msra.mxu0 0.0
        %6153 = vmatprep.subr.mxu0 0.0
        %6154 = vmatpush1.msra.mxu0 0.0
        %6155 = vmatprep.subr.mxu0 0.0
        %6156 = vmatpush1.msra.mxu0 0.0
        %6157 = vmatprep.subr.mxu0 0.0
        %6158 = vmatpush1.msra.mxu0 0.0
        %6159 = vmatprep.subr.mxu0 0.0
        %6160 = vmatpush1.msra.mxu0 0.0
        %6161 = vmatprep.subr.mxu0 0.0
        %6162 = vmatpush1.msra.mxu0 0.0
        %6163 = vmatprep.subr.mxu0 0.0
        %6164 = vmatpush1.msra.mxu0 0.0
        %6165 = vmatprep.subr.mxu0 0.0
        %6166 = vmatpush1.msra.mxu0 0.0
        %6167 = vmatprep.subr.mxu0 0.0
        %6168 = vmatpush1.msra.mxu0 0.0
        %6169 = vmatprep.subr.mxu0 0.0
        %6170 = vmatpush1.msra.mxu0 0.0
        %6171 = vmatprep.subr.mxu0 0.0
        %6172 = vmatpush1.msra.mxu0 0.0
        %6173 = vmatprep.subr.mxu0 0.0
        %6174 = vmatpush1.msra.mxu0 0.0
        %6175 = vmatprep.subr.mxu0 0.0
        %6176 = vmatpush1.msra.mxu0 0.0
        %6177 = vmatprep.subr.mxu0 0.0
        %6178 = vmatpush1.msra.mxu0 0.0
        %6179 = vmatprep.subr.mxu0 0.0
        %6180 = vmatpush1.msra.mxu0 0.0
        %6181 = vmatprep.subr.mxu0 0.0
        %6182 = vmatpush1.msra.mxu0 0.0
        %6183 = vmatprep.subr.mxu0 0.0
        %6184 = vmatpush1.msra.mxu0 0.0
        %6185 = vmatprep.subr.mxu0 0.0
        %6186 = vmatpush1.msra.mxu0 0.0
        %6187 = vmatprep.subr.mxu0 0.0
        %6188 = vmatpush1.msra.mxu0 0.0
        %6189 = vmatprep.subr.mxu0 0.0
        %6190 = vmatpush1.msra.mxu0 0.0
        %6191 = vmatprep.subr.mxu0 0.0
        %6192 = vmatpush1.msra.mxu0 0.0
        %6193 = vmatprep.subr.mxu0 0.0
        %6194 = vmatpush1.msra.mxu0 0.0
        %6195 = vmatprep.subr.mxu0 0.0
        %6196 = vmatpush1.msra.mxu0 0.0
        %6197 = vmatprep.subr.mxu0 0.0
        %6198 = vmatpush1.msra.mxu0 0.0
        %6199 = vmatprep.subr.mxu0 0.0
        %6200 = vmatpush1.msra.mxu0 0.0
        %6201 = vmatprep.subr.mxu0 0.0
        %6202 = vmatpush1.msra.mxu0 0.0
        %6203 = vmatprep.subr.mxu0 0.0
        %6204 = vmatpush1.msra.mxu0 0.0
        %6205 = vmatprep.mubr.f32.mxu0 0.0
        %6206 = vmatmul.mubr.f32.gmra.mrb[0].mxu0 %v5824
        %v6207 = vpop.f32.mrb[0].mxu0
        %v6208 = vadd.f32 0.0, %v6207
        %v6209 = vpop.f32.mrb[0].mxu0
        %6210 = vmatprep.mubr.f32.mxu0 0.0
        %6211 = vmatmul.mubr.f32.gmra.mrb[0].mxu0 %v5827
        %v6212 = vpop.f32.mrb[0].mxu0
        %v6213 = vadd.f32 0.0, %v6212
        %v6214 = vpop.f32.mrb[0].mxu0
        %6215 = vdwg.mxu0
        %s6216 = scalar_lea.vmem %s498, 64 [#allocation5]
        %6217 = vst.msk [vmem:[%s6216] sm:$0xff] %vm5904, %v6208
        %6218 = vst.msk [vmem:[%s6216 + $0x8] sm:$0xff] %vm5904, %v6213
        %6219 = vmatprep.subr.mxu0 0.0
        %6220 = vmatpush1.msra.mxu0 %v5415
        %6221 = vmatprep.subr.mxu0 0.0
        %6222 = vmatpush1.msra.mxu0 %v5800
        %6223 = vmatprep.subr.mxu0 0.0
        %6224 = vmatpush1.msra.mxu0 0.0
        %6225 = vmatprep.subr.mxu0 0.0
        %6226 = vmatpush1.msra.mxu0 0.0
        %6227 = vmatprep.subr.mxu0 0.0
        %6228 = vmatpush1.msra.mxu0 0.0
        %6229 = vmatprep.subr.mxu0 0.0
        %6230 = vmatpush1.msra.mxu0 0.0
        %6231 = vmatprep.subr.mxu0 0.0
        %6232 = vmatpush1.msra.mxu0 0.0
        %6233 = vmatprep.subr.mxu0 0.0
        %6234 = vmatpush1.msra.mxu0 0.0
        %6235 = vmatprep.subr.mxu0 0.0
        %6236 = vmatpush1.msra.mxu0 0.0
        %6237 = vmatprep.subr.mxu0 0.0
        %6238 = vmatpush1.msra.mxu0 0.0
        %6239 = vmatprep.subr.mxu0 0.0
        %6240 = vmatpush1.msra.mxu0 0.0
        %6241 = vmatprep.subr.mxu0 0.0
        %6242 = vmatpush1.msra.mxu0 0.0
        %6243 = vmatprep.subr.mxu0 0.0
        %6244 = vmatpush1.msra.mxu0 0.0
        %6245 = vmatprep.subr.mxu0 0.0
        %6246 = vmatpush1.msra.mxu0 0.0
        %6247 = vmatprep.subr.mxu0 0.0
        %6248 = vmatpush1.msra.mxu0 0.0
        %6249 = vmatprep.subr.mxu0 0.0
        %6250 = vmatpush1.msra.mxu0 0.0
        %6251 = vmatprep.subr.mxu0 0.0
        %6252 = vmatpush1.msra.mxu0 0.0
        %6253 = vmatprep.subr.mxu0 0.0
        %6254 = vmatpush1.msra.mxu0 0.0
        %6255 = vmatprep.subr.mxu0 0.0
        %6256 = vmatpush1.msra.mxu0 0.0
        %6257 = vmatprep.subr.mxu0 0.0
        %6258 = vmatpush1.msra.mxu0 0.0
        %6259 = vmatprep.subr.mxu0 0.0
        %6260 = vmatpush1.msra.mxu0 0.0
        %6261 = vmatprep.subr.mxu0 0.0
        %6262 = vmatpush1.msra.mxu0 0.0
        %6263 = vmatprep.subr.mxu0 0.0
        %6264 = vmatpush1.msra.mxu0 0.0
        %6265 = vmatprep.subr.mxu0 0.0
        %6266 = vmatpush1.msra.mxu0 0.0
        %6267 = vmatprep.subr.mxu0 0.0
        %6268 = vmatpush1.msra.mxu0 0.0
        %6269 = vmatprep.subr.mxu0 0.0
        %6270 = vmatpush1.msra.mxu0 0.0
        %6271 = vmatprep.subr.mxu0 0.0
        %6272 = vmatpush1.msra.mxu0 0.0
        %6273 = vmatprep.subr.mxu0 0.0
        %6274 = vmatpush1.msra.mxu0 0.0
        %6275 = vmatprep.subr.mxu0 0.0
        %6276 = vmatpush1.msra.mxu0 0.0
        %6277 = vmatprep.subr.mxu0 0.0
        %6278 = vmatpush1.msra.mxu0 0.0
        %6279 = vmatprep.subr.mxu0 0.0
        %6280 = vmatpush1.msra.mxu0 0.0
        %6281 = vmatprep.subr.mxu0 0.0
        %6282 = vmatpush1.msra.mxu0 0.0
        %6283 = vmatprep.mubr.f32.mxu0 0.0
        %6284 = vmatmul.mubr.f32.gmra.mrb[0].mxu0 %v5824
        %v6285 = vpop.f32.mrb[0].mxu0
        %v6286 = vadd.f32 0.0, %v6285
        %v6287 = vpop.f32.mrb[0].mxu0
        %6288 = vmatprep.mubr.f32.mxu0 0.0
        %6289 = vmatmul.mubr.f32.gmra.mrb[0].mxu0 %v5827
        %v6290 = vpop.f32.mrb[0].mxu0
        %v6291 = vadd.f32 0.0, %v6290
        %v6292 = vpop.f32.mrb[0].mxu0
        %6293 = vdwg.mxu0
        %s6294 = scalar_lea.vmem %s498, 80 [#allocation5]
        %6295 = vst.msk [vmem:[%s6294] sm:$0xff] %vm5904, %v6286
        %6296 = vst.msk [vmem:[%s6294 + $0x8] sm:$0xff] %vm5904, %v6291
        %6297 = vmatprep.subr.mxu0 0.0
        %6298 = vmatpush1.msra.mxu0 %v5425
        %6299 = vmatprep.subr.mxu0 0.0
        %6300 = vmatpush1.msra.mxu0 %v5810
        %6301 = vmatprep.subr.mxu0 0.0
        %6302 = vmatpush1.msra.mxu0 0.0
        %6303 = vmatprep.subr.mxu0 0.0
        %6304 = vmatpush1.msra.mxu0 0.0
        %6305 = vmatprep.subr.mxu0 0.0
        %6306 = vmatpush1.msra.mxu0 0.0
        %6307 = vmatprep.subr.mxu0 0.0
        %6308 = vmatpush1.msra.mxu0 0.0
        %6309 = vmatprep.subr.mxu0 0.0
        %6310 = vmatpush1.msra.mxu0 0.0
        %6311 = vmatprep.subr.mxu0 0.0
        %6312 = vmatpush1.msra.mxu0 0.0
        %6313 = vmatprep.subr.mxu0 0.0
        %6314 = vmatpush1.msra.mxu0 0.0
        %6315 = vmatprep.subr.mxu0 0.0
        %6316 = vmatpush1.msra.mxu0 0.0
        %6317 = vmatprep.subr.mxu0 0.0
        %6318 = vmatpush1.msra.mxu0 0.0
        %6319 = vmatprep.subr.mxu0 0.0
        %6320 = vmatpush1.msra.mxu0 0.0
        %6321 = vmatprep.subr.mxu0 0.0
        %6322 = vmatpush1.msra.mxu0 0.0
        %6323 = vmatprep.subr.mxu0 0.0
        %6324 = vmatpush1.msra.mxu0 0.0
        %6325 = vmatprep.subr.mxu0 0.0
        %6326 = vmatpush1.msra.mxu0 0.0
        %6327 = vmatprep.subr.mxu0 0.0
        %6328 = vmatpush1.msra.mxu0 0.0
        %6329 = vmatprep.subr.mxu0 0.0
        %6330 = vmatpush1.msra.mxu0 0.0
        %6331 = vmatprep.subr.mxu0 0.0
        %6332 = vmatpush1.msra.mxu0 0.0
        %6333 = vmatprep.subr.mxu0 0.0
        %6334 = vmatpush1.msra.mxu0 0.0
        %6335 = vmatprep.subr.mxu0 0.0
        %6336 = vmatpush1.msra.mxu0 0.0
        %6337 = vmatprep.subr.mxu0 0.0
        %6338 = vmatpush1.msra.mxu0 0.0
        %6339 = vmatprep.subr.mxu0 0.0
        %6340 = vmatpush1.msra.mxu0 0.0
        %6341 = vmatprep.subr.mxu0 0.0
        %6342 = vmatpush1.msra.mxu0 0.0
        %6343 = vmatprep.subr.mxu0 0.0
        %6344 = vmatpush1.msra.mxu0 0.0
        %6345 = vmatprep.subr.mxu0 0.0
        %6346 = vmatpush1.msra.mxu0 0.0
        %6347 = vmatprep.subr.mxu0 0.0
        %6348 = vmatpush1.msra.mxu0 0.0
        %6349 = vmatprep.subr.mxu0 0.0
        %6350 = vmatpush1.msra.mxu0 0.0
        %6351 = vmatprep.subr.mxu0 0.0
        %6352 = vmatpush1.msra.mxu0 0.0
        %6353 = vmatprep.subr.mxu0 0.0
        %6354 = vmatpush1.msra.mxu0 0.0
        %6355 = vmatprep.subr.mxu0 0.0
        %6356 = vmatpush1.msra.mxu0 0.0
        %6357 = vmatprep.subr.mxu0 0.0
        %6358 = vmatpush1.msra.mxu0 0.0
        %6359 = vmatprep.subr.mxu0 0.0
        %6360 = vmatpush1.msra.mxu0 0.0
        %6361 = vmatprep.mubr.f32.mxu0 0.0
        %6362 = vmatmul.mubr.f32.gmra.mrb[0].mxu0 %v5824
        %v6363 = vpop.f32.mrb[0].mxu0
        %v6364 = vadd.f32 0.0, %v6363
        %v6365 = vpop.f32.mrb[0].mxu0
        %6366 = vmatprep.mubr.f32.mxu0 0.0
        %6367 = vmatmul.mubr.f32.gmra.mrb[0].mxu0 %v5827
        %v6368 = vpop.f32.mrb[0].mxu0
        %v6369 = vadd.f32 0.0, %v6368
        %v6370 = vpop.f32.mrb[0].mxu0
        %6371 = vdwg.mxu0
        %s6372 = scalar_lea.vmem %s498, 96 [#allocation5]
        %6373 = vst.msk [vmem:[%s6372] sm:$0xff] %vm5904, %v6364
        %6374 = vst.msk [vmem:[%s6372 + $0x8] sm:$0xff] %vm5904, %v6369
        %6375 = vmatprep.subr.mxu0 0.0
        %6376 = vmatpush1.msra.mxu0 %v5435
        %6377 = vmatprep.subr.mxu0 0.0
        %6378 = vmatpush1.msra.mxu0 %v5820
        %6379 = vmatprep.subr.mxu0 0.0
        %6380 = vmatpush1.msra.mxu0 0.0
        %6381 = vmatprep.subr.mxu0 0.0
        %6382 = vmatpush1.msra.mxu0 0.0
        %6383 = vmatprep.subr.mxu0 0.0
        %6384 = vmatpush1.msra.mxu0 0.0
        %6385 = vmatprep.subr.mxu0 0.0
        %6386 = vmatpush1.msra.mxu0 0.0
        %6387 = vmatprep.subr.mxu0 0.0
        %6388 = vmatpush1.msra.mxu0 0.0
        %6389 = vmatprep.subr.mxu0 0.0
        %6390 = vmatpush1.msra.mxu0 0.0
        %6391 = vmatprep.subr.mxu0 0.0
        %6392 = vmatpush1.msra.mxu0 0.0
        %6393 = vmatprep.subr.mxu0 0.0
        %6394 = vmatpush1.msra.mxu0 0.0
        %6395 = vmatprep.subr.mxu0 0.0
        %6396 = vmatpush1.msra.mxu0 0.0
        %6397 = vmatprep.subr.mxu0 0.0
        %6398 = vmatpush1.msra.mxu0 0.0
        %6399 = vmatprep.subr.mxu0 0.0
        %6400 = vmatpush1.msra.mxu0 0.0
        %6401 = vmatprep.subr.mxu0 0.0
        %6402 = vmatpush1.msra.mxu0 0.0
        %6403 = vmatprep.subr.mxu0 0.0
        %6404 = vmatpush1.msra.mxu0 0.0
        %6405 = vmatprep.subr.mxu0 0.0
        %6406 = vmatpush1.msra.mxu0 0.0
        %6407 = vmatprep.subr.mxu0 0.0
        %6408 = vmatpush1.msra.mxu0 0.0
        %6409 = vmatprep.subr.mxu0 0.0
        %6410 = vmatpush1.msra.mxu0 0.0
        %6411 = vmatprep.subr.mxu0 0.0
        %6412 = vmatpush1.msra.mxu0 0.0
        %6413 = vmatprep.subr.mxu0 0.0
        %6414 = vmatpush1.msra.mxu0 0.0
        %6415 = vmatprep.subr.mxu0 0.0
        %6416 = vmatpush1.msra.mxu0 0.0
        %6417 = vmatprep.subr.mxu0 0.0
        %6418 = vmatpush1.msra.mxu0 0.0
        %6419 = vmatprep.subr.mxu0 0.0
        %6420 = vmatpush1.msra.mxu0 0.0
        %6421 = vmatprep.subr.mxu0 0.0
        %6422 = vmatpush1.msra.mxu0 0.0
        %6423 = vmatprep.subr.mxu0 0.0
        %6424 = vmatpush1.msra.mxu0 0.0
        %6425 = vmatprep.subr.mxu0 0.0
        %6426 = vmatpush1.msra.mxu0 0.0
        %6427 = vmatprep.subr.mxu0 0.0
        %6428 = vmatpush1.msra.mxu0 0.0
        %6429 = vmatprep.subr.mxu0 0.0
        %6430 = vmatpush1.msra.mxu0 0.0
        %6431 = vmatprep.subr.mxu0 0.0
        %6432 = vmatpush1.msra.mxu0 0.0
        %6433 = vmatprep.subr.mxu0 0.0
        %6434 = vmatpush1.msra.mxu0 0.0
        %6435 = vmatprep.subr.mxu0 0.0
        %6436 = vmatpush1.msra.mxu0 0.0
        %6437 = vmatprep.subr.mxu0 0.0
        %6438 = vmatpush1.msra.mxu0 0.0
        %6439 = vmatprep.mubr.f32.mxu0 0.0
        %6440 = vmatmul.mubr.f32.gmra.mrb[0].mxu0 %v5824
        %v6441 = vpop.f32.mrb[0].mxu0
        %v6442 = vadd.f32 0.0, %v6441
        %v6443 = vpop.f32.mrb[0].mxu0
        %6444 = vmatprep.mubr.f32.mxu0 0.0
        %6445 = vmatmul.mubr.f32.gmra.mrb[0].mxu0 %v5827
        %v6446 = vpop.f32.mrb[0].mxu0
        %v6447 = vadd.f32 0.0, %v6446
        %v6448 = vpop.f32.mrb[0].mxu0
        %6449 = vdwg.mxu0
        %s6450 = scalar_lea.vmem %s498, 112 [#allocation5]
        %6451 = vst.msk [vmem:[%s6450] sm:$0xff] %vm5904, %v6442
        %6452 = vst.msk [vmem:[%s6450 + $0x8] sm:$0xff] %vm5904, %v6447
        %s6453 = sand.u32 %s223, 1
        %s6454 = scalar_lea.sflag [#allocation6], %s6453
        %s6455 = sand.u32 %s223, 1
        %s6456 = smul.addr %s6455, 128
        %s6457 = scalar_lea.vmem [#allocation5], %s6456
        // Predicated region
        $region163: #{tpu_custom_call.1} parent=149 // pred_check
          %p6458 = pneg %p233
        $region164: #{tpu_custom_call.1} parent=149 // pred_check_branch
          %6460 = sbr.rel (%p6458) target = $region166
        $region165: #{tpu_custom_call.1} parent=149 // pred_region
          #allocation8 [shape = 'u32[6]{0}', space=smem, size = 0x18, scoped, tag = 'DMA stride descriptor']
          %s6461 = smul.u32 2, %s26
          %s6463 = ssub.s32 2048, 2048
          %6464 = vsyncadd %s6454, %s6463
          %s6465 = smul.addr %s25, 32
          %s6466 = sadd.s32 %s6461, %s6465
          %s6467 = smul.addr %s6466, 128
          %s6468 = scalar_lea.hbm %s7, %s6467
          %s6470 = sshll.u32 1, 14
          %s6471 = sxor.u32 4294967295, %s6470
          %s6474 = sshll.u32 7, 18
          %s6475 = sxor.u32 4294967295, %s6474
          %s6476 = sand.u32 0, %s6475
          %s6478 = sor.u32 %s6476, 0
          %s6480 = sshll.u32 3, 24
          %s6481 = sxor.u32 4294967295, %s6480
          %s6482 = sand.u32 %s6478, %s6481
          %s6484 = sor.u32 %s6482, 0
          %s6485 = sshll.u32 %s6457, 4
          %s6486 = int_to_ptr.vmem [resolvable:$true] %s6485
          %6492 = sst [smem:[#allocation8]] 256
          %s6493 = scalar_lea.smem [#allocation8], 1
          %6494 = sst [smem:[%s6493]] 512
          %s6495 = scalar_lea.smem [#allocation8], 2
          %6496 = sst [smem:[%s6495]] 2
          %s6497 = scalar_lea.smem [#allocation8], 3
          %6498 = sst [smem:[%s6497]] 128
          %s6499 = scalar_lea.smem [#allocation8], 4
          %6500 = sst [smem:[%s6499]] 128
          %s6501 = scalar_lea.smem [#allocation8], 5
          %6502 = sst [smem:[%s6501]] 8
          %6504 = dma.general %s6486, 2048, %s6468, %s6454, [#allocation7], [#allocation8], %s6484, 0
        $region166: #{tpu_custom_call.1} parent=149 // pred_fallthru
          _
      $region150: #{tpu_custom_call.1} parent=5 // pred_fallthru
        _
      %p6505 = scmp.le.s32.totalorder 2, %s16
      // Predicated region
      $region167: #{tpu_custom_call.1} parent=5 // pred_check
        %p6506 = pneg %p6505
      $region168: #{tpu_custom_call.1} parent=5 // pred_check_branch
        %6508 = sbr.rel (%p6506) target = $region170
      $region169: #{tpu_custom_call.1} parent=5 // pred_region
        %s6509 = ssub.s32 %s16, 2
        // Predicated region
        $region171: #{tpu_custom_call.1} parent=169 // pred_check
          %p6510 = pneg %p239
        $region172: #{tpu_custom_call.1} parent=169 // pred_check_branch
          %6512 = sbr.rel (%p6510) target = $region174
        $region173: #{tpu_custom_call.1} parent=169 // pred_region
          %s6513 = sand.u32 %s224, 1
          %s6514 = scalar_lea.sflag [#allocation6], %s6513
          %s6515 = sand.u32 %s224, 1
          %s6516 = smul.addr %s6515, 128
          %s6517 = scalar_lea.vmem [#allocation5], %s6516
          %6518 = dma.done %s6514, 2048
        $region174: #{tpu_custom_call.1} parent=169 // pred_fallthru
          _
      $region170: #{tpu_custom_call.1} parent=5 // pred_fallthru
        _
    $region6: #{tpu_custom_call.1} parent=1 // loop_footer
      %s20 = sadd.s32 1, %s16
    $region7: #{tpu_custom_call.1} parent=1 // loop_footer_branch
      %15 = sbr.rel target = $region3
    $region8: #{tpu_custom_call.1} parent=1 // loop_exit
      _
    %6519 = vsyncpa [#allocation6], 1
    %s6520 = scalar_lea.sflag [#allocation6], 1
    %6521 = vsyncpa %s6520, 1

</llo_original>
